<compile_context>
chip_gen: v7x
topology: tpu7x:2x2x1
jax: 0.10.0
libtpu: 0.0.40
codegen_flags: <defaults>
</compile_context>

<pallas_src>
import functools

import jax
import jax.numpy as jnp
import numpy as np
from jax.experimental import pallas as pl
from jax.experimental.pallas import tpu as pltpu


def _tpu_generation_info():
    """Best-effort TPU generation query.  Only affects tiling/precision policy."""
    try:
        kind = jax.devices()[0].device_kind.lower()
    except Exception:  # pragma: no cover
        kind = ""
    is_v7 = ("v7" in kind) or ("7x" in kind)
    is_v6 = "v6" in kind
    is_v5 = "v5" in kind

    vmem_cap = None
    try:
        vmem_cap = int(pltpu.get_tpu_info().vmem_capacity_bytes)
    except Exception:  # pragma: no cover
        vmem_cap = None

    if vmem_cap:
        vmem_limit = min((vmem_cap * 3) // 4, 100 * 1024 * 1024)
    elif is_v7:
        vmem_limit = 48 * 1024 * 1024        # 64 MiB physical per TensorCore
    elif is_v5 or is_v6 or "v4" in kind:
        vmem_limit = 96 * 1024 * 1024        # 128 MiB physical
    else:
        vmem_limit = 32 * 1024 * 1024        # unknown: stay at scoped default

    return dict(
        vmem_limit=vmem_limit,
        num_tc=2 if is_v7 else 1,            # v7x: 2 TensorCores share the grid
        mxu_dim=256 if (is_v6 or is_v7) else 128,   # v5e MXUs are 128x128
        bf16_softmax=(is_v6 or is_v7),       # v5e has no bf16 VPU/EUP path
    )


def _pick_tile_b(B, N, C, num_heads, head_dim, out_itemsize,
                 num_tc, mxu_dim, vmem_limit):
    """Largest batch tile whose estimated VMEM footprint fits the budget.

    v7x (2 TCs): keep >= num_tc grid steps and prefer an even split across
    cores.  v5e/v6e (1 TC): the grid is a serial loop, so tile_b may go up to
    B (forcing >= 2 steps there only shrinks the MXU M dim and adds ~0.35 us
    of per-step overhead).
    """
    def footprint(tb):
        M = tb * N
        x_io = 2 * (M * C * 2)                        # double-buffered bf16 x tile
        o_io = 2 * (M * C * out_itemsize)             # double-buffered out tile
        w = (3 * num_heads * C * head_dim             # wq/wk/wv (bf16, 1-buffered)
             + num_heads * head_dim * C) * 2 + C * 4  # wproj + f32 bias
        acc = M * C * 4                               # f32 accumulator scratch
        per_head = 3 * M * head_dim * 6 + tb * N * N * 6   # q/k/v + scores/probs
        return x_io + o_io + w + acc + per_head

    budget = vmem_limit // 2                          # headroom for vregs/spills
    best, best_key = 1, None
    for tb in range(1, B + 1):
        if B % tb:
            continue
        gb = B // tb
        if gb < num_tc:                               # v7x: >= 1 step per core
            continue
        if tb > 1 and footprint(tb) > budget:
            continue
        M = tb * N
        key = (gb % num_tc == 0,                      # balanced across TCs (v7x)
               M % mxu_dim == 0,                      # MXU-aligned M rows
               M)                                     # otherwise: biggest tile
        if best_key is None or key > best_key:
            best, best_key = tb, key
    return best


def _attention_kernel(x_ref, wq_ref, wk_ref, wv_ref, wp_ref, b_ref, o_ref,
                      acc_ref, *, num_heads, head_dim, tile_b, seq_len,
                      bf16_softmax, lane_dense_out, approx_reciprocal):
    """Fused per-head qkv-proj -> attention -> accumulated out-proj.

    x_ref  : (tile_b, N, C)   bf16
    wq_ref : (H, C, d)        bf16   (attention scale pre-folded)
    wk_ref : (H, C, d)        bf16
    wv_ref : (H, C, d)        bf16
    wp_ref : (H, d, C)        bf16   (proj weight rows grouped per head)
    b_ref  : (1, C)           f32    (proj bias)
    o_ref  : (tile_b, N*C) or (tile_b, N, C)
    acc_ref: (tile_b*N, C)    f32 VMEM scratch
    """
    C = num_heads * head_dim
    M = tile_b * seq_len

    # (tile_b, N, C) -> (M, C): leading-dim merge only (lane layout unchanged).
    x = x_ref[...].reshape(M, C)

    acc_ref[...] = jnp.zeros_like(acc_ref)

    def head_body(h, carry):
        # q/k/v come straight out of the projection in head-major form: the
        # head axis never enters the lane dim, so there is no lane->batch
        # relayout and no (M, 3C) f32 qkv temporary.  (Per-head matmuls trade
        # some MXU lane width when head_dim < 128 for zero relayout traffic;
        # a head-group variant could restore width at tiny relayout cost.)
        q = jnp.dot(x, wq_ref[h], preferred_element_type=jnp.float32)  # (M, d)
        k = jnp.dot(x, wk_ref[h], preferred_element_type=jnp.float32)
        v = jnp.dot(x, wv_ref[h], preferred_element_type=jnp.float32)
        qb = q.reshape(tile_b, seq_len, head_dim).astype(jnp.bfloat16)
        kb = k.reshape(tile_b, seq_len, head_dim).astype(jnp.bfloat16)
        vb = v.reshape(tile_b, seq_len, head_dim).astype(jnp.bfloat16)

        # Scores: contract head_dim of both operands (no explicit transpose).
        s = jnp.einsum('bqd,bkd->bqk', qb, kb,
                       preferred_element_type=jnp.float32)   # (tile_b, N, N)
        s = s - jnp.max(s, axis=-1, keepdims=True)           # row max in f32
        if bf16_softmax:
            # v6e/v7x: bf16 exp halves EUP/VALU data volume; p is consumed in
            # bf16 by the PV matmul anyway.
            p = jnp.exp(s.astype(jnp.bfloat16))
        else:
            # v5e: no bf16 VPU/EUP -- keep the exp in f32.
            p = jnp.exp(s)
        denom = jnp.sum(p, axis=-1, keepdims=True).astype(jnp.float32)

        o = jnp.einsum('bqk,bkd->bqd', p.astype(jnp.bfloat16), vb,
                       preferred_element_type=jnp.float32)   # (tile_b, N, d)
        # Deferred softmax normalization on the small (N, d) slab.
        o = o * pl.reciprocal(denom, approx=approx_reciprocal)

        # Head -> channel merge rides the MXU: accumulate (M, d) @ (d, C)
        # into the f32 accumulator (no sublane->lane concat).
        acc_ref[...] += jnp.dot(o.reshape(M, head_dim).astype(jnp.bfloat16),
                                wp_ref[h], preferred_element_type=jnp.float32)
        return carry

    # TODO(synk): at large N (tile_b*N*N*6 B > ~1/3 of VMEM) switch this head
    # loop to a flash-style inner KV loop (online softmax with m/l/acc
    # scratch); per-head scores here are already H-times smaller than a
    # batched (H*tile_b, N, N) formulation.
    jax.lax.fori_loop(0, num_heads, head_body, 0, unroll=True)

    y = acc_ref[...] + b_ref[...]                             # (M, C) f32
    if lane_dense_out:
        # C is not a multiple of 128: present a lane-dense (tile_b, N*C) slab
        # so the final store is unmasked on the lane axis.
        o_ref[...] = y.reshape(tile_b, seq_len * C).astype(o_ref.dtype)
    else:
        o_ref[...] = y.reshape(tile_b, seq_len, C).astype(o_ref.dtype)


def attention_pallas(x, w_qkv, w_proj, b_proj, *, num_heads, tile_b=None,
                     approx_reciprocal=True):
    """x: (B, N, C); w_qkv: (C, 3C) (= torch W_qkv.T); w_proj: (C, C) (= W.T);
    b_proj: (C,).  approx_reciprocal=False uses an exact softmax denominator."""
    B, N, C = x.shape
    assert C % num_heads == 0
    head_dim = C // num_heads
    scale = head_dim ** (-0.5)

    info = _tpu_generation_info()
    if tile_b is None:
        tile_b = _pick_tile_b(B, N, C, num_heads, head_dim, x.dtype.itemsize,
                              info["num_tc"], info["mxu_dim"],
                              info["vmem_limit"])
    assert B % tile_b == 0
    grid_b = B // tile_b
    M = tile_b * N

    # Head-major weight layout (done once in XLA, outside the kernel):
    # torch qkv output column j -> (which = j // C, head = (j % C) // d, j % d).
    w_qkv = w_qkv.astype(jnp.float32)
    wq = w_qkv[:, :C].reshape(C, num_heads, head_dim).transpose(1, 0, 2) * scale
    wk = w_qkv[:, C:2 * C].reshape(C, num_heads, head_dim).transpose(1, 0, 2)
    wv = w_qkv[:, 2 * C:].reshape(C, num_heads, head_dim).transpose(1, 0, 2)
    wp = w_proj.astype(jnp.float32).reshape(num_heads, head_dim, C)

    x_bf = x.astype(jnp.bfloat16)
    wq_bf = wq.astype(jnp.bfloat16)
    wk_bf = wk.astype(jnp.bfloat16)
    wv_bf = wv.astype(jnp.bfloat16)
    wp_bf = wp.astype(jnp.bfloat16)
    b2d = b_proj.reshape(1, C).astype(jnp.float32)

    flops = (2 * B * N * C * 3 * C                        # qkv projection
             + 2 * 2 * B * num_heads * N * N * head_dim   # scores + attn @ v
             + 2 * B * N * C * C)                         # output projection
    bytes_accessed = (x_bf.size * 2
                      + (wq_bf.size + wk_bf.size + wv_bf.size + wp_bf.size) * 2
                      + b2d.size * 4 + B * N * C * x.dtype.itemsize)

    # Lane-dense output only when C is not a multiple of 128 and the flattened
    # (tile_b, N*C) block still satisfies the (8,128)/full-dim BlockSpec rule.
    lane_dense_ok = (C % 128 != 0) and (tile_b == B or tile_b % 8 == 0)

    def _call(single_buffer_weights, lane_dense_out):
        wmode = {}
        if single_buffer_weights:
            # Grid-invariant weights (constant index_map): double-buffering
            # buys nothing -- halve their resident VMEM (matters at real ViT
            # widths, especially under v7x's 64 MiB).
            wmode = dict(pipeline_mode=pl.Buffered(1))

        in_specs = [
            pl.BlockSpec((tile_b, N, C), lambda b: (b, 0, 0)),
            pl.BlockSpec((num_heads, C, head_dim), lambda b: (0, 0, 0), **wmode),
            pl.BlockSpec((num_heads, C, head_dim), lambda b: (0, 0, 0), **wmode),
            pl.BlockSpec((num_heads, C, head_dim), lambda b: (0, 0, 0), **wmode),
            pl.BlockSpec((num_heads, head_dim, C), lambda b: (0, 0, 0), **wmode),
            pl.BlockSpec((1, C), lambda b: (0, 0), **wmode),
        ]
        if lane_dense_out:
            out_shape = jax.ShapeDtypeStruct((B, N * C), x.dtype)
            out_specs = pl.BlockSpec((tile_b, N * C), lambda b: (b, 0))
        else:
            out_shape = jax.ShapeDtypeStruct((B, N, C), x.dtype)
            out_specs = pl.BlockSpec((tile_b, N, C), lambda b: (b, 0, 0))

        kernel = functools.partial(
            _attention_kernel, num_heads=num_heads, head_dim=head_dim,
            tile_b=tile_b, seq_len=N, bf16_softmax=info["bf16_softmax"],
            lane_dense_out=lane_dense_out, approx_reciprocal=approx_reciprocal)

        out = pl.pallas_call(
            kernel,
            out_shape=out_shape,
            grid_spec=pltpu.PrefetchScalarGridSpec(
                num_scalar_prefetch=0,
                grid=(grid_b,),
                in_specs=in_specs,
                out_specs=out_specs,
                scratch_shapes=[pltpu.VMEM((M, C), jnp.float32)]),
            compiler_params=pltpu.CompilerParams(
                dimension_semantics=("parallel",),
                vmem_limit_bytes=info["vmem_limit"]),
            cost_estimate=pl.CostEstimate(
                flops=flops,
                transcendentals=B * num_heads * N * N,
                bytes_accessed=bytes_accessed),
        )(x_bf, wq_bf, wk_bf, wv_bf, wp_bf, b2d)
        if lane_dense_out:
            out = out.reshape(B, N, C)
        return out

    # Try the fully-optimized configuration first; fall back if this
    # jax/Mosaic build rejects Buffered(1) or the lane-collapsing output
    # reshape (correctness is identical on every path).
    attempts = [(True, lane_dense_ok)]
    if lane_dense_ok:
        attempts.append((True, False))
    attempts.append((False, False))
    last_err = None
    for sbw, ldo in attempts:
        try:
            return jax.block_until_ready(_call(sbw, ldo))
        except Exception as e:  # pragma: no cover - toolchain feature fallback
            last_err = e
    raise last_err


def attention_reference(x, w_qkv, w_proj, b_proj, *, num_heads):
    """Pure-JAX (f32) reference mirroring the PyTorch forward."""
    B, N, C = x.shape
    head_dim = C // num_heads
    scale = head_dim ** (-0.5)
    qkv = x @ w_qkv                                           # (B, N, 3C)
    qkv = qkv.reshape(B, N, 3, num_heads, head_dim).transpose(2, 0, 3, 1, 4)
    q, k, v = qkv[0], qkv[1], qkv[2]                          # (B, H, N, hd)
    attn = jnp.einsum('bhqd,bhkd->bhqk', q, k) * scale
    attn = jax.nn.softmax(attn, axis=-1)
    out = jnp.einsum('bhqk,bhkd->bhqd', attn, v)              # (B, H, N, hd)
    out = out.transpose(0, 2, 1, 3).reshape(B, N, C)
    return out @ w_proj + b_proj


if __name__ == "__main__":
    # Small shapes consistent with the module: B=2, N=8 tokens, C=32 (dim),
    # num_heads=8 -> head_dim=4.  Dropouts are p=0.0 (identity).
    B, N, C, H = 2, 8, 32, 8

    key = jax.random.PRNGKey(0)
    kx, kqkv, kproj, kb = jax.random.split(key, 4)

    x = jax.random.normal(kx, (B, N, C), dtype=jnp.float32)
    # qkv_bias=False (module default) -> no qkv bias.
    w_qkv = jax.random.normal(kqkv, (C, 3 * C), dtype=jnp.float32) * 0.02
    w_proj = jax.random.normal(kproj, (C, C), dtype=jnp.float32) * 0.02
    b_proj = jax.random.normal(kb, (C,), dtype=jnp.float32) * 0.02

    out = attention_pallas(x, w_qkv, w_proj, b_proj, num_heads=H)
    out = jax.block_until_ready(out)

    ref = attention_reference(x, w_qkv, w_proj, b_proj, num_heads=H)
    # bf16 matmul operands (f32 accumulate) + approx reciprocal -> loose tol.
    np.testing.assert_allclose(np.asarray(out), np.asarray(ref),
                               rtol=2e-2, atol=2e-3)

    print("KERNEL_OK")
</pallas_src>

<mosaic_0001>
module attributes {stable_mosaic.version = 11 : i64} {
  func.func @_attention_kernel(%arg0: i32, %arg1: memref<2x8x32xbf16, #tpu.memory_space<vmem>>, %arg2: memref<8x32x4xbf16, #tpu.memory_space<vmem>>, %arg3: memref<8x32x4xbf16, #tpu.memory_space<vmem>>, %arg4: memref<8x32x4xbf16, #tpu.memory_space<vmem>>, %arg5: memref<8x4x32xbf16, #tpu.memory_space<vmem>>, %arg6: memref<1x32xf32, #tpu.memory_space<vmem>>, %arg7: memref<2x256xf32, #tpu.memory_space<vmem>>, %arg8: memref<16x32xf32, #tpu.memory_space<vmem>>) attributes {dimension_semantics = [#tpu.dimension_semantics<parallel>], iteration_bounds = array<i64: 1>, scalar_prefetch = 0 : i64, scratch_operands = 1 : i64, tpu.core_type = #tpu.core_type<tc>, window_params = [{transform_indices = @transform_0, window_bounds = array<i64: 2, 8, 32>}, {pipeline_mode = #tpu.pipeline_mode<synchronous>, transform_indices = @transform_1, window_bounds = array<i64: 8, 32, 4>}, {pipeline_mode = #tpu.pipeline_mode<synchronous>, transform_indices = @transform_2, window_bounds = array<i64: 8, 32, 4>}, {pipeline_mode = #tpu.pipeline_mode<synchronous>, transform_indices = @transform_3, window_bounds = array<i64: 8, 32, 4>}, {pipeline_mode = #tpu.pipeline_mode<synchronous>, transform_indices = @transform_4, window_bounds = array<i64: 8, 4, 32>}, {pipeline_mode = #tpu.pipeline_mode<synchronous>, transform_indices = @transform_5, window_bounds = array<i64: 1, 32>}, {transform_indices = @transform_6, window_bounds = array<i64: 2, 256>}]} {
    %c0 = arith.constant 0 : index
    %c0_0 = arith.constant 0 : index
    %c0_1 = arith.constant 0 : index
    %0 = vector.load %arg1[%c0, %c0_0, %c0_1] : memref<2x8x32xbf16, #tpu.memory_space<vmem>>, vector<2x8x32xbf16>
    %1 = vector.shape_cast %0 : vector<2x8x32xbf16> to vector<16x32xbf16>
    %cst = arith.constant 0.000000e+00 : f32
    %2 = vector.broadcast %cst : f32 to vector<16x32xf32>
    %c0_2 = arith.constant 0 : index
    %c0_3 = arith.constant 0 : index
    %3 = vector.load %arg8[%c0_2, %c0_3] : memref<16x32xf32, #tpu.memory_space<vmem>>, vector<16x32xf32>
    tpu.vector_store %arg8[%c0_2, %c0_3], %2 {strides = array<i32>} : memref<16x32xf32, #tpu.memory_space<vmem>>, vector<16x32xf32>,
    %c0_i32 = arith.constant 0 : i32
    %4 = arith.index_cast %c0_i32 : i32 to index
    %c0_4 = arith.constant 0 : index
    %c0_5 = arith.constant 0 : index
    %5 = vector.load %arg2[%4, %c0_4, %c0_5] : memref<8x32x4xbf16, #tpu.memory_space<vmem>>, vector<1x32x4xbf16>
    %6 = vector.shape_cast %5 : vector<1x32x4xbf16> to vector<32x4xbf16>
    %cst_6 = arith.constant dense<0.000000e+00> : vector<16x4xf32>
    %7 = tpu.matmul %1, %6, %cst_6 {dimension_numbers = #tpu.dot_dimension_numbers<[1], [0], [0], [1], [0, 0, 1, 1], [], []>} : vector<16x32xbf16>, vector<32x4xbf16>, vector<16x4xf32> -> vector<16x4xf32>
    %8 = arith.index_cast %c0_i32 : i32 to index
    %c0_7 = arith.constant 0 : index
    %c0_8 = arith.constant 0 : index
    %9 = vector.load %arg3[%8, %c0_7, %c0_8] : memref<8x32x4xbf16, #tpu.memory_space<vmem>>, vector<1x32x4xbf16>
    %10 = vector.shape_cast %9 : vector<1x32x4xbf16> to vector<32x4xbf16>
    %cst_9 = arith.constant dense<0.000000e+00> : vector<16x4xf32>
    %11 = tpu.matmul %1, %10, %cst_9 {dimension_numbers = #tpu.dot_dimension_numbers<[1], [0], [0], [1], [0, 0, 1, 1], [], []>} : vector<16x32xbf16>, vector<32x4xbf16>, vector<16x4xf32> -> vector<16x4xf32>
    %12 = arith.index_cast %c0_i32 : i32 to index
    %c0_10 = arith.constant 0 : index
    %c0_11 = arith.constant 0 : index
    %13 = vector.load %arg4[%12, %c0_10, %c0_11] : memref<8x32x4xbf16, #tpu.memory_space<vmem>>, vector<1x32x4xbf16>
    %14 = vector.shape_cast %13 : vector<1x32x4xbf16> to vector<32x4xbf16>
    %cst_12 = arith.constant dense<0.000000e+00> : vector<16x4xf32>
    %15 = tpu.matmul %1, %14, %cst_12 {dimension_numbers = #tpu.dot_dimension_numbers<[1], [0], [0], [1], [0, 0, 1, 1], [], []>} : vector<16x32xbf16>, vector<32x4xbf16>, vector<16x4xf32> -> vector<16x4xf32>
    %16 = vector.shape_cast %7 : vector<16x4xf32> to vector<2x8x4xf32>
    %17 = arith.truncf %16 : vector<2x8x4xf32> to vector<2x8x4xbf16>
    %18 = vector.shape_cast %11 : vector<16x4xf32> to vector<2x8x4xf32>
    %19 = arith.truncf %18 : vector<2x8x4xf32> to vector<2x8x4xbf16>
    %20 = vector.shape_cast %15 : vector<16x4xf32> to vector<2x8x4xf32>
    %21 = arith.truncf %20 : vector<2x8x4xf32> to vector<2x8x4xbf16>
    "tpu.trace_start"() <{level = 10 : i32, message = "bqd,bkd->bqk"}> : () -> ()
    %cst_13 = arith.constant dense<0.000000e+00> : vector<2x8x8xf32>
    %22 = tpu.matmul %17, %19, %cst_13 {dimension_numbers = #tpu.dot_dimension_numbers<[2], [2], [1], [1], [0, 0, 0, 1, 1, 1], [0], [0]>} : vector<2x8x4xbf16>, vector<2x8x4xbf16>, vector<2x8x8xf32> -> vector<2x8x8xf32>
    "tpu.trace_stop"() : () -> ()
    %cst_14 = arith.constant dense<0xFF800000> : vector<2x8xf32>
    %23 = vector.multi_reduction <maximumf>, %22, %cst_14 [2] : vector<2x8x8xf32> to vector<2x8xf32>
    %24 = vector.shape_cast %23 : vector<2x8xf32> to vector<2x8x1xf32>
    %25 = vector.broadcast %24 : vector<2x8x1xf32> to vector<2x8x8xf32>
    %26 = arith.subf %22, %25 : vector<2x8x8xf32>
    %27 = math.exp %26 : vector<2x8x8xf32>
    %cst_15 = arith.constant dense<0.000000e+00> : vector<2x8xf32>
    %28 = vector.multi_reduction <add>, %27, %cst_15 [2] : vector<2x8x8xf32> to vector<2x8xf32>
    %29 = vector.shape_cast %28 : vector<2x8xf32> to vector<2x8x1xf32>
    %30 = arith.truncf %27 : vector<2x8x8xf32> to vector<2x8x8xbf16>
    "tpu.trace_start"() <{level = 10 : i32, message = "bqk,bkd->bqd"}> : () -> ()
    %cst_16 = arith.constant dense<0.000000e+00> : vector<2x8x4xf32>
    %31 = tpu.matmul %30, %21, %cst_16 {dimension_numbers = #tpu.dot_dimension_numbers<[2], [1], [1], [2], [0, 0, 0, 1, 1, 2], [0], [0]>} : vector<2x8x8xbf16>, vector<2x8x4xbf16>, vector<2x8x4xf32> -> vector<2x8x4xf32>
    "tpu.trace_stop"() : () -> ()
    %32 = tpu.reciprocal %29 {approx = true} : vector<2x8x1xf32> -> vector<2x8x1xf32>
    %33 = vector.broadcast %32 : vector<2x8x1xf32> to vector<2x8x4xf32>
    %34 = arith.mulf %31, %33 : vector<2x8x4xf32>
    %c0_17 = arith.constant 0 : index
    %c0_18 = arith.constant 0 : index
    %35 = vector.load %arg8[%c0_17, %c0_18] : memref<16x32xf32, #tpu.memory_space<vmem>>, vector<16x32xf32>
    %36 = vector.shape_cast %34 : vector<2x8x4xf32> to vector<16x4xf32>
    %37 = arith.truncf %36 : vector<16x4xf32> to vector<16x4xbf16>
    %38 = arith.index_cast %c0_i32 : i32 to index
    %c0_19 = arith.constant 0 : index
    %c0_20 = arith.constant 0 : index
    %39 = vector.load %arg5[%38, %c0_19, %c0_20] : memref<8x4x32xbf16, #tpu.memory_space<vmem>>, vector<1x4x32xbf16>
    %40 = vector.shape_cast %39 : vector<1x4x32xbf16> to vector<4x32xbf16>
    %cst_21 = arith.constant dense<0.000000e+00> : vector<16x32xf32>
    %41 = tpu.matmul %37, %40, %cst_21 {dimension_numbers = #tpu.dot_dimension_numbers<[1], [0], [0], [1], [0, 0, 1, 1], [], []>} : vector<16x4xbf16>, vector<4x32xbf16>, vector<16x32xf32> -> vector<16x32xf32>
    %42 = arith.addf %35, %41 : vector<16x32xf32>
    %c0_22 = arith.constant 0 : index
    %c0_23 = arith.constant 0 : index
    %43 = vector.load %arg8[%c0_22, %c0_23] : memref<16x32xf32, #tpu.memory_space<vmem>>, vector<16x32xf32>
    tpu.vector_store %arg8[%c0_22, %c0_23], %42 {strides = array<i32>} : memref<16x32xf32, #tpu.memory_space<vmem>>, vector<16x32xf32>,
    %c1_i32 = arith.constant 1 : i32
    %44 = arith.index_cast %c1_i32 : i32 to index
    %c0_24 = arith.constant 0 : index
    %c0_25 = arith.constant 0 : index
    %45 = vector.load %arg2[%44, %c0_24, %c0_25] : memref<8x32x4xbf16, #tpu.memory_space<vmem>>, vector<1x32x4xbf16>
    %46 = vector.shape_cast %45 : vector<1x32x4xbf16> to vector<32x4xbf16>
    %cst_26 = arith.constant dense<0.000000e+00> : vector<16x4xf32>
    %47 = tpu.matmul %1, %46, %cst_26 {dimension_numbers = #tpu.dot_dimension_numbers<[1], [0], [0], [1], [0, 0, 1, 1], [], []>} : vector<16x32xbf16>, vector<32x4xbf16>, vector<16x4xf32> -> vector<16x4xf32>
    %48 = arith.index_cast %c1_i32 : i32 to index
    %c0_27 = arith.constant 0 : index
    %c0_28 = arith.constant 0 : index
    %49 = vector.load %arg3[%48, %c0_27, %c0_28] : memref<8x32x4xbf16, #tpu.memory_space<vmem>>, vector<1x32x4xbf16>
    %50 = vector.shape_cast %49 : vector<1x32x4xbf16> to vector<32x4xbf16>
    %cst_29 = arith.constant dense<0.000000e+00> : vector<16x4xf32>
    %51 = tpu.matmul %1, %50, %cst_29 {dimension_numbers = #tpu.dot_dimension_numbers<[1], [0], [0], [1], [0, 0, 1, 1], [], []>} : vector<16x32xbf16>, vector<32x4xbf16>, vector<16x4xf32> -> vector<16x4xf32>
    %52 = arith.index_cast %c1_i32 : i32 to index
    %c0_30 = arith.constant 0 : index
    %c0_31 = arith.constant 0 : index
    %53 = vector.load %arg4[%52, %c0_30, %c0_31] : memref<8x32x4xbf16, #tpu.memory_space<vmem>>, vector<1x32x4xbf16>
    %54 = vector.shape_cast %53 : vector<1x32x4xbf16> to vector<32x4xbf16>
    %cst_32 = arith.constant dense<0.000000e+00> : vector<16x4xf32>
    %55 = tpu.matmul %1, %54, %cst_32 {dimension_numbers = #tpu.dot_dimension_numbers<[1], [0], [0], [1], [0, 0, 1, 1], [], []>} : vector<16x32xbf16>, vector<32x4xbf16>, vector<16x4xf32> -> vector<16x4xf32>
    %56 = vector.shape_cast %47 : vector<16x4xf32> to vector<2x8x4xf32>
    %57 = arith.truncf %56 : vector<2x8x4xf32> to vector<2x8x4xbf16>
    %58 = vector.shape_cast %51 : vector<16x4xf32> to vector<2x8x4xf32>
    %59 = arith.truncf %58 : vector<2x8x4xf32> to vector<2x8x4xbf16>
    %60 = vector.shape_cast %55 : vector<16x4xf32> to vector<2x8x4xf32>
    %61 = arith.truncf %60 : vector<2x8x4xf32> to vector<2x8x4xbf16>
    "tpu.trace_start"() <{level = 10 : i32, message = "bqd,bkd->bqk"}> : () -> ()
    %cst_33 = arith.constant dense<0.000000e+00> : vector<2x8x8xf32>
    %62 = tpu.matmul %57, %59, %cst_33 {dimension_numbers = #tpu.dot_dimension_numbers<[2], [2], [1], [1], [0, 0, 0, 1, 1, 1], [0], [0]>} : vector<2x8x4xbf16>, vector<2x8x4xbf16>, vector<2x8x8xf32> -> vector<2x8x8xf32>
    "tpu.trace_stop"() : () -> ()
    %cst_34 = arith.constant dense<0xFF800000> : vector<2x8xf32>
    %63 = vector.multi_reduction <maximumf>, %62, %cst_34 [2] : vector<2x8x8xf32> to vector<2x8xf32>
    %64 = vector.shape_cast %63 : vector<2x8xf32> to vector<2x8x1xf32>
    %65 = vector.broadcast %64 : vector<2x8x1xf32> to vector<2x8x8xf32>
    %66 = arith.subf %62, %65 : vector<2x8x8xf32>
    %67 = math.exp %66 : vector<2x8x8xf32>
    %cst_35 = arith.constant dense<0.000000e+00> : vector<2x8xf32>
    %68 = vector.multi_reduction <add>, %67, %cst_35 [2] : vector<2x8x8xf32> to vector<2x8xf32>
    %69 = vector.shape_cast %68 : vector<2x8xf32> to vector<2x8x1xf32>
    %70 = arith.truncf %67 : vector<2x8x8xf32> to vector<2x8x8xbf16>
    "tpu.trace_start"() <{level = 10 : i32, message = "bqk,bkd->bqd"}> : () -> ()
    %cst_36 = arith.constant dense<0.000000e+00> : vector<2x8x4xf32>
    %71 = tpu.matmul %70, %61, %cst_36 {dimension_numbers = #tpu.dot_dimension_numbers<[2], [1], [1], [2], [0, 0, 0, 1, 1, 2], [0], [0]>} : vector<2x8x8xbf16>, vector<2x8x4xbf16>, vector<2x8x4xf32> -> vector<2x8x4xf32>
    "tpu.trace_stop"() : () -> ()
    %72 = tpu.reciprocal %69 {approx = true} : vector<2x8x1xf32> -> vector<2x8x1xf32>
    %73 = vector.broadcast %72 : vector<2x8x1xf32> to vector<2x8x4xf32>
    %74 = arith.mulf %71, %73 : vector<2x8x4xf32>
    %c0_37 = arith.constant 0 : index
    %c0_38 = arith.constant 0 : index
    %75 = vector.load %arg8[%c0_37, %c0_38] : memref<16x32xf32, #tpu.memory_space<vmem>>, vector<16x32xf32>
    %76 = vector.shape_cast %74 : vector<2x8x4xf32> to vector<16x4xf32>
    %77 = arith.truncf %76 : vector<16x4xf32> to vector<16x4xbf16>
    %78 = arith.index_cast %c1_i32 : i32 to index
    %c0_39 = arith.constant 0 : index
    %c0_40 = arith.constant 0 : index
    %79 = vector.load %arg5[%78, %c0_39, %c0_40] : memref<8x4x32xbf16, #tpu.memory_space<vmem>>, vector<1x4x32xbf16>
    %80 = vector.shape_cast %79 : vector<1x4x32xbf16> to vector<4x32xbf16>
    %cst_41 = arith.constant dense<0.000000e+00> : vector<16x32xf32>
    %81 = tpu.matmul %77, %80, %cst_41 {dimension_numbers = #tpu.dot_dimension_numbers<[1], [0], [0], [1], [0, 0, 1, 1], [], []>} : vector<16x4xbf16>, vector<4x32xbf16>, vector<16x32xf32> -> vector<16x32xf32>
    %82 = arith.addf %75, %81 : vector<16x32xf32>
    %c0_42 = arith.constant 0 : index
    %c0_43 = arith.constant 0 : index
    %83 = vector.load %arg8[%c0_42, %c0_43] : memref<16x32xf32, #tpu.memory_space<vmem>>, vector<16x32xf32>
    tpu.vector_store %arg8[%c0_42, %c0_43], %82 {strides = array<i32>} : memref<16x32xf32, #tpu.memory_space<vmem>>, vector<16x32xf32>,
    %c2_i32 = arith.constant 2 : i32
    %84 = arith.index_cast %c2_i32 : i32 to index
    %c0_44 = arith.constant 0 : index
    %c0_45 = arith.constant 0 : index
    %85 = vector.load %arg2[%84, %c0_44, %c0_45] : memref<8x32x4xbf16, #tpu.memory_space<vmem>>, vector<1x32x4xbf16>
    %86 = vector.shape_cast %85 : vector<1x32x4xbf16> to vector<32x4xbf16>
    %cst_46 = arith.constant dense<0.000000e+00> : vector<16x4xf32>
    %87 = tpu.matmul %1, %86, %cst_46 {dimension_numbers = #tpu.dot_dimension_numbers<[1], [0], [0], [1], [0, 0, 1, 1], [], []>} : vector<16x32xbf16>, vector<32x4xbf16>, vector<16x4xf32> -> vector<16x4xf32>
    %88 = arith.index_cast %c2_i32 : i32 to index
    %c0_47 = arith.constant 0 : index
    %c0_48 = arith.constant 0 : index
    %89 = vector.load %arg3[%88, %c0_47, %c0_48] : memref<8x32x4xbf16, #tpu.memory_space<vmem>>, vector<1x32x4xbf16>
    %90 = vector.shape_cast %89 : vector<1x32x4xbf16> to vector<32x4xbf16>
    %cst_49 = arith.constant dense<0.000000e+00> : vector<16x4xf32>
    %91 = tpu.matmul %1, %90, %cst_49 {dimension_numbers = #tpu.dot_dimension_numbers<[1], [0], [0], [1], [0, 0, 1, 1], [], []>} : vector<16x32xbf16>, vector<32x4xbf16>, vector<16x4xf32> -> vector<16x4xf32>
    %92 = arith.index_cast %c2_i32 : i32 to index
    %c0_50 = arith.constant 0 : index
    %c0_51 = arith.constant 0 : index
    %93 = vector.load %arg4[%92, %c0_50, %c0_51] : memref<8x32x4xbf16, #tpu.memory_space<vmem>>, vector<1x32x4xbf16>
    %94 = vector.shape_cast %93 : vector<1x32x4xbf16> to vector<32x4xbf16>
    %cst_52 = arith.constant dense<0.000000e+00> : vector<16x4xf32>
    %95 = tpu.matmul %1, %94, %cst_52 {dimension_numbers = #tpu.dot_dimension_numbers<[1], [0], [0], [1], [0, 0, 1, 1], [], []>} : vector<16x32xbf16>, vector<32x4xbf16>, vector<16x4xf32> -> vector<16x4xf32>
    %96 = vector.shape_cast %87 : vector<16x4xf32> to vector<2x8x4xf32>
    %97 = arith.truncf %96 : vector<2x8x4xf32> to vector<2x8x4xbf16>
    %98 = vector.shape_cast %91 : vector<16x4xf32> to vector<2x8x4xf32>
    %99 = arith.truncf %98 : vector<2x8x4xf32> to vector<2x8x4xbf16>
    %100 = vector.shape_cast %95 : vector<16x4xf32> to vector<2x8x4xf32>
    %101 = arith.truncf %100 : vector<2x8x4xf32> to vector<2x8x4xbf16>
    "tpu.trace_start"() <{level = 10 : i32, message = "bqd,bkd->bqk"}> : () -> ()
    %cst_53 = arith.constant dense<0.000000e+00> : vector<2x8x8xf32>
    %102 = tpu.matmul %97, %99, %cst_53 {dimension_numbers = #tpu.dot_dimension_numbers<[2], [2], [1], [1], [0, 0, 0, 1, 1, 1], [0], [0]>} : vector<2x8x4xbf16>, vector<2x8x4xbf16>, vector<2x8x8xf32> -> vector<2x8x8xf32>
    "tpu.trace_stop"() : () -> ()
    %cst_54 = arith.constant dense<0xFF800000> : vector<2x8xf32>
    %103 = vector.multi_reduction <maximumf>, %102, %cst_54 [2] : vector<2x8x8xf32> to vector<2x8xf32>
    %104 = vector.shape_cast %103 : vector<2x8xf32> to vector<2x8x1xf32>
    %105 = vector.broadcast %104 : vector<2x8x1xf32> to vector<2x8x8xf32>
    %106 = arith.subf %102, %105 : vector<2x8x8xf32>
    %107 = math.exp %106 : vector<2x8x8xf32>
    %cst_55 = arith.constant dense<0.000000e+00> : vector<2x8xf32>
    %108 = vector.multi_reduction <add>, %107, %cst_55 [2] : vector<2x8x8xf32> to vector<2x8xf32>
    %109 = vector.shape_cast %108 : vector<2x8xf32> to vector<2x8x1xf32>
    %110 = arith.truncf %107 : vector<2x8x8xf32> to vector<2x8x8xbf16>
    "tpu.trace_start"() <{level = 10 : i32, message = "bqk,bkd->bqd"}> : () -> ()
    %cst_56 = arith.constant dense<0.000000e+00> : vector<2x8x4xf32>
    %111 = tpu.matmul %110, %101, %cst_56 {dimension_numbers = #tpu.dot_dimension_numbers<[2], [1], [1], [2], [0, 0, 0, 1, 1, 2], [0], [0]>} : vector<2x8x8xbf16>, vector<2x8x4xbf16>, vector<2x8x4xf32> -> vector<2x8x4xf32>
    "tpu.trace_stop"() : () -> ()
    %112 = tpu.reciprocal %109 {approx = true} : vector<2x8x1xf32> -> vector<2x8x1xf32>
    %113 = vector.broadcast %112 : vector<2x8x1xf32> to vector<2x8x4xf32>
    %114 = arith.mulf %111, %113 : vector<2x8x4xf32>
    %c0_57 = arith.constant 0 : index
    %c0_58 = arith.constant 0 : index
    %115 = vector.load %arg8[%c0_57, %c0_58] : memref<16x32xf32, #tpu.memory_space<vmem>>, vector<16x32xf32>
    %116 = vector.shape_cast %114 : vector<2x8x4xf32> to vector<16x4xf32>
    %117 = arith.truncf %116 : vector<16x4xf32> to vector<16x4xbf16>
    %118 = arith.index_cast %c2_i32 : i32 to index
    %c0_59 = arith.constant 0 : index
    %c0_60 = arith.constant 0 : index
    %119 = vector.load %arg5[%118, %c0_59, %c0_60] : memref<8x4x32xbf16, #tpu.memory_space<vmem>>, vector<1x4x32xbf16>
    %120 = vector.shape_cast %119 : vector<1x4x32xbf16> to vector<4x32xbf16>
    %cst_61 = arith.constant dense<0.000000e+00> : vector<16x32xf32>
    %121 = tpu.matmul %117, %120, %cst_61 {dimension_numbers = #tpu.dot_dimension_numbers<[1], [0], [0], [1], [0, 0, 1, 1], [], []>} : vector<16x4xbf16>, vector<4x32xbf16>, vector<16x32xf32> -> vector<16x32xf32>
    %122 = arith.addf %115, %121 : vector<16x32xf32>
    %c0_62 = arith.constant 0 : index
    %c0_63 = arith.constant 0 : index
    %123 = vector.load %arg8[%c0_62, %c0_63] : memref<16x32xf32, #tpu.memory_space<vmem>>, vector<16x32xf32>
    tpu.vector_store %arg8[%c0_62, %c0_63], %122 {strides = array<i32>} : memref<16x32xf32, #tpu.memory_space<vmem>>, vector<16x32xf32>,
    %c3_i32 = arith.constant 3 : i32
    %124 = arith.index_cast %c3_i32 : i32 to index
    %c0_64 = arith.constant 0 : index
    %c0_65 = arith.constant 0 : index
    %125 = vector.load %arg2[%124, %c0_64, %c0_65] : memref<8x32x4xbf16, #tpu.memory_space<vmem>>, vector<1x32x4xbf16>
    %126 = vector.shape_cast %125 : vector<1x32x4xbf16> to vector<32x4xbf16>
    %cst_66 = arith.constant dense<0.000000e+00> : vector<16x4xf32>
    %127 = tpu.matmul %1, %126, %cst_66 {dimension_numbers = #tpu.dot_dimension_numbers<[1], [0], [0], [1], [0, 0, 1, 1], [], []>} : vector<16x32xbf16>, vector<32x4xbf16>, vector<16x4xf32> -> vector<16x4xf32>
    %128 = arith.index_cast %c3_i32 : i32 to index
    %c0_67 = arith.constant 0 : index
    %c0_68 = arith.constant 0 : index
    %129 = vector.load %arg3[%128, %c0_67, %c0_68] : memref<8x32x4xbf16, #tpu.memory_space<vmem>>, vector<1x32x4xbf16>
    %130 = vector.shape_cast %129 : vector<1x32x4xbf16> to vector<32x4xbf16>
    %cst_69 = arith.constant dense<0.000000e+00> : vector<16x4xf32>
    %131 = tpu.matmul %1, %130, %cst_69 {dimension_numbers = #tpu.dot_dimension_numbers<[1], [0], [0], [1], [0, 0, 1, 1], [], []>} : vector<16x32xbf16>, vector<32x4xbf16>, vector<16x4xf32> -> vector<16x4xf32>
    %132 = arith.index_cast %c3_i32 : i32 to index
    %c0_70 = arith.constant 0 : index
    %c0_71 = arith.constant 0 : index
    %133 = vector.load %arg4[%132, %c0_70, %c0_71] : memref<8x32x4xbf16, #tpu.memory_space<vmem>>, vector<1x32x4xbf16>
    %134 = vector.shape_cast %133 : vector<1x32x4xbf16> to vector<32x4xbf16>
    %cst_72 = arith.constant dense<0.000000e+00> : vector<16x4xf32>
    %135 = tpu.matmul %1, %134, %cst_72 {dimension_numbers = #tpu.dot_dimension_numbers<[1], [0], [0], [1], [0, 0, 1, 1], [], []>} : vector<16x32xbf16>, vector<32x4xbf16>, vector<16x4xf32> -> vector<16x4xf32>
    %136 = vector.shape_cast %127 : vector<16x4xf32> to vector<2x8x4xf32>
    %137 = arith.truncf %136 : vector<2x8x4xf32> to vector<2x8x4xbf16>
    %138 = vector.shape_cast %131 : vector<16x4xf32> to vector<2x8x4xf32>
    %139 = arith.truncf %138 : vector<2x8x4xf32> to vector<2x8x4xbf16>
    %140 = vector.shape_cast %135 : vector<16x4xf32> to vector<2x8x4xf32>
    %141 = arith.truncf %140 : vector<2x8x4xf32> to vector<2x8x4xbf16>
    "tpu.trace_start"() <{level = 10 : i32, message = "bqd,bkd->bqk"}> : () -> ()
    %cst_73 = arith.constant dense<0.000000e+00> : vector<2x8x8xf32>
    %142 = tpu.matmul %137, %139, %cst_73 {dimension_numbers = #tpu.dot_dimension_numbers<[2], [2], [1], [1], [0, 0, 0, 1, 1, 1], [0], [0]>} : vector<2x8x4xbf16>, vector<2x8x4xbf16>, vector<2x8x8xf32> -> vector<2x8x8xf32>
    "tpu.trace_stop"() : () -> ()
    %cst_74 = arith.constant dense<0xFF800000> : vector<2x8xf32>
    %143 = vector.multi_reduction <maximumf>, %142, %cst_74 [2] : vector<2x8x8xf32> to vector<2x8xf32>
    %144 = vector.shape_cast %143 : vector<2x8xf32> to vector<2x8x1xf32>
    %145 = vector.broadcast %144 : vector<2x8x1xf32> to vector<2x8x8xf32>
    %146 = arith.subf %142, %145 : vector<2x8x8xf32>
    %147 = math.exp %146 : vector<2x8x8xf32>
    %cst_75 = arith.constant dense<0.000000e+00> : vector<2x8xf32>
    %148 = vector.multi_reduction <add>, %147, %cst_75 [2] : vector<2x8x8xf32> to vector<2x8xf32>
    %149 = vector.shape_cast %148 : vector<2x8xf32> to vector<2x8x1xf32>
    %150 = arith.truncf %147 : vector<2x8x8xf32> to vector<2x8x8xbf16>
    "tpu.trace_start"() <{level = 10 : i32, message = "bqk,bkd->bqd"}> : () -> ()
    %cst_76 = arith.constant dense<0.000000e+00> : vector<2x8x4xf32>
    %151 = tpu.matmul %150, %141, %cst_76 {dimension_numbers = #tpu.dot_dimension_numbers<[2], [1], [1], [2], [0, 0, 0, 1, 1, 2], [0], [0]>} : vector<2x8x8xbf16>, vector<2x8x4xbf16>, vector<2x8x4xf32> -> vector<2x8x4xf32>
    "tpu.trace_stop"() : () -> ()
    %152 = tpu.reciprocal %149 {approx = true} : vector<2x8x1xf32> -> vector<2x8x1xf32>
    %153 = vector.broadcast %152 : vector<2x8x1xf32> to vector<2x8x4xf32>
    %154 = arith.mulf %151, %153 : vector<2x8x4xf32>
    %c0_77 = arith.constant 0 : index
    %c0_78 = arith.constant 0 : index
    %155 = vector.load %arg8[%c0_77, %c0_78] : memref<16x32xf32, #tpu.memory_space<vmem>>, vector<16x32xf32>
    %156 = vector.shape_cast %154 : vector<2x8x4xf32> to vector<16x4xf32>
    %157 = arith.truncf %156 : vector<16x4xf32> to vector<16x4xbf16>
    %158 = arith.index_cast %c3_i32 : i32 to index
    %c0_79 = arith.constant 0 : index
    %c0_80 = arith.constant 0 : index
    %159 = vector.load %arg5[%158, %c0_79, %c0_80] : memref<8x4x32xbf16, #tpu.memory_space<vmem>>, vector<1x4x32xbf16>
    %160 = vector.shape_cast %159 : vector<1x4x32xbf16> to vector<4x32xbf16>
    %cst_81 = arith.constant dense<0.000000e+00> : vector<16x32xf32>
    %161 = tpu.matmul %157, %160, %cst_81 {dimension_numbers = #tpu.dot_dimension_numbers<[1], [0], [0], [1], [0, 0, 1, 1], [], []>} : vector<16x4xbf16>, vector<4x32xbf16>, vector<16x32xf32> -> vector<16x32xf32>
    %162 = arith.addf %155, %161 : vector<16x32xf32>
    %c0_82 = arith.constant 0 : index
    %c0_83 = arith.constant 0 : index
    %163 = vector.load %arg8[%c0_82, %c0_83] : memref<16x32xf32, #tpu.memory_space<vmem>>, vector<16x32xf32>
    tpu.vector_store %arg8[%c0_82, %c0_83], %162 {strides = array<i32>} : memref<16x32xf32, #tpu.memory_space<vmem>>, vector<16x32xf32>,
    %c4_i32 = arith.constant 4 : i32
    %164 = arith.index_cast %c4_i32 : i32 to index
    %c0_84 = arith.constant 0 : index
    %c0_85 = arith.constant 0 : index
    %165 = vector.load %arg2[%164, %c0_84, %c0_85] : memref<8x32x4xbf16, #tpu.memory_space<vmem>>, vector<1x32x4xbf16>
    %166 = vector.shape_cast %165 : vector<1x32x4xbf16> to vector<32x4xbf16>
    %cst_86 = arith.constant dense<0.000000e+00> : vector<16x4xf32>
    %167 = tpu.matmul %1, %166, %cst_86 {dimension_numbers = #tpu.dot_dimension_numbers<[1], [0], [0], [1], [0, 0, 1, 1], [], []>} : vector<16x32xbf16>, vector<32x4xbf16>, vector<16x4xf32> -> vector<16x4xf32>
    %168 = arith.index_cast %c4_i32 : i32 to index
    %c0_87 = arith.constant 0 : index
    %c0_88 = arith.constant 0 : index
    %169 = vector.load %arg3[%168, %c0_87, %c0_88] : memref<8x32x4xbf16, #tpu.memory_space<vmem>>, vector<1x32x4xbf16>
    %170 = vector.shape_cast %169 : vector<1x32x4xbf16> to vector<32x4xbf16>
    %cst_89 = arith.constant dense<0.000000e+00> : vector<16x4xf32>
    %171 = tpu.matmul %1, %170, %cst_89 {dimension_numbers = #tpu.dot_dimension_numbers<[1], [0], [0], [1], [0, 0, 1, 1], [], []>} : vector<16x32xbf16>, vector<32x4xbf16>, vector<16x4xf32> -> vector<16x4xf32>
    %172 = arith.index_cast %c4_i32 : i32 to index
    %c0_90 = arith.constant 0 : index
    %c0_91 = arith.constant 0 : index
    %173 = vector.load %arg4[%172, %c0_90, %c0_91] : memref<8x32x4xbf16, #tpu.memory_space<vmem>>, vector<1x32x4xbf16>
    %174 = vector.shape_cast %173 : vector<1x32x4xbf16> to vector<32x4xbf16>
    %cst_92 = arith.constant dense<0.000000e+00> : vector<16x4xf32>
    %175 = tpu.matmul %1, %174, %cst_92 {dimension_numbers = #tpu.dot_dimension_numbers<[1], [0], [0], [1], [0, 0, 1, 1], [], []>} : vector<16x32xbf16>, vector<32x4xbf16>, vector<16x4xf32> -> vector<16x4xf32>
    %176 = vector.shape_cast %167 : vector<16x4xf32> to vector<2x8x4xf32>
    %177 = arith.truncf %176 : vector<2x8x4xf32> to vector<2x8x4xbf16>
    %178 = vector.shape_cast %171 : vector<16x4xf32> to vector<2x8x4xf32>
    %179 = arith.truncf %178 : vector<2x8x4xf32> to vector<2x8x4xbf16>
    %180 = vector.shape_cast %175 : vector<16x4xf32> to vector<2x8x4xf32>
    %181 = arith.truncf %180 : vector<2x8x4xf32> to vector<2x8x4xbf16>
    "tpu.trace_start"() <{level = 10 : i32, message = "bqd,bkd->bqk"}> : () -> ()
    %cst_93 = arith.constant dense<0.000000e+00> : vector<2x8x8xf32>
    %182 = tpu.matmul %177, %179, %cst_93 {dimension_numbers = #tpu.dot_dimension_numbers<[2], [2], [1], [1], [0, 0, 0, 1, 1, 1], [0], [0]>} : vector<2x8x4xbf16>, vector<2x8x4xbf16>, vector<2x8x8xf32> -> vector<2x8x8xf32>
    "tpu.trace_stop"() : () -> ()
    %cst_94 = arith.constant dense<0xFF800000> : vector<2x8xf32>
    %183 = vector.multi_reduction <maximumf>, %182, %cst_94 [2] : vector<2x8x8xf32> to vector<2x8xf32>
    %184 = vector.shape_cast %183 : vector<2x8xf32> to vector<2x8x1xf32>
    %185 = vector.broadcast %184 : vector<2x8x1xf32> to vector<2x8x8xf32>
    %186 = arith.subf %182, %185 : vector<2x8x8xf32>
    %187 = math.exp %186 : vector<2x8x8xf32>
    %cst_95 = arith.constant dense<0.000000e+00> : vector<2x8xf32>
    %188 = vector.multi_reduction <add>, %187, %cst_95 [2] : vector<2x8x8xf32> to vector<2x8xf32>
    %189 = vector.shape_cast %188 : vector<2x8xf32> to vector<2x8x1xf32>
    %190 = arith.truncf %187 : vector<2x8x8xf32> to vector<2x8x8xbf16>
    "tpu.trace_start"() <{level = 10 : i32, message = "bqk,bkd->bqd"}> : () -> ()
    %cst_96 = arith.constant dense<0.000000e+00> : vector<2x8x4xf32>
    %191 = tpu.matmul %190, %181, %cst_96 {dimension_numbers = #tpu.dot_dimension_numbers<[2], [1], [1], [2], [0, 0, 0, 1, 1, 2], [0], [0]>} : vector<2x8x8xbf16>, vector<2x8x4xbf16>, vector<2x8x4xf32> -> vector<2x8x4xf32>
    "tpu.trace_stop"() : () -> ()
    %192 = tpu.reciprocal %189 {approx = true} : vector<2x8x1xf32> -> vector<2x8x1xf32>
    %193 = vector.broadcast %192 : vector<2x8x1xf32> to vector<2x8x4xf32>
    %194 = arith.mulf %191, %193 : vector<2x8x4xf32>
    %c0_97 = arith.constant 0 : index
    %c0_98 = arith.constant 0 : index
    %195 = vector.load %arg8[%c0_97, %c0_98] : memref<16x32xf32, #tpu.memory_space<vmem>>, vector<16x32xf32>
    %196 = vector.shape_cast %194 : vector<2x8x4xf32> to vector<16x4xf32>
    %197 = arith.truncf %196 : vector<16x4xf32> to vector<16x4xbf16>
    %198 = arith.index_cast %c4_i32 : i32 to index
    %c0_99 = arith.constant 0 : index
    %c0_100 = arith.constant 0 : index
    %199 = vector.load %arg5[%198, %c0_99, %c0_100] : memref<8x4x32xbf16, #tpu.memory_space<vmem>>, vector<1x4x32xbf16>
    %200 = vector.shape_cast %199 : vector<1x4x32xbf16> to vector<4x32xbf16>
    %cst_101 = arith.constant dense<0.000000e+00> : vector<16x32xf32>
    %201 = tpu.matmul %197, %200, %cst_101 {dimension_numbers = #tpu.dot_dimension_numbers<[1], [0], [0], [1], [0, 0, 1, 1], [], []>} : vector<16x4xbf16>, vector<4x32xbf16>, vector<16x32xf32> -> vector<16x32xf32>
    %202 = arith.addf %195, %201 : vector<16x32xf32>
    %c0_102 = arith.constant 0 : index
    %c0_103 = arith.constant 0 : index
    %203 = vector.load %arg8[%c0_102, %c0_103] : memref<16x32xf32, #tpu.memory_space<vmem>>, vector<16x32xf32>
    tpu.vector_store %arg8[%c0_102, %c0_103], %202 {strides = array<i32>} : memref<16x32xf32, #tpu.memory_space<vmem>>, vector<16x32xf32>,
    %c5_i32 = arith.constant 5 : i32
    %204 = arith.index_cast %c5_i32 : i32 to index
    %c0_104 = arith.constant 0 : index
    %c0_105 = arith.constant 0 : index
    %205 = vector.load %arg2[%204, %c0_104, %c0_105] : memref<8x32x4xbf16, #tpu.memory_space<vmem>>, vector<1x32x4xbf16>
    %206 = vector.shape_cast %205 : vector<1x32x4xbf16> to vector<32x4xbf16>
    %cst_106 = arith.constant dense<0.000000e+00> : vector<16x4xf32>
    %207 = tpu.matmul %1, %206, %cst_106 {dimension_numbers = #tpu.dot_dimension_numbers<[1], [0], [0], [1], [0, 0, 1, 1], [], []>} : vector<16x32xbf16>, vector<32x4xbf16>, vector<16x4xf32> -> vector<16x4xf32>
    %208 = arith.index_cast %c5_i32 : i32 to index
    %c0_107 = arith.constant 0 : index
    %c0_108 = arith.constant 0 : index
    %209 = vector.load %arg3[%208, %c0_107, %c0_108] : memref<8x32x4xbf16, #tpu.memory_space<vmem>>, vector<1x32x4xbf16>
    %210 = vector.shape_cast %209 : vector<1x32x4xbf16> to vector<32x4xbf16>
    %cst_109 = arith.constant dense<0.000000e+00> : vector<16x4xf32>
    %211 = tpu.matmul %1, %210, %cst_109 {dimension_numbers = #tpu.dot_dimension_numbers<[1], [0], [0], [1], [0, 0, 1, 1], [], []>} : vector<16x32xbf16>, vector<32x4xbf16>, vector<16x4xf32> -> vector<16x4xf32>
    %212 = arith.index_cast %c5_i32 : i32 to index
    %c0_110 = arith.constant 0 : index
    %c0_111 = arith.constant 0 : index
    %213 = vector.load %arg4[%212, %c0_110, %c0_111] : memref<8x32x4xbf16, #tpu.memory_space<vmem>>, vector<1x32x4xbf16>
    %214 = vector.shape_cast %213 : vector<1x32x4xbf16> to vector<32x4xbf16>
    %cst_112 = arith.constant dense<0.000000e+00> : vector<16x4xf32>
    %215 = tpu.matmul %1, %214, %cst_112 {dimension_numbers = #tpu.dot_dimension_numbers<[1], [0], [0], [1], [0, 0, 1, 1], [], []>} : vector<16x32xbf16>, vector<32x4xbf16>, vector<16x4xf32> -> vector<16x4xf32>
    %216 = vector.shape_cast %207 : vector<16x4xf32> to vector<2x8x4xf32>
    %217 = arith.truncf %216 : vector<2x8x4xf32> to vector<2x8x4xbf16>
    %218 = vector.shape_cast %211 : vector<16x4xf32> to vector<2x8x4xf32>
    %219 = arith.truncf %218 : vector<2x8x4xf32> to vector<2x8x4xbf16>
    %220 = vector.shape_cast %215 : vector<16x4xf32> to vector<2x8x4xf32>
    %221 = arith.truncf %220 : vector<2x8x4xf32> to vector<2x8x4xbf16>
    "tpu.trace_start"() <{level = 10 : i32, message = "bqd,bkd->bqk"}> : () -> ()
    %cst_113 = arith.constant dense<0.000000e+00> : vector<2x8x8xf32>
    %222 = tpu.matmul %217, %219, %cst_113 {dimension_numbers = #tpu.dot_dimension_numbers<[2], [2], [1], [1], [0, 0, 0, 1, 1, 1], [0], [0]>} : vector<2x8x4xbf16>, vector<2x8x4xbf16>, vector<2x8x8xf32> -> vector<2x8x8xf32>
    "tpu.trace_stop"() : () -> ()
    %cst_114 = arith.constant dense<0xFF800000> : vector<2x8xf32>
    %223 = vector.multi_reduction <maximumf>, %222, %cst_114 [2] : vector<2x8x8xf32> to vector<2x8xf32>
    %224 = vector.shape_cast %223 : vector<2x8xf32> to vector<2x8x1xf32>
    %225 = vector.broadcast %224 : vector<2x8x1xf32> to vector<2x8x8xf32>
    %226 = arith.subf %222, %225 : vector<2x8x8xf32>
    %227 = math.exp %226 : vector<2x8x8xf32>
    %cst_115 = arith.constant dense<0.000000e+00> : vector<2x8xf32>
    %228 = vector.multi_reduction <add>, %227, %cst_115 [2] : vector<2x8x8xf32> to vector<2x8xf32>
    %229 = vector.shape_cast %228 : vector<2x8xf32> to vector<2x8x1xf32>
    %230 = arith.truncf %227 : vector<2x8x8xf32> to vector<2x8x8xbf16>
    "tpu.trace_start"() <{level = 10 : i32, message = "bqk,bkd->bqd"}> : () -> ()
    %cst_116 = arith.constant dense<0.000000e+00> : vector<2x8x4xf32>
    %231 = tpu.matmul %230, %221, %cst_116 {dimension_numbers = #tpu.dot_dimension_numbers<[2], [1], [1], [2], [0, 0, 0, 1, 1, 2], [0], [0]>} : vector<2x8x8xbf16>, vector<2x8x4xbf16>, vector<2x8x4xf32> -> vector<2x8x4xf32>
    "tpu.trace_stop"() : () -> ()
    %232 = tpu.reciprocal %229 {approx = true} : vector<2x8x1xf32> -> vector<2x8x1xf32>
    %233 = vector.broadcast %232 : vector<2x8x1xf32> to vector<2x8x4xf32>
    %234 = arith.mulf %231, %233 : vector<2x8x4xf32>
    %c0_117 = arith.constant 0 : index
    %c0_118 = arith.constant 0 : index
    %235 = vector.load %arg8[%c0_117, %c0_118] : memref<16x32xf32, #tpu.memory_space<vmem>>, vector<16x32xf32>
    %236 = vector.shape_cast %234 : vector<2x8x4xf32> to vector<16x4xf32>
    %237 = arith.truncf %236 : vector<16x4xf32> to vector<16x4xbf16>
    %238 = arith.index_cast %c5_i32 : i32 to index
    %c0_119 = arith.constant 0 : index
    %c0_120 = arith.constant 0 : index
    %239 = vector.load %arg5[%238, %c0_119, %c0_120] : memref<8x4x32xbf16, #tpu.memory_space<vmem>>, vector<1x4x32xbf16>
    %240 = vector.shape_cast %239 : vector<1x4x32xbf16> to vector<4x32xbf16>
    %cst_121 = arith.constant dense<0.000000e+00> : vector<16x32xf32>
    %241 = tpu.matmul %237, %240, %cst_121 {dimension_numbers = #tpu.dot_dimension_numbers<[1], [0], [0], [1], [0, 0, 1, 1], [], []>} : vector<16x4xbf16>, vector<4x32xbf16>, vector<16x32xf32> -> vector<16x32xf32>
    %242 = arith.addf %235, %241 : vector<16x32xf32>
    %c0_122 = arith.constant 0 : index
    %c0_123 = arith.constant 0 : index
    %243 = vector.load %arg8[%c0_122, %c0_123] : memref<16x32xf32, #tpu.memory_space<vmem>>, vector<16x32xf32>
    tpu.vector_store %arg8[%c0_122, %c0_123], %242 {strides = array<i32>} : memref<16x32xf32, #tpu.memory_space<vmem>>, vector<16x32xf32>,
    %c6_i32 = arith.constant 6 : i32
    %244 = arith.index_cast %c6_i32 : i32 to index
    %c0_124 = arith.constant 0 : index
    %c0_125 = arith.constant 0 : index
    %245 = vector.load %arg2[%244, %c0_124, %c0_125] : memref<8x32x4xbf16, #tpu.memory_space<vmem>>, vector<1x32x4xbf16>
    %246 = vector.shape_cast %245 : vector<1x32x4xbf16> to vector<32x4xbf16>
    %cst_126 = arith.constant dense<0.000000e+00> : vector<16x4xf32>
    %247 = tpu.matmul %1, %246, %cst_126 {dimension_numbers = #tpu.dot_dimension_numbers<[1], [0], [0], [1], [0, 0, 1, 1], [], []>} : vector<16x32xbf16>, vector<32x4xbf16>, vector<16x4xf32> -> vector<16x4xf32>
    %248 = arith.index_cast %c6_i32 : i32 to index
    %c0_127 = arith.constant 0 : index
    %c0_128 = arith.constant 0 : index
    %249 = vector.load %arg3[%248, %c0_127, %c0_128] : memref<8x32x4xbf16, #tpu.memory_space<vmem>>, vector<1x32x4xbf16>
    %250 = vector.shape_cast %249 : vector<1x32x4xbf16> to vector<32x4xbf16>
    %cst_129 = arith.constant dense<0.000000e+00> : vector<16x4xf32>
    %251 = tpu.matmul %1, %250, %cst_129 {dimension_numbers = #tpu.dot_dimension_numbers<[1], [0], [0], [1], [0, 0, 1, 1], [], []>} : vector<16x32xbf16>, vector<32x4xbf16>, vector<16x4xf32> -> vector<16x4xf32>
    %252 = arith.index_cast %c6_i32 : i32 to index
    %c0_130 = arith.constant 0 : index
    %c0_131 = arith.constant 0 : index
    %253 = vector.load %arg4[%252, %c0_130, %c0_131] : memref<8x32x4xbf16, #tpu.memory_space<vmem>>, vector<1x32x4xbf16>
    %254 = vector.shape_cast %253 : vector<1x32x4xbf16> to vector<32x4xbf16>
    %cst_132 = arith.constant dense<0.000000e+00> : vector<16x4xf32>
    %255 = tpu.matmul %1, %254, %cst_132 {dimension_numbers = #tpu.dot_dimension_numbers<[1], [0], [0], [1], [0, 0, 1, 1], [], []>} : vector<16x32xbf16>, vector<32x4xbf16>, vector<16x4xf32> -> vector<16x4xf32>
    %256 = vector.shape_cast %247 : vector<16x4xf32> to vector<2x8x4xf32>
    %257 = arith.truncf %256 : vector<2x8x4xf32> to vector<2x8x4xbf16>
    %258 = vector.shape_cast %251 : vector<16x4xf32> to vector<2x8x4xf32>
    %259 = arith.truncf %258 : vector<2x8x4xf32> to vector<2x8x4xbf16>
    %260 = vector.shape_cast %255 : vector<16x4xf32> to vector<2x8x4xf32>
    %261 = arith.truncf %260 : vector<2x8x4xf32> to vector<2x8x4xbf16>
    "tpu.trace_start"() <{level = 10 : i32, message = "bqd,bkd->bqk"}> : () -> ()
    %cst_133 = arith.constant dense<0.000000e+00> : vector<2x8x8xf32>
    %262 = tpu.matmul %257, %259, %cst_133 {dimension_numbers = #tpu.dot_dimension_numbers<[2], [2], [1], [1], [0, 0, 0, 1, 1, 1], [0], [0]>} : vector<2x8x4xbf16>, vector<2x8x4xbf16>, vector<2x8x8xf32> -> vector<2x8x8xf32>
    "tpu.trace_stop"() : () -> ()
    %cst_134 = arith.constant dense<0xFF800000> : vector<2x8xf32>
    %263 = vector.multi_reduction <maximumf>, %262, %cst_134 [2] : vector<2x8x8xf32> to vector<2x8xf32>
    %264 = vector.shape_cast %263 : vector<2x8xf32> to vector<2x8x1xf32>
    %265 = vector.broadcast %264 : vector<2x8x1xf32> to vector<2x8x8xf32>
    %266 = arith.subf %262, %265 : vector<2x8x8xf32>
    %267 = math.exp %266 : vector<2x8x8xf32>
    %cst_135 = arith.constant dense<0.000000e+00> : vector<2x8xf32>
    %268 = vector.multi_reduction <add>, %267, %cst_135 [2] : vector<2x8x8xf32> to vector<2x8xf32>
    %269 = vector.shape_cast %268 : vector<2x8xf32> to vector<2x8x1xf32>
    %270 = arith.truncf %267 : vector<2x8x8xf32> to vector<2x8x8xbf16>
    "tpu.trace_start"() <{level = 10 : i32, message = "bqk,bkd->bqd"}> : () -> ()
    %cst_136 = arith.constant dense<0.000000e+00> : vector<2x8x4xf32>
    %271 = tpu.matmul %270, %261, %cst_136 {dimension_numbers = #tpu.dot_dimension_numbers<[2], [1], [1], [2], [0, 0, 0, 1, 1, 2], [0], [0]>} : vector<2x8x8xbf16>, vector<2x8x4xbf16>, vector<2x8x4xf32> -> vector<2x8x4xf32>
    "tpu.trace_stop"() : () -> ()
    %272 = tpu.reciprocal %269 {approx = true} : vector<2x8x1xf32> -> vector<2x8x1xf32>
    %273 = vector.broadcast %272 : vector<2x8x1xf32> to vector<2x8x4xf32>
    %274 = arith.mulf %271, %273 : vector<2x8x4xf32>
    %c0_137 = arith.constant 0 : index
    %c0_138 = arith.constant 0 : index
    %275 = vector.load %arg8[%c0_137, %c0_138] : memref<16x32xf32, #tpu.memory_space<vmem>>, vector<16x32xf32>
    %276 = vector.shape_cast %274 : vector<2x8x4xf32> to vector<16x4xf32>
    %277 = arith.truncf %276 : vector<16x4xf32> to vector<16x4xbf16>
    %278 = arith.index_cast %c6_i32 : i32 to index
    %c0_139 = arith.constant 0 : index
    %c0_140 = arith.constant 0 : index
    %279 = vector.load %arg5[%278, %c0_139, %c0_140] : memref<8x4x32xbf16, #tpu.memory_space<vmem>>, vector<1x4x32xbf16>
    %280 = vector.shape_cast %279 : vector<1x4x32xbf16> to vector<4x32xbf16>
    %cst_141 = arith.constant dense<0.000000e+00> : vector<16x32xf32>
    %281 = tpu.matmul %277, %280, %cst_141 {dimension_numbers = #tpu.dot_dimension_numbers<[1], [0], [0], [1], [0, 0, 1, 1], [], []>} : vector<16x4xbf16>, vector<4x32xbf16>, vector<16x32xf32> -> vector<16x32xf32>
    %282 = arith.addf %275, %281 : vector<16x32xf32>
    %c0_142 = arith.constant 0 : index
    %c0_143 = arith.constant 0 : index
    %283 = vector.load %arg8[%c0_142, %c0_143] : memref<16x32xf32, #tpu.memory_space<vmem>>, vector<16x32xf32>
    tpu.vector_store %arg8[%c0_142, %c0_143], %282 {strides = array<i32>} : memref<16x32xf32, #tpu.memory_space<vmem>>, vector<16x32xf32>,
    %c7_i32 = arith.constant 7 : i32
    %284 = arith.index_cast %c7_i32 : i32 to index
    %c0_144 = arith.constant 0 : index
    %c0_145 = arith.constant 0 : index
    %285 = vector.load %arg2[%284, %c0_144, %c0_145] : memref<8x32x4xbf16, #tpu.memory_space<vmem>>, vector<1x32x4xbf16>
    %286 = vector.shape_cast %285 : vector<1x32x4xbf16> to vector<32x4xbf16>
    %cst_146 = arith.constant dense<0.000000e+00> : vector<16x4xf32>
    %287 = tpu.matmul %1, %286, %cst_146 {dimension_numbers = #tpu.dot_dimension_numbers<[1], [0], [0], [1], [0, 0, 1, 1], [], []>} : vector<16x32xbf16>, vector<32x4xbf16>, vector<16x4xf32> -> vector<16x4xf32>
    %288 = arith.index_cast %c7_i32 : i32 to index
    %c0_147 = arith.constant 0 : index
    %c0_148 = arith.constant 0 : index
    %289 = vector.load %arg3[%288, %c0_147, %c0_148] : memref<8x32x4xbf16, #tpu.memory_space<vmem>>, vector<1x32x4xbf16>
    %290 = vector.shape_cast %289 : vector<1x32x4xbf16> to vector<32x4xbf16>
    %cst_149 = arith.constant dense<0.000000e+00> : vector<16x4xf32>
    %291 = tpu.matmul %1, %290, %cst_149 {dimension_numbers = #tpu.dot_dimension_numbers<[1], [0], [0], [1], [0, 0, 1, 1], [], []>} : vector<16x32xbf16>, vector<32x4xbf16>, vector<16x4xf32> -> vector<16x4xf32>
    %292 = arith.index_cast %c7_i32 : i32 to index
    %c0_150 = arith.constant 0 : index
    %c0_151 = arith.constant 0 : index
    %293 = vector.load %arg4[%292, %c0_150, %c0_151] : memref<8x32x4xbf16, #tpu.memory_space<vmem>>, vector<1x32x4xbf16>
    %294 = vector.shape_cast %293 : vector<1x32x4xbf16> to vector<32x4xbf16>
    %cst_152 = arith.constant dense<0.000000e+00> : vector<16x4xf32>
    %295 = tpu.matmul %1, %294, %cst_152 {dimension_numbers = #tpu.dot_dimension_numbers<[1], [0], [0], [1], [0, 0, 1, 1], [], []>} : vector<16x32xbf16>, vector<32x4xbf16>, vector<16x4xf32> -> vector<16x4xf32>
    %296 = vector.shape_cast %287 : vector<16x4xf32> to vector<2x8x4xf32>
    %297 = arith.truncf %296 : vector<2x8x4xf32> to vector<2x8x4xbf16>
    %298 = vector.shape_cast %291 : vector<16x4xf32> to vector<2x8x4xf32>
    %299 = arith.truncf %298 : vector<2x8x4xf32> to vector<2x8x4xbf16>
    %300 = vector.shape_cast %295 : vector<16x4xf32> to vector<2x8x4xf32>
    %301 = arith.truncf %300 : vector<2x8x4xf32> to vector<2x8x4xbf16>
    "tpu.trace_start"() <{level = 10 : i32, message = "bqd,bkd->bqk"}> : () -> ()
    %cst_153 = arith.constant dense<0.000000e+00> : vector<2x8x8xf32>
    %302 = tpu.matmul %297, %299, %cst_153 {dimension_numbers = #tpu.dot_dimension_numbers<[2], [2], [1], [1], [0, 0, 0, 1, 1, 1], [0], [0]>} : vector<2x8x4xbf16>, vector<2x8x4xbf16>, vector<2x8x8xf32> -> vector<2x8x8xf32>
    "tpu.trace_stop"() : () -> ()
    %cst_154 = arith.constant dense<0xFF800000> : vector<2x8xf32>
    %303 = vector.multi_reduction <maximumf>, %302, %cst_154 [2] : vector<2x8x8xf32> to vector<2x8xf32>
    %304 = vector.shape_cast %303 : vector<2x8xf32> to vector<2x8x1xf32>
    %305 = vector.broadcast %304 : vector<2x8x1xf32> to vector<2x8x8xf32>
    %306 = arith.subf %302, %305 : vector<2x8x8xf32>
    %307 = math.exp %306 : vector<2x8x8xf32>
    %cst_155 = arith.constant dense<0.000000e+00> : vector<2x8xf32>
    %308 = vector.multi_reduction <add>, %307, %cst_155 [2] : vector<2x8x8xf32> to vector<2x8xf32>
    %309 = vector.shape_cast %308 : vector<2x8xf32> to vector<2x8x1xf32>
    %310 = arith.truncf %307 : vector<2x8x8xf32> to vector<2x8x8xbf16>
    "tpu.trace_start"() <{level = 10 : i32, message = "bqk,bkd->bqd"}> : () -> ()
    %cst_156 = arith.constant dense<0.000000e+00> : vector<2x8x4xf32>
    %311 = tpu.matmul %310, %301, %cst_156 {dimension_numbers = #tpu.dot_dimension_numbers<[2], [1], [1], [2], [0, 0, 0, 1, 1, 2], [0], [0]>} : vector<2x8x8xbf16>, vector<2x8x4xbf16>, vector<2x8x4xf32> -> vector<2x8x4xf32>
    "tpu.trace_stop"() : () -> ()
    %312 = tpu.reciprocal %309 {approx = true} : vector<2x8x1xf32> -> vector<2x8x1xf32>
    %313 = vector.broadcast %312 : vector<2x8x1xf32> to vector<2x8x4xf32>
    %314 = arith.mulf %311, %313 : vector<2x8x4xf32>
    %c0_157 = arith.constant 0 : index
    %c0_158 = arith.constant 0 : index
    %315 = vector.load %arg8[%c0_157, %c0_158] : memref<16x32xf32, #tpu.memory_space<vmem>>, vector<16x32xf32>
    %316 = vector.shape_cast %314 : vector<2x8x4xf32> to vector<16x4xf32>
    %317 = arith.truncf %316 : vector<16x4xf32> to vector<16x4xbf16>
    %318 = arith.index_cast %c7_i32 : i32 to index
    %c0_159 = arith.constant 0 : index
    %c0_160 = arith.constant 0 : index
    %319 = vector.load %arg5[%318, %c0_159, %c0_160] : memref<8x4x32xbf16, #tpu.memory_space<vmem>>, vector<1x4x32xbf16>
    %320 = vector.shape_cast %319 : vector<1x4x32xbf16> to vector<4x32xbf16>
    %cst_161 = arith.constant dense<0.000000e+00> : vector<16x32xf32>
    %321 = tpu.matmul %317, %320, %cst_161 {dimension_numbers = #tpu.dot_dimension_numbers<[1], [0], [0], [1], [0, 0, 1, 1], [], []>} : vector<16x4xbf16>, vector<4x32xbf16>, vector<16x32xf32> -> vector<16x32xf32>
    %322 = arith.addf %315, %321 : vector<16x32xf32>
    %c0_162 = arith.constant 0 : index
    %c0_163 = arith.constant 0 : index
    %323 = vector.load %arg8[%c0_162, %c0_163] : memref<16x32xf32, #tpu.memory_space<vmem>>, vector<16x32xf32>
    tpu.vector_store %arg8[%c0_162, %c0_163], %322 {strides = array<i32>} : memref<16x32xf32, #tpu.memory_space<vmem>>, vector<16x32xf32>,
    %c8_i32 = arith.constant 8 : i32
    %c0_164 = arith.constant 0 : index
    %c0_165 = arith.constant 0 : index
    %324 = vector.load %arg8[%c0_164, %c0_165] : memref<16x32xf32, #tpu.memory_space<vmem>>, vector<16x32xf32>
    %c0_166 = arith.constant 0 : index
    %c0_167 = arith.constant 0 : index
    %325 = vector.load %arg6[%c0_166, %c0_167] : memref<1x32xf32, #tpu.memory_space<vmem>>, vector<1x32xf32>
    %326 = vector.broadcast %325 : vector<1x32xf32> to vector<16x32xf32>
    %327 = arith.addf %324, %326 : vector<16x32xf32>
    %328 = vector.shape_cast %327 : vector<16x32xf32> to vector<2x256xf32>
    %c0_168 = arith.constant 0 : index
    %c0_169 = arith.constant 0 : index
    %329 = vector.load %arg7[%c0_168, %c0_169] : memref<2x256xf32, #tpu.memory_space<vmem>>, vector<2x256xf32>
    tpu.vector_store %arg7[%c0_168, %c0_169], %328 {strides = array<i32>} : memref<2x256xf32, #tpu.memory_space<vmem>>, vector<2x256xf32>,
    return
  }
  func.func @transform_0(%arg0: i32) -> (i32, i32, i32) {
    %c0_i32 = arith.constant 0 : i32
    %c0_i32_0 = arith.constant 0 : i32
    %c0_i32_1 = arith.constant 0 : i32
    return %arg0, %c0_i32, %c0_i32_0 : i32, i32, i32
  }
  func.func @transform_1(%arg0: i32) -> (i32, i32, i32) {
    %c0_i32 = arith.constant 0 : i32
    %c0_i32_0 = arith.constant 0 : i32
    %c0_i32_1 = arith.constant 0 : i32
    %c0_i32_2 = arith.constant 0 : i32
    return %c0_i32, %c0_i32_0, %c0_i32_1 : i32, i32, i32
  }
  func.func @transform_2(%arg0: i32) -> (i32, i32, i32) {
    %c0_i32 = arith.constant 0 : i32
    %c0_i32_0 = arith.constant 0 : i32
    %c0_i32_1 = arith.constant 0 : i32
    %c0_i32_2 = arith.constant 0 : i32
    return %c0_i32, %c0_i32_0, %c0_i32_1 : i32, i32, i32
  }
  func.func @transform_3(%arg0: i32) -> (i32, i32, i32) {
    %c0_i32 = arith.constant 0 : i32
    %c0_i32_0 = arith.constant 0 : i32
    %c0_i32_1 = arith.constant 0 : i32
    %c0_i32_2 = arith.constant 0 : i32
    return %c0_i32, %c0_i32_0, %c0_i32_1 : i32, i32, i32
  }
  func.func @transform_4(%arg0: i32) -> (i32, i32, i32) {
    %c0_i32 = arith.constant 0 : i32
    %c0_i32_0 = arith.constant 0 : i32
    %c0_i32_1 = arith.constant 0 : i32
    %c0_i32_2 = arith.constant 0 : i32
    return %c0_i32, %c0_i32_0, %c0_i32_1 : i32, i32, i32
  }
  func.func @transform_5(%arg0: i32) -> (i32, i32) {
    %c0_i32 = arith.constant 0 : i32
    %c0_i32_0 = arith.constant 0 : i32
    %c0_i32_1 = arith.constant 0 : i32
    return %c0_i32, %c0_i32_0 : i32, i32
  }
  func.func @transform_6(%arg0: i32) -> (i32, i32) {
    %c0_i32 = arith.constant 0 : i32
    %c0_i32_0 = arith.constant 0 : i32
    return %arg0, %c0_i32 : i32, i32
  }
}

module attributes {stable_mosaic.version = 11 : i64} {
  func.func @_attention_kernel(%arg0: i32, %arg1: memref<2x8x32xbf16, #tpu.memory_space<vmem>>, %arg2: memref<8x32x4xbf16, #tpu.memory_space<vmem>>, %arg3: memref<8x32x4xbf16, #tpu.memory_space<vmem>>, %arg4: memref<8x32x4xbf16, #tpu.memory_space<vmem>>, %arg5: memref<8x4x32xbf16, #tpu.memory_space<vmem>>, %arg6: memref<1x32xf32, #tpu.memory_space<vmem>>, %arg7: memref<2x8x32xf32, #tpu.memory_space<vmem>>, %arg8: memref<16x32xf32, #tpu.memory_space<vmem>>) attributes {dimension_semantics = [#tpu.dimension_semantics<parallel>], iteration_bounds = array<i64: 1>, scalar_prefetch = 0 : i64, scratch_operands = 1 : i64, tpu.core_type = #tpu.core_type<tc>, window_params = [{transform_indices = @transform_0, window_bounds = array<i64: 2, 8, 32>}, {pipeline_mode = #tpu.pipeline_mode<synchronous>, transform_indices = @transform_1, window_bounds = array<i64: 8, 32, 4>}, {pipeline_mode = #tpu.pipeline_mode<synchronous>, transform_indices = @transform_2, window_bounds = array<i64: 8, 32, 4>}, {pipeline_mode = #tpu.pipeline_mode<synchronous>, transform_indices = @transform_3, window_bounds = array<i64: 8, 32, 4>}, {pipeline_mode = #tpu.pipeline_mode<synchronous>, transform_indices = @transform_4, window_bounds = array<i64: 8, 4, 32>}, {pipeline_mode = #tpu.pipeline_mode<synchronous>, transform_indices = @transform_5, window_bounds = array<i64: 1, 32>}, {transform_indices = @transform_6, window_bounds = array<i64: 2, 8, 32>}]} {
    %c0 = arith.constant 0 : index
    %c0_0 = arith.constant 0 : index
    %c0_1 = arith.constant 0 : index
    %0 = vector.load %arg1[%c0, %c0_0, %c0_1] : memref<2x8x32xbf16, #tpu.memory_space<vmem>>, vector<2x8x32xbf16>
    %1 = vector.shape_cast %0 : vector<2x8x32xbf16> to vector<16x32xbf16>
    %cst = arith.constant 0.000000e+00 : f32
    %2 = vector.broadcast %cst : f32 to vector<16x32xf32>
    %c0_2 = arith.constant 0 : index
    %c0_3 = arith.constant 0 : index
    %3 = vector.load %arg8[%c0_2, %c0_3] : memref<16x32xf32, #tpu.memory_space<vmem>>, vector<16x32xf32>
    tpu.vector_store %arg8[%c0_2, %c0_3], %2 {strides = array<i32>} : memref<16x32xf32, #tpu.memory_space<vmem>>, vector<16x32xf32>,
    %c0_i32 = arith.constant 0 : i32
    %4 = arith.index_cast %c0_i32 : i32 to index
    %c0_4 = arith.constant 0 : index
    %c0_5 = arith.constant 0 : index
    %5 = vector.load %arg2[%4, %c0_4, %c0_5] : memref<8x32x4xbf16, #tpu.memory_space<vmem>>, vector<1x32x4xbf16>
    %6 = vector.shape_cast %5 : vector<1x32x4xbf16> to vector<32x4xbf16>
    %cst_6 = arith.constant dense<0.000000e+00> : vector<16x4xf32>
    %7 = tpu.matmul %1, %6, %cst_6 {dimension_numbers = #tpu.dot_dimension_numbers<[1], [0], [0], [1], [0, 0, 1, 1], [], []>} : vector<16x32xbf16>, vector<32x4xbf16>, vector<16x4xf32> -> vector<16x4xf32>
    %8 = arith.index_cast %c0_i32 : i32 to index
    %c0_7 = arith.constant 0 : index
    %c0_8 = arith.constant 0 : index
    %9 = vector.load %arg3[%8, %c0_7, %c0_8] : memref<8x32x4xbf16, #tpu.memory_space<vmem>>, vector<1x32x4xbf16>
    %10 = vector.shape_cast %9 : vector<1x32x4xbf16> to vector<32x4xbf16>
    %cst_9 = arith.constant dense<0.000000e+00> : vector<16x4xf32>
    %11 = tpu.matmul %1, %10, %cst_9 {dimension_numbers = #tpu.dot_dimension_numbers<[1], [0], [0], [1], [0, 0, 1, 1], [], []>} : vector<16x32xbf16>, vector<32x4xbf16>, vector<16x4xf32> -> vector<16x4xf32>
    %12 = arith.index_cast %c0_i32 : i32 to index
    %c0_10 = arith.constant 0 : index
    %c0_11 = arith.constant 0 : index
    %13 = vector.load %arg4[%12, %c0_10, %c0_11] : memref<8x32x4xbf16, #tpu.memory_space<vmem>>, vector<1x32x4xbf16>
    %14 = vector.shape_cast %13 : vector<1x32x4xbf16> to vector<32x4xbf16>
    %cst_12 = arith.constant dense<0.000000e+00> : vector<16x4xf32>
    %15 = tpu.matmul %1, %14, %cst_12 {dimension_numbers = #tpu.dot_dimension_numbers<[1], [0], [0], [1], [0, 0, 1, 1], [], []>} : vector<16x32xbf16>, vector<32x4xbf16>, vector<16x4xf32> -> vector<16x4xf32>
    %16 = vector.shape_cast %7 : vector<16x4xf32> to vector<2x8x4xf32>
    %17 = arith.truncf %16 : vector<2x8x4xf32> to vector<2x8x4xbf16>
    %18 = vector.shape_cast %11 : vector<16x4xf32> to vector<2x8x4xf32>
    %19 = arith.truncf %18 : vector<2x8x4xf32> to vector<2x8x4xbf16>
    %20 = vector.shape_cast %15 : vector<16x4xf32> to vector<2x8x4xf32>
    %21 = arith.truncf %20 : vector<2x8x4xf32> to vector<2x8x4xbf16>
    "tpu.trace_start"() <{level = 10 : i32, message = "bqd,bkd->bqk"}> : () -> ()
    %cst_13 = arith.constant dense<0.000000e+00> : vector<2x8x8xf32>
    %22 = tpu.matmul %17, %19, %cst_13 {dimension_numbers = #tpu.dot_dimension_numbers<[2], [2], [1], [1], [0, 0, 0, 1, 1, 1], [0], [0]>} : vector<2x8x4xbf16>, vector<2x8x4xbf16>, vector<2x8x8xf32> -> vector<2x8x8xf32>
    "tpu.trace_stop"() : () -> ()
    %cst_14 = arith.constant dense<0xFF800000> : vector<2x8xf32>
    %23 = vector.multi_reduction <maximumf>, %22, %cst_14 [2] : vector<2x8x8xf32> to vector<2x8xf32>
    %24 = vector.shape_cast %23 : vector<2x8xf32> to vector<2x8x1xf32>
    %25 = vector.broadcast %24 : vector<2x8x1xf32> to vector<2x8x8xf32>
    %26 = arith.subf %22, %25 : vector<2x8x8xf32>
    %27 = math.exp %26 : vector<2x8x8xf32>
    %cst_15 = arith.constant dense<0.000000e+00> : vector<2x8xf32>
    %28 = vector.multi_reduction <add>, %27, %cst_15 [2] : vector<2x8x8xf32> to vector<2x8xf32>
    %29 = vector.shape_cast %28 : vector<2x8xf32> to vector<2x8x1xf32>
    %30 = arith.truncf %27 : vector<2x8x8xf32> to vector<2x8x8xbf16>
    "tpu.trace_start"() <{level = 10 : i32, message = "bqk,bkd->bqd"}> : () -> ()
    %cst_16 = arith.constant dense<0.000000e+00> : vector<2x8x4xf32>
    %31 = tpu.matmul %30, %21, %cst_16 {dimension_numbers = #tpu.dot_dimension_numbers<[2], [1], [1], [2], [0, 0, 0, 1, 1, 2], [0], [0]>} : vector<2x8x8xbf16>, vector<2x8x4xbf16>, vector<2x8x4xf32> -> vector<2x8x4xf32>
    "tpu.trace_stop"() : () -> ()
    %32 = tpu.reciprocal %29 {approx = true} : vector<2x8x1xf32> -> vector<2x8x1xf32>
    %33 = vector.broadcast %32 : vector<2x8x1xf32> to vector<2x8x4xf32>
    %34 = arith.mulf %31, %33 : vector<2x8x4xf32>
    %c0_17 = arith.constant 0 : index
    %c0_18 = arith.constant 0 : index
    %35 = vector.load %arg8[%c0_17, %c0_18] : memref<16x32xf32, #tpu.memory_space<vmem>>, vector<16x32xf32>
    %36 = vector.shape_cast %34 : vector<2x8x4xf32> to vector<16x4xf32>
    %37 = arith.truncf %36 : vector<16x4xf32> to vector<16x4xbf16>
    %38 = arith.index_cast %c0_i32 : i32 to index
    %c0_19 = arith.constant 0 : index
    %c0_20 = arith.constant 0 : index
    %39 = vector.load %arg5[%38, %c0_19, %c0_20] : memref<8x4x32xbf16, #tpu.memory_space<vmem>>, vector<1x4x32xbf16>
    %40 = vector.shape_cast %39 : vector<1x4x32xbf16> to vector<4x32xbf16>
    %cst_21 = arith.constant dense<0.000000e+00> : vector<16x32xf32>
    %41 = tpu.matmul %37, %40, %cst_21 {dimension_numbers = #tpu.dot_dimension_numbers<[1], [0], [0], [1], [0, 0, 1, 1], [], []>} : vector<16x4xbf16>, vector<4x32xbf16>, vector<16x32xf32> -> vector<16x32xf32>
    %42 = arith.addf %35, %41 : vector<16x32xf32>
    %c0_22 = arith.constant 0 : index
    %c0_23 = arith.constant 0 : index
    %43 = vector.load %arg8[%c0_22, %c0_23] : memref<16x32xf32, #tpu.memory_space<vmem>>, vector<16x32xf32>
    tpu.vector_store %arg8[%c0_22, %c0_23], %42 {strides = array<i32>} : memref<16x32xf32, #tpu.memory_space<vmem>>, vector<16x32xf32>,
    %c1_i32 = arith.constant 1 : i32
    %44 = arith.index_cast %c1_i32 : i32 to index
    %c0_24 = arith.constant 0 : index
    %c0_25 = arith.constant 0 : index
    %45 = vector.load %arg2[%44, %c0_24, %c0_25] : memref<8x32x4xbf16, #tpu.memory_space<vmem>>, vector<1x32x4xbf16>
    %46 = vector.shape_cast %45 : vector<1x32x4xbf16> to vector<32x4xbf16>
    %cst_26 = arith.constant dense<0.000000e+00> : vector<16x4xf32>
    %47 = tpu.matmul %1, %46, %cst_26 {dimension_numbers = #tpu.dot_dimension_numbers<[1], [0], [0], [1], [0, 0, 1, 1], [], []>} : vector<16x32xbf16>, vector<32x4xbf16>, vector<16x4xf32> -> vector<16x4xf32>
    %48 = arith.index_cast %c1_i32 : i32 to index
    %c0_27 = arith.constant 0 : index
    %c0_28 = arith.constant 0 : index
    %49 = vector.load %arg3[%48, %c0_27, %c0_28] : memref<8x32x4xbf16, #tpu.memory_space<vmem>>, vector<1x32x4xbf16>
    %50 = vector.shape_cast %49 : vector<1x32x4xbf16> to vector<32x4xbf16>
    %cst_29 = arith.constant dense<0.000000e+00> : vector<16x4xf32>
    %51 = tpu.matmul %1, %50, %cst_29 {dimension_numbers = #tpu.dot_dimension_numbers<[1], [0], [0], [1], [0, 0, 1, 1], [], []>} : vector<16x32xbf16>, vector<32x4xbf16>, vector<16x4xf32> -> vector<16x4xf32>
    %52 = arith.index_cast %c1_i32 : i32 to index
    %c0_30 = arith.constant 0 : index
    %c0_31 = arith.constant 0 : index
    %53 = vector.load %arg4[%52, %c0_30, %c0_31] : memref<8x32x4xbf16, #tpu.memory_space<vmem>>, vector<1x32x4xbf16>
    %54 = vector.shape_cast %53 : vector<1x32x4xbf16> to vector<32x4xbf16>
    %cst_32 = arith.constant dense<0.000000e+00> : vector<16x4xf32>
    %55 = tpu.matmul %1, %54, %cst_32 {dimension_numbers = #tpu.dot_dimension_numbers<[1], [0], [0], [1], [0, 0, 1, 1], [], []>} : vector<16x32xbf16>, vector<32x4xbf16>, vector<16x4xf32> -> vector<16x4xf32>
    %56 = vector.shape_cast %47 : vector<16x4xf32> to vector<2x8x4xf32>
    %57 = arith.truncf %56 : vector<2x8x4xf32> to vector<2x8x4xbf16>
    %58 = vector.shape_cast %51 : vector<16x4xf32> to vector<2x8x4xf32>
    %59 = arith.truncf %58 : vector<2x8x4xf32> to vector<2x8x4xbf16>
    %60 = vector.shape_cast %55 : vector<16x4xf32> to vector<2x8x4xf32>
    %61 = arith.truncf %60 : vector<2x8x4xf32> to vector<2x8x4xbf16>
    "tpu.trace_start"() <{level = 10 : i32, message = "bqd,bkd->bqk"}> : () -> ()
    %cst_33 = arith.constant dense<0.000000e+00> : vector<2x8x8xf32>
    %62 = tpu.matmul %57, %59, %cst_33 {dimension_numbers = #tpu.dot_dimension_numbers<[2], [2], [1], [1], [0, 0, 0, 1, 1, 1], [0], [0]>} : vector<2x8x4xbf16>, vector<2x8x4xbf16>, vector<2x8x8xf32> -> vector<2x8x8xf32>
    "tpu.trace_stop"() : () -> ()
    %cst_34 = arith.constant dense<0xFF800000> : vector<2x8xf32>
    %63 = vector.multi_reduction <maximumf>, %62, %cst_34 [2] : vector<2x8x8xf32> to vector<2x8xf32>
    %64 = vector.shape_cast %63 : vector<2x8xf32> to vector<2x8x1xf32>
    %65 = vector.broadcast %64 : vector<2x8x1xf32> to vector<2x8x8xf32>
    %66 = arith.subf %62, %65 : vector<2x8x8xf32>
    %67 = math.exp %66 : vector<2x8x8xf32>
    %cst_35 = arith.constant dense<0.000000e+00> : vector<2x8xf32>
    %68 = vector.multi_reduction <add>, %67, %cst_35 [2] : vector<2x8x8xf32> to vector<2x8xf32>
    %69 = vector.shape_cast %68 : vector<2x8xf32> to vector<2x8x1xf32>
    %70 = arith.truncf %67 : vector<2x8x8xf32> to vector<2x8x8xbf16>
    "tpu.trace_start"() <{level = 10 : i32, message = "bqk,bkd->bqd"}> : () -> ()
    %cst_36 = arith.constant dense<0.000000e+00> : vector<2x8x4xf32>
    %71 = tpu.matmul %70, %61, %cst_36 {dimension_numbers = #tpu.dot_dimension_numbers<[2], [1], [1], [2], [0, 0, 0, 1, 1, 2], [0], [0]>} : vector<2x8x8xbf16>, vector<2x8x4xbf16>, vector<2x8x4xf32> -> vector<2x8x4xf32>
    "tpu.trace_stop"() : () -> ()
    %72 = tpu.reciprocal %69 {approx = true} : vector<2x8x1xf32> -> vector<2x8x1xf32>
    %73 = vector.broadcast %72 : vector<2x8x1xf32> to vector<2x8x4xf32>
    %74 = arith.mulf %71, %73 : vector<2x8x4xf32>
    %c0_37 = arith.constant 0 : index
    %c0_38 = arith.constant 0 : index
    %75 = vector.load %arg8[%c0_37, %c0_38] : memref<16x32xf32, #tpu.memory_space<vmem>>, vector<16x32xf32>
    %76 = vector.shape_cast %74 : vector<2x8x4xf32> to vector<16x4xf32>
    %77 = arith.truncf %76 : vector<16x4xf32> to vector<16x4xbf16>
    %78 = arith.index_cast %c1_i32 : i32 to index
    %c0_39 = arith.constant 0 : index
    %c0_40 = arith.constant 0 : index
    %79 = vector.load %arg5[%78, %c0_39, %c0_40] : memref<8x4x32xbf16, #tpu.memory_space<vmem>>, vector<1x4x32xbf16>
    %80 = vector.shape_cast %79 : vector<1x4x32xbf16> to vector<4x32xbf16>
    %cst_41 = arith.constant dense<0.000000e+00> : vector<16x32xf32>
    %81 = tpu.matmul %77, %80, %cst_41 {dimension_numbers = #tpu.dot_dimension_numbers<[1], [0], [0], [1], [0, 0, 1, 1], [], []>} : vector<16x4xbf16>, vector<4x32xbf16>, vector<16x32xf32> -> vector<16x32xf32>
    %82 = arith.addf %75, %81 : vector<16x32xf32>
    %c0_42 = arith.constant 0 : index
    %c0_43 = arith.constant 0 : index
    %83 = vector.load %arg8[%c0_42, %c0_43] : memref<16x32xf32, #tpu.memory_space<vmem>>, vector<16x32xf32>
    tpu.vector_store %arg8[%c0_42, %c0_43], %82 {strides = array<i32>} : memref<16x32xf32, #tpu.memory_space<vmem>>, vector<16x32xf32>,
    %c2_i32 = arith.constant 2 : i32
    %84 = arith.index_cast %c2_i32 : i32 to index
    %c0_44 = arith.constant 0 : index
    %c0_45 = arith.constant 0 : index
    %85 = vector.load %arg2[%84, %c0_44, %c0_45] : memref<8x32x4xbf16, #tpu.memory_space<vmem>>, vector<1x32x4xbf16>
    %86 = vector.shape_cast %85 : vector<1x32x4xbf16> to vector<32x4xbf16>
    %cst_46 = arith.constant dense<0.000000e+00> : vector<16x4xf32>
    %87 = tpu.matmul %1, %86, %cst_46 {dimension_numbers = #tpu.dot_dimension_numbers<[1], [0], [0], [1], [0, 0, 1, 1], [], []>} : vector<16x32xbf16>, vector<32x4xbf16>, vector<16x4xf32> -> vector<16x4xf32>
    %88 = arith.index_cast %c2_i32 : i32 to index
    %c0_47 = arith.constant 0 : index
    %c0_48 = arith.constant 0 : index
    %89 = vector.load %arg3[%88, %c0_47, %c0_48] : memref<8x32x4xbf16, #tpu.memory_space<vmem>>, vector<1x32x4xbf16>
    %90 = vector.shape_cast %89 : vector<1x32x4xbf16> to vector<32x4xbf16>
    %cst_49 = arith.constant dense<0.000000e+00> : vector<16x4xf32>
    %91 = tpu.matmul %1, %90, %cst_49 {dimension_numbers = #tpu.dot_dimension_numbers<[1], [0], [0], [1], [0, 0, 1, 1], [], []>} : vector<16x32xbf16>, vector<32x4xbf16>, vector<16x4xf32> -> vector<16x4xf32>
    %92 = arith.index_cast %c2_i32 : i32 to index
    %c0_50 = arith.constant 0 : index
    %c0_51 = arith.constant 0 : index
    %93 = vector.load %arg4[%92, %c0_50, %c0_51] : memref<8x32x4xbf16, #tpu.memory_space<vmem>>, vector<1x32x4xbf16>
    %94 = vector.shape_cast %93 : vector<1x32x4xbf16> to vector<32x4xbf16>
    %cst_52 = arith.constant dense<0.000000e+00> : vector<16x4xf32>
    %95 = tpu.matmul %1, %94, %cst_52 {dimension_numbers = #tpu.dot_dimension_numbers<[1], [0], [0], [1], [0, 0, 1, 1], [], []>} : vector<16x32xbf16>, vector<32x4xbf16>, vector<16x4xf32> -> vector<16x4xf32>
    %96 = vector.shape_cast %87 : vector<16x4xf32> to vector<2x8x4xf32>
    %97 = arith.truncf %96 : vector<2x8x4xf32> to vector<2x8x4xbf16>
    %98 = vector.shape_cast %91 : vector<16x4xf32> to vector<2x8x4xf32>
    %99 = arith.truncf %98 : vector<2x8x4xf32> to vector<2x8x4xbf16>
    %100 = vector.shape_cast %95 : vector<16x4xf32> to vector<2x8x4xf32>
    %101 = arith.truncf %100 : vector<2x8x4xf32> to vector<2x8x4xbf16>
    "tpu.trace_start"() <{level = 10 : i32, message = "bqd,bkd->bqk"}> : () -> ()
    %cst_53 = arith.constant dense<0.000000e+00> : vector<2x8x8xf32>
    %102 = tpu.matmul %97, %99, %cst_53 {dimension_numbers = #tpu.dot_dimension_numbers<[2], [2], [1], [1], [0, 0, 0, 1, 1, 1], [0], [0]>} : vector<2x8x4xbf16>, vector<2x8x4xbf16>, vector<2x8x8xf32> -> vector<2x8x8xf32>
    "tpu.trace_stop"() : () -> ()
    %cst_54 = arith.constant dense<0xFF800000> : vector<2x8xf32>
    %103 = vector.multi_reduction <maximumf>, %102, %cst_54 [2] : vector<2x8x8xf32> to vector<2x8xf32>
    %104 = vector.shape_cast %103 : vector<2x8xf32> to vector<2x8x1xf32>
    %105 = vector.broadcast %104 : vector<2x8x1xf32> to vector<2x8x8xf32>
    %106 = arith.subf %102, %105 : vector<2x8x8xf32>
    %107 = math.exp %106 : vector<2x8x8xf32>
    %cst_55 = arith.constant dense<0.000000e+00> : vector<2x8xf32>
    %108 = vector.multi_reduction <add>, %107, %cst_55 [2] : vector<2x8x8xf32> to vector<2x8xf32>
    %109 = vector.shape_cast %108 : vector<2x8xf32> to vector<2x8x1xf32>
    %110 = arith.truncf %107 : vector<2x8x8xf32> to vector<2x8x8xbf16>
    "tpu.trace_start"() <{level = 10 : i32, message = "bqk,bkd->bqd"}> : () -> ()
    %cst_56 = arith.constant dense<0.000000e+00> : vector<2x8x4xf32>
    %111 = tpu.matmul %110, %101, %cst_56 {dimension_numbers = #tpu.dot_dimension_numbers<[2], [1], [1], [2], [0, 0, 0, 1, 1, 2], [0], [0]>} : vector<2x8x8xbf16>, vector<2x8x4xbf16>, vector<2x8x4xf32> -> vector<2x8x4xf32>
    "tpu.trace_stop"() : () -> ()
    %112 = tpu.reciprocal %109 {approx = true} : vector<2x8x1xf32> -> vector<2x8x1xf32>
    %113 = vector.broadcast %112 : vector<2x8x1xf32> to vector<2x8x4xf32>
    %114 = arith.mulf %111, %113 : vector<2x8x4xf32>
    %c0_57 = arith.constant 0 : index
    %c0_58 = arith.constant 0 : index
    %115 = vector.load %arg8[%c0_57, %c0_58] : memref<16x32xf32, #tpu.memory_space<vmem>>, vector<16x32xf32>
    %116 = vector.shape_cast %114 : vector<2x8x4xf32> to vector<16x4xf32>
    %117 = arith.truncf %116 : vector<16x4xf32> to vector<16x4xbf16>
    %118 = arith.index_cast %c2_i32 : i32 to index
    %c0_59 = arith.constant 0 : index
    %c0_60 = arith.constant 0 : index
    %119 = vector.load %arg5[%118, %c0_59, %c0_60] : memref<8x4x32xbf16, #tpu.memory_space<vmem>>, vector<1x4x32xbf16>
    %120 = vector.shape_cast %119 : vector<1x4x32xbf16> to vector<4x32xbf16>
    %cst_61 = arith.constant dense<0.000000e+00> : vector<16x32xf32>
    %121 = tpu.matmul %117, %120, %cst_61 {dimension_numbers = #tpu.dot_dimension_numbers<[1], [0], [0], [1], [0, 0, 1, 1], [], []>} : vector<16x4xbf16>, vector<4x32xbf16>, vector<16x32xf32> -> vector<16x32xf32>
    %122 = arith.addf %115, %121 : vector<16x32xf32>
    %c0_62 = arith.constant 0 : index
    %c0_63 = arith.constant 0 : index
    %123 = vector.load %arg8[%c0_62, %c0_63] : memref<16x32xf32, #tpu.memory_space<vmem>>, vector<16x32xf32>
    tpu.vector_store %arg8[%c0_62, %c0_63], %122 {strides = array<i32>} : memref<16x32xf32, #tpu.memory_space<vmem>>, vector<16x32xf32>,
    %c3_i32 = arith.constant 3 : i32
    %124 = arith.index_cast %c3_i32 : i32 to index
    %c0_64 = arith.constant 0 : index
    %c0_65 = arith.constant 0 : index
    %125 = vector.load %arg2[%124, %c0_64, %c0_65] : memref<8x32x4xbf16, #tpu.memory_space<vmem>>, vector<1x32x4xbf16>
    %126 = vector.shape_cast %125 : vector<1x32x4xbf16> to vector<32x4xbf16>
    %cst_66 = arith.constant dense<0.000000e+00> : vector<16x4xf32>
    %127 = tpu.matmul %1, %126, %cst_66 {dimension_numbers = #tpu.dot_dimension_numbers<[1], [0], [0], [1], [0, 0, 1, 1], [], []>} : vector<16x32xbf16>, vector<32x4xbf16>, vector<16x4xf32> -> vector<16x4xf32>
    %128 = arith.index_cast %c3_i32 : i32 to index
    %c0_67 = arith.constant 0 : index
    %c0_68 = arith.constant 0 : index
    %129 = vector.load %arg3[%128, %c0_67, %c0_68] : memref<8x32x4xbf16, #tpu.memory_space<vmem>>, vector<1x32x4xbf16>
    %130 = vector.shape_cast %129 : vector<1x32x4xbf16> to vector<32x4xbf16>
    %cst_69 = arith.constant dense<0.000000e+00> : vector<16x4xf32>
    %131 = tpu.matmul %1, %130, %cst_69 {dimension_numbers = #tpu.dot_dimension_numbers<[1], [0], [0], [1], [0, 0, 1, 1], [], []>} : vector<16x32xbf16>, vector<32x4xbf16>, vector<16x4xf32> -> vector<16x4xf32>
    %132 = arith.index_cast %c3_i32 : i32 to index
    %c0_70 = arith.constant 0 : index
    %c0_71 = arith.constant 0 : index
    %133 = vector.load %arg4[%132, %c0_70, %c0_71] : memref<8x32x4xbf16, #tpu.memory_space<vmem>>, vector<1x32x4xbf16>
    %134 = vector.shape_cast %133 : vector<1x32x4xbf16> to vector<32x4xbf16>
    %cst_72 = arith.constant dense<0.000000e+00> : vector<16x4xf32>
    %135 = tpu.matmul %1, %134, %cst_72 {dimension_numbers = #tpu.dot_dimension_numbers<[1], [0], [0], [1], [0, 0, 1, 1], [], []>} : vector<16x32xbf16>, vector<32x4xbf16>, vector<16x4xf32> -> vector<16x4xf32>
    %136 = vector.shape_cast %127 : vector<16x4xf32> to vector<2x8x4xf32>
    %137 = arith.truncf %136 : vector<2x8x4xf32> to vector<2x8x4xbf16>
    %138 = vector.shape_cast %131 : vector<16x4xf32> to vector<2x8x4xf32>
    %139 = arith.truncf %138 : vector<2x8x4xf32> to vector<2x8x4xbf16>
    %140 = vector.shape_cast %135 : vector<16x4xf32> to vector<2x8x4xf32>
    %141 = arith.truncf %140 : vector<2x8x4xf32> to vector<2x8x4xbf16>
    "tpu.trace_start"() <{level = 10 : i32, message = "bqd,bkd->bqk"}> : () -> ()
    %cst_73 = arith.constant dense<0.000000e+00> : vector<2x8x8xf32>
    %142 = tpu.matmul %137, %139, %cst_73 {dimension_numbers = #tpu.dot_dimension_numbers<[2], [2], [1], [1], [0, 0, 0, 1, 1, 1], [0], [0]>} : vector<2x8x4xbf16>, vector<2x8x4xbf16>, vector<2x8x8xf32> -> vector<2x8x8xf32>
    "tpu.trace_stop"() : () -> ()
    %cst_74 = arith.constant dense<0xFF800000> : vector<2x8xf32>
    %143 = vector.multi_reduction <maximumf>, %142, %cst_74 [2] : vector<2x8x8xf32> to vector<2x8xf32>
    %144 = vector.shape_cast %143 : vector<2x8xf32> to vector<2x8x1xf32>
    %145 = vector.broadcast %144 : vector<2x8x1xf32> to vector<2x8x8xf32>
    %146 = arith.subf %142, %145 : vector<2x8x8xf32>
    %147 = math.exp %146 : vector<2x8x8xf32>
    %cst_75 = arith.constant dense<0.000000e+00> : vector<2x8xf32>
    %148 = vector.multi_reduction <add>, %147, %cst_75 [2] : vector<2x8x8xf32> to vector<2x8xf32>
    %149 = vector.shape_cast %148 : vector<2x8xf32> to vector<2x8x1xf32>
    %150 = arith.truncf %147 : vector<2x8x8xf32> to vector<2x8x8xbf16>
    "tpu.trace_start"() <{level = 10 : i32, message = "bqk,bkd->bqd"}> : () -> ()
    %cst_76 = arith.constant dense<0.000000e+00> : vector<2x8x4xf32>
    %151 = tpu.matmul %150, %141, %cst_76 {dimension_numbers = #tpu.dot_dimension_numbers<[2], [1], [1], [2], [0, 0, 0, 1, 1, 2], [0], [0]>} : vector<2x8x8xbf16>, vector<2x8x4xbf16>, vector<2x8x4xf32> -> vector<2x8x4xf32>
    "tpu.trace_stop"() : () -> ()
    %152 = tpu.reciprocal %149 {approx = true} : vector<2x8x1xf32> -> vector<2x8x1xf32>
    %153 = vector.broadcast %152 : vector<2x8x1xf32> to vector<2x8x4xf32>
    %154 = arith.mulf %151, %153 : vector<2x8x4xf32>
    %c0_77 = arith.constant 0 : index
    %c0_78 = arith.constant 0 : index
    %155 = vector.load %arg8[%c0_77, %c0_78] : memref<16x32xf32, #tpu.memory_space<vmem>>, vector<16x32xf32>
    %156 = vector.shape_cast %154 : vector<2x8x4xf32> to vector<16x4xf32>
    %157 = arith.truncf %156 : vector<16x4xf32> to vector<16x4xbf16>
    %158 = arith.index_cast %c3_i32 : i32 to index
    %c0_79 = arith.constant 0 : index
    %c0_80 = arith.constant 0 : index
    %159 = vector.load %arg5[%158, %c0_79, %c0_80] : memref<8x4x32xbf16, #tpu.memory_space<vmem>>, vector<1x4x32xbf16>
    %160 = vector.shape_cast %159 : vector<1x4x32xbf16> to vector<4x32xbf16>
    %cst_81 = arith.constant dense<0.000000e+00> : vector<16x32xf32>
    %161 = tpu.matmul %157, %160, %cst_81 {dimension_numbers = #tpu.dot_dimension_numbers<[1], [0], [0], [1], [0, 0, 1, 1], [], []>} : vector<16x4xbf16>, vector<4x32xbf16>, vector<16x32xf32> -> vector<16x32xf32>
    %162 = arith.addf %155, %161 : vector<16x32xf32>
    %c0_82 = arith.constant 0 : index
    %c0_83 = arith.constant 0 : index
    %163 = vector.load %arg8[%c0_82, %c0_83] : memref<16x32xf32, #tpu.memory_space<vmem>>, vector<16x32xf32>
    tpu.vector_store %arg8[%c0_82, %c0_83], %162 {strides = array<i32>} : memref<16x32xf32, #tpu.memory_space<vmem>>, vector<16x32xf32>,
    %c4_i32 = arith.constant 4 : i32
    %164 = arith.index_cast %c4_i32 : i32 to index
    %c0_84 = arith.constant 0 : index
    %c0_85 = arith.constant 0 : index
    %165 = vector.load %arg2[%164, %c0_84, %c0_85] : memref<8x32x4xbf16, #tpu.memory_space<vmem>>, vector<1x32x4xbf16>
    %166 = vector.shape_cast %165 : vector<1x32x4xbf16> to vector<32x4xbf16>
    %cst_86 = arith.constant dense<0.000000e+00> : vector<16x4xf32>
    %167 = tpu.matmul %1, %166, %cst_86 {dimension_numbers = #tpu.dot_dimension_numbers<[1], [0], [0], [1], [0, 0, 1, 1], [], []>} : vector<16x32xbf16>, vector<32x4xbf16>, vector<16x4xf32> -> vector<16x4xf32>
    %168 = arith.index_cast %c4_i32 : i32 to index
    %c0_87 = arith.constant 0 : index
    %c0_88 = arith.constant 0 : index
    %169 = vector.load %arg3[%168, %c0_87, %c0_88] : memref<8x32x4xbf16, #tpu.memory_space<vmem>>, vector<1x32x4xbf16>
    %170 = vector.shape_cast %169 : vector<1x32x4xbf16> to vector<32x4xbf16>
    %cst_89 = arith.constant dense<0.000000e+00> : vector<16x4xf32>
    %171 = tpu.matmul %1, %170, %cst_89 {dimension_numbers = #tpu.dot_dimension_numbers<[1], [0], [0], [1], [0, 0, 1, 1], [], []>} : vector<16x32xbf16>, vector<32x4xbf16>, vector<16x4xf32> -> vector<16x4xf32>
    %172 = arith.index_cast %c4_i32 : i32 to index
    %c0_90 = arith.constant 0 : index
    %c0_91 = arith.constant 0 : index
    %173 = vector.load %arg4[%172, %c0_90, %c0_91] : memref<8x32x4xbf16, #tpu.memory_space<vmem>>, vector<1x32x4xbf16>
    %174 = vector.shape_cast %173 : vector<1x32x4xbf16> to vector<32x4xbf16>
    %cst_92 = arith.constant dense<0.000000e+00> : vector<16x4xf32>
    %175 = tpu.matmul %1, %174, %cst_92 {dimension_numbers = #tpu.dot_dimension_numbers<[1], [0], [0], [1], [0, 0, 1, 1], [], []>} : vector<16x32xbf16>, vector<32x4xbf16>, vector<16x4xf32> -> vector<16x4xf32>
    %176 = vector.shape_cast %167 : vector<16x4xf32> to vector<2x8x4xf32>
    %177 = arith.truncf %176 : vector<2x8x4xf32> to vector<2x8x4xbf16>
    %178 = vector.shape_cast %171 : vector<16x4xf32> to vector<2x8x4xf32>
    %179 = arith.truncf %178 : vector<2x8x4xf32> to vector<2x8x4xbf16>
    %180 = vector.shape_cast %175 : vector<16x4xf32> to vector<2x8x4xf32>
    %181 = arith.truncf %180 : vector<2x8x4xf32> to vector<2x8x4xbf16>
    "tpu.trace_start"() <{level = 10 : i32, message = "bqd,bkd->bqk"}> : () -> ()
    %cst_93 = arith.constant dense<0.000000e+00> : vector<2x8x8xf32>
    %182 = tpu.matmul %177, %179, %cst_93 {dimension_numbers = #tpu.dot_dimension_numbers<[2], [2], [1], [1], [0, 0, 0, 1, 1, 1], [0], [0]>} : vector<2x8x4xbf16>, vector<2x8x4xbf16>, vector<2x8x8xf32> -> vector<2x8x8xf32>
    "tpu.trace_stop"() : () -> ()
    %cst_94 = arith.constant dense<0xFF800000> : vector<2x8xf32>
    %183 = vector.multi_reduction <maximumf>, %182, %cst_94 [2] : vector<2x8x8xf32> to vector<2x8xf32>
    %184 = vector.shape_cast %183 : vector<2x8xf32> to vector<2x8x1xf32>
    %185 = vector.broadcast %184 : vector<2x8x1xf32> to vector<2x8x8xf32>
    %186 = arith.subf %182, %185 : vector<2x8x8xf32>
    %187 = math.exp %186 : vector<2x8x8xf32>
    %cst_95 = arith.constant dense<0.000000e+00> : vector<2x8xf32>
    %188 = vector.multi_reduction <add>, %187, %cst_95 [2] : vector<2x8x8xf32> to vector<2x8xf32>
    %189 = vector.shape_cast %188 : vector<2x8xf32> to vector<2x8x1xf32>
    %190 = arith.truncf %187 : vector<2x8x8xf32> to vector<2x8x8xbf16>
    "tpu.trace_start"() <{level = 10 : i32, message = "bqk,bkd->bqd"}> : () -> ()
    %cst_96 = arith.constant dense<0.000000e+00> : vector<2x8x4xf32>
    %191 = tpu.matmul %190, %181, %cst_96 {dimension_numbers = #tpu.dot_dimension_numbers<[2], [1], [1], [2], [0, 0, 0, 1, 1, 2], [0], [0]>} : vector<2x8x8xbf16>, vector<2x8x4xbf16>, vector<2x8x4xf32> -> vector<2x8x4xf32>
    "tpu.trace_stop"() : () -> ()
    %192 = tpu.reciprocal %189 {approx = true} : vector<2x8x1xf32> -> vector<2x8x1xf32>
    %193 = vector.broadcast %192 : vector<2x8x1xf32> to vector<2x8x4xf32>
    %194 = arith.mulf %191, %193 : vector<2x8x4xf32>
    %c0_97 = arith.constant 0 : index
    %c0_98 = arith.constant 0 : index
    %195 = vector.load %arg8[%c0_97, %c0_98] : memref<16x32xf32, #tpu.memory_space<vmem>>, vector<16x32xf32>
    %196 = vector.shape_cast %194 : vector<2x8x4xf32> to vector<16x4xf32>
    %197 = arith.truncf %196 : vector<16x4xf32> to vector<16x4xbf16>
    %198 = arith.index_cast %c4_i32 : i32 to index
    %c0_99 = arith.constant 0 : index
    %c0_100 = arith.constant 0 : index
    %199 = vector.load %arg5[%198, %c0_99, %c0_100] : memref<8x4x32xbf16, #tpu.memory_space<vmem>>, vector<1x4x32xbf16>
    %200 = vector.shape_cast %199 : vector<1x4x32xbf16> to vector<4x32xbf16>
    %cst_101 = arith.constant dense<0.000000e+00> : vector<16x32xf32>
    %201 = tpu.matmul %197, %200, %cst_101 {dimension_numbers = #tpu.dot_dimension_numbers<[1], [0], [0], [1], [0, 0, 1, 1], [], []>} : vector<16x4xbf16>, vector<4x32xbf16>, vector<16x32xf32> -> vector<16x32xf32>
    %202 = arith.addf %195, %201 : vector<16x32xf32>
    %c0_102 = arith.constant 0 : index
    %c0_103 = arith.constant 0 : index
    %203 = vector.load %arg8[%c0_102, %c0_103] : memref<16x32xf32, #tpu.memory_space<vmem>>, vector<16x32xf32>
    tpu.vector_store %arg8[%c0_102, %c0_103], %202 {strides = array<i32>} : memref<16x32xf32, #tpu.memory_space<vmem>>, vector<16x32xf32>,
    %c5_i32 = arith.constant 5 : i32
    %204 = arith.index_cast %c5_i32 : i32 to index
    %c0_104 = arith.constant 0 : index
    %c0_105 = arith.constant 0 : index
    %205 = vector.load %arg2[%204, %c0_104, %c0_105] : memref<8x32x4xbf16, #tpu.memory_space<vmem>>, vector<1x32x4xbf16>
    %206 = vector.shape_cast %205 : vector<1x32x4xbf16> to vector<32x4xbf16>
    %cst_106 = arith.constant dense<0.000000e+00> : vector<16x4xf32>
    %207 = tpu.matmul %1, %206, %cst_106 {dimension_numbers = #tpu.dot_dimension_numbers<[1], [0], [0], [1], [0, 0, 1, 1], [], []>} : vector<16x32xbf16>, vector<32x4xbf16>, vector<16x4xf32> -> vector<16x4xf32>
    %208 = arith.index_cast %c5_i32 : i32 to index
    %c0_107 = arith.constant 0 : index
    %c0_108 = arith.constant 0 : index
    %209 = vector.load %arg3[%208, %c0_107, %c0_108] : memref<8x32x4xbf16, #tpu.memory_space<vmem>>, vector<1x32x4xbf16>
    %210 = vector.shape_cast %209 : vector<1x32x4xbf16> to vector<32x4xbf16>
    %cst_109 = arith.constant dense<0.000000e+00> : vector<16x4xf32>
    %211 = tpu.matmul %1, %210, %cst_109 {dimension_numbers = #tpu.dot_dimension_numbers<[1], [0], [0], [1], [0, 0, 1, 1], [], []>} : vector<16x32xbf16>, vector<32x4xbf16>, vector<16x4xf32> -> vector<16x4xf32>
    %212 = arith.index_cast %c5_i32 : i32 to index
    %c0_110 = arith.constant 0 : index
    %c0_111 = arith.constant 0 : index
    %213 = vector.load %arg4[%212, %c0_110, %c0_111] : memref<8x32x4xbf16, #tpu.memory_space<vmem>>, vector<1x32x4xbf16>
    %214 = vector.shape_cast %213 : vector<1x32x4xbf16> to vector<32x4xbf16>
    %cst_112 = arith.constant dense<0.000000e+00> : vector<16x4xf32>
    %215 = tpu.matmul %1, %214, %cst_112 {dimension_numbers = #tpu.dot_dimension_numbers<[1], [0], [0], [1], [0, 0, 1, 1], [], []>} : vector<16x32xbf16>, vector<32x4xbf16>, vector<16x4xf32> -> vector<16x4xf32>
    %216 = vector.shape_cast %207 : vector<16x4xf32> to vector<2x8x4xf32>
    %217 = arith.truncf %216 : vector<2x8x4xf32> to vector<2x8x4xbf16>
    %218 = vector.shape_cast %211 : vector<16x4xf32> to vector<2x8x4xf32>
    %219 = arith.truncf %218 : vector<2x8x4xf32> to vector<2x8x4xbf16>
    %220 = vector.shape_cast %215 : vector<16x4xf32> to vector<2x8x4xf32>
    %221 = arith.truncf %220 : vector<2x8x4xf32> to vector<2x8x4xbf16>
    "tpu.trace_start"() <{level = 10 : i32, message = "bqd,bkd->bqk"}> : () -> ()
    %cst_113 = arith.constant dense<0.000000e+00> : vector<2x8x8xf32>
    %222 = tpu.matmul %217, %219, %cst_113 {dimension_numbers = #tpu.dot_dimension_numbers<[2], [2], [1], [1], [0, 0, 0, 1, 1, 1], [0], [0]>} : vector<2x8x4xbf16>, vector<2x8x4xbf16>, vector<2x8x8xf32> -> vector<2x8x8xf32>
    "tpu.trace_stop"() : () -> ()
    %cst_114 = arith.constant dense<0xFF800000> : vector<2x8xf32>
    %223 = vector.multi_reduction <maximumf>, %222, %cst_114 [2] : vector<2x8x8xf32> to vector<2x8xf32>
    %224 = vector.shape_cast %223 : vector<2x8xf32> to vector<2x8x1xf32>
    %225 = vector.broadcast %224 : vector<2x8x1xf32> to vector<2x8x8xf32>
    %226 = arith.subf %222, %225 : vector<2x8x8xf32>
    %227 = math.exp %226 : vector<2x8x8xf32>
    %cst_115 = arith.constant dense<0.000000e+00> : vector<2x8xf32>
    %228 = vector.multi_reduction <add>, %227, %cst_115 [2] : vector<2x8x8xf32> to vector<2x8xf32>
    %229 = vector.shape_cast %228 : vector<2x8xf32> to vector<2x8x1xf32>
    %230 = arith.truncf %227 : vector<2x8x8xf32> to vector<2x8x8xbf16>
    "tpu.trace_start"() <{level = 10 : i32, message = "bqk,bkd->bqd"}> : () -> ()
    %cst_116 = arith.constant dense<0.000000e+00> : vector<2x8x4xf32>
    %231 = tpu.matmul %230, %221, %cst_116 {dimension_numbers = #tpu.dot_dimension_numbers<[2], [1], [1], [2], [0, 0, 0, 1, 1, 2], [0], [0]>} : vector<2x8x8xbf16>, vector<2x8x4xbf16>, vector<2x8x4xf32> -> vector<2x8x4xf32>
    "tpu.trace_stop"() : () -> ()
    %232 = tpu.reciprocal %229 {approx = true} : vector<2x8x1xf32> -> vector<2x8x1xf32>
    %233 = vector.broadcast %232 : vector<2x8x1xf32> to vector<2x8x4xf32>
    %234 = arith.mulf %231, %233 : vector<2x8x4xf32>
    %c0_117 = arith.constant 0 : index
    %c0_118 = arith.constant 0 : index
    %235 = vector.load %arg8[%c0_117, %c0_118] : memref<16x32xf32, #tpu.memory_space<vmem>>, vector<16x32xf32>
    %236 = vector.shape_cast %234 : vector<2x8x4xf32> to vector<16x4xf32>
    %237 = arith.truncf %236 : vector<16x4xf32> to vector<16x4xbf16>
    %238 = arith.index_cast %c5_i32 : i32 to index
    %c0_119 = arith.constant 0 : index
    %c0_120 = arith.constant 0 : index
    %239 = vector.load %arg5[%238, %c0_119, %c0_120] : memref<8x4x32xbf16, #tpu.memory_space<vmem>>, vector<1x4x32xbf16>
    %240 = vector.shape_cast %239 : vector<1x4x32xbf16> to vector<4x32xbf16>
    %cst_121 = arith.constant dense<0.000000e+00> : vector<16x32xf32>
    %241 = tpu.matmul %237, %240, %cst_121 {dimension_numbers = #tpu.dot_dimension_numbers<[1], [0], [0], [1], [0, 0, 1, 1], [], []>} : vector<16x4xbf16>, vector<4x32xbf16>, vector<16x32xf32> -> vector<16x32xf32>
    %242 = arith.addf %235, %241 : vector<16x32xf32>
    %c0_122 = arith.constant 0 : index
    %c0_123 = arith.constant 0 : index
    %243 = vector.load %arg8[%c0_122, %c0_123] : memref<16x32xf32, #tpu.memory_space<vmem>>, vector<16x32xf32>
    tpu.vector_store %arg8[%c0_122, %c0_123], %242 {strides = array<i32>} : memref<16x32xf32, #tpu.memory_space<vmem>>, vector<16x32xf32>,
    %c6_i32 = arith.constant 6 : i32
    %244 = arith.index_cast %c6_i32 : i32 to index
    %c0_124 = arith.constant 0 : index
    %c0_125 = arith.constant 0 : index
    %245 = vector.load %arg2[%244, %c0_124, %c0_125] : memref<8x32x4xbf16, #tpu.memory_space<vmem>>, vector<1x32x4xbf16>
    %246 = vector.shape_cast %245 : vector<1x32x4xbf16> to vector<32x4xbf16>
    %cst_126 = arith.constant dense<0.000000e+00> : vector<16x4xf32>
    %247 = tpu.matmul %1, %246, %cst_126 {dimension_numbers = #tpu.dot_dimension_numbers<[1], [0], [0], [1], [0, 0, 1, 1], [], []>} : vector<16x32xbf16>, vector<32x4xbf16>, vector<16x4xf32> -> vector<16x4xf32>
    %248 = arith.index_cast %c6_i32 : i32 to index
    %c0_127 = arith.constant 0 : index
    %c0_128 = arith.constant 0 : index
    %249 = vector.load %arg3[%248, %c0_127, %c0_128] : memref<8x32x4xbf16, #tpu.memory_space<vmem>>, vector<1x32x4xbf16>
    %250 = vector.shape_cast %249 : vector<1x32x4xbf16> to vector<32x4xbf16>
    %cst_129 = arith.constant dense<0.000000e+00> : vector<16x4xf32>
    %251 = tpu.matmul %1, %250, %cst_129 {dimension_numbers = #tpu.dot_dimension_numbers<[1], [0], [0], [1], [0, 0, 1, 1], [], []>} : vector<16x32xbf16>, vector<32x4xbf16>, vector<16x4xf32> -> vector<16x4xf32>
    %252 = arith.index_cast %c6_i32 : i32 to index
    %c0_130 = arith.constant 0 : index
    %c0_131 = arith.constant 0 : index
    %253 = vector.load %arg4[%252, %c0_130, %c0_131] : memref<8x32x4xbf16, #tpu.memory_space<vmem>>, vector<1x32x4xbf16>
    %254 = vector.shape_cast %253 : vector<1x32x4xbf16> to vector<32x4xbf16>
    %cst_132 = arith.constant dense<0.000000e+00> : vector<16x4xf32>
    %255 = tpu.matmul %1, %254, %cst_132 {dimension_numbers = #tpu.dot_dimension_numbers<[1], [0], [0], [1], [0, 0, 1, 1], [], []>} : vector<16x32xbf16>, vector<32x4xbf16>, vector<16x4xf32> -> vector<16x4xf32>
    %256 = vector.shape_cast %247 : vector<16x4xf32> to vector<2x8x4xf32>
    %257 = arith.truncf %256 : vector<2x8x4xf32> to vector<2x8x4xbf16>
    %258 = vector.shape_cast %251 : vector<16x4xf32> to vector<2x8x4xf32>
    %259 = arith.truncf %258 : vector<2x8x4xf32> to vector<2x8x4xbf16>
    %260 = vector.shape_cast %255 : vector<16x4xf32> to vector<2x8x4xf32>
    %261 = arith.truncf %260 : vector<2x8x4xf32> to vector<2x8x4xbf16>
    "tpu.trace_start"() <{level = 10 : i32, message = "bqd,bkd->bqk"}> : () -> ()
    %cst_133 = arith.constant dense<0.000000e+00> : vector<2x8x8xf32>
    %262 = tpu.matmul %257, %259, %cst_133 {dimension_numbers = #tpu.dot_dimension_numbers<[2], [2], [1], [1], [0, 0, 0, 1, 1, 1], [0], [0]>} : vector<2x8x4xbf16>, vector<2x8x4xbf16>, vector<2x8x8xf32> -> vector<2x8x8xf32>
    "tpu.trace_stop"() : () -> ()
    %cst_134 = arith.constant dense<0xFF800000> : vector<2x8xf32>
    %263 = vector.multi_reduction <maximumf>, %262, %cst_134 [2] : vector<2x8x8xf32> to vector<2x8xf32>
    %264 = vector.shape_cast %263 : vector<2x8xf32> to vector<2x8x1xf32>
    %265 = vector.broadcast %264 : vector<2x8x1xf32> to vector<2x8x8xf32>
    %266 = arith.subf %262, %265 : vector<2x8x8xf32>
    %267 = math.exp %266 : vector<2x8x8xf32>
    %cst_135 = arith.constant dense<0.000000e+00> : vector<2x8xf32>
    %268 = vector.multi_reduction <add>, %267, %cst_135 [2] : vector<2x8x8xf32> to vector<2x8xf32>
    %269 = vector.shape_cast %268 : vector<2x8xf32> to vector<2x8x1xf32>
    %270 = arith.truncf %267 : vector<2x8x8xf32> to vector<2x8x8xbf16>
    "tpu.trace_start"() <{level = 10 : i32, message = "bqk,bkd->bqd"}> : () -> ()
    %cst_136 = arith.constant dense<0.000000e+00> : vector<2x8x4xf32>
    %271 = tpu.matmul %270, %261, %cst_136 {dimension_numbers = #tpu.dot_dimension_numbers<[2], [1], [1], [2], [0, 0, 0, 1, 1, 2], [0], [0]>} : vector<2x8x8xbf16>, vector<2x8x4xbf16>, vector<2x8x4xf32> -> vector<2x8x4xf32>
    "tpu.trace_stop"() : () -> ()
    %272 = tpu.reciprocal %269 {approx = true} : vector<2x8x1xf32> -> vector<2x8x1xf32>
    %273 = vector.broadcast %272 : vector<2x8x1xf32> to vector<2x8x4xf32>
    %274 = arith.mulf %271, %273 : vector<2x8x4xf32>
    %c0_137 = arith.constant 0 : index
    %c0_138 = arith.constant 0 : index
    %275 = vector.load %arg8[%c0_137, %c0_138] : memref<16x32xf32, #tpu.memory_space<vmem>>, vector<16x32xf32>
    %276 = vector.shape_cast %274 : vector<2x8x4xf32> to vector<16x4xf32>
    %277 = arith.truncf %276 : vector<16x4xf32> to vector<16x4xbf16>
    %278 = arith.index_cast %c6_i32 : i32 to index
    %c0_139 = arith.constant 0 : index
    %c0_140 = arith.constant 0 : index
    %279 = vector.load %arg5[%278, %c0_139, %c0_140] : memref<8x4x32xbf16, #tpu.memory_space<vmem>>, vector<1x4x32xbf16>
    %280 = vector.shape_cast %279 : vector<1x4x32xbf16> to vector<4x32xbf16>
    %cst_141 = arith.constant dense<0.000000e+00> : vector<16x32xf32>
    %281 = tpu.matmul %277, %280, %cst_141 {dimension_numbers = #tpu.dot_dimension_numbers<[1], [0], [0], [1], [0, 0, 1, 1], [], []>} : vector<16x4xbf16>, vector<4x32xbf16>, vector<16x32xf32> -> vector<16x32xf32>
    %282 = arith.addf %275, %281 : vector<16x32xf32>
    %c0_142 = arith.constant 0 : index
    %c0_143 = arith.constant 0 : index
    %283 = vector.load %arg8[%c0_142, %c0_143] : memref<16x32xf32, #tpu.memory_space<vmem>>, vector<16x32xf32>
    tpu.vector_store %arg8[%c0_142, %c0_143], %282 {strides = array<i32>} : memref<16x32xf32, #tpu.memory_space<vmem>>, vector<16x32xf32>,
    %c7_i32 = arith.constant 7 : i32
    %284 = arith.index_cast %c7_i32 : i32 to index
    %c0_144 = arith.constant 0 : index
    %c0_145 = arith.constant 0 : index
    %285 = vector.load %arg2[%284, %c0_144, %c0_145] : memref<8x32x4xbf16, #tpu.memory_space<vmem>>, vector<1x32x4xbf16>
    %286 = vector.shape_cast %285 : vector<1x32x4xbf16> to vector<32x4xbf16>
    %cst_146 = arith.constant dense<0.000000e+00> : vector<16x4xf32>
    %287 = tpu.matmul %1, %286, %cst_146 {dimension_numbers = #tpu.dot_dimension_numbers<[1], [0], [0], [1], [0, 0, 1, 1], [], []>} : vector<16x32xbf16>, vector<32x4xbf16>, vector<16x4xf32> -> vector<16x4xf32>
    %288 = arith.index_cast %c7_i32 : i32 to index
    %c0_147 = arith.constant 0 : index
    %c0_148 = arith.constant 0 : index
    %289 = vector.load %arg3[%288, %c0_147, %c0_148] : memref<8x32x4xbf16, #tpu.memory_space<vmem>>, vector<1x32x4xbf16>
    %290 = vector.shape_cast %289 : vector<1x32x4xbf16> to vector<32x4xbf16>
    %cst_149 = arith.constant dense<0.000000e+00> : vector<16x4xf32>
    %291 = tpu.matmul %1, %290, %cst_149 {dimension_numbers = #tpu.dot_dimension_numbers<[1], [0], [0], [1], [0, 0, 1, 1], [], []>} : vector<16x32xbf16>, vector<32x4xbf16>, vector<16x4xf32> -> vector<16x4xf32>
    %292 = arith.index_cast %c7_i32 : i32 to index
    %c0_150 = arith.constant 0 : index
    %c0_151 = arith.constant 0 : index
    %293 = vector.load %arg4[%292, %c0_150, %c0_151] : memref<8x32x4xbf16, #tpu.memory_space<vmem>>, vector<1x32x4xbf16>
    %294 = vector.shape_cast %293 : vector<1x32x4xbf16> to vector<32x4xbf16>
    %cst_152 = arith.constant dense<0.000000e+00> : vector<16x4xf32>
    %295 = tpu.matmul %1, %294, %cst_152 {dimension_numbers = #tpu.dot_dimension_numbers<[1], [0], [0], [1], [0, 0, 1, 1], [], []>} : vector<16x32xbf16>, vector<32x4xbf16>, vector<16x4xf32> -> vector<16x4xf32>
    %296 = vector.shape_cast %287 : vector<16x4xf32> to vector<2x8x4xf32>
    %297 = arith.truncf %296 : vector<2x8x4xf32> to vector<2x8x4xbf16>
    %298 = vector.shape_cast %291 : vector<16x4xf32> to vector<2x8x4xf32>
    %299 = arith.truncf %298 : vector<2x8x4xf32> to vector<2x8x4xbf16>
    %300 = vector.shape_cast %295 : vector<16x4xf32> to vector<2x8x4xf32>
    %301 = arith.truncf %300 : vector<2x8x4xf32> to vector<2x8x4xbf16>
    "tpu.trace_start"() <{level = 10 : i32, message = "bqd,bkd->bqk"}> : () -> ()
    %cst_153 = arith.constant dense<0.000000e+00> : vector<2x8x8xf32>
    %302 = tpu.matmul %297, %299, %cst_153 {dimension_numbers = #tpu.dot_dimension_numbers<[2], [2], [1], [1], [0, 0, 0, 1, 1, 1], [0], [0]>} : vector<2x8x4xbf16>, vector<2x8x4xbf16>, vector<2x8x8xf32> -> vector<2x8x8xf32>
    "tpu.trace_stop"() : () -> ()
    %cst_154 = arith.constant dense<0xFF800000> : vector<2x8xf32>
    %303 = vector.multi_reduction <maximumf>, %302, %cst_154 [2] : vector<2x8x8xf32> to vector<2x8xf32>
    %304 = vector.shape_cast %303 : vector<2x8xf32> to vector<2x8x1xf32>
    %305 = vector.broadcast %304 : vector<2x8x1xf32> to vector<2x8x8xf32>
    %306 = arith.subf %302, %305 : vector<2x8x8xf32>
    %307 = math.exp %306 : vector<2x8x8xf32>
    %cst_155 = arith.constant dense<0.000000e+00> : vector<2x8xf32>
    %308 = vector.multi_reduction <add>, %307, %cst_155 [2] : vector<2x8x8xf32> to vector<2x8xf32>
    %309 = vector.shape_cast %308 : vector<2x8xf32> to vector<2x8x1xf32>
    %310 = arith.truncf %307 : vector<2x8x8xf32> to vector<2x8x8xbf16>
    "tpu.trace_start"() <{level = 10 : i32, message = "bqk,bkd->bqd"}> : () -> ()
    %cst_156 = arith.constant dense<0.000000e+00> : vector<2x8x4xf32>
    %311 = tpu.matmul %310, %301, %cst_156 {dimension_numbers = #tpu.dot_dimension_numbers<[2], [1], [1], [2], [0, 0, 0, 1, 1, 2], [0], [0]>} : vector<2x8x8xbf16>, vector<2x8x4xbf16>, vector<2x8x4xf32> -> vector<2x8x4xf32>
    "tpu.trace_stop"() : () -> ()
    %312 = tpu.reciprocal %309 {approx = true} : vector<2x8x1xf32> -> vector<2x8x1xf32>
    %313 = vector.broadcast %312 : vector<2x8x1xf32> to vector<2x8x4xf32>
    %314 = arith.mulf %311, %313 : vector<2x8x4xf32>
    %c0_157 = arith.constant 0 : index
    %c0_158 = arith.constant 0 : index
    %315 = vector.load %arg8[%c0_157, %c0_158] : memref<16x32xf32, #tpu.memory_space<vmem>>, vector<16x32xf32>
    %316 = vector.shape_cast %314 : vector<2x8x4xf32> to vector<16x4xf32>
    %317 = arith.truncf %316 : vector<16x4xf32> to vector<16x4xbf16>
    %318 = arith.index_cast %c7_i32 : i32 to index
    %c0_159 = arith.constant 0 : index
    %c0_160 = arith.constant 0 : index
    %319 = vector.load %arg5[%318, %c0_159, %c0_160] : memref<8x4x32xbf16, #tpu.memory_space<vmem>>, vector<1x4x32xbf16>
    %320 = vector.shape_cast %319 : vector<1x4x32xbf16> to vector<4x32xbf16>
    %cst_161 = arith.constant dense<0.000000e+00> : vector<16x32xf32>
    %321 = tpu.matmul %317, %320, %cst_161 {dimension_numbers = #tpu.dot_dimension_numbers<[1], [0], [0], [1], [0, 0, 1, 1], [], []>} : vector<16x4xbf16>, vector<4x32xbf16>, vector<16x32xf32> -> vector<16x32xf32>
    %322 = arith.addf %315, %321 : vector<16x32xf32>
    %c0_162 = arith.constant 0 : index
    %c0_163 = arith.constant 0 : index
    %323 = vector.load %arg8[%c0_162, %c0_163] : memref<16x32xf32, #tpu.memory_space<vmem>>, vector<16x32xf32>
    tpu.vector_store %arg8[%c0_162, %c0_163], %322 {strides = array<i32>} : memref<16x32xf32, #tpu.memory_space<vmem>>, vector<16x32xf32>,
    %c8_i32 = arith.constant 8 : i32
    %c0_164 = arith.constant 0 : index
    %c0_165 = arith.constant 0 : index
    %324 = vector.load %arg8[%c0_164, %c0_165] : memref<16x32xf32, #tpu.memory_space<vmem>>, vector<16x32xf32>
    %c0_166 = arith.constant 0 : index
    %c0_167 = arith.constant 0 : index
    %325 = vector.load %arg6[%c0_166, %c0_167] : memref<1x32xf32, #tpu.memory_space<vmem>>, vector<1x32xf32>
    %326 = vector.broadcast %325 : vector<1x32xf32> to vector<16x32xf32>
    %327 = arith.addf %324, %326 : vector<16x32xf32>
    %328 = vector.shape_cast %327 : vector<16x32xf32> to vector<2x8x32xf32>
    %c0_168 = arith.constant 0 : index
    %c0_169 = arith.constant 0 : index
    %c0_170 = arith.constant 0 : index
    %329 = vector.load %arg7[%c0_168, %c0_169, %c0_170] : memref<2x8x32xf32, #tpu.memory_space<vmem>>, vector<2x8x32xf32>
    tpu.vector_store %arg7[%c0_168, %c0_169, %c0_170], %328 {strides = array<i32>} : memref<2x8x32xf32, #tpu.memory_space<vmem>>, vector<2x8x32xf32>,
    return
  }
  func.func @transform_0(%arg0: i32) -> (i32, i32, i32) {
    %c0_i32 = arith.constant 0 : i32
    %c0_i32_0 = arith.constant 0 : i32
    %c0_i32_1 = arith.constant 0 : i32
    return %arg0, %c0_i32, %c0_i32_0 : i32, i32, i32
  }
  func.func @transform_1(%arg0: i32) -> (i32, i32, i32) {
    %c0_i32 = arith.constant 0 : i32
    %c0_i32_0 = arith.constant 0 : i32
    %c0_i32_1 = arith.constant 0 : i32
    %c0_i32_2 = arith.constant 0 : i32
    return %c0_i32, %c0_i32_0, %c0_i32_1 : i32, i32, i32
  }
  func.func @transform_2(%arg0: i32) -> (i32, i32, i32) {
    %c0_i32 = arith.constant 0 : i32
    %c0_i32_0 = arith.constant 0 : i32
    %c0_i32_1 = arith.constant 0 : i32
    %c0_i32_2 = arith.constant 0 : i32
    return %c0_i32, %c0_i32_0, %c0_i32_1 : i32, i32, i32
  }
  func.func @transform_3(%arg0: i32) -> (i32, i32, i32) {
    %c0_i32 = arith.constant 0 : i32
    %c0_i32_0 = arith.constant 0 : i32
    %c0_i32_1 = arith.constant 0 : i32
    %c0_i32_2 = arith.constant 0 : i32
    return %c0_i32, %c0_i32_0, %c0_i32_1 : i32, i32, i32
  }
  func.func @transform_4(%arg0: i32) -> (i32, i32, i32) {
    %c0_i32 = arith.constant 0 : i32
    %c0_i32_0 = arith.constant 0 : i32
    %c0_i32_1 = arith.constant 0 : i32
    %c0_i32_2 = arith.constant 0 : i32
    return %c0_i32, %c0_i32_0, %c0_i32_1 : i32, i32, i32
  }
  func.func @transform_5(%arg0: i32) -> (i32, i32) {
    %c0_i32 = arith.constant 0 : i32
    %c0_i32_0 = arith.constant 0 : i32
    %c0_i32_1 = arith.constant 0 : i32
    return %c0_i32, %c0_i32_0 : i32, i32
  }
  func.func @transform_6(%arg0: i32) -> (i32, i32, i32) {
    %c0_i32 = arith.constant 0 : i32
    %c0_i32_0 = arith.constant 0 : i32
    %c0_i32_1 = arith.constant 0 : i32
    return %arg0, %c0_i32, %c0_i32_0 : i32, i32, i32
  }
}

module attributes {stable_mosaic.version = 11 : i64} {
  func.func @_attention_kernel(%arg0: i32, %arg1: memref<2x8x32xbf16, #tpu.memory_space<vmem>>, %arg2: memref<8x32x4xbf16, #tpu.memory_space<vmem>>, %arg3: memref<8x32x4xbf16, #tpu.memory_space<vmem>>, %arg4: memref<8x32x4xbf16, #tpu.memory_space<vmem>>, %arg5: memref<8x4x32xbf16, #tpu.memory_space<vmem>>, %arg6: memref<1x32xf32, #tpu.memory_space<vmem>>, %arg7: memref<2x8x32xf32, #tpu.memory_space<vmem>>, %arg8: memref<16x32xf32, #tpu.memory_space<vmem>>) attributes {dimension_semantics = [#tpu.dimension_semantics<parallel>], iteration_bounds = array<i64: 1>, scalar_prefetch = 0 : i64, scratch_operands = 1 : i64, tpu.core_type = #tpu.core_type<tc>, window_params = [{transform_indices = @transform_0, window_bounds = array<i64: 2, 8, 32>}, {pipeline_mode = #tpu.pipeline_mode<synchronous>, transform_indices = @transform_1, window_bounds = array<i64: 8, 32, 4>}, {pipeline_mode = #tpu.pipeline_mode<synchronous>, transform_indices = @transform_2, window_bounds = array<i64: 8, 32, 4>}, {pipeline_mode = #tpu.pipeline_mode<synchronous>, transform_indices = @transform_3, window_bounds = array<i64: 8, 32, 4>}, {pipeline_mode = #tpu.pipeline_mode<synchronous>, transform_indices = @transform_4, window_bounds = array<i64: 8, 4, 32>}, {pipeline_mode = #tpu.pipeline_mode<synchronous>, transform_indices = @transform_5, window_bounds = array<i64: 1, 32>}, {transform_indices = @transform_6, window_bounds = array<i64: 2, 8, 32>}]} {
    %c0 = arith.constant 0 : index
    %c0_0 = arith.constant 0 : index
    %c0_1 = arith.constant 0 : index
    %0 = vector.load %arg1[%c0, %c0_0, %c0_1] : memref<2x8x32xbf16, #tpu.memory_space<vmem>>, vector<2x8x32xbf16>
    %1 = vector.shape_cast %0 : vector<2x8x32xbf16> to vector<16x32xbf16>
    %cst = arith.constant 0.000000e+00 : f32
    %2 = vector.broadcast %cst : f32 to vector<16x32xf32>
    %c0_2 = arith.constant 0 : index
    %c0_3 = arith.constant 0 : index
    %3 = vector.load %arg8[%c0_2, %c0_3] : memref<16x32xf32, #tpu.memory_space<vmem>>, vector<16x32xf32>
    tpu.vector_store %arg8[%c0_2, %c0_3], %2 {strides = array<i32>} : memref<16x32xf32, #tpu.memory_space<vmem>>, vector<16x32xf32>,
    %c0_i32 = arith.constant 0 : i32
    %4 = arith.index_cast %c0_i32 : i32 to index
    %c0_4 = arith.constant 0 : index
    %c0_5 = arith.constant 0 : index
    %5 = vector.load %arg2[%4, %c0_4, %c0_5] : memref<8x32x4xbf16, #tpu.memory_space<vmem>>, vector<1x32x4xbf16>
    %6 = vector.shape_cast %5 : vector<1x32x4xbf16> to vector<32x4xbf16>
    %cst_6 = arith.constant dense<0.000000e+00> : vector<16x4xf32>
    %7 = tpu.matmul %1, %6, %cst_6 {dimension_numbers = #tpu.dot_dimension_numbers<[1], [0], [0], [1], [0, 0, 1, 1], [], []>} : vector<16x32xbf16>, vector<32x4xbf16>, vector<16x4xf32> -> vector<16x4xf32>
    %8 = arith.index_cast %c0_i32 : i32 to index
    %c0_7 = arith.constant 0 : index
    %c0_8 = arith.constant 0 : index
    %9 = vector.load %arg3[%8, %c0_7, %c0_8] : memref<8x32x4xbf16, #tpu.memory_space<vmem>>, vector<1x32x4xbf16>
    %10 = vector.shape_cast %9 : vector<1x32x4xbf16> to vector<32x4xbf16>
    %cst_9 = arith.constant dense<0.000000e+00> : vector<16x4xf32>
    %11 = tpu.matmul %1, %10, %cst_9 {dimension_numbers = #tpu.dot_dimension_numbers<[1], [0], [0], [1], [0, 0, 1, 1], [], []>} : vector<16x32xbf16>, vector<32x4xbf16>, vector<16x4xf32> -> vector<16x4xf32>
    %12 = arith.index_cast %c0_i32 : i32 to index
    %c0_10 = arith.constant 0 : index
    %c0_11 = arith.constant 0 : index
    %13 = vector.load %arg4[%12, %c0_10, %c0_11] : memref<8x32x4xbf16, #tpu.memory_space<vmem>>, vector<1x32x4xbf16>
    %14 = vector.shape_cast %13 : vector<1x32x4xbf16> to vector<32x4xbf16>
    %cst_12 = arith.constant dense<0.000000e+00> : vector<16x4xf32>
    %15 = tpu.matmul %1, %14, %cst_12 {dimension_numbers = #tpu.dot_dimension_numbers<[1], [0], [0], [1], [0, 0, 1, 1], [], []>} : vector<16x32xbf16>, vector<32x4xbf16>, vector<16x4xf32> -> vector<16x4xf32>
    %16 = vector.shape_cast %7 : vector<16x4xf32> to vector<2x8x4xf32>
    %17 = arith.truncf %16 : vector<2x8x4xf32> to vector<2x8x4xbf16>
    %18 = vector.shape_cast %11 : vector<16x4xf32> to vector<2x8x4xf32>
    %19 = arith.truncf %18 : vector<2x8x4xf32> to vector<2x8x4xbf16>
    %20 = vector.shape_cast %15 : vector<16x4xf32> to vector<2x8x4xf32>
    %21 = arith.truncf %20 : vector<2x8x4xf32> to vector<2x8x4xbf16>
    "tpu.trace_start"() <{level = 10 : i32, message = "bqd,bkd->bqk"}> : () -> ()
    %cst_13 = arith.constant dense<0.000000e+00> : vector<2x8x8xf32>
    %22 = tpu.matmul %17, %19, %cst_13 {dimension_numbers = #tpu.dot_dimension_numbers<[2], [2], [1], [1], [0, 0, 0, 1, 1, 1], [0], [0]>} : vector<2x8x4xbf16>, vector<2x8x4xbf16>, vector<2x8x8xf32> -> vector<2x8x8xf32>
    "tpu.trace_stop"() : () -> ()
    %cst_14 = arith.constant dense<0xFF800000> : vector<2x8xf32>
    %23 = vector.multi_reduction <maximumf>, %22, %cst_14 [2] : vector<2x8x8xf32> to vector<2x8xf32>
    %24 = vector.shape_cast %23 : vector<2x8xf32> to vector<2x8x1xf32>
    %25 = vector.broadcast %24 : vector<2x8x1xf32> to vector<2x8x8xf32>
    %26 = arith.subf %22, %25 : vector<2x8x8xf32>
    %27 = math.exp %26 : vector<2x8x8xf32>
    %cst_15 = arith.constant dense<0.000000e+00> : vector<2x8xf32>
    %28 = vector.multi_reduction <add>, %27, %cst_15 [2] : vector<2x8x8xf32> to vector<2x8xf32>
    %29 = vector.shape_cast %28 : vector<2x8xf32> to vector<2x8x1xf32>
    %30 = arith.truncf %27 : vector<2x8x8xf32> to vector<2x8x8xbf16>
    "tpu.trace_start"() <{level = 10 : i32, message = "bqk,bkd->bqd"}> : () -> ()
    %cst_16 = arith.constant dense<0.000000e+00> : vector<2x8x4xf32>
    %31 = tpu.matmul %30, %21, %cst_16 {dimension_numbers = #tpu.dot_dimension_numbers<[2], [1], [1], [2], [0, 0, 0, 1, 1, 2], [0], [0]>} : vector<2x8x8xbf16>, vector<2x8x4xbf16>, vector<2x8x4xf32> -> vector<2x8x4xf32>
    "tpu.trace_stop"() : () -> ()
    %32 = tpu.reciprocal %29 {approx = true} : vector<2x8x1xf32> -> vector<2x8x1xf32>
    %33 = vector.broadcast %32 : vector<2x8x1xf32> to vector<2x8x4xf32>
    %34 = arith.mulf %31, %33 : vector<2x8x4xf32>
    %c0_17 = arith.constant 0 : index
    %c0_18 = arith.constant 0 : index
    %35 = vector.load %arg8[%c0_17, %c0_18] : memref<16x32xf32, #tpu.memory_space<vmem>>, vector<16x32xf32>
    %36 = vector.shape_cast %34 : vector<2x8x4xf32> to vector<16x4xf32>
    %37 = arith.truncf %36 : vector<16x4xf32> to vector<16x4xbf16>
    %38 = arith.index_cast %c0_i32 : i32 to index
    %c0_19 = arith.constant 0 : index
    %c0_20 = arith.constant 0 : index
    %39 = vector.load %arg5[%38, %c0_19, %c0_20] : memref<8x4x32xbf16, #tpu.memory_space<vmem>>, vector<1x4x32xbf16>
    %40 = vector.shape_cast %39 : vector<1x4x32xbf16> to vector<4x32xbf16>
    %cst_21 = arith.constant dense<0.000000e+00> : vector<16x32xf32>
    %41 = tpu.matmul %37, %40, %cst_21 {dimension_numbers = #tpu.dot_dimension_numbers<[1], [0], [0], [1], [0, 0, 1, 1], [], []>} : vector<16x4xbf16>, vector<4x32xbf16>, vector<16x32xf32> -> vector<16x32xf32>
    %42 = arith.addf %35, %41 : vector<16x32xf32>
    %c0_22 = arith.constant 0 : index
    %c0_23 = arith.constant 0 : index
    %43 = vector.load %arg8[%c0_22, %c0_23] : memref<16x32xf32, #tpu.memory_space<vmem>>, vector<16x32xf32>
    tpu.vector_store %arg8[%c0_22, %c0_23], %42 {strides = array<i32>} : memref<16x32xf32, #tpu.memory_space<vmem>>, vector<16x32xf32>,
    %c1_i32 = arith.constant 1 : i32
    %44 = arith.index_cast %c1_i32 : i32 to index
    %c0_24 = arith.constant 0 : index
    %c0_25 = arith.constant 0 : index
    %45 = vector.load %arg2[%44, %c0_24, %c0_25] : memref<8x32x4xbf16, #tpu.memory_space<vmem>>, vector<1x32x4xbf16>
    %46 = vector.shape_cast %45 : vector<1x32x4xbf16> to vector<32x4xbf16>
    %cst_26 = arith.constant dense<0.000000e+00> : vector<16x4xf32>
    %47 = tpu.matmul %1, %46, %cst_26 {dimension_numbers = #tpu.dot_dimension_numbers<[1], [0], [0], [1], [0, 0, 1, 1], [], []>} : vector<16x32xbf16>, vector<32x4xbf16>, vector<16x4xf32> -> vector<16x4xf32>
    %48 = arith.index_cast %c1_i32 : i32 to index
    %c0_27 = arith.constant 0 : index
    %c0_28 = arith.constant 0 : index
    %49 = vector.load %arg3[%48, %c0_27, %c0_28] : memref<8x32x4xbf16, #tpu.memory_space<vmem>>, vector<1x32x4xbf16>
    %50 = vector.shape_cast %49 : vector<1x32x4xbf16> to vector<32x4xbf16>
    %cst_29 = arith.constant dense<0.000000e+00> : vector<16x4xf32>
    %51 = tpu.matmul %1, %50, %cst_29 {dimension_numbers = #tpu.dot_dimension_numbers<[1], [0], [0], [1], [0, 0, 1, 1], [], []>} : vector<16x32xbf16>, vector<32x4xbf16>, vector<16x4xf32> -> vector<16x4xf32>
    %52 = arith.index_cast %c1_i32 : i32 to index
    %c0_30 = arith.constant 0 : index
    %c0_31 = arith.constant 0 : index
    %53 = vector.load %arg4[%52, %c0_30, %c0_31] : memref<8x32x4xbf16, #tpu.memory_space<vmem>>, vector<1x32x4xbf16>
    %54 = vector.shape_cast %53 : vector<1x32x4xbf16> to vector<32x4xbf16>
    %cst_32 = arith.constant dense<0.000000e+00> : vector<16x4xf32>
    %55 = tpu.matmul %1, %54, %cst_32 {dimension_numbers = #tpu.dot_dimension_numbers<[1], [0], [0], [1], [0, 0, 1, 1], [], []>} : vector<16x32xbf16>, vector<32x4xbf16>, vector<16x4xf32> -> vector<16x4xf32>
    %56 = vector.shape_cast %47 : vector<16x4xf32> to vector<2x8x4xf32>
    %57 = arith.truncf %56 : vector<2x8x4xf32> to vector<2x8x4xbf16>
    %58 = vector.shape_cast %51 : vector<16x4xf32> to vector<2x8x4xf32>
    %59 = arith.truncf %58 : vector<2x8x4xf32> to vector<2x8x4xbf16>
    %60 = vector.shape_cast %55 : vector<16x4xf32> to vector<2x8x4xf32>
    %61 = arith.truncf %60 : vector<2x8x4xf32> to vector<2x8x4xbf16>
    "tpu.trace_start"() <{level = 10 : i32, message = "bqd,bkd->bqk"}> : () -> ()
    %cst_33 = arith.constant dense<0.000000e+00> : vector<2x8x8xf32>
    %62 = tpu.matmul %57, %59, %cst_33 {dimension_numbers = #tpu.dot_dimension_numbers<[2], [2], [1], [1], [0, 0, 0, 1, 1, 1], [0], [0]>} : vector<2x8x4xbf16>, vector<2x8x4xbf16>, vector<2x8x8xf32> -> vector<2x8x8xf32>
    "tpu.trace_stop"() : () -> ()
    %cst_34 = arith.constant dense<0xFF800000> : vector<2x8xf32>
    %63 = vector.multi_reduction <maximumf>, %62, %cst_34 [2] : vector<2x8x8xf32> to vector<2x8xf32>
    %64 = vector.shape_cast %63 : vector<2x8xf32> to vector<2x8x1xf32>
    %65 = vector.broadcast %64 : vector<2x8x1xf32> to vector<2x8x8xf32>
    %66 = arith.subf %62, %65 : vector<2x8x8xf32>
    %67 = math.exp %66 : vector<2x8x8xf32>
    %cst_35 = arith.constant dense<0.000000e+00> : vector<2x8xf32>
    %68 = vector.multi_reduction <add>, %67, %cst_35 [2] : vector<2x8x8xf32> to vector<2x8xf32>
    %69 = vector.shape_cast %68 : vector<2x8xf32> to vector<2x8x1xf32>
    %70 = arith.truncf %67 : vector<2x8x8xf32> to vector<2x8x8xbf16>
    "tpu.trace_start"() <{level = 10 : i32, message = "bqk,bkd->bqd"}> : () -> ()
    %cst_36 = arith.constant dense<0.000000e+00> : vector<2x8x4xf32>
    %71 = tpu.matmul %70, %61, %cst_36 {dimension_numbers = #tpu.dot_dimension_numbers<[2], [1], [1], [2], [0, 0, 0, 1, 1, 2], [0], [0]>} : vector<2x8x8xbf16>, vector<2x8x4xbf16>, vector<2x8x4xf32> -> vector<2x8x4xf32>
    "tpu.trace_stop"() : () -> ()
    %72 = tpu.reciprocal %69 {approx = true} : vector<2x8x1xf32> -> vector<2x8x1xf32>
    %73 = vector.broadcast %72 : vector<2x8x1xf32> to vector<2x8x4xf32>
    %74 = arith.mulf %71, %73 : vector<2x8x4xf32>
    %c0_37 = arith.constant 0 : index
    %c0_38 = arith.constant 0 : index
    %75 = vector.load %arg8[%c0_37, %c0_38] : memref<16x32xf32, #tpu.memory_space<vmem>>, vector<16x32xf32>
    %76 = vector.shape_cast %74 : vector<2x8x4xf32> to vector<16x4xf32>
    %77 = arith.truncf %76 : vector<16x4xf32> to vector<16x4xbf16>
    %78 = arith.index_cast %c1_i32 : i32 to index
    %c0_39 = arith.constant 0 : index
    %c0_40 = arith.constant 0 : index
    %79 = vector.load %arg5[%78, %c0_39, %c0_40] : memref<8x4x32xbf16, #tpu.memory_space<vmem>>, vector<1x4x32xbf16>
    %80 = vector.shape_cast %79 : vector<1x4x32xbf16> to vector<4x32xbf16>
    %cst_41 = arith.constant dense<0.000000e+00> : vector<16x32xf32>
    %81 = tpu.matmul %77, %80, %cst_41 {dimension_numbers = #tpu.dot_dimension_numbers<[1], [0], [0], [1], [0, 0, 1, 1], [], []>} : vector<16x4xbf16>, vector<4x32xbf16>, vector<16x32xf32> -> vector<16x32xf32>
    %82 = arith.addf %75, %81 : vector<16x32xf32>
    %c0_42 = arith.constant 0 : index
    %c0_43 = arith.constant 0 : index
    %83 = vector.load %arg8[%c0_42, %c0_43] : memref<16x32xf32, #tpu.memory_space<vmem>>, vector<16x32xf32>
    tpu.vector_store %arg8[%c0_42, %c0_43], %82 {strides = array<i32>} : memref<16x32xf32, #tpu.memory_space<vmem>>, vector<16x32xf32>,
    %c2_i32 = arith.constant 2 : i32
    %84 = arith.index_cast %c2_i32 : i32 to index
    %c0_44 = arith.constant 0 : index
    %c0_45 = arith.constant 0 : index
    %85 = vector.load %arg2[%84, %c0_44, %c0_45] : memref<8x32x4xbf16, #tpu.memory_space<vmem>>, vector<1x32x4xbf16>
    %86 = vector.shape_cast %85 : vector<1x32x4xbf16> to vector<32x4xbf16>
    %cst_46 = arith.constant dense<0.000000e+00> : vector<16x4xf32>
    %87 = tpu.matmul %1, %86, %cst_46 {dimension_numbers = #tpu.dot_dimension_numbers<[1], [0], [0], [1], [0, 0, 1, 1], [], []>} : vector<16x32xbf16>, vector<32x4xbf16>, vector<16x4xf32> -> vector<16x4xf32>
    %88 = arith.index_cast %c2_i32 : i32 to index
    %c0_47 = arith.constant 0 : index
    %c0_48 = arith.constant 0 : index
    %89 = vector.load %arg3[%88, %c0_47, %c0_48] : memref<8x32x4xbf16, #tpu.memory_space<vmem>>, vector<1x32x4xbf16>
    %90 = vector.shape_cast %89 : vector<1x32x4xbf16> to vector<32x4xbf16>
    %cst_49 = arith.constant dense<0.000000e+00> : vector<16x4xf32>
    %91 = tpu.matmul %1, %90, %cst_49 {dimension_numbers = #tpu.dot_dimension_numbers<[1], [0], [0], [1], [0, 0, 1, 1], [], []>} : vector<16x32xbf16>, vector<32x4xbf16>, vector<16x4xf32> -> vector<16x4xf32>
    %92 = arith.index_cast %c2_i32 : i32 to index
    %c0_50 = arith.constant 0 : index
    %c0_51 = arith.constant 0 : index
    %93 = vector.load %arg4[%92, %c0_50, %c0_51] : memref<8x32x4xbf16, #tpu.memory_space<vmem>>, vector<1x32x4xbf16>
    %94 = vector.shape_cast %93 : vector<1x32x4xbf16> to vector<32x4xbf16>
    %cst_52 = arith.constant dense<0.000000e+00> : vector<16x4xf32>
    %95 = tpu.matmul %1, %94, %cst_52 {dimension_numbers = #tpu.dot_dimension_numbers<[1], [0], [0], [1], [0, 0, 1, 1], [], []>} : vector<16x32xbf16>, vector<32x4xbf16>, vector<16x4xf32> -> vector<16x4xf32>
    %96 = vector.shape_cast %87 : vector<16x4xf32> to vector<2x8x4xf32>
    %97 = arith.truncf %96 : vector<2x8x4xf32> to vector<2x8x4xbf16>
    %98 = vector.shape_cast %91 : vector<16x4xf32> to vector<2x8x4xf32>
    %99 = arith.truncf %98 : vector<2x8x4xf32> to vector<2x8x4xbf16>
    %100 = vector.shape_cast %95 : vector<16x4xf32> to vector<2x8x4xf32>
    %101 = arith.truncf %100 : vector<2x8x4xf32> to vector<2x8x4xbf16>
    "tpu.trace_start"() <{level = 10 : i32, message = "bqd,bkd->bqk"}> : () -> ()
    %cst_53 = arith.constant dense<0.000000e+00> : vector<2x8x8xf32>
    %102 = tpu.matmul %97, %99, %cst_53 {dimension_numbers = #tpu.dot_dimension_numbers<[2], [2], [1], [1], [0, 0, 0, 1, 1, 1], [0], [0]>} : vector<2x8x4xbf16>, vector<2x8x4xbf16>, vector<2x8x8xf32> -> vector<2x8x8xf32>
    "tpu.trace_stop"() : () -> ()
    %cst_54 = arith.constant dense<0xFF800000> : vector<2x8xf32>
    %103 = vector.multi_reduction <maximumf>, %102, %cst_54 [2] : vector<2x8x8xf32> to vector<2x8xf32>
    %104 = vector.shape_cast %103 : vector<2x8xf32> to vector<2x8x1xf32>
    %105 = vector.broadcast %104 : vector<2x8x1xf32> to vector<2x8x8xf32>
    %106 = arith.subf %102, %105 : vector<2x8x8xf32>
    %107 = math.exp %106 : vector<2x8x8xf32>
    %cst_55 = arith.constant dense<0.000000e+00> : vector<2x8xf32>
    %108 = vector.multi_reduction <add>, %107, %cst_55 [2] : vector<2x8x8xf32> to vector<2x8xf32>
    %109 = vector.shape_cast %108 : vector<2x8xf32> to vector<2x8x1xf32>
    %110 = arith.truncf %107 : vector<2x8x8xf32> to vector<2x8x8xbf16>
    "tpu.trace_start"() <{level = 10 : i32, message = "bqk,bkd->bqd"}> : () -> ()
    %cst_56 = arith.constant dense<0.000000e+00> : vector<2x8x4xf32>
    %111 = tpu.matmul %110, %101, %cst_56 {dimension_numbers = #tpu.dot_dimension_numbers<[2], [1], [1], [2], [0, 0, 0, 1, 1, 2], [0], [0]>} : vector<2x8x8xbf16>, vector<2x8x4xbf16>, vector<2x8x4xf32> -> vector<2x8x4xf32>
    "tpu.trace_stop"() : () -> ()
    %112 = tpu.reciprocal %109 {approx = true} : vector<2x8x1xf32> -> vector<2x8x1xf32>
    %113 = vector.broadcast %112 : vector<2x8x1xf32> to vector<2x8x4xf32>
    %114 = arith.mulf %111, %113 : vector<2x8x4xf32>
    %c0_57 = arith.constant 0 : index
    %c0_58 = arith.constant 0 : index
    %115 = vector.load %arg8[%c0_57, %c0_58] : memref<16x32xf32, #tpu.memory_space<vmem>>, vector<16x32xf32>
    %116 = vector.shape_cast %114 : vector<2x8x4xf32> to vector<16x4xf32>
    %117 = arith.truncf %116 : vector<16x4xf32> to vector<16x4xbf16>
    %118 = arith.index_cast %c2_i32 : i32 to index
    %c0_59 = arith.constant 0 : index
    %c0_60 = arith.constant 0 : index
    %119 = vector.load %arg5[%118, %c0_59, %c0_60] : memref<8x4x32xbf16, #tpu.memory_space<vmem>>, vector<1x4x32xbf16>
    %120 = vector.shape_cast %119 : vector<1x4x32xbf16> to vector<4x32xbf16>
    %cst_61 = arith.constant dense<0.000000e+00> : vector<16x32xf32>
    %121 = tpu.matmul %117, %120, %cst_61 {dimension_numbers = #tpu.dot_dimension_numbers<[1], [0], [0], [1], [0, 0, 1, 1], [], []>} : vector<16x4xbf16>, vector<4x32xbf16>, vector<16x32xf32> -> vector<16x32xf32>
    %122 = arith.addf %115, %121 : vector<16x32xf32>
    %c0_62 = arith.constant 0 : index
    %c0_63 = arith.constant 0 : index
    %123 = vector.load %arg8[%c0_62, %c0_63] : memref<16x32xf32, #tpu.memory_space<vmem>>, vector<16x32xf32>
    tpu.vector_store %arg8[%c0_62, %c0_63], %122 {strides = array<i32>} : memref<16x32xf32, #tpu.memory_space<vmem>>, vector<16x32xf32>,
    %c3_i32 = arith.constant 3 : i32
    %124 = arith.index_cast %c3_i32 : i32 to index
    %c0_64 = arith.constant 0 : index
    %c0_65 = arith.constant 0 : index
    %125 = vector.load %arg2[%124, %c0_64, %c0_65] : memref<8x32x4xbf16, #tpu.memory_space<vmem>>, vector<1x32x4xbf16>
    %126 = vector.shape_cast %125 : vector<1x32x4xbf16> to vector<32x4xbf16>
    %cst_66 = arith.constant dense<0.000000e+00> : vector<16x4xf32>
    %127 = tpu.matmul %1, %126, %cst_66 {dimension_numbers = #tpu.dot_dimension_numbers<[1], [0], [0], [1], [0, 0, 1, 1], [], []>} : vector<16x32xbf16>, vector<32x4xbf16>, vector<16x4xf32> -> vector<16x4xf32>
    %128 = arith.index_cast %c3_i32 : i32 to index
    %c0_67 = arith.constant 0 : index
    %c0_68 = arith.constant 0 : index
    %129 = vector.load %arg3[%128, %c0_67, %c0_68] : memref<8x32x4xbf16, #tpu.memory_space<vmem>>, vector<1x32x4xbf16>
    %130 = vector.shape_cast %129 : vector<1x32x4xbf16> to vector<32x4xbf16>
    %cst_69 = arith.constant dense<0.000000e+00> : vector<16x4xf32>
    %131 = tpu.matmul %1, %130, %cst_69 {dimension_numbers = #tpu.dot_dimension_numbers<[1], [0], [0], [1], [0, 0, 1, 1], [], []>} : vector<16x32xbf16>, vector<32x4xbf16>, vector<16x4xf32> -> vector<16x4xf32>
    %132 = arith.index_cast %c3_i32 : i32 to index
    %c0_70 = arith.constant 0 : index
    %c0_71 = arith.constant 0 : index
    %133 = vector.load %arg4[%132, %c0_70, %c0_71] : memref<8x32x4xbf16, #tpu.memory_space<vmem>>, vector<1x32x4xbf16>
    %134 = vector.shape_cast %133 : vector<1x32x4xbf16> to vector<32x4xbf16>
    %cst_72 = arith.constant dense<0.000000e+00> : vector<16x4xf32>
    %135 = tpu.matmul %1, %134, %cst_72 {dimension_numbers = #tpu.dot_dimension_numbers<[1], [0], [0], [1], [0, 0, 1, 1], [], []>} : vector<16x32xbf16>, vector<32x4xbf16>, vector<16x4xf32> -> vector<16x4xf32>
    %136 = vector.shape_cast %127 : vector<16x4xf32> to vector<2x8x4xf32>
    %137 = arith.truncf %136 : vector<2x8x4xf32> to vector<2x8x4xbf16>
    %138 = vector.shape_cast %131 : vector<16x4xf32> to vector<2x8x4xf32>
    %139 = arith.truncf %138 : vector<2x8x4xf32> to vector<2x8x4xbf16>
    %140 = vector.shape_cast %135 : vector<16x4xf32> to vector<2x8x4xf32>
    %141 = arith.truncf %140 : vector<2x8x4xf32> to vector<2x8x4xbf16>
    "tpu.trace_start"() <{level = 10 : i32, message = "bqd,bkd->bqk"}> : () -> ()
    %cst_73 = arith.constant dense<0.000000e+00> : vector<2x8x8xf32>
    %142 = tpu.matmul %137, %139, %cst_73 {dimension_numbers = #tpu.dot_dimension_numbers<[2], [2], [1], [1], [0, 0, 0, 1, 1, 1], [0], [0]>} : vector<2x8x4xbf16>, vector<2x8x4xbf16>, vector<2x8x8xf32> -> vector<2x8x8xf32>
    "tpu.trace_stop"() : () -> ()
    %cst_74 = arith.constant dense<0xFF800000> : vector<2x8xf32>
    %143 = vector.multi_reduction <maximumf>, %142, %cst_74 [2] : vector<2x8x8xf32> to vector<2x8xf32>
    %144 = vector.shape_cast %143 : vector<2x8xf32> to vector<2x8x1xf32>
    %145 = vector.broadcast %144 : vector<2x8x1xf32> to vector<2x8x8xf32>
    %146 = arith.subf %142, %145 : vector<2x8x8xf32>
    %147 = math.exp %146 : vector<2x8x8xf32>
    %cst_75 = arith.constant dense<0.000000e+00> : vector<2x8xf32>
    %148 = vector.multi_reduction <add>, %147, %cst_75 [2] : vector<2x8x8xf32> to vector<2x8xf32>
    %149 = vector.shape_cast %148 : vector<2x8xf32> to vector<2x8x1xf32>
    %150 = arith.truncf %147 : vector<2x8x8xf32> to vector<2x8x8xbf16>
    "tpu.trace_start"() <{level = 10 : i32, message = "bqk,bkd->bqd"}> : () -> ()
    %cst_76 = arith.constant dense<0.000000e+00> : vector<2x8x4xf32>
    %151 = tpu.matmul %150, %141, %cst_76 {dimension_numbers = #tpu.dot_dimension_numbers<[2], [1], [1], [2], [0, 0, 0, 1, 1, 2], [0], [0]>} : vector<2x8x8xbf16>, vector<2x8x4xbf16>, vector<2x8x4xf32> -> vector<2x8x4xf32>
    "tpu.trace_stop"() : () -> ()
    %152 = tpu.reciprocal %149 {approx = true} : vector<2x8x1xf32> -> vector<2x8x1xf32>
    %153 = vector.broadcast %152 : vector<2x8x1xf32> to vector<2x8x4xf32>
    %154 = arith.mulf %151, %153 : vector<2x8x4xf32>
    %c0_77 = arith.constant 0 : index
    %c0_78 = arith.constant 0 : index
    %155 = vector.load %arg8[%c0_77, %c0_78] : memref<16x32xf32, #tpu.memory_space<vmem>>, vector<16x32xf32>
    %156 = vector.shape_cast %154 : vector<2x8x4xf32> to vector<16x4xf32>
    %157 = arith.truncf %156 : vector<16x4xf32> to vector<16x4xbf16>
    %158 = arith.index_cast %c3_i32 : i32 to index
    %c0_79 = arith.constant 0 : index
    %c0_80 = arith.constant 0 : index
    %159 = vector.load %arg5[%158, %c0_79, %c0_80] : memref<8x4x32xbf16, #tpu.memory_space<vmem>>, vector<1x4x32xbf16>
    %160 = vector.shape_cast %159 : vector<1x4x32xbf16> to vector<4x32xbf16>
    %cst_81 = arith.constant dense<0.000000e+00> : vector<16x32xf32>
    %161 = tpu.matmul %157, %160, %cst_81 {dimension_numbers = #tpu.dot_dimension_numbers<[1], [0], [0], [1], [0, 0, 1, 1], [], []>} : vector<16x4xbf16>, vector<4x32xbf16>, vector<16x32xf32> -> vector<16x32xf32>
    %162 = arith.addf %155, %161 : vector<16x32xf32>
    %c0_82 = arith.constant 0 : index
    %c0_83 = arith.constant 0 : index
    %163 = vector.load %arg8[%c0_82, %c0_83] : memref<16x32xf32, #tpu.memory_space<vmem>>, vector<16x32xf32>
    tpu.vector_store %arg8[%c0_82, %c0_83], %162 {strides = array<i32>} : memref<16x32xf32, #tpu.memory_space<vmem>>, vector<16x32xf32>,
    %c4_i32 = arith.constant 4 : i32
    %164 = arith.index_cast %c4_i32 : i32 to index
    %c0_84 = arith.constant 0 : index
    %c0_85 = arith.constant 0 : index
    %165 = vector.load %arg2[%164, %c0_84, %c0_85] : memref<8x32x4xbf16, #tpu.memory_space<vmem>>, vector<1x32x4xbf16>
    %166 = vector.shape_cast %165 : vector<1x32x4xbf16> to vector<32x4xbf16>
    %cst_86 = arith.constant dense<0.000000e+00> : vector<16x4xf32>
    %167 = tpu.matmul %1, %166, %cst_86 {dimension_numbers = #tpu.dot_dimension_numbers<[1], [0], [0], [1], [0, 0, 1, 1], [], []>} : vector<16x32xbf16>, vector<32x4xbf16>, vector<16x4xf32> -> vector<16x4xf32>
    %168 = arith.index_cast %c4_i32 : i32 to index
    %c0_87 = arith.constant 0 : index
    %c0_88 = arith.constant 0 : index
    %169 = vector.load %arg3[%168, %c0_87, %c0_88] : memref<8x32x4xbf16, #tpu.memory_space<vmem>>, vector<1x32x4xbf16>
    %170 = vector.shape_cast %169 : vector<1x32x4xbf16> to vector<32x4xbf16>
    %cst_89 = arith.constant dense<0.000000e+00> : vector<16x4xf32>
    %171 = tpu.matmul %1, %170, %cst_89 {dimension_numbers = #tpu.dot_dimension_numbers<[1], [0], [0], [1], [0, 0, 1, 1], [], []>} : vector<16x32xbf16>, vector<32x4xbf16>, vector<16x4xf32> -> vector<16x4xf32>
    %172 = arith.index_cast %c4_i32 : i32 to index
    %c0_90 = arith.constant 0 : index
    %c0_91 = arith.constant 0 : index
    %173 = vector.load %arg4[%172, %c0_90, %c0_91] : memref<8x32x4xbf16, #tpu.memory_space<vmem>>, vector<1x32x4xbf16>
    %174 = vector.shape_cast %173 : vector<1x32x4xbf16> to vector<32x4xbf16>
    %cst_92 = arith.constant dense<0.000000e+00> : vector<16x4xf32>
    %175 = tpu.matmul %1, %174, %cst_92 {dimension_numbers = #tpu.dot_dimension_numbers<[1], [0], [0], [1], [0, 0, 1, 1], [], []>} : vector<16x32xbf16>, vector<32x4xbf16>, vector<16x4xf32> -> vector<16x4xf32>
    %176 = vector.shape_cast %167 : vector<16x4xf32> to vector<2x8x4xf32>
    %177 = arith.truncf %176 : vector<2x8x4xf32> to vector<2x8x4xbf16>
    %178 = vector.shape_cast %171 : vector<16x4xf32> to vector<2x8x4xf32>
    %179 = arith.truncf %178 : vector<2x8x4xf32> to vector<2x8x4xbf16>
    %180 = vector.shape_cast %175 : vector<16x4xf32> to vector<2x8x4xf32>
    %181 = arith.truncf %180 : vector<2x8x4xf32> to vector<2x8x4xbf16>
    "tpu.trace_start"() <{level = 10 : i32, message = "bqd,bkd->bqk"}> : () -> ()
    %cst_93 = arith.constant dense<0.000000e+00> : vector<2x8x8xf32>
    %182 = tpu.matmul %177, %179, %cst_93 {dimension_numbers = #tpu.dot_dimension_numbers<[2], [2], [1], [1], [0, 0, 0, 1, 1, 1], [0], [0]>} : vector<2x8x4xbf16>, vector<2x8x4xbf16>, vector<2x8x8xf32> -> vector<2x8x8xf32>
    "tpu.trace_stop"() : () -> ()
    %cst_94 = arith.constant dense<0xFF800000> : vector<2x8xf32>
    %183 = vector.multi_reduction <maximumf>, %182, %cst_94 [2] : vector<2x8x8xf32> to vector<2x8xf32>
    %184 = vector.shape_cast %183 : vector<2x8xf32> to vector<2x8x1xf32>
    %185 = vector.broadcast %184 : vector<2x8x1xf32> to vector<2x8x8xf32>
    %186 = arith.subf %182, %185 : vector<2x8x8xf32>
    %187 = math.exp %186 : vector<2x8x8xf32>
    %cst_95 = arith.constant dense<0.000000e+00> : vector<2x8xf32>
    %188 = vector.multi_reduction <add>, %187, %cst_95 [2] : vector<2x8x8xf32> to vector<2x8xf32>
    %189 = vector.shape_cast %188 : vector<2x8xf32> to vector<2x8x1xf32>
    %190 = arith.truncf %187 : vector<2x8x8xf32> to vector<2x8x8xbf16>
    "tpu.trace_start"() <{level = 10 : i32, message = "bqk,bkd->bqd"}> : () -> ()
    %cst_96 = arith.constant dense<0.000000e+00> : vector<2x8x4xf32>
    %191 = tpu.matmul %190, %181, %cst_96 {dimension_numbers = #tpu.dot_dimension_numbers<[2], [1], [1], [2], [0, 0, 0, 1, 1, 2], [0], [0]>} : vector<2x8x8xbf16>, vector<2x8x4xbf16>, vector<2x8x4xf32> -> vector<2x8x4xf32>
    "tpu.trace_stop"() : () -> ()
    %192 = tpu.reciprocal %189 {approx = true} : vector<2x8x1xf32> -> vector<2x8x1xf32>
    %193 = vector.broadcast %192 : vector<2x8x1xf32> to vector<2x8x4xf32>
    %194 = arith.mulf %191, %193 : vector<2x8x4xf32>
    %c0_97 = arith.constant 0 : index
    %c0_98 = arith.constant 0 : index
    %195 = vector.load %arg8[%c0_97, %c0_98] : memref<16x32xf32, #tpu.memory_space<vmem>>, vector<16x32xf32>
    %196 = vector.shape_cast %194 : vector<2x8x4xf32> to vector<16x4xf32>
    %197 = arith.truncf %196 : vector<16x4xf32> to vector<16x4xbf16>
    %198 = arith.index_cast %c4_i32 : i32 to index
    %c0_99 = arith.constant 0 : index
    %c0_100 = arith.constant 0 : index
    %199 = vector.load %arg5[%198, %c0_99, %c0_100] : memref<8x4x32xbf16, #tpu.memory_space<vmem>>, vector<1x4x32xbf16>
    %200 = vector.shape_cast %199 : vector<1x4x32xbf16> to vector<4x32xbf16>
    %cst_101 = arith.constant dense<0.000000e+00> : vector<16x32xf32>
    %201 = tpu.matmul %197, %200, %cst_101 {dimension_numbers = #tpu.dot_dimension_numbers<[1], [0], [0], [1], [0, 0, 1, 1], [], []>} : vector<16x4xbf16>, vector<4x32xbf16>, vector<16x32xf32> -> vector<16x32xf32>
    %202 = arith.addf %195, %201 : vector<16x32xf32>
    %c0_102 = arith.constant 0 : index
    %c0_103 = arith.constant 0 : index
    %203 = vector.load %arg8[%c0_102, %c0_103] : memref<16x32xf32, #tpu.memory_space<vmem>>, vector<16x32xf32>
    tpu.vector_store %arg8[%c0_102, %c0_103], %202 {strides = array<i32>} : memref<16x32xf32, #tpu.memory_space<vmem>>, vector<16x32xf32>,
    %c5_i32 = arith.constant 5 : i32
    %204 = arith.index_cast %c5_i32 : i32 to index
    %c0_104 = arith.constant 0 : index
    %c0_105 = arith.constant 0 : index
    %205 = vector.load %arg2[%204, %c0_104, %c0_105] : memref<8x32x4xbf16, #tpu.memory_space<vmem>>, vector<1x32x4xbf16>
    %206 = vector.shape_cast %205 : vector<1x32x4xbf16> to vector<32x4xbf16>
    %cst_106 = arith.constant dense<0.000000e+00> : vector<16x4xf32>
    %207 = tpu.matmul %1, %206, %cst_106 {dimension_numbers = #tpu.dot_dimension_numbers<[1], [0], [0], [1], [0, 0, 1, 1], [], []>} : vector<16x32xbf16>, vector<32x4xbf16>, vector<16x4xf32> -> vector<16x4xf32>
    %208 = arith.index_cast %c5_i32 : i32 to index
    %c0_107 = arith.constant 0 : index
    %c0_108 = arith.constant 0 : index
    %209 = vector.load %arg3[%208, %c0_107, %c0_108] : memref<8x32x4xbf16, #tpu.memory_space<vmem>>, vector<1x32x4xbf16>
    %210 = vector.shape_cast %209 : vector<1x32x4xbf16> to vector<32x4xbf16>
    %cst_109 = arith.constant dense<0.000000e+00> : vector<16x4xf32>
    %211 = tpu.matmul %1, %210, %cst_109 {dimension_numbers = #tpu.dot_dimension_numbers<[1], [0], [0], [1], [0, 0, 1, 1], [], []>} : vector<16x32xbf16>, vector<32x4xbf16>, vector<16x4xf32> -> vector<16x4xf32>
    %212 = arith.index_cast %c5_i32 : i32 to index
    %c0_110 = arith.constant 0 : index
    %c0_111 = arith.constant 0 : index
    %213 = vector.load %arg4[%212, %c0_110, %c0_111] : memref<8x32x4xbf16, #tpu.memory_space<vmem>>, vector<1x32x4xbf16>
    %214 = vector.shape_cast %213 : vector<1x32x4xbf16> to vector<32x4xbf16>
    %cst_112 = arith.constant dense<0.000000e+00> : vector<16x4xf32>
    %215 = tpu.matmul %1, %214, %cst_112 {dimension_numbers = #tpu.dot_dimension_numbers<[1], [0], [0], [1], [0, 0, 1, 1], [], []>} : vector<16x32xbf16>, vector<32x4xbf16>, vector<16x4xf32> -> vector<16x4xf32>
    %216 = vector.shape_cast %207 : vector<16x4xf32> to vector<2x8x4xf32>
    %217 = arith.truncf %216 : vector<2x8x4xf32> to vector<2x8x4xbf16>
    %218 = vector.shape_cast %211 : vector<16x4xf32> to vector<2x8x4xf32>
    %219 = arith.truncf %218 : vector<2x8x4xf32> to vector<2x8x4xbf16>
    %220 = vector.shape_cast %215 : vector<16x4xf32> to vector<2x8x4xf32>
    %221 = arith.truncf %220 : vector<2x8x4xf32> to vector<2x8x4xbf16>
    "tpu.trace_start"() <{level = 10 : i32, message = "bqd,bkd->bqk"}> : () -> ()
    %cst_113 = arith.constant dense<0.000000e+00> : vector<2x8x8xf32>
    %222 = tpu.matmul %217, %219, %cst_113 {dimension_numbers = #tpu.dot_dimension_numbers<[2], [2], [1], [1], [0, 0, 0, 1, 1, 1], [0], [0]>} : vector<2x8x4xbf16>, vector<2x8x4xbf16>, vector<2x8x8xf32> -> vector<2x8x8xf32>
    "tpu.trace_stop"() : () -> ()
    %cst_114 = arith.constant dense<0xFF800000> : vector<2x8xf32>
    %223 = vector.multi_reduction <maximumf>, %222, %cst_114 [2] : vector<2x8x8xf32> to vector<2x8xf32>
    %224 = vector.shape_cast %223 : vector<2x8xf32> to vector<2x8x1xf32>
    %225 = vector.broadcast %224 : vector<2x8x1xf32> to vector<2x8x8xf32>
    %226 = arith.subf %222, %225 : vector<2x8x8xf32>
    %227 = math.exp %226 : vector<2x8x8xf32>
    %cst_115 = arith.constant dense<0.000000e+00> : vector<2x8xf32>
    %228 = vector.multi_reduction <add>, %227, %cst_115 [2] : vector<2x8x8xf32> to vector<2x8xf32>
    %229 = vector.shape_cast %228 : vector<2x8xf32> to vector<2x8x1xf32>
    %230 = arith.truncf %227 : vector<2x8x8xf32> to vector<2x8x8xbf16>
    "tpu.trace_start"() <{level = 10 : i32, message = "bqk,bkd->bqd"}> : () -> ()
    %cst_116 = arith.constant dense<0.000000e+00> : vector<2x8x4xf32>
    %231 = tpu.matmul %230, %221, %cst_116 {dimension_numbers = #tpu.dot_dimension_numbers<[2], [1], [1], [2], [0, 0, 0, 1, 1, 2], [0], [0]>} : vector<2x8x8xbf16>, vector<2x8x4xbf16>, vector<2x8x4xf32> -> vector<2x8x4xf32>
    "tpu.trace_stop"() : () -> ()
    %232 = tpu.reciprocal %229 {approx = true} : vector<2x8x1xf32> -> vector<2x8x1xf32>
    %233 = vector.broadcast %232 : vector<2x8x1xf32> to vector<2x8x4xf32>
    %234 = arith.mulf %231, %233 : vector<2x8x4xf32>
    %c0_117 = arith.constant 0 : index
    %c0_118 = arith.constant 0 : index
    %235 = vector.load %arg8[%c0_117, %c0_118] : memref<16x32xf32, #tpu.memory_space<vmem>>, vector<16x32xf32>
    %236 = vector.shape_cast %234 : vector<2x8x4xf32> to vector<16x4xf32>
    %237 = arith.truncf %236 : vector<16x4xf32> to vector<16x4xbf16>
    %238 = arith.index_cast %c5_i32 : i32 to index
    %c0_119 = arith.constant 0 : index
    %c0_120 = arith.constant 0 : index
    %239 = vector.load %arg5[%238, %c0_119, %c0_120] : memref<8x4x32xbf16, #tpu.memory_space<vmem>>, vector<1x4x32xbf16>
    %240 = vector.shape_cast %239 : vector<1x4x32xbf16> to vector<4x32xbf16>
    %cst_121 = arith.constant dense<0.000000e+00> : vector<16x32xf32>
    %241 = tpu.matmul %237, %240, %cst_121 {dimension_numbers = #tpu.dot_dimension_numbers<[1], [0], [0], [1], [0, 0, 1, 1], [], []>} : vector<16x4xbf16>, vector<4x32xbf16>, vector<16x32xf32> -> vector<16x32xf32>
    %242 = arith.addf %235, %241 : vector<16x32xf32>
    %c0_122 = arith.constant 0 : index
    %c0_123 = arith.constant 0 : index
    %243 = vector.load %arg8[%c0_122, %c0_123] : memref<16x32xf32, #tpu.memory_space<vmem>>, vector<16x32xf32>
    tpu.vector_store %arg8[%c0_122, %c0_123], %242 {strides = array<i32>} : memref<16x32xf32, #tpu.memory_space<vmem>>, vector<16x32xf32>,
    %c6_i32 = arith.constant 6 : i32
    %244 = arith.index_cast %c6_i32 : i32 to index
    %c0_124 = arith.constant 0 : index
    %c0_125 = arith.constant 0 : index
    %245 = vector.load %arg2[%244, %c0_124, %c0_125] : memref<8x32x4xbf16, #tpu.memory_space<vmem>>, vector<1x32x4xbf16>
    %246 = vector.shape_cast %245 : vector<1x32x4xbf16> to vector<32x4xbf16>
    %cst_126 = arith.constant dense<0.000000e+00> : vector<16x4xf32>
    %247 = tpu.matmul %1, %246, %cst_126 {dimension_numbers = #tpu.dot_dimension_numbers<[1], [0], [0], [1], [0, 0, 1, 1], [], []>} : vector<16x32xbf16>, vector<32x4xbf16>, vector<16x4xf32> -> vector<16x4xf32>
    %248 = arith.index_cast %c6_i32 : i32 to index
    %c0_127 = arith.constant 0 : index
    %c0_128 = arith.constant 0 : index
    %249 = vector.load %arg3[%248, %c0_127, %c0_128] : memref<8x32x4xbf16, #tpu.memory_space<vmem>>, vector<1x32x4xbf16>
    %250 = vector.shape_cast %249 : vector<1x32x4xbf16> to vector<32x4xbf16>
    %cst_129 = arith.constant dense<0.000000e+00> : vector<16x4xf32>
    %251 = tpu.matmul %1, %250, %cst_129 {dimension_numbers = #tpu.dot_dimension_numbers<[1], [0], [0], [1], [0, 0, 1, 1], [], []>} : vector<16x32xbf16>, vector<32x4xbf16>, vector<16x4xf32> -> vector<16x4xf32>
    %252 = arith.index_cast %c6_i32 : i32 to index
    %c0_130 = arith.constant 0 : index
    %c0_131 = arith.constant 0 : index
    %253 = vector.load %arg4[%252, %c0_130, %c0_131] : memref<8x32x4xbf16, #tpu.memory_space<vmem>>, vector<1x32x4xbf16>
    %254 = vector.shape_cast %253 : vector<1x32x4xbf16> to vector<32x4xbf16>
    %cst_132 = arith.constant dense<0.000000e+00> : vector<16x4xf32>
    %255 = tpu.matmul %1, %254, %cst_132 {dimension_numbers = #tpu.dot_dimension_numbers<[1], [0], [0], [1], [0, 0, 1, 1], [], []>} : vector<16x32xbf16>, vector<32x4xbf16>, vector<16x4xf32> -> vector<16x4xf32>
    %256 = vector.shape_cast %247 : vector<16x4xf32> to vector<2x8x4xf32>
    %257 = arith.truncf %256 : vector<2x8x4xf32> to vector<2x8x4xbf16>
    %258 = vector.shape_cast %251 : vector<16x4xf32> to vector<2x8x4xf32>
    %259 = arith.truncf %258 : vector<2x8x4xf32> to vector<2x8x4xbf16>
    %260 = vector.shape_cast %255 : vector<16x4xf32> to vector<2x8x4xf32>
    %261 = arith.truncf %260 : vector<2x8x4xf32> to vector<2x8x4xbf16>
    "tpu.trace_start"() <{level = 10 : i32, message = "bqd,bkd->bqk"}> : () -> ()
    %cst_133 = arith.constant dense<0.000000e+00> : vector<2x8x8xf32>
    %262 = tpu.matmul %257, %259, %cst_133 {dimension_numbers = #tpu.dot_dimension_numbers<[2], [2], [1], [1], [0, 0, 0, 1, 1, 1], [0], [0]>} : vector<2x8x4xbf16>, vector<2x8x4xbf16>, vector<2x8x8xf32> -> vector<2x8x8xf32>
    "tpu.trace_stop"() : () -> ()
    %cst_134 = arith.constant dense<0xFF800000> : vector<2x8xf32>
    %263 = vector.multi_reduction <maximumf>, %262, %cst_134 [2] : vector<2x8x8xf32> to vector<2x8xf32>
    %264 = vector.shape_cast %263 : vector<2x8xf32> to vector<2x8x1xf32>
    %265 = vector.broadcast %264 : vector<2x8x1xf32> to vector<2x8x8xf32>
    %266 = arith.subf %262, %265 : vector<2x8x8xf32>
    %267 = math.exp %266 : vector<2x8x8xf32>
    %cst_135 = arith.constant dense<0.000000e+00> : vector<2x8xf32>
    %268 = vector.multi_reduction <add>, %267, %cst_135 [2] : vector<2x8x8xf32> to vector<2x8xf32>
    %269 = vector.shape_cast %268 : vector<2x8xf32> to vector<2x8x1xf32>
    %270 = arith.truncf %267 : vector<2x8x8xf32> to vector<2x8x8xbf16>
    "tpu.trace_start"() <{level = 10 : i32, message = "bqk,bkd->bqd"}> : () -> ()
    %cst_136 = arith.constant dense<0.000000e+00> : vector<2x8x4xf32>
    %271 = tpu.matmul %270, %261, %cst_136 {dimension_numbers = #tpu.dot_dimension_numbers<[2], [1], [1], [2], [0, 0, 0, 1, 1, 2], [0], [0]>} : vector<2x8x8xbf16>, vector<2x8x4xbf16>, vector<2x8x4xf32> -> vector<2x8x4xf32>
    "tpu.trace_stop"() : () -> ()
    %272 = tpu.reciprocal %269 {approx = true} : vector<2x8x1xf32> -> vector<2x8x1xf32>
    %273 = vector.broadcast %272 : vector<2x8x1xf32> to vector<2x8x4xf32>
    %274 = arith.mulf %271, %273 : vector<2x8x4xf32>
    %c0_137 = arith.constant 0 : index
    %c0_138 = arith.constant 0 : index
    %275 = vector.load %arg8[%c0_137, %c0_138] : memref<16x32xf32, #tpu.memory_space<vmem>>, vector<16x32xf32>
    %276 = vector.shape_cast %274 : vector<2x8x4xf32> to vector<16x4xf32>
    %277 = arith.truncf %276 : vector<16x4xf32> to vector<16x4xbf16>
    %278 = arith.index_cast %c6_i32 : i32 to index
    %c0_139 = arith.constant 0 : index
    %c0_140 = arith.constant 0 : index
    %279 = vector.load %arg5[%278, %c0_139, %c0_140] : memref<8x4x32xbf16, #tpu.memory_space<vmem>>, vector<1x4x32xbf16>
    %280 = vector.shape_cast %279 : vector<1x4x32xbf16> to vector<4x32xbf16>
    %cst_141 = arith.constant dense<0.000000e+00> : vector<16x32xf32>
    %281 = tpu.matmul %277, %280, %cst_141 {dimension_numbers = #tpu.dot_dimension_numbers<[1], [0], [0], [1], [0, 0, 1, 1], [], []>} : vector<16x4xbf16>, vector<4x32xbf16>, vector<16x32xf32> -> vector<16x32xf32>
    %282 = arith.addf %275, %281 : vector<16x32xf32>
    %c0_142 = arith.constant 0 : index
    %c0_143 = arith.constant 0 : index
    %283 = vector.load %arg8[%c0_142, %c0_143] : memref<16x32xf32, #tpu.memory_space<vmem>>, vector<16x32xf32>
    tpu.vector_store %arg8[%c0_142, %c0_143], %282 {strides = array<i32>} : memref<16x32xf32, #tpu.memory_space<vmem>>, vector<16x32xf32>,
    %c7_i32 = arith.constant 7 : i32
    %284 = arith.index_cast %c7_i32 : i32 to index
    %c0_144 = arith.constant 0 : index
    %c0_145 = arith.constant 0 : index
    %285 = vector.load %arg2[%284, %c0_144, %c0_145] : memref<8x32x4xbf16, #tpu.memory_space<vmem>>, vector<1x32x4xbf16>
    %286 = vector.shape_cast %285 : vector<1x32x4xbf16> to vector<32x4xbf16>
    %cst_146 = arith.constant dense<0.000000e+00> : vector<16x4xf32>
    %287 = tpu.matmul %1, %286, %cst_146 {dimension_numbers = #tpu.dot_dimension_numbers<[1], [0], [0], [1], [0, 0, 1, 1], [], []>} : vector<16x32xbf16>, vector<32x4xbf16>, vector<16x4xf32> -> vector<16x4xf32>
    %288 = arith.index_cast %c7_i32 : i32 to index
    %c0_147 = arith.constant 0 : index
    %c0_148 = arith.constant 0 : index
    %289 = vector.load %arg3[%288, %c0_147, %c0_148] : memref<8x32x4xbf16, #tpu.memory_space<vmem>>, vector<1x32x4xbf16>
    %290 = vector.shape_cast %289 : vector<1x32x4xbf16> to vector<32x4xbf16>
    %cst_149 = arith.constant dense<0.000000e+00> : vector<16x4xf32>
    %291 = tpu.matmul %1, %290, %cst_149 {dimension_numbers = #tpu.dot_dimension_numbers<[1], [0], [0], [1], [0, 0, 1, 1], [], []>} : vector<16x32xbf16>, vector<32x4xbf16>, vector<16x4xf32> -> vector<16x4xf32>
    %292 = arith.index_cast %c7_i32 : i32 to index
    %c0_150 = arith.constant 0 : index
    %c0_151 = arith.constant 0 : index
    %293 = vector.load %arg4[%292, %c0_150, %c0_151] : memref<8x32x4xbf16, #tpu.memory_space<vmem>>, vector<1x32x4xbf16>
    %294 = vector.shape_cast %293 : vector<1x32x4xbf16> to vector<32x4xbf16>
    %cst_152 = arith.constant dense<0.000000e+00> : vector<16x4xf32>
    %295 = tpu.matmul %1, %294, %cst_152 {dimension_numbers = #tpu.dot_dimension_numbers<[1], [0], [0], [1], [0, 0, 1, 1], [], []>} : vector<16x32xbf16>, vector<32x4xbf16>, vector<16x4xf32> -> vector<16x4xf32>
    %296 = vector.shape_cast %287 : vector<16x4xf32> to vector<2x8x4xf32>
    %297 = arith.truncf %296 : vector<2x8x4xf32> to vector<2x8x4xbf16>
    %298 = vector.shape_cast %291 : vector<16x4xf32> to vector<2x8x4xf32>
    %299 = arith.truncf %298 : vector<2x8x4xf32> to vector<2x8x4xbf16>
    %300 = vector.shape_cast %295 : vector<16x4xf32> to vector<2x8x4xf32>
    %301 = arith.truncf %300 : vector<2x8x4xf32> to vector<2x8x4xbf16>
    "tpu.trace_start"() <{level = 10 : i32, message = "bqd,bkd->bqk"}> : () -> ()
    %cst_153 = arith.constant dense<0.000000e+00> : vector<2x8x8xf32>
    %302 = tpu.matmul %297, %299, %cst_153 {dimension_numbers = #tpu.dot_dimension_numbers<[2], [2], [1], [1], [0, 0, 0, 1, 1, 1], [0], [0]>} : vector<2x8x4xbf16>, vector<2x8x4xbf16>, vector<2x8x8xf32> -> vector<2x8x8xf32>
    "tpu.trace_stop"() : () -> ()
    %cst_154 = arith.constant dense<0xFF800000> : vector<2x8xf32>
    %303 = vector.multi_reduction <maximumf>, %302, %cst_154 [2] : vector<2x8x8xf32> to vector<2x8xf32>
    %304 = vector.shape_cast %303 : vector<2x8xf32> to vector<2x8x1xf32>
    %305 = vector.broadcast %304 : vector<2x8x1xf32> to vector<2x8x8xf32>
    %306 = arith.subf %302, %305 : vector<2x8x8xf32>
    %307 = math.exp %306 : vector<2x8x8xf32>
    %cst_155 = arith.constant dense<0.000000e+00> : vector<2x8xf32>
    %308 = vector.multi_reduction <add>, %307, %cst_155 [2] : vector<2x8x8xf32> to vector<2x8xf32>
    %309 = vector.shape_cast %308 : vector<2x8xf32> to vector<2x8x1xf32>
    %310 = arith.truncf %307 : vector<2x8x8xf32> to vector<2x8x8xbf16>
    "tpu.trace_start"() <{level = 10 : i32, message = "bqk,bkd->bqd"}> : () -> ()
    %cst_156 = arith.constant dense<0.000000e+00> : vector<2x8x4xf32>
    %311 = tpu.matmul %310, %301, %cst_156 {dimension_numbers = #tpu.dot_dimension_numbers<[2], [1], [1], [2], [0, 0, 0, 1, 1, 2], [0], [0]>} : vector<2x8x8xbf16>, vector<2x8x4xbf16>, vector<2x8x4xf32> -> vector<2x8x4xf32>
    "tpu.trace_stop"() : () -> ()
    %312 = tpu.reciprocal %309 {approx = true} : vector<2x8x1xf32> -> vector<2x8x1xf32>
    %313 = vector.broadcast %312 : vector<2x8x1xf32> to vector<2x8x4xf32>
    %314 = arith.mulf %311, %313 : vector<2x8x4xf32>
    %c0_157 = arith.constant 0 : index
    %c0_158 = arith.constant 0 : index
    %315 = vector.load %arg8[%c0_157, %c0_158] : memref<16x32xf32, #tpu.memory_space<vmem>>, vector<16x32xf32>
    %316 = vector.shape_cast %314 : vector<2x8x4xf32> to vector<16x4xf32>
    %317 = arith.truncf %316 : vector<16x4xf32> to vector<16x4xbf16>
    %318 = arith.index_cast %c7_i32 : i32 to index
    %c0_159 = arith.constant 0 : index
    %c0_160 = arith.constant 0 : index
    %319 = vector.load %arg5[%318, %c0_159, %c0_160] : memref<8x4x32xbf16, #tpu.memory_space<vmem>>, vector<1x4x32xbf16>
    %320 = vector.shape_cast %319 : vector<1x4x32xbf16> to vector<4x32xbf16>
    %cst_161 = arith.constant dense<0.000000e+00> : vector<16x32xf32>
    %321 = tpu.matmul %317, %320, %cst_161 {dimension_numbers = #tpu.dot_dimension_numbers<[1], [0], [0], [1], [0, 0, 1, 1], [], []>} : vector<16x4xbf16>, vector<4x32xbf16>, vector<16x32xf32> -> vector<16x32xf32>
    %322 = arith.addf %315, %321 : vector<16x32xf32>
    %c0_162 = arith.constant 0 : index
    %c0_163 = arith.constant 0 : index
    %323 = vector.load %arg8[%c0_162, %c0_163] : memref<16x32xf32, #tpu.memory_space<vmem>>, vector<16x32xf32>
    tpu.vector_store %arg8[%c0_162, %c0_163], %322 {strides = array<i32>} : memref<16x32xf32, #tpu.memory_space<vmem>>, vector<16x32xf32>,
    %c8_i32 = arith.constant 8 : i32
    %c0_164 = arith.constant 0 : index
    %c0_165 = arith.constant 0 : index
    %324 = vector.load %arg8[%c0_164, %c0_165] : memref<16x32xf32, #tpu.memory_space<vmem>>, vector<16x32xf32>
    %c0_166 = arith.constant 0 : index
    %c0_167 = arith.constant 0 : index
    %325 = vector.load %arg6[%c0_166, %c0_167] : memref<1x32xf32, #tpu.memory_space<vmem>>, vector<1x32xf32>
    %326 = vector.broadcast %325 : vector<1x32xf32> to vector<16x32xf32>
    %327 = arith.addf %324, %326 : vector<16x32xf32>
    %328 = vector.shape_cast %327 : vector<16x32xf32> to vector<2x8x32xf32>
    %c0_168 = arith.constant 0 : index
    %c0_169 = arith.constant 0 : index
    %c0_170 = arith.constant 0 : index
    %329 = vector.load %arg7[%c0_168, %c0_169, %c0_170] : memref<2x8x32xf32, #tpu.memory_space<vmem>>, vector<2x8x32xf32>
    tpu.vector_store %arg7[%c0_168, %c0_169, %c0_170], %328 {strides = array<i32>} : memref<2x8x32xf32, #tpu.memory_space<vmem>>, vector<2x8x32xf32>,
    return
  }
  func.func @transform_0(%arg0: i32) -> (i32, i32, i32) {
    %c0_i32 = arith.constant 0 : i32
    %c0_i32_0 = arith.constant 0 : i32
    %c0_i32_1 = arith.constant 0 : i32
    return %arg0, %c0_i32, %c0_i32_0 : i32, i32, i32
  }
  func.func @transform_1(%arg0: i32) -> (i32, i32, i32) {
    %c0_i32 = arith.constant 0 : i32
    %c0_i32_0 = arith.constant 0 : i32
    %c0_i32_1 = arith.constant 0 : i32
    %c0_i32_2 = arith.constant 0 : i32
    return %c0_i32, %c0_i32_0, %c0_i32_1 : i32, i32, i32
  }
  func.func @transform_2(%arg0: i32) -> (i32, i32, i32) {
    %c0_i32 = arith.constant 0 : i32
    %c0_i32_0 = arith.constant 0 : i32
    %c0_i32_1 = arith.constant 0 : i32
    %c0_i32_2 = arith.constant 0 : i32
    return %c0_i32, %c0_i32_0, %c0_i32_1 : i32, i32, i32
  }
  func.func @transform_3(%arg0: i32) -> (i32, i32, i32) {
    %c0_i32 = arith.constant 0 : i32
    %c0_i32_0 = arith.constant 0 : i32
    %c0_i32_1 = arith.constant 0 : i32
    %c0_i32_2 = arith.constant 0 : i32
    return %c0_i32, %c0_i32_0, %c0_i32_1 : i32, i32, i32
  }
  func.func @transform_4(%arg0: i32) -> (i32, i32, i32) {
    %c0_i32 = arith.constant 0 : i32
    %c0_i32_0 = arith.constant 0 : i32
    %c0_i32_1 = arith.constant 0 : i32
    %c0_i32_2 = arith.constant 0 : i32
    return %c0_i32, %c0_i32_0, %c0_i32_1 : i32, i32, i32
  }
  func.func @transform_5(%arg0: i32) -> (i32, i32) {
    %c0_i32 = arith.constant 0 : i32
    %c0_i32_0 = arith.constant 0 : i32
    %c0_i32_1 = arith.constant 0 : i32
    return %c0_i32, %c0_i32_0 : i32, i32
  }
  func.func @transform_6(%arg0: i32) -> (i32, i32, i32) {
    %c0_i32 = arith.constant 0 : i32
    %c0_i32_0 = arith.constant 0 : i32
    %c0_i32_1 = arith.constant 0 : i32
    return %arg0, %c0_i32, %c0_i32_0 : i32, i32, i32
  }
}

</mosaic_0001>

<llo_original>
// kernel: tpu_custom_call.1
$region0: #{tpu_custom_call.1}
  #allocation0 [shape = 'u32[]', space=smem, size = 0x4, offset = 0x4, fixed_abs, tag = 'smem constant byte address 0x4 - core index']
  #allocation1 [shape = 'u32[144,128]{1,0:T(1,128)}', space=vmem, size = 0x12000, scoped, tag = 'internal scratch']
  #allocation2 [shape = 'f32[16,32]{1,0:T(8,128)}', space=vmem, size = 0x2000, scoped, tag = 'scratch operand']
  %s0 = inlined_call_operand.vmem [shape: bf16[2,8,32], index: 0, kind: input, shape index: {}]
  %s1 = inlined_call_operand.vmem [shape: bf16[8,32,4], index: 1, kind: input, shape index: {}]
  %s2 = inlined_call_operand.vmem [shape: bf16[8,32,4], index: 2, kind: input, shape index: {}]
  %s3 = inlined_call_operand.vmem [shape: bf16[8,32,4], index: 3, kind: input, shape index: {}]
  %s4 = inlined_call_operand.vmem [shape: bf16[8,4,32], index: 4, kind: input, shape index: {}]
  %s5 = inlined_call_operand.vmem [shape: f32[1,32], index: 5, kind: input, shape index: {}]
  %s6 = inlined_call_operand.hbm [shape: f32[2,8,32], index: 6, kind: output, shape index: {}]
  %s7 = sld [smem:[#allocation0]]
  $region34: #{tpu_custom_call.1} parent=0
    _
  %s9 = ssub.s32 1, %s7
  %s10 = scalar_select 0, %s9, %s7
  $region1: #{tpu_custom_call.1} parent=0
    #allocation3 [shape = 'u8[8192]{0}', space=vmem, size = 0x2000, scoped, tag = 'output window, operand 0, single buffered']
    #allocation4 [shape = 's32[1]{0}', space=sflag, size = 0x4, scoped, tag = 'scoped memory for tpu_custom_call.1']
    %11 = vsyncpa [#allocation4], 0
    // Predicated region
    $region2: #{tpu_custom_call.1} parent=1 // pred_check
      _
    $region3: #{tpu_custom_call.1} parent=1 // pred_check_branch
      %13 = sbr.rel (0) target = $region5
    $region4: #{tpu_custom_call.1} parent=1 // pred_region
      _
    $region5: #{tpu_custom_call.1} parent=1 // pred_fallthru
      _
    // Predicated region
    $region6: #{tpu_custom_call.1} parent=1 // pred_check
      _
    $region7: #{tpu_custom_call.1} parent=1 // pred_check_branch
      %15 = sbr.rel (0) target = $region9
    $region8: #{tpu_custom_call.1} parent=1 // pred_region
      _
    $region9: #{tpu_custom_call.1} parent=1 // pred_fallthru
      _
    // Predicated region
    $region10: #{tpu_custom_call.1} parent=1 // pred_check
      _
    $region11: #{tpu_custom_call.1} parent=1 // pred_check_branch
      %17 = sbr.rel (0) target = $region13
    $region12: #{tpu_custom_call.1} parent=1 // pred_region
      _
    $region13: #{tpu_custom_call.1} parent=1 // pred_fallthru
      _
    // Predicated region
    $region14: #{tpu_custom_call.1} parent=1 // pred_check
      _
    $region15: #{tpu_custom_call.1} parent=1 // pred_check_branch
      %19 = sbr.rel (0) target = $region17
    $region16: #{tpu_custom_call.1} parent=1 // pred_region
      _
    $region17: #{tpu_custom_call.1} parent=1 // pred_fallthru
      _
    // Predicated region
    $region18: #{tpu_custom_call.1} parent=1 // pred_check
      _
    $region19: #{tpu_custom_call.1} parent=1 // pred_check_branch
      %21 = sbr.rel (0) target = $region21
    $region20: #{tpu_custom_call.1} parent=1 // pred_region
      _
    $region21: #{tpu_custom_call.1} parent=1 // pred_fallthru
      _
    // Predicated region
    $region22: #{tpu_custom_call.1} parent=1 // pred_check
      _
    $region23: #{tpu_custom_call.1} parent=1 // pred_check_branch
      %23 = sbr.rel (0) target = $region25
    $region24: #{tpu_custom_call.1} parent=1 // pred_region
      _
    $region25: #{tpu_custom_call.1} parent=1 // pred_fallthru
      _
    %v25 = vld [vmem:[%s0] sm:$0xf]
    %v26 = vld [vmem:[%s0 + $0x4] sm:$0xf]
    %vm27 = vcmask 261120
    %28 = vst.msk [vmem:[#allocation2] sm:$0xff] %vm27, 0.0
    %29 = vst.msk [vmem:[#allocation2 + $0x8] sm:$0xff] %vm27, 0.0
    %v30 = vld [vmem:[%s1] sm:$0xf]
    %v31 = vld [vmem:[%s1 + $0x4] sm:$0xf]
    %v32 = vld [vmem:[%s1 + $0x8] sm:$0xf]
    %v33 = vld [vmem:[%s1 + $0xc] sm:$0xf]
    %v36 = vunpack.c.l.b16 %v25
    %v37 = vunpack.c.l.b16 %v26
    %v38 = vpack.c.b16 %v37, %v36
    %v43 = vunpack.c.l.b16 %v30
    %v44 = vunpack.c.l.b16 %v31
    %v45 = vunpack.c.l.b16 %v32
    %v46 = vunpack.c.l.b16 %v33
    %v47 = vpack.c.b16 %v44, %v43
    %v48 = vpack.c.b16 %v46, %v45
    %v52 = vsel %vm27, %v38, 0
    %54 = vmatprep.subr.bf16.mxu0 0
    %55 = vmatpush1.bf16.msra.mxu0 %v47
    %56 = vmatprep.subr.bf16.mxu0 0
    %57 = vmatpush1.bf16.msra.mxu0 %v48
    %58 = vmatprep.subr.bf16.mxu0 0
    %59 = vmatpush1.bf16.msra.mxu0 0
    %60 = vmatprep.subr.bf16.mxu0 0
    %61 = vmatpush1.bf16.msra.mxu0 0
    %62 = vmatprep.subr.bf16.mxu0 0
    %63 = vmatpush1.bf16.msra.mxu0 0
    %64 = vmatprep.subr.bf16.mxu0 0
    %65 = vmatpush1.bf16.msra.mxu0 0
    %66 = vmatprep.subr.bf16.mxu0 0
    %67 = vmatpush1.bf16.msra.mxu0 0
    %68 = vmatprep.subr.bf16.mxu0 0
    %69 = vmatpush1.bf16.msra.mxu0 0
    %70 = vmatprep.subr.bf16.mxu0 0
    %71 = vmatpush1.bf16.msra.mxu0 0
    %72 = vmatprep.subr.bf16.mxu0 0
    %73 = vmatpush1.bf16.msra.mxu0 0
    %74 = vmatprep.subr.bf16.mxu0 0
    %75 = vmatpush1.bf16.msra.mxu0 0
    %76 = vmatprep.subr.bf16.mxu0 0
    %77 = vmatpush1.bf16.msra.mxu0 0
    %78 = vmatprep.subr.bf16.mxu0 0
    %79 = vmatpush1.bf16.msra.mxu0 0
    %80 = vmatprep.subr.bf16.mxu0 0
    %81 = vmatpush1.bf16.msra.mxu0 0
    %82 = vmatprep.subr.bf16.mxu0 0
    %83 = vmatpush1.bf16.msra.mxu0 0
    %84 = vmatprep.subr.bf16.mxu0 0
    %85 = vmatpush1.bf16.msra.mxu0 0
    %86 = vmatprep.mubr.bf16.mxu0 0
    %87 = vmatmul.mubr.bf16.gmra.mrb[0].mxu0 %v52
    %v88 = vpop.f32.mrb[0].mxu0
    %v89 = vadd.f32 0.0, %v88
    %v90 = vpop.f32.mrb[0].mxu0
    %v91 = vpop.f32.mrb[0].mxu0
    %v92 = vadd.f32 0.0, %v91
    %v93 = vpop.f32.mrb[0].mxu0
    %94 = vdwg.mxu0
    %v95 = vld [vmem:[%s2] sm:$0xf]
    %v96 = vld [vmem:[%s2 + $0x4] sm:$0xf]
    %v97 = vld [vmem:[%s2 + $0x8] sm:$0xf]
    %v98 = vld [vmem:[%s2 + $0xc] sm:$0xf]
    %v103 = vunpack.c.l.b16 %v95
    %v104 = vunpack.c.l.b16 %v96
    %v105 = vunpack.c.l.b16 %v97
    %v106 = vunpack.c.l.b16 %v98
    %v107 = vpack.c.b16 %v104, %v103
    %v108 = vpack.c.b16 %v106, %v105
    %111 = vmatprep.subr.bf16.mxu0 0
    %112 = vmatpush1.bf16.msra.mxu0 %v107
    %113 = vmatprep.subr.bf16.mxu0 0
    %114 = vmatpush1.bf16.msra.mxu0 %v108
    %115 = vmatprep.subr.bf16.mxu0 0
    %116 = vmatpush1.bf16.msra.mxu0 0
    %117 = vmatprep.subr.bf16.mxu0 0
    %118 = vmatpush1.bf16.msra.mxu0 0
    %119 = vmatprep.subr.bf16.mxu0 0
    %120 = vmatpush1.bf16.msra.mxu0 0
    %121 = vmatprep.subr.bf16.mxu0 0
    %122 = vmatpush1.bf16.msra.mxu0 0
    %123 = vmatprep.subr.bf16.mxu0 0
    %124 = vmatpush1.bf16.msra.mxu0 0
    %125 = vmatprep.subr.bf16.mxu0 0
    %126 = vmatpush1.bf16.msra.mxu0 0
    %127 = vmatprep.subr.bf16.mxu0 0
    %128 = vmatpush1.bf16.msra.mxu0 0
    %129 = vmatprep.subr.bf16.mxu0 0
    %130 = vmatpush1.bf16.msra.mxu0 0
    %131 = vmatprep.subr.bf16.mxu0 0
    %132 = vmatpush1.bf16.msra.mxu0 0
    %133 = vmatprep.subr.bf16.mxu0 0
    %134 = vmatpush1.bf16.msra.mxu0 0
    %135 = vmatprep.subr.bf16.mxu0 0
    %136 = vmatpush1.bf16.msra.mxu0 0
    %137 = vmatprep.subr.bf16.mxu0 0
    %138 = vmatpush1.bf16.msra.mxu0 0
    %139 = vmatprep.subr.bf16.mxu0 0
    %140 = vmatpush1.bf16.msra.mxu0 0
    %141 = vmatprep.subr.bf16.mxu0 0
    %142 = vmatpush1.bf16.msra.mxu0 0
    %143 = vmatprep.mubr.bf16.mxu0 0
    %144 = vmatmul.mubr.bf16.gmra.mrb[0].mxu0 %v52
    %v145 = vpop.f32.mrb[0].mxu0
    %v146 = vadd.f32 0.0, %v145
    %v147 = vpop.f32.mrb[0].mxu0
    %v148 = vpop.f32.mrb[0].mxu0
    %v149 = vadd.f32 0.0, %v148
    %v150 = vpop.f32.mrb[0].mxu0
    %151 = vdwg.mxu0
    %v152 = vld [vmem:[%s3] sm:$0xf]
    %v153 = vld [vmem:[%s3 + $0x4] sm:$0xf]
    %v154 = vld [vmem:[%s3 + $0x8] sm:$0xf]
    %v155 = vld [vmem:[%s3 + $0xc] sm:$0xf]
    %v160 = vunpack.c.l.b16 %v152
    %v161 = vunpack.c.l.b16 %v153
    %v162 = vunpack.c.l.b16 %v154
    %v163 = vunpack.c.l.b16 %v155
    %v164 = vpack.c.b16 %v161, %v160
    %v165 = vpack.c.b16 %v163, %v162
    %168 = vmatprep.subr.bf16.mxu0 0
    %169 = vmatpush1.bf16.msra.mxu0 %v164
    %170 = vmatprep.subr.bf16.mxu0 0
    %171 = vmatpush1.bf16.msra.mxu0 %v165
    %172 = vmatprep.subr.bf16.mxu0 0
    %173 = vmatpush1.bf16.msra.mxu0 0
    %174 = vmatprep.subr.bf16.mxu0 0
    %175 = vmatpush1.bf16.msra.mxu0 0
    %176 = vmatprep.subr.bf16.mxu0 0
    %177 = vmatpush1.bf16.msra.mxu0 0
    %178 = vmatprep.subr.bf16.mxu0 0
    %179 = vmatpush1.bf16.msra.mxu0 0
    %180 = vmatprep.subr.bf16.mxu0 0
    %181 = vmatpush1.bf16.msra.mxu0 0
    %182 = vmatprep.subr.bf16.mxu0 0
    %183 = vmatpush1.bf16.msra.mxu0 0
    %184 = vmatprep.subr.bf16.mxu0 0
    %185 = vmatpush1.bf16.msra.mxu0 0
    %186 = vmatprep.subr.bf16.mxu0 0
    %187 = vmatpush1.bf16.msra.mxu0 0
    %188 = vmatprep.subr.bf16.mxu0 0
    %189 = vmatpush1.bf16.msra.mxu0 0
    %190 = vmatprep.subr.bf16.mxu0 0
    %191 = vmatpush1.bf16.msra.mxu0 0
    %192 = vmatprep.subr.bf16.mxu0 0
    %193 = vmatpush1.bf16.msra.mxu0 0
    %194 = vmatprep.subr.bf16.mxu0 0
    %195 = vmatpush1.bf16.msra.mxu0 0
    %196 = vmatprep.subr.bf16.mxu0 0
    %197 = vmatpush1.bf16.msra.mxu0 0
    %198 = vmatprep.subr.bf16.mxu0 0
    %199 = vmatpush1.bf16.msra.mxu0 0
    %200 = vmatprep.mubr.bf16.mxu0 0
    %201 = vmatmul.mubr.bf16.gmra.mrb[0].mxu0 %v52
    %v202 = vpop.f32.mrb[0].mxu0
    %v203 = vadd.f32 0.0, %v202
    %v204 = vpop.f32.mrb[0].mxu0
    %v205 = vpop.f32.mrb[0].mxu0
    %v206 = vadd.f32 0.0, %v205
    %v207 = vpop.f32.mrb[0].mxu0
    %208 = vdwg.mxu0
    %v209 = vpack.c.bf16 %v89, %v89
    %v210 = vpack.c.bf16 %v92, %v92
    %v211 = vpack.c.bf16 %v146, %v146
    %v212 = vpack.c.bf16 %v149, %v149
    %v213 = vpack.c.bf16 %v203, %v203
    %v214 = vpack.c.bf16 %v206, %v206
    %vm215 = vcmask 31744
    %v217 = vsel %vm215, %v209, 0
    %v220 = vsel %vm215, %v211, 0
    %222 = vmatprep.subr.bf16.mxu0 0
    %223 = vmatpush1.bf16.xpose.msra.mxu0 %v220
    %224 = vmatprep.subr.bf16.mxu0 0
    %225 = vmatpush1.bf16.xpose.msra.mxu0 0
    %226 = vmatprep.subr.bf16.mxu0 0
    %227 = vmatpush1.bf16.xpose.msra.mxu0 0
    %228 = vmatprep.subr.bf16.mxu0 0
    %229 = vmatpush1.bf16.xpose.msra.mxu0 0
    %230 = vmatprep.subr.bf16.mxu0 0
    %231 = vmatpush1.bf16.xpose.msra.mxu0 0
    %232 = vmatprep.subr.bf16.mxu0 0
    %233 = vmatpush1.bf16.xpose.msra.mxu0 0
    %234 = vmatprep.subr.bf16.mxu0 0
    %235 = vmatpush1.bf16.xpose.msra.mxu0 0
    %236 = vmatprep.subr.bf16.mxu0 0
    %237 = vmatpush1.bf16.xpose.msra.mxu0 0
    %238 = vmatprep.subr.bf16.mxu0 0
    %239 = vmatpush1.bf16.xpose.msra.mxu0 0
    %240 = vmatprep.subr.bf16.mxu0 0
    %241 = vmatpush1.bf16.xpose.msra.mxu0 0
    %242 = vmatprep.subr.bf16.mxu0 0
    %243 = vmatpush1.bf16.xpose.msra.mxu0 0
    %244 = vmatprep.subr.bf16.mxu0 0
    %245 = vmatpush1.bf16.xpose.msra.mxu0 0
    %246 = vmatprep.subr.bf16.mxu0 0
    %247 = vmatpush1.bf16.xpose.msra.mxu0 0
    %248 = vmatprep.subr.bf16.mxu0 0
    %249 = vmatpush1.bf16.xpose.msra.mxu0 0
    %250 = vmatprep.subr.bf16.mxu0 0
    %251 = vmatpush1.bf16.xpose.msra.mxu0 0
    %252 = vmatprep.subr.bf16.mxu0 0
    %253 = vmatpush1.bf16.xpose.msra.mxu0 0
    %254 = vmatprep.mubr.bf16.mxu0 0
    %255 = vmatmul.mubr.bf16.gmra.mrb[0].mxu0 %v217
    %v256 = vpop.f32.mrb[0].mxu0
    %v257 = vadd.f32 0.0, %v256
    %v258 = vpop.f32.mrb[0].mxu0
    %v259 = vpop.f32.mrb[0].mxu0
    %v260 = vpop.f32.mrb[0].mxu0
    %261 = vdwg.mxu0
    %v263 = vsel %vm215, %v210, 0
    %v266 = vsel %vm215, %v212, 0
    %268 = vmatprep.subr.bf16.mxu0 0
    %269 = vmatpush1.bf16.xpose.msra.mxu0 %v266
    %270 = vmatprep.subr.bf16.mxu0 0
    %271 = vmatpush1.bf16.xpose.msra.mxu0 0
    %272 = vmatprep.subr.bf16.mxu0 0
    %273 = vmatpush1.bf16.xpose.msra.mxu0 0
    %274 = vmatprep.subr.bf16.mxu0 0
    %275 = vmatpush1.bf16.xpose.msra.mxu0 0
    %276 = vmatprep.subr.bf16.mxu0 0
    %277 = vmatpush1.bf16.xpose.msra.mxu0 0
    %278 = vmatprep.subr.bf16.mxu0 0
    %279 = vmatpush1.bf16.xpose.msra.mxu0 0
    %280 = vmatprep.subr.bf16.mxu0 0
    %281 = vmatpush1.bf16.xpose.msra.mxu0 0
    %282 = vmatprep.subr.bf16.mxu0 0
    %283 = vmatpush1.bf16.xpose.msra.mxu0 0
    %284 = vmatprep.subr.bf16.mxu0 0
    %285 = vmatpush1.bf16.xpose.msra.mxu0 0
    %286 = vmatprep.subr.bf16.mxu0 0
    %287 = vmatpush1.bf16.xpose.msra.mxu0 0
    %288 = vmatprep.subr.bf16.mxu0 0
    %289 = vmatpush1.bf16.xpose.msra.mxu0 0
    %290 = vmatprep.subr.bf16.mxu0 0
    %291 = vmatpush1.bf16.xpose.msra.mxu0 0
    %292 = vmatprep.subr.bf16.mxu0 0
    %293 = vmatpush1.bf16.xpose.msra.mxu0 0
    %294 = vmatprep.subr.bf16.mxu0 0
    %295 = vmatpush1.bf16.xpose.msra.mxu0 0
    %296 = vmatprep.subr.bf16.mxu0 0
    %297 = vmatpush1.bf16.xpose.msra.mxu0 0
    %298 = vmatprep.subr.bf16.mxu0 0
    %299 = vmatpush1.bf16.xpose.msra.mxu0 0
    %300 = vmatprep.mubr.bf16.mxu0 0
    %301 = vmatmul.mubr.bf16.gmra.mrb[0].mxu0 %v263
    %v302 = vpop.f32.mrb[0].mxu0
    %v303 = vadd.f32 0.0, %v302
    %v304 = vpop.f32.mrb[0].mxu0
    %v305 = vpop.f32.mrb[0].mxu0
    %v306 = vpop.f32.mrb[0].mxu0
    %307 = vdwg.mxu0
    %vm308 = vcmask 64512
    %v309 = vsel %vm308, %v257, -inf
    %310 = vmax.xlane.f32.xlu0 %v309
    %v311 = vpop.xlane.xlu0 %310
    %v312 = vsel %vm308, %v303, -inf
    %313 = vmax.xlane.f32.xlu0 %v312
    %v314 = vpop.xlane.xlu0 %313
    %v315 = vsub.f32 %v257, %v311
    %v316 = vsub.f32 %v303, %v314
    %v317 = vmul.f32 %v315, 1.442695
    %v318 = vpow.pop %v317
    %v319 = vmul.f32 %v316, 1.442695
    %v320 = vpow.pop %v319
    %v321 = vsel %vm308, %v318, 0.0
    %322 = vadd.xlane.f32.xlu0 %v321
    %v323 = vpop.xlane.xlu0 %322
    %v324 = vsel %vm308, %v320, 0.0
    %325 = vadd.xlane.f32.xlu0 %v324
    %v326 = vpop.xlane.xlu0 %325
    %v327 = vpack.c.bf16 %v318, %v318
    %v328 = vpack.c.bf16 %v320, %v320
    %v330 = vsel %vm308, %v327, 0
    %vm332 = vcmask 1043456
    %v334 = vsel %vm332, %v213, 0
    %336 = vmatprep.subr.bf16.mxu0 0
    %337 = vmatpush1.bf16.msra.mxu0 %v334
    %338 = vmatprep.subr.bf16.mxu0 0
    %339 = vmatpush1.bf16.msra.mxu0 0
    %340 = vmatprep.subr.bf16.mxu0 0
    %341 = vmatpush1.bf16.msra.mxu0 0
    %342 = vmatprep.subr.bf16.mxu0 0
    %343 = vmatpush1.bf16.msra.mxu0 0
    %344 = vmatprep.subr.bf16.mxu0 0
    %345 = vmatpush1.bf16.msra.mxu0 0
    %346 = vmatprep.subr.bf16.mxu0 0
    %347 = vmatpush1.bf16.msra.mxu0 0
    %348 = vmatprep.subr.bf16.mxu0 0
    %349 = vmatpush1.bf16.msra.mxu0 0
    %350 = vmatprep.subr.bf16.mxu0 0
    %351 = vmatpush1.bf16.msra.mxu0 0
    %352 = vmatprep.subr.bf16.mxu0 0
    %353 = vmatpush1.bf16.msra.mxu0 0
    %354 = vmatprep.subr.bf16.mxu0 0
    %355 = vmatpush1.bf16.msra.mxu0 0
    %356 = vmatprep.subr.bf16.mxu0 0
    %357 = vmatpush1.bf16.msra.mxu0 0
    %358 = vmatprep.subr.bf16.mxu0 0
    %359 = vmatpush1.bf16.msra.mxu0 0
    %360 = vmatprep.subr.bf16.mxu0 0
    %361 = vmatpush1.bf16.msra.mxu0 0
    %362 = vmatprep.subr.bf16.mxu0 0
    %363 = vmatpush1.bf16.msra.mxu0 0
    %364 = vmatprep.subr.bf16.mxu0 0
    %365 = vmatpush1.bf16.msra.mxu0 0
    %366 = vmatprep.subr.bf16.mxu0 0
    %367 = vmatpush1.bf16.msra.mxu0 0
    %368 = vmatprep.mubr.bf16.mxu0 0
    %369 = vmatmul.mubr.bf16.gmra.mrb[0].mxu0 %v330
    %v370 = vpop.f32.mrb[0].mxu0
    %v371 = vadd.f32 0.0, %v370
    %v372 = vpop.f32.mrb[0].mxu0
    %v373 = vpop.f32.mrb[0].mxu0
    %v374 = vpop.f32.mrb[0].mxu0
    %375 = vdwg.mxu0
    %v377 = vsel %vm308, %v328, 0
    %v380 = vsel %vm332, %v214, 0
    %382 = vmatprep.subr.bf16.mxu0 0
    %383 = vmatpush1.bf16.msra.mxu0 %v380
    %384 = vmatprep.subr.bf16.mxu0 0
    %385 = vmatpush1.bf16.msra.mxu0 0
    %386 = vmatprep.subr.bf16.mxu0 0
    %387 = vmatpush1.bf16.msra.mxu0 0
    %388 = vmatprep.subr.bf16.mxu0 0
    %389 = vmatpush1.bf16.msra.mxu0 0
    %390 = vmatprep.subr.bf16.mxu0 0
    %391 = vmatpush1.bf16.msra.mxu0 0
    %392 = vmatprep.subr.bf16.mxu0 0
    %393 = vmatpush1.bf16.msra.mxu0 0
    %394 = vmatprep.subr.bf16.mxu0 0
    %395 = vmatpush1.bf16.msra.mxu0 0
    %396 = vmatprep.subr.bf16.mxu0 0
    %397 = vmatpush1.bf16.msra.mxu0 0
    %398 = vmatprep.subr.bf16.mxu0 0
    %399 = vmatpush1.bf16.msra.mxu0 0
    %400 = vmatprep.subr.bf16.mxu0 0
    %401 = vmatpush1.bf16.msra.mxu0 0
    %402 = vmatprep.subr.bf16.mxu0 0
    %403 = vmatpush1.bf16.msra.mxu0 0
    %404 = vmatprep.subr.bf16.mxu0 0
    %405 = vmatpush1.bf16.msra.mxu0 0
    %406 = vmatprep.subr.bf16.mxu0 0
    %407 = vmatpush1.bf16.msra.mxu0 0
    %408 = vmatprep.subr.bf16.mxu0 0
    %409 = vmatpush1.bf16.msra.mxu0 0
    %410 = vmatprep.subr.bf16.mxu0 0
    %411 = vmatpush1.bf16.msra.mxu0 0
    %412 = vmatprep.subr.bf16.mxu0 0
    %413 = vmatpush1.bf16.msra.mxu0 0
    %414 = vmatprep.mubr.bf16.mxu0 0
    %415 = vmatmul.mubr.bf16.gmra.mrb[0].mxu0 %v377
    %v416 = vpop.f32.mrb[0].mxu0
    %v417 = vadd.f32 0.0, %v416
    %v418 = vpop.f32.mrb[0].mxu0
    %v419 = vpop.f32.mrb[0].mxu0
    %v420 = vpop.f32.mrb[0].mxu0
    %421 = vdwg.mxu0
    %v422 = vrcp.pop %v323
    %v423 = vrcp.pop %v326
    %v424 = vmul.f32 %v371, %v422
    %v425 = vmul.f32 %v417, %v423
    %v426 = vld [vmem:[#allocation2] sm:$0xff]
    %v427 = vld [vmem:[#allocation2 + $0x8] sm:$0xff]
    %v428 = vpack.c.bf16 %v425, %v424
    %v429 = vld [vmem:[%s4] sm:$0x3]
    %v431 = vsel %vm215, %v428, 0
    %vm433 = vcmask 1041408
    %v435 = vsel %vm433, %v429, 0
    %437 = vmatprep.subr.bf16.mxu0 0
    %438 = vmatpush1.bf16.msra.mxu0 %v435
    %439 = vmatprep.subr.bf16.mxu0 0
    %440 = vmatpush1.bf16.msra.mxu0 0
    %441 = vmatprep.subr.bf16.mxu0 0
    %442 = vmatpush1.bf16.msra.mxu0 0
    %443 = vmatprep.subr.bf16.mxu0 0
    %444 = vmatpush1.bf16.msra.mxu0 0
    %445 = vmatprep.subr.bf16.mxu0 0
    %446 = vmatpush1.bf16.msra.mxu0 0
    %447 = vmatprep.subr.bf16.mxu0 0
    %448 = vmatpush1.bf16.msra.mxu0 0
    %449 = vmatprep.subr.bf16.mxu0 0
    %450 = vmatpush1.bf16.msra.mxu0 0
    %451 = vmatprep.subr.bf16.mxu0 0
    %452 = vmatpush1.bf16.msra.mxu0 0
    %453 = vmatprep.subr.bf16.mxu0 0
    %454 = vmatpush1.bf16.msra.mxu0 0
    %455 = vmatprep.subr.bf16.mxu0 0
    %456 = vmatpush1.bf16.msra.mxu0 0
    %457 = vmatprep.subr.bf16.mxu0 0
    %458 = vmatpush1.bf16.msra.mxu0 0
    %459 = vmatprep.subr.bf16.mxu0 0
    %460 = vmatpush1.bf16.msra.mxu0 0
    %461 = vmatprep.subr.bf16.mxu0 0
    %462 = vmatpush1.bf16.msra.mxu0 0
    %463 = vmatprep.subr.bf16.mxu0 0
    %464 = vmatpush1.bf16.msra.mxu0 0
    %465 = vmatprep.subr.bf16.mxu0 0
    %466 = vmatpush1.bf16.msra.mxu0 0
    %467 = vmatprep.subr.bf16.mxu0 0
    %468 = vmatpush1.bf16.msra.mxu0 0
    %469 = vmatprep.mubr.bf16.mxu0 0
    %470 = vmatmul.mubr.bf16.gmra.mrb[0].mxu0 %v431
    %v471 = vpop.f32.mrb[0].mxu0
    %v472 = vadd.f32 0.0, %v471
    %v473 = vpop.f32.mrb[0].mxu0
    %v474 = vpop.f32.mrb[0].mxu0
    %v475 = vadd.f32 0.0, %v474
    %v476 = vpop.f32.mrb[0].mxu0
    %477 = vdwg.mxu0
    %v478 = vadd.f32 %v426, %v472
    %v479 = vadd.f32 %v427, %v475
    %480 = vst.msk [vmem:[#allocation2] sm:$0xff] %vm27, %v478
    %481 = vst.msk [vmem:[#allocation2 + $0x8] sm:$0xff] %vm27, %v479
    %s482 = scalar_lea.vmem %s1, 16
    %v483 = vld [vmem:[%s482] sm:$0xf]
    %v484 = vld [vmem:[%s482 + $0x4] sm:$0xf]
    %v485 = vld [vmem:[%s482 + $0x8] sm:$0xf]
    %v486 = vld [vmem:[%s482 + $0xc] sm:$0xf]
    %v491 = vunpack.c.l.b16 %v483
    %v492 = vunpack.c.l.b16 %v484
    %v493 = vunpack.c.l.b16 %v485
    %v494 = vunpack.c.l.b16 %v486
    %v495 = vpack.c.b16 %v492, %v491
    %v496 = vpack.c.b16 %v494, %v493
    %499 = vmatprep.subr.bf16.mxu0 0
    %500 = vmatpush1.bf16.msra.mxu0 %v495
    %501 = vmatprep.subr.bf16.mxu0 0
    %502 = vmatpush1.bf16.msra.mxu0 %v496
    %503 = vmatprep.subr.bf16.mxu0 0
    %504 = vmatpush1.bf16.msra.mxu0 0
    %505 = vmatprep.subr.bf16.mxu0 0
    %506 = vmatpush1.bf16.msra.mxu0 0
    %507 = vmatprep.subr.bf16.mxu0 0
    %508 = vmatpush1.bf16.msra.mxu0 0
    %509 = vmatprep.subr.bf16.mxu0 0
    %510 = vmatpush1.bf16.msra.mxu0 0
    %511 = vmatprep.subr.bf16.mxu0 0
    %512 = vmatpush1.bf16.msra.mxu0 0
    %513 = vmatprep.subr.bf16.mxu0 0
    %514 = vmatpush1.bf16.msra.mxu0 0
    %515 = vmatprep.subr.bf16.mxu0 0
    %516 = vmatpush1.bf16.msra.mxu0 0
    %517 = vmatprep.subr.bf16.mxu0 0
    %518 = vmatpush1.bf16.msra.mxu0 0
    %519 = vmatprep.subr.bf16.mxu0 0
    %520 = vmatpush1.bf16.msra.mxu0 0
    %521 = vmatprep.subr.bf16.mxu0 0
    %522 = vmatpush1.bf16.msra.mxu0 0
    %523 = vmatprep.subr.bf16.mxu0 0
    %524 = vmatpush1.bf16.msra.mxu0 0
    %525 = vmatprep.subr.bf16.mxu0 0
    %526 = vmatpush1.bf16.msra.mxu0 0
    %527 = vmatprep.subr.bf16.mxu0 0
    %528 = vmatpush1.bf16.msra.mxu0 0
    %529 = vmatprep.subr.bf16.mxu0 0
    %530 = vmatpush1.bf16.msra.mxu0 0
    %531 = vmatprep.mubr.bf16.mxu0 0
    %532 = vmatmul.mubr.bf16.gmra.mrb[0].mxu0 %v52
    %v533 = vpop.f32.mrb[0].mxu0
    %v534 = vadd.f32 0.0, %v533
    %v535 = vpop.f32.mrb[0].mxu0
    %v536 = vpop.f32.mrb[0].mxu0
    %v537 = vadd.f32 0.0, %v536
    %v538 = vpop.f32.mrb[0].mxu0
    %539 = vdwg.mxu0
    %s540 = scalar_lea.vmem %s2, 16
    %v541 = vld [vmem:[%s540] sm:$0xf]
    %v542 = vld [vmem:[%s540 + $0x4] sm:$0xf]
    %v543 = vld [vmem:[%s540 + $0x8] sm:$0xf]
    %v544 = vld [vmem:[%s540 + $0xc] sm:$0xf]
    %v549 = vunpack.c.l.b16 %v541
    %v550 = vunpack.c.l.b16 %v542
    %v551 = vunpack.c.l.b16 %v543
    %v552 = vunpack.c.l.b16 %v544
    %v553 = vpack.c.b16 %v550, %v549
    %v554 = vpack.c.b16 %v552, %v551
    %557 = vmatprep.subr.bf16.mxu0 0
    %558 = vmatpush1.bf16.msra.mxu0 %v553
    %559 = vmatprep.subr.bf16.mxu0 0
    %560 = vmatpush1.bf16.msra.mxu0 %v554
    %561 = vmatprep.subr.bf16.mxu0 0
    %562 = vmatpush1.bf16.msra.mxu0 0
    %563 = vmatprep.subr.bf16.mxu0 0
    %564 = vmatpush1.bf16.msra.mxu0 0
    %565 = vmatprep.subr.bf16.mxu0 0
    %566 = vmatpush1.bf16.msra.mxu0 0
    %567 = vmatprep.subr.bf16.mxu0 0
    %568 = vmatpush1.bf16.msra.mxu0 0
    %569 = vmatprep.subr.bf16.mxu0 0
    %570 = vmatpush1.bf16.msra.mxu0 0
    %571 = vmatprep.subr.bf16.mxu0 0
    %572 = vmatpush1.bf16.msra.mxu0 0
    %573 = vmatprep.subr.bf16.mxu0 0
    %574 = vmatpush1.bf16.msra.mxu0 0
    %575 = vmatprep.subr.bf16.mxu0 0
    %576 = vmatpush1.bf16.msra.mxu0 0
    %577 = vmatprep.subr.bf16.mxu0 0
    %578 = vmatpush1.bf16.msra.mxu0 0
    %579 = vmatprep.subr.bf16.mxu0 0
    %580 = vmatpush1.bf16.msra.mxu0 0
    %581 = vmatprep.subr.bf16.mxu0 0
    %582 = vmatpush1.bf16.msra.mxu0 0
    %583 = vmatprep.subr.bf16.mxu0 0
    %584 = vmatpush1.bf16.msra.mxu0 0
    %585 = vmatprep.subr.bf16.mxu0 0
    %586 = vmatpush1.bf16.msra.mxu0 0
    %587 = vmatprep.subr.bf16.mxu0 0
    %588 = vmatpush1.bf16.msra.mxu0 0
    %589 = vmatprep.mubr.bf16.mxu0 0
    %590 = vmatmul.mubr.bf16.gmra.mrb[0].mxu0 %v52
    %v591 = vpop.f32.mrb[0].mxu0
    %v592 = vadd.f32 0.0, %v591
    %v593 = vpop.f32.mrb[0].mxu0
    %v594 = vpop.f32.mrb[0].mxu0
    %v595 = vadd.f32 0.0, %v594
    %v596 = vpop.f32.mrb[0].mxu0
    %597 = vdwg.mxu0
    %s598 = scalar_lea.vmem %s3, 16
    %v599 = vld [vmem:[%s598] sm:$0xf]
    %v600 = vld [vmem:[%s598 + $0x4] sm:$0xf]
    %v601 = vld [vmem:[%s598 + $0x8] sm:$0xf]
    %v602 = vld [vmem:[%s598 + $0xc] sm:$0xf]
    %v607 = vunpack.c.l.b16 %v599
    %v608 = vunpack.c.l.b16 %v600
    %v609 = vunpack.c.l.b16 %v601
    %v610 = vunpack.c.l.b16 %v602
    %v611 = vpack.c.b16 %v608, %v607
    %v612 = vpack.c.b16 %v610, %v609
    %615 = vmatprep.subr.bf16.mxu0 0
    %616 = vmatpush1.bf16.msra.mxu0 %v611
    %617 = vmatprep.subr.bf16.mxu0 0
    %618 = vmatpush1.bf16.msra.mxu0 %v612
    %619 = vmatprep.subr.bf16.mxu0 0
    %620 = vmatpush1.bf16.msra.mxu0 0
    %621 = vmatprep.subr.bf16.mxu0 0
    %622 = vmatpush1.bf16.msra.mxu0 0
    %623 = vmatprep.subr.bf16.mxu0 0
    %624 = vmatpush1.bf16.msra.mxu0 0
    %625 = vmatprep.subr.bf16.mxu0 0
    %626 = vmatpush1.bf16.msra.mxu0 0
    %627 = vmatprep.subr.bf16.mxu0 0
    %628 = vmatpush1.bf16.msra.mxu0 0
    %629 = vmatprep.subr.bf16.mxu0 0
    %630 = vmatpush1.bf16.msra.mxu0 0
    %631 = vmatprep.subr.bf16.mxu0 0
    %632 = vmatpush1.bf16.msra.mxu0 0
    %633 = vmatprep.subr.bf16.mxu0 0
    %634 = vmatpush1.bf16.msra.mxu0 0
    %635 = vmatprep.subr.bf16.mxu0 0
    %636 = vmatpush1.bf16.msra.mxu0 0
    %637 = vmatprep.subr.bf16.mxu0 0
    %638 = vmatpush1.bf16.msra.mxu0 0
    %639 = vmatprep.subr.bf16.mxu0 0
    %640 = vmatpush1.bf16.msra.mxu0 0
    %641 = vmatprep.subr.bf16.mxu0 0
    %642 = vmatpush1.bf16.msra.mxu0 0
    %643 = vmatprep.subr.bf16.mxu0 0
    %644 = vmatpush1.bf16.msra.mxu0 0
    %645 = vmatprep.subr.bf16.mxu0 0
    %646 = vmatpush1.bf16.msra.mxu0 0
    %647 = vmatprep.mubr.bf16.mxu0 0
    %648 = vmatmul.mubr.bf16.gmra.mrb[0].mxu0 %v52
    %v649 = vpop.f32.mrb[0].mxu0
    %v650 = vadd.f32 0.0, %v649
    %v651 = vpop.f32.mrb[0].mxu0
    %v652 = vpop.f32.mrb[0].mxu0
    %v653 = vadd.f32 0.0, %v652
    %v654 = vpop.f32.mrb[0].mxu0
    %655 = vdwg.mxu0
    %v656 = vpack.c.bf16 %v534, %v534
    %v657 = vpack.c.bf16 %v537, %v537
    %v658 = vpack.c.bf16 %v592, %v592
    %v659 = vpack.c.bf16 %v595, %v595
    %v660 = vpack.c.bf16 %v650, %v650
    %v661 = vpack.c.bf16 %v653, %v653
    %v663 = vsel %vm215, %v656, 0
    %v666 = vsel %vm215, %v658, 0
    %668 = vmatprep.subr.bf16.mxu0 0
    %669 = vmatpush1.bf16.xpose.msra.mxu0 %v666
    %670 = vmatprep.subr.bf16.mxu0 0
    %671 = vmatpush1.bf16.xpose.msra.mxu0 0
    %672 = vmatprep.subr.bf16.mxu0 0
    %673 = vmatpush1.bf16.xpose.msra.mxu0 0
    %674 = vmatprep.subr.bf16.mxu0 0
    %675 = vmatpush1.bf16.xpose.msra.mxu0 0
    %676 = vmatprep.subr.bf16.mxu0 0
    %677 = vmatpush1.bf16.xpose.msra.mxu0 0
    %678 = vmatprep.subr.bf16.mxu0 0
    %679 = vmatpush1.bf16.xpose.msra.mxu0 0
    %680 = vmatprep.subr.bf16.mxu0 0
    %681 = vmatpush1.bf16.xpose.msra.mxu0 0
    %682 = vmatprep.subr.bf16.mxu0 0
    %683 = vmatpush1.bf16.xpose.msra.mxu0 0
    %684 = vmatprep.subr.bf16.mxu0 0
    %685 = vmatpush1.bf16.xpose.msra.mxu0 0
    %686 = vmatprep.subr.bf16.mxu0 0
    %687 = vmatpush1.bf16.xpose.msra.mxu0 0
    %688 = vmatprep.subr.bf16.mxu0 0
    %689 = vmatpush1.bf16.xpose.msra.mxu0 0
    %690 = vmatprep.subr.bf16.mxu0 0
    %691 = vmatpush1.bf16.xpose.msra.mxu0 0
    %692 = vmatprep.subr.bf16.mxu0 0
    %693 = vmatpush1.bf16.xpose.msra.mxu0 0
    %694 = vmatprep.subr.bf16.mxu0 0
    %695 = vmatpush1.bf16.xpose.msra.mxu0 0
    %696 = vmatprep.subr.bf16.mxu0 0
    %697 = vmatpush1.bf16.xpose.msra.mxu0 0
    %698 = vmatprep.subr.bf16.mxu0 0
    %699 = vmatpush1.bf16.xpose.msra.mxu0 0
    %700 = vmatprep.mubr.bf16.mxu0 0
    %701 = vmatmul.mubr.bf16.gmra.mrb[0].mxu0 %v663
    %v702 = vpop.f32.mrb[0].mxu0
    %v703 = vadd.f32 0.0, %v702
    %v704 = vpop.f32.mrb[0].mxu0
    %v705 = vpop.f32.mrb[0].mxu0
    %v706 = vpop.f32.mrb[0].mxu0
    %707 = vdwg.mxu0
    %v709 = vsel %vm215, %v657, 0
    %v712 = vsel %vm215, %v659, 0
    %714 = vmatprep.subr.bf16.mxu0 0
    %715 = vmatpush1.bf16.xpose.msra.mxu0 %v712
    %716 = vmatprep.subr.bf16.mxu0 0
    %717 = vmatpush1.bf16.xpose.msra.mxu0 0
    %718 = vmatprep.subr.bf16.mxu0 0
    %719 = vmatpush1.bf16.xpose.msra.mxu0 0
    %720 = vmatprep.subr.bf16.mxu0 0
    %721 = vmatpush1.bf16.xpose.msra.mxu0 0
    %722 = vmatprep.subr.bf16.mxu0 0
    %723 = vmatpush1.bf16.xpose.msra.mxu0 0
    %724 = vmatprep.subr.bf16.mxu0 0
    %725 = vmatpush1.bf16.xpose.msra.mxu0 0
    %726 = vmatprep.subr.bf16.mxu0 0
    %727 = vmatpush1.bf16.xpose.msra.mxu0 0
    %728 = vmatprep.subr.bf16.mxu0 0
    %729 = vmatpush1.bf16.xpose.msra.mxu0 0
    %730 = vmatprep.subr.bf16.mxu0 0
    %731 = vmatpush1.bf16.xpose.msra.mxu0 0
    %732 = vmatprep.subr.bf16.mxu0 0
    %733 = vmatpush1.bf16.xpose.msra.mxu0 0
    %734 = vmatprep.subr.bf16.mxu0 0
    %735 = vmatpush1.bf16.xpose.msra.mxu0 0
    %736 = vmatprep.subr.bf16.mxu0 0
    %737 = vmatpush1.bf16.xpose.msra.mxu0 0
    %738 = vmatprep.subr.bf16.mxu0 0
    %739 = vmatpush1.bf16.xpose.msra.mxu0 0
    %740 = vmatprep.subr.bf16.mxu0 0
    %741 = vmatpush1.bf16.xpose.msra.mxu0 0
    %742 = vmatprep.subr.bf16.mxu0 0
    %743 = vmatpush1.bf16.xpose.msra.mxu0 0
    %744 = vmatprep.subr.bf16.mxu0 0
    %745 = vmatpush1.bf16.xpose.msra.mxu0 0
    %746 = vmatprep.mubr.bf16.mxu0 0
    %747 = vmatmul.mubr.bf16.gmra.mrb[0].mxu0 %v709
    %v748 = vpop.f32.mrb[0].mxu0
    %v749 = vadd.f32 0.0, %v748
    %v750 = vpop.f32.mrb[0].mxu0
    %v751 = vpop.f32.mrb[0].mxu0
    %v752 = vpop.f32.mrb[0].mxu0
    %753 = vdwg.mxu0
    %v754 = vsel %vm308, %v703, -inf
    %755 = vmax.xlane.f32.xlu0 %v754
    %v756 = vpop.xlane.xlu0 %755
    %v757 = vsel %vm308, %v749, -inf
    %758 = vmax.xlane.f32.xlu0 %v757
    %v759 = vpop.xlane.xlu0 %758
    %v760 = vsub.f32 %v703, %v756
    %v761 = vsub.f32 %v749, %v759
    %v762 = vmul.f32 %v760, 1.442695
    %v763 = vpow.pop %v762
    %v764 = vmul.f32 %v761, 1.442695
    %v765 = vpow.pop %v764
    %v766 = vsel %vm308, %v763, 0.0
    %767 = vadd.xlane.f32.xlu0 %v766
    %v768 = vpop.xlane.xlu0 %767
    %v769 = vsel %vm308, %v765, 0.0
    %770 = vadd.xlane.f32.xlu0 %v769
    %v771 = vpop.xlane.xlu0 %770
    %v772 = vpack.c.bf16 %v763, %v763
    %v773 = vpack.c.bf16 %v765, %v765
    %v775 = vsel %vm308, %v772, 0
    %v778 = vsel %vm332, %v660, 0
    %780 = vmatprep.subr.bf16.mxu0 0
    %781 = vmatpush1.bf16.msra.mxu0 %v778
    %782 = vmatprep.subr.bf16.mxu0 0
    %783 = vmatpush1.bf16.msra.mxu0 0
    %784 = vmatprep.subr.bf16.mxu0 0
    %785 = vmatpush1.bf16.msra.mxu0 0
    %786 = vmatprep.subr.bf16.mxu0 0
    %787 = vmatpush1.bf16.msra.mxu0 0
    %788 = vmatprep.subr.bf16.mxu0 0
    %789 = vmatpush1.bf16.msra.mxu0 0
    %790 = vmatprep.subr.bf16.mxu0 0
    %791 = vmatpush1.bf16.msra.mxu0 0
    %792 = vmatprep.subr.bf16.mxu0 0
    %793 = vmatpush1.bf16.msra.mxu0 0
    %794 = vmatprep.subr.bf16.mxu0 0
    %795 = vmatpush1.bf16.msra.mxu0 0
    %796 = vmatprep.subr.bf16.mxu0 0
    %797 = vmatpush1.bf16.msra.mxu0 0
    %798 = vmatprep.subr.bf16.mxu0 0
    %799 = vmatpush1.bf16.msra.mxu0 0
    %800 = vmatprep.subr.bf16.mxu0 0
    %801 = vmatpush1.bf16.msra.mxu0 0
    %802 = vmatprep.subr.bf16.mxu0 0
    %803 = vmatpush1.bf16.msra.mxu0 0
    %804 = vmatprep.subr.bf16.mxu0 0
    %805 = vmatpush1.bf16.msra.mxu0 0
    %806 = vmatprep.subr.bf16.mxu0 0
    %807 = vmatpush1.bf16.msra.mxu0 0
    %808 = vmatprep.subr.bf16.mxu0 0
    %809 = vmatpush1.bf16.msra.mxu0 0
    %810 = vmatprep.subr.bf16.mxu0 0
    %811 = vmatpush1.bf16.msra.mxu0 0
    %812 = vmatprep.mubr.bf16.mxu0 0
    %813 = vmatmul.mubr.bf16.gmra.mrb[0].mxu0 %v775
    %v814 = vpop.f32.mrb[0].mxu0
    %v815 = vadd.f32 0.0, %v814
    %v816 = vpop.f32.mrb[0].mxu0
    %v817 = vpop.f32.mrb[0].mxu0
    %v818 = vpop.f32.mrb[0].mxu0
    %819 = vdwg.mxu0
    %v821 = vsel %vm308, %v773, 0
    %v824 = vsel %vm332, %v661, 0
    %826 = vmatprep.subr.bf16.mxu0 0
    %827 = vmatpush1.bf16.msra.mxu0 %v824
    %828 = vmatprep.subr.bf16.mxu0 0
    %829 = vmatpush1.bf16.msra.mxu0 0
    %830 = vmatprep.subr.bf16.mxu0 0
    %831 = vmatpush1.bf16.msra.mxu0 0
    %832 = vmatprep.subr.bf16.mxu0 0
    %833 = vmatpush1.bf16.msra.mxu0 0
    %834 = vmatprep.subr.bf16.mxu0 0
    %835 = vmatpush1.bf16.msra.mxu0 0
    %836 = vmatprep.subr.bf16.mxu0 0
    %837 = vmatpush1.bf16.msra.mxu0 0
    %838 = vmatprep.subr.bf16.mxu0 0
    %839 = vmatpush1.bf16.msra.mxu0 0
    %840 = vmatprep.subr.bf16.mxu0 0
    %841 = vmatpush1.bf16.msra.mxu0 0
    %842 = vmatprep.subr.bf16.mxu0 0
    %843 = vmatpush1.bf16.msra.mxu0 0
    %844 = vmatprep.subr.bf16.mxu0 0
    %845 = vmatpush1.bf16.msra.mxu0 0
    %846 = vmatprep.subr.bf16.mxu0 0
    %847 = vmatpush1.bf16.msra.mxu0 0
    %848 = vmatprep.subr.bf16.mxu0 0
    %849 = vmatpush1.bf16.msra.mxu0 0
    %850 = vmatprep.subr.bf16.mxu0 0
    %851 = vmatpush1.bf16.msra.mxu0 0
    %852 = vmatprep.subr.bf16.mxu0 0
    %853 = vmatpush1.bf16.msra.mxu0 0
    %854 = vmatprep.subr.bf16.mxu0 0
    %855 = vmatpush1.bf16.msra.mxu0 0
    %856 = vmatprep.subr.bf16.mxu0 0
    %857 = vmatpush1.bf16.msra.mxu0 0
    %858 = vmatprep.mubr.bf16.mxu0 0
    %859 = vmatmul.mubr.bf16.gmra.mrb[0].mxu0 %v821
    %v860 = vpop.f32.mrb[0].mxu0
    %v861 = vadd.f32 0.0, %v860
    %v862 = vpop.f32.mrb[0].mxu0
    %v863 = vpop.f32.mrb[0].mxu0
    %v864 = vpop.f32.mrb[0].mxu0
    %865 = vdwg.mxu0
    %v866 = vrcp.pop %v768
    %v867 = vrcp.pop %v771
    %v868 = vmul.f32 %v815, %v866
    %v869 = vmul.f32 %v861, %v867
    %v870 = vld [vmem:[#allocation2] sm:$0xff]
    %v871 = vld [vmem:[#allocation2 + $0x8] sm:$0xff]
    %v872 = vpack.c.bf16 %v869, %v868
    %s873 = scalar_lea.vmem %s4, 2
    %v874 = vld [vmem:[%s873] sm:$0x3]
    %v876 = vsel %vm215, %v872, 0
    %v879 = vsel %vm433, %v874, 0
    %881 = vmatprep.subr.bf16.mxu0 0
    %882 = vmatpush1.bf16.msra.mxu0 %v879
    %883 = vmatprep.subr.bf16.mxu0 0
    %884 = vmatpush1.bf16.msra.mxu0 0
    %885 = vmatprep.subr.bf16.mxu0 0
    %886 = vmatpush1.bf16.msra.mxu0 0
    %887 = vmatprep.subr.bf16.mxu0 0
    %888 = vmatpush1.bf16.msra.mxu0 0
    %889 = vmatprep.subr.bf16.mxu0 0
    %890 = vmatpush1.bf16.msra.mxu0 0
    %891 = vmatprep.subr.bf16.mxu0 0
    %892 = vmatpush1.bf16.msra.mxu0 0
    %893 = vmatprep.subr.bf16.mxu0 0
    %894 = vmatpush1.bf16.msra.mxu0 0
    %895 = vmatprep.subr.bf16.mxu0 0
    %896 = vmatpush1.bf16.msra.mxu0 0
    %897 = vmatprep.subr.bf16.mxu0 0
    %898 = vmatpush1.bf16.msra.mxu0 0
    %899 = vmatprep.subr.bf16.mxu0 0
    %900 = vmatpush1.bf16.msra.mxu0 0
    %901 = vmatprep.subr.bf16.mxu0 0
    %902 = vmatpush1.bf16.msra.mxu0 0
    %903 = vmatprep.subr.bf16.mxu0 0
    %904 = vmatpush1.bf16.msra.mxu0 0
    %905 = vmatprep.subr.bf16.mxu0 0
    %906 = vmatpush1.bf16.msra.mxu0 0
    %907 = vmatprep.subr.bf16.mxu0 0
    %908 = vmatpush1.bf16.msra.mxu0 0
    %909 = vmatprep.subr.bf16.mxu0 0
    %910 = vmatpush1.bf16.msra.mxu0 0
    %911 = vmatprep.subr.bf16.mxu0 0
    %912 = vmatpush1.bf16.msra.mxu0 0
    %913 = vmatprep.mubr.bf16.mxu0 0
    %914 = vmatmul.mubr.bf16.gmra.mrb[0].mxu0 %v876
    %v915 = vpop.f32.mrb[0].mxu0
    %v916 = vadd.f32 0.0, %v915
    %v917 = vpop.f32.mrb[0].mxu0
    %v918 = vpop.f32.mrb[0].mxu0
    %v919 = vadd.f32 0.0, %v918
    %v920 = vpop.f32.mrb[0].mxu0
    %921 = vdwg.mxu0
    %v922 = vadd.f32 %v870, %v916
    %v923 = vadd.f32 %v871, %v919
    %924 = vst.msk [vmem:[#allocation2] sm:$0xff] %vm27, %v922
    %925 = vst.msk [vmem:[#allocation2 + $0x8] sm:$0xff] %vm27, %v923
    %s926 = scalar_lea.vmem %s1, 32
    %v927 = vld [vmem:[%s926] sm:$0xf]
    %v928 = vld [vmem:[%s926 + $0x4] sm:$0xf]
    %v929 = vld [vmem:[%s926 + $0x8] sm:$0xf]
    %v930 = vld [vmem:[%s926 + $0xc] sm:$0xf]
    %v935 = vunpack.c.l.b16 %v927
    %v936 = vunpack.c.l.b16 %v928
    %v937 = vunpack.c.l.b16 %v929
    %v938 = vunpack.c.l.b16 %v930
    %v939 = vpack.c.b16 %v936, %v935
    %v940 = vpack.c.b16 %v938, %v937
    %943 = vmatprep.subr.bf16.mxu0 0
    %944 = vmatpush1.bf16.msra.mxu0 %v939
    %945 = vmatprep.subr.bf16.mxu0 0
    %946 = vmatpush1.bf16.msra.mxu0 %v940
    %947 = vmatprep.subr.bf16.mxu0 0
    %948 = vmatpush1.bf16.msra.mxu0 0
    %949 = vmatprep.subr.bf16.mxu0 0
    %950 = vmatpush1.bf16.msra.mxu0 0
    %951 = vmatprep.subr.bf16.mxu0 0
    %952 = vmatpush1.bf16.msra.mxu0 0
    %953 = vmatprep.subr.bf16.mxu0 0
    %954 = vmatpush1.bf16.msra.mxu0 0
    %955 = vmatprep.subr.bf16.mxu0 0
    %956 = vmatpush1.bf16.msra.mxu0 0
    %957 = vmatprep.subr.bf16.mxu0 0
    %958 = vmatpush1.bf16.msra.mxu0 0
    %959 = vmatprep.subr.bf16.mxu0 0
    %960 = vmatpush1.bf16.msra.mxu0 0
    %961 = vmatprep.subr.bf16.mxu0 0
    %962 = vmatpush1.bf16.msra.mxu0 0
    %963 = vmatprep.subr.bf16.mxu0 0
    %964 = vmatpush1.bf16.msra.mxu0 0
    %965 = vmatprep.subr.bf16.mxu0 0
    %966 = vmatpush1.bf16.msra.mxu0 0
    %967 = vmatprep.subr.bf16.mxu0 0
    %968 = vmatpush1.bf16.msra.mxu0 0
    %969 = vmatprep.subr.bf16.mxu0 0
    %970 = vmatpush1.bf16.msra.mxu0 0
    %971 = vmatprep.subr.bf16.mxu0 0
    %972 = vmatpush1.bf16.msra.mxu0 0
    %973 = vmatprep.subr.bf16.mxu0 0
    %974 = vmatpush1.bf16.msra.mxu0 0
    %975 = vmatprep.mubr.bf16.mxu0 0
    %976 = vmatmul.mubr.bf16.gmra.mrb[0].mxu0 %v52
    %v977 = vpop.f32.mrb[0].mxu0
    %v978 = vadd.f32 0.0, %v977
    %v979 = vpop.f32.mrb[0].mxu0
    %v980 = vpop.f32.mrb[0].mxu0
    %v981 = vadd.f32 0.0, %v980
    %v982 = vpop.f32.mrb[0].mxu0
    %983 = vdwg.mxu0
    %s984 = scalar_lea.vmem %s2, 32
    %v985 = vld [vmem:[%s984] sm:$0xf]
    %v986 = vld [vmem:[%s984 + $0x4] sm:$0xf]
    %v987 = vld [vmem:[%s984 + $0x8] sm:$0xf]
    %v988 = vld [vmem:[%s984 + $0xc] sm:$0xf]
    %v993 = vunpack.c.l.b16 %v985
    %v994 = vunpack.c.l.b16 %v986
    %v995 = vunpack.c.l.b16 %v987
    %v996 = vunpack.c.l.b16 %v988
    %v997 = vpack.c.b16 %v994, %v993
    %v998 = vpack.c.b16 %v996, %v995
    %1001 = vmatprep.subr.bf16.mxu0 0
    %1002 = vmatpush1.bf16.msra.mxu0 %v997
    %1003 = vmatprep.subr.bf16.mxu0 0
    %1004 = vmatpush1.bf16.msra.mxu0 %v998
    %1005 = vmatprep.subr.bf16.mxu0 0
    %1006 = vmatpush1.bf16.msra.mxu0 0
    %1007 = vmatprep.subr.bf16.mxu0 0
    %1008 = vmatpush1.bf16.msra.mxu0 0
    %1009 = vmatprep.subr.bf16.mxu0 0
    %1010 = vmatpush1.bf16.msra.mxu0 0
    %1011 = vmatprep.subr.bf16.mxu0 0
    %1012 = vmatpush1.bf16.msra.mxu0 0
    %1013 = vmatprep.subr.bf16.mxu0 0
    %1014 = vmatpush1.bf16.msra.mxu0 0
    %1015 = vmatprep.subr.bf16.mxu0 0
    %1016 = vmatpush1.bf16.msra.mxu0 0
    %1017 = vmatprep.subr.bf16.mxu0 0
    %1018 = vmatpush1.bf16.msra.mxu0 0
    %1019 = vmatprep.subr.bf16.mxu0 0
    %1020 = vmatpush1.bf16.msra.mxu0 0
    %1021 = vmatprep.subr.bf16.mxu0 0
    %1022 = vmatpush1.bf16.msra.mxu0 0
    %1023 = vmatprep.subr.bf16.mxu0 0
    %1024 = vmatpush1.bf16.msra.mxu0 0
    %1025 = vmatprep.subr.bf16.mxu0 0
    %1026 = vmatpush1.bf16.msra.mxu0 0
    %1027 = vmatprep.subr.bf16.mxu0 0
    %1028 = vmatpush1.bf16.msra.mxu0 0
    %1029 = vmatprep.subr.bf16.mxu0 0
    %1030 = vmatpush1.bf16.msra.mxu0 0
    %1031 = vmatprep.subr.bf16.mxu0 0
    %1032 = vmatpush1.bf16.msra.mxu0 0
    %1033 = vmatprep.mubr.bf16.mxu0 0
    %1034 = vmatmul.mubr.bf16.gmra.mrb[0].mxu0 %v52
    %v1035 = vpop.f32.mrb[0].mxu0
    %v1036 = vadd.f32 0.0, %v1035
    %v1037 = vpop.f32.mrb[0].mxu0
    %v1038 = vpop.f32.mrb[0].mxu0
    %v1039 = vadd.f32 0.0, %v1038
    %v1040 = vpop.f32.mrb[0].mxu0
    %1041 = vdwg.mxu0
    %s1042 = scalar_lea.vmem %s3, 32
    %v1043 = vld [vmem:[%s1042] sm:$0xf]
    %v1044 = vld [vmem:[%s1042 + $0x4] sm:$0xf]
    %v1045 = vld [vmem:[%s1042 + $0x8] sm:$0xf]
    %v1046 = vld [vmem:[%s1042 + $0xc] sm:$0xf]
    %v1051 = vunpack.c.l.b16 %v1043
    %v1052 = vunpack.c.l.b16 %v1044
    %v1053 = vunpack.c.l.b16 %v1045
    %v1054 = vunpack.c.l.b16 %v1046
    %v1055 = vpack.c.b16 %v1052, %v1051
    %v1056 = vpack.c.b16 %v1054, %v1053
    %1059 = vmatprep.subr.bf16.mxu0 0
    %1060 = vmatpush1.bf16.msra.mxu0 %v1055
    %1061 = vmatprep.subr.bf16.mxu0 0
    %1062 = vmatpush1.bf16.msra.mxu0 %v1056
    %1063 = vmatprep.subr.bf16.mxu0 0
    %1064 = vmatpush1.bf16.msra.mxu0 0
    %1065 = vmatprep.subr.bf16.mxu0 0
    %1066 = vmatpush1.bf16.msra.mxu0 0
    %1067 = vmatprep.subr.bf16.mxu0 0
    %1068 = vmatpush1.bf16.msra.mxu0 0
    %1069 = vmatprep.subr.bf16.mxu0 0
    %1070 = vmatpush1.bf16.msra.mxu0 0
    %1071 = vmatprep.subr.bf16.mxu0 0
    %1072 = vmatpush1.bf16.msra.mxu0 0
    %1073 = vmatprep.subr.bf16.mxu0 0
    %1074 = vmatpush1.bf16.msra.mxu0 0
    %1075 = vmatprep.subr.bf16.mxu0 0
    %1076 = vmatpush1.bf16.msra.mxu0 0
    %1077 = vmatprep.subr.bf16.mxu0 0
    %1078 = vmatpush1.bf16.msra.mxu0 0
    %1079 = vmatprep.subr.bf16.mxu0 0
    %1080 = vmatpush1.bf16.msra.mxu0 0
    %1081 = vmatprep.subr.bf16.mxu0 0
    %1082 = vmatpush1.bf16.msra.mxu0 0
    %1083 = vmatprep.subr.bf16.mxu0 0
    %1084 = vmatpush1.bf16.msra.mxu0 0
    %1085 = vmatprep.subr.bf16.mxu0 0
    %1086 = vmatpush1.bf16.msra.mxu0 0
    %1087 = vmatprep.subr.bf16.mxu0 0
    %1088 = vmatpush1.bf16.msra.mxu0 0
    %1089 = vmatprep.subr.bf16.mxu0 0
    %1090 = vmatpush1.bf16.msra.mxu0 0
    %1091 = vmatprep.mubr.bf16.mxu0 0
    %1092 = vmatmul.mubr.bf16.gmra.mrb[0].mxu0 %v52
    %v1093 = vpop.f32.mrb[0].mxu0
    %v1094 = vadd.f32 0.0, %v1093
    %v1095 = vpop.f32.mrb[0].mxu0
    %v1096 = vpop.f32.mrb[0].mxu0
    %v1097 = vadd.f32 0.0, %v1096
    %v1098 = vpop.f32.mrb[0].mxu0
    %1099 = vdwg.mxu0
    %v1100 = vpack.c.bf16 %v978, %v978
    %v1101 = vpack.c.bf16 %v981, %v981
    %v1102 = vpack.c.bf16 %v1036, %v1036
    %v1103 = vpack.c.bf16 %v1039, %v1039
    %v1104 = vpack.c.bf16 %v1094, %v1094
    %v1105 = vpack.c.bf16 %v1097, %v1097
    %v1107 = vsel %vm215, %v1100, 0
    %v1110 = vsel %vm215, %v1102, 0
    %1112 = vmatprep.subr.bf16.mxu0 0
    %1113 = vmatpush1.bf16.xpose.msra.mxu0 %v1110
    %1114 = vmatprep.subr.bf16.mxu0 0
    %1115 = vmatpush1.bf16.xpose.msra.mxu0 0
    %1116 = vmatprep.subr.bf16.mxu0 0
    %1117 = vmatpush1.bf16.xpose.msra.mxu0 0
    %1118 = vmatprep.subr.bf16.mxu0 0
    %1119 = vmatpush1.bf16.xpose.msra.mxu0 0
    %1120 = vmatprep.subr.bf16.mxu0 0
    %1121 = vmatpush1.bf16.xpose.msra.mxu0 0
    %1122 = vmatprep.subr.bf16.mxu0 0
    %1123 = vmatpush1.bf16.xpose.msra.mxu0 0
    %1124 = vmatprep.subr.bf16.mxu0 0
    %1125 = vmatpush1.bf16.xpose.msra.mxu0 0
    %1126 = vmatprep.subr.bf16.mxu0 0
    %1127 = vmatpush1.bf16.xpose.msra.mxu0 0
    %1128 = vmatprep.subr.bf16.mxu0 0
    %1129 = vmatpush1.bf16.xpose.msra.mxu0 0
    %1130 = vmatprep.subr.bf16.mxu0 0
    %1131 = vmatpush1.bf16.xpose.msra.mxu0 0
    %1132 = vmatprep.subr.bf16.mxu0 0
    %1133 = vmatpush1.bf16.xpose.msra.mxu0 0
    %1134 = vmatprep.subr.bf16.mxu0 0
    %1135 = vmatpush1.bf16.xpose.msra.mxu0 0
    %1136 = vmatprep.subr.bf16.mxu0 0
    %1137 = vmatpush1.bf16.xpose.msra.mxu0 0
    %1138 = vmatprep.subr.bf16.mxu0 0
    %1139 = vmatpush1.bf16.xpose.msra.mxu0 0
    %1140 = vmatprep.subr.bf16.mxu0 0
    %1141 = vmatpush1.bf16.xpose.msra.mxu0 0
    %1142 = vmatprep.subr.bf16.mxu0 0
    %1143 = vmatpush1.bf16.xpose.msra.mxu0 0
    %1144 = vmatprep.mubr.bf16.mxu0 0
    %1145 = vmatmul.mubr.bf16.gmra.mrb[0].mxu0 %v1107
    %v1146 = vpop.f32.mrb[0].mxu0
    %v1147 = vadd.f32 0.0, %v1146
    %v1148 = vpop.f32.mrb[0].mxu0
    %v1149 = vpop.f32.mrb[0].mxu0
    %v1150 = vpop.f32.mrb[0].mxu0
    %1151 = vdwg.mxu0
    %v1153 = vsel %vm215, %v1101, 0
    %v1156 = vsel %vm215, %v1103, 0
    %1158 = vmatprep.subr.bf16.mxu0 0
    %1159 = vmatpush1.bf16.xpose.msra.mxu0 %v1156
    %1160 = vmatprep.subr.bf16.mxu0 0
    %1161 = vmatpush1.bf16.xpose.msra.mxu0 0
    %1162 = vmatprep.subr.bf16.mxu0 0
    %1163 = vmatpush1.bf16.xpose.msra.mxu0 0
    %1164 = vmatprep.subr.bf16.mxu0 0
    %1165 = vmatpush1.bf16.xpose.msra.mxu0 0
    %1166 = vmatprep.subr.bf16.mxu0 0
    %1167 = vmatpush1.bf16.xpose.msra.mxu0 0
    %1168 = vmatprep.subr.bf16.mxu0 0
    %1169 = vmatpush1.bf16.xpose.msra.mxu0 0
    %1170 = vmatprep.subr.bf16.mxu0 0
    %1171 = vmatpush1.bf16.xpose.msra.mxu0 0
    %1172 = vmatprep.subr.bf16.mxu0 0
    %1173 = vmatpush1.bf16.xpose.msra.mxu0 0
    %1174 = vmatprep.subr.bf16.mxu0 0
    %1175 = vmatpush1.bf16.xpose.msra.mxu0 0
    %1176 = vmatprep.subr.bf16.mxu0 0
    %1177 = vmatpush1.bf16.xpose.msra.mxu0 0
    %1178 = vmatprep.subr.bf16.mxu0 0
    %1179 = vmatpush1.bf16.xpose.msra.mxu0 0
    %1180 = vmatprep.subr.bf16.mxu0 0
    %1181 = vmatpush1.bf16.xpose.msra.mxu0 0
    %1182 = vmatprep.subr.bf16.mxu0 0
    %1183 = vmatpush1.bf16.xpose.msra.mxu0 0
    %1184 = vmatprep.subr.bf16.mxu0 0
    %1185 = vmatpush1.bf16.xpose.msra.mxu0 0
    %1186 = vmatprep.subr.bf16.mxu0 0
    %1187 = vmatpush1.bf16.xpose.msra.mxu0 0
    %1188 = vmatprep.subr.bf16.mxu0 0
    %1189 = vmatpush1.bf16.xpose.msra.mxu0 0
    %1190 = vmatprep.mubr.bf16.mxu0 0
    %1191 = vmatmul.mubr.bf16.gmra.mrb[0].mxu0 %v1153
    %v1192 = vpop.f32.mrb[0].mxu0
    %v1193 = vadd.f32 0.0, %v1192
    %v1194 = vpop.f32.mrb[0].mxu0
    %v1195 = vpop.f32.mrb[0].mxu0
    %v1196 = vpop.f32.mrb[0].mxu0
    %1197 = vdwg.mxu0
    %v1198 = vsel %vm308, %v1147, -inf
    %1199 = vmax.xlane.f32.xlu0 %v1198
    %v1200 = vpop.xlane.xlu0 %1199
    %v1201 = vsel %vm308, %v1193, -inf
    %1202 = vmax.xlane.f32.xlu0 %v1201
    %v1203 = vpop.xlane.xlu0 %1202
    %v1204 = vsub.f32 %v1147, %v1200
    %v1205 = vsub.f32 %v1193, %v1203
    %v1206 = vmul.f32 %v1204, 1.442695
    %v1207 = vpow.pop %v1206
    %v1208 = vmul.f32 %v1205, 1.442695
    %v1209 = vpow.pop %v1208
    %v1210 = vsel %vm308, %v1207, 0.0
    %1211 = vadd.xlane.f32.xlu0 %v1210
    %v1212 = vpop.xlane.xlu0 %1211
    %v1213 = vsel %vm308, %v1209, 0.0
    %1214 = vadd.xlane.f32.xlu0 %v1213
    %v1215 = vpop.xlane.xlu0 %1214
    %v1216 = vpack.c.bf16 %v1207, %v1207
    %v1217 = vpack.c.bf16 %v1209, %v1209
    %v1219 = vsel %vm308, %v1216, 0
    %v1222 = vsel %vm332, %v1104, 0
    %1224 = vmatprep.subr.bf16.mxu0 0
    %1225 = vmatpush1.bf16.msra.mxu0 %v1222
    %1226 = vmatprep.subr.bf16.mxu0 0
    %1227 = vmatpush1.bf16.msra.mxu0 0
    %1228 = vmatprep.subr.bf16.mxu0 0
    %1229 = vmatpush1.bf16.msra.mxu0 0
    %1230 = vmatprep.subr.bf16.mxu0 0
    %1231 = vmatpush1.bf16.msra.mxu0 0
    %1232 = vmatprep.subr.bf16.mxu0 0
    %1233 = vmatpush1.bf16.msra.mxu0 0
    %1234 = vmatprep.subr.bf16.mxu0 0
    %1235 = vmatpush1.bf16.msra.mxu0 0
    %1236 = vmatprep.subr.bf16.mxu0 0
    %1237 = vmatpush1.bf16.msra.mxu0 0
    %1238 = vmatprep.subr.bf16.mxu0 0
    %1239 = vmatpush1.bf16.msra.mxu0 0
    %1240 = vmatprep.subr.bf16.mxu0 0
    %1241 = vmatpush1.bf16.msra.mxu0 0
    %1242 = vmatprep.subr.bf16.mxu0 0
    %1243 = vmatpush1.bf16.msra.mxu0 0
    %1244 = vmatprep.subr.bf16.mxu0 0
    %1245 = vmatpush1.bf16.msra.mxu0 0
    %1246 = vmatprep.subr.bf16.mxu0 0
    %1247 = vmatpush1.bf16.msra.mxu0 0
    %1248 = vmatprep.subr.bf16.mxu0 0
    %1249 = vmatpush1.bf16.msra.mxu0 0
    %1250 = vmatprep.subr.bf16.mxu0 0
    %1251 = vmatpush1.bf16.msra.mxu0 0
    %1252 = vmatprep.subr.bf16.mxu0 0
    %1253 = vmatpush1.bf16.msra.mxu0 0
    %1254 = vmatprep.subr.bf16.mxu0 0
    %1255 = vmatpush1.bf16.msra.mxu0 0
    %1256 = vmatprep.mubr.bf16.mxu0 0
    %1257 = vmatmul.mubr.bf16.gmra.mrb[0].mxu0 %v1219
    %v1258 = vpop.f32.mrb[0].mxu0
    %v1259 = vadd.f32 0.0, %v1258
    %v1260 = vpop.f32.mrb[0].mxu0
    %v1261 = vpop.f32.mrb[0].mxu0
    %v1262 = vpop.f32.mrb[0].mxu0
    %1263 = vdwg.mxu0
    %v1265 = vsel %vm308, %v1217, 0
    %v1268 = vsel %vm332, %v1105, 0
    %1270 = vmatprep.subr.bf16.mxu0 0
    %1271 = vmatpush1.bf16.msra.mxu0 %v1268
    %1272 = vmatprep.subr.bf16.mxu0 0
    %1273 = vmatpush1.bf16.msra.mxu0 0
    %1274 = vmatprep.subr.bf16.mxu0 0
    %1275 = vmatpush1.bf16.msra.mxu0 0
    %1276 = vmatprep.subr.bf16.mxu0 0
    %1277 = vmatpush1.bf16.msra.mxu0 0
    %1278 = vmatprep.subr.bf16.mxu0 0
    %1279 = vmatpush1.bf16.msra.mxu0 0
    %1280 = vmatprep.subr.bf16.mxu0 0
    %1281 = vmatpush1.bf16.msra.mxu0 0
    %1282 = vmatprep.subr.bf16.mxu0 0
    %1283 = vmatpush1.bf16.msra.mxu0 0
    %1284 = vmatprep.subr.bf16.mxu0 0
    %1285 = vmatpush1.bf16.msra.mxu0 0
    %1286 = vmatprep.subr.bf16.mxu0 0
    %1287 = vmatpush1.bf16.msra.mxu0 0
    %1288 = vmatprep.subr.bf16.mxu0 0
    %1289 = vmatpush1.bf16.msra.mxu0 0
    %1290 = vmatprep.subr.bf16.mxu0 0
    %1291 = vmatpush1.bf16.msra.mxu0 0
    %1292 = vmatprep.subr.bf16.mxu0 0
    %1293 = vmatpush1.bf16.msra.mxu0 0
    %1294 = vmatprep.subr.bf16.mxu0 0
    %1295 = vmatpush1.bf16.msra.mxu0 0
    %1296 = vmatprep.subr.bf16.mxu0 0
    %1297 = vmatpush1.bf16.msra.mxu0 0
    %1298 = vmatprep.subr.bf16.mxu0 0
    %1299 = vmatpush1.bf16.msra.mxu0 0
    %1300 = vmatprep.subr.bf16.mxu0 0
    %1301 = vmatpush1.bf16.msra.mxu0 0
    %1302 = vmatprep.mubr.bf16.mxu0 0
    %1303 = vmatmul.mubr.bf16.gmra.mrb[0].mxu0 %v1265
    %v1304 = vpop.f32.mrb[0].mxu0
    %v1305 = vadd.f32 0.0, %v1304
    %v1306 = vpop.f32.mrb[0].mxu0
    %v1307 = vpop.f32.mrb[0].mxu0
    %v1308 = vpop.f32.mrb[0].mxu0
    %1309 = vdwg.mxu0
    %v1310 = vrcp.pop %v1212
    %v1311 = vrcp.pop %v1215
    %v1312 = vmul.f32 %v1259, %v1310
    %v1313 = vmul.f32 %v1305, %v1311
    %v1314 = vld [vmem:[#allocation2] sm:$0xff]
    %v1315 = vld [vmem:[#allocation2 + $0x8] sm:$0xff]
    %v1316 = vpack.c.bf16 %v1313, %v1312
    %s1317 = scalar_lea.vmem %s4, 4
    %v1318 = vld [vmem:[%s1317] sm:$0x3]
    %v1320 = vsel %vm215, %v1316, 0
    %v1323 = vsel %vm433, %v1318, 0
    %1325 = vmatprep.subr.bf16.mxu0 0
    %1326 = vmatpush1.bf16.msra.mxu0 %v1323
    %1327 = vmatprep.subr.bf16.mxu0 0
    %1328 = vmatpush1.bf16.msra.mxu0 0
    %1329 = vmatprep.subr.bf16.mxu0 0
    %1330 = vmatpush1.bf16.msra.mxu0 0
    %1331 = vmatprep.subr.bf16.mxu0 0
    %1332 = vmatpush1.bf16.msra.mxu0 0
    %1333 = vmatprep.subr.bf16.mxu0 0
    %1334 = vmatpush1.bf16.msra.mxu0 0
    %1335 = vmatprep.subr.bf16.mxu0 0
    %1336 = vmatpush1.bf16.msra.mxu0 0
    %1337 = vmatprep.subr.bf16.mxu0 0
    %1338 = vmatpush1.bf16.msra.mxu0 0
    %1339 = vmatprep.subr.bf16.mxu0 0
    %1340 = vmatpush1.bf16.msra.mxu0 0
    %1341 = vmatprep.subr.bf16.mxu0 0
    %1342 = vmatpush1.bf16.msra.mxu0 0
    %1343 = vmatprep.subr.bf16.mxu0 0
    %1344 = vmatpush1.bf16.msra.mxu0 0
    %1345 = vmatprep.subr.bf16.mxu0 0
    %1346 = vmatpush1.bf16.msra.mxu0 0
    %1347 = vmatprep.subr.bf16.mxu0 0
    %1348 = vmatpush1.bf16.msra.mxu0 0
    %1349 = vmatprep.subr.bf16.mxu0 0
    %1350 = vmatpush1.bf16.msra.mxu0 0
    %1351 = vmatprep.subr.bf16.mxu0 0
    %1352 = vmatpush1.bf16.msra.mxu0 0
    %1353 = vmatprep.subr.bf16.mxu0 0
    %1354 = vmatpush1.bf16.msra.mxu0 0
    %1355 = vmatprep.subr.bf16.mxu0 0
    %1356 = vmatpush1.bf16.msra.mxu0 0
    %1357 = vmatprep.mubr.bf16.mxu0 0
    %1358 = vmatmul.mubr.bf16.gmra.mrb[0].mxu0 %v1320
    %v1359 = vpop.f32.mrb[0].mxu0
    %v1360 = vadd.f32 0.0, %v1359
    %v1361 = vpop.f32.mrb[0].mxu0
    %v1362 = vpop.f32.mrb[0].mxu0
    %v1363 = vadd.f32 0.0, %v1362
    %v1364 = vpop.f32.mrb[0].mxu0
    %1365 = vdwg.mxu0
    %v1366 = vadd.f32 %v1314, %v1360
    %v1367 = vadd.f32 %v1315, %v1363
    %1368 = vst.msk [vmem:[#allocation2] sm:$0xff] %vm27, %v1366
    %1369 = vst.msk [vmem:[#allocation2 + $0x8] sm:$0xff] %vm27, %v1367
    %s1370 = scalar_lea.vmem %s1, 48
    %v1371 = vld [vmem:[%s1370] sm:$0xf]
    %v1372 = vld [vmem:[%s1370 + $0x4] sm:$0xf]
    %v1373 = vld [vmem:[%s1370 + $0x8] sm:$0xf]
    %v1374 = vld [vmem:[%s1370 + $0xc] sm:$0xf]
    %v1379 = vunpack.c.l.b16 %v1371
    %v1380 = vunpack.c.l.b16 %v1372
    %v1381 = vunpack.c.l.b16 %v1373
    %v1382 = vunpack.c.l.b16 %v1374
    %v1383 = vpack.c.b16 %v1380, %v1379
    %v1384 = vpack.c.b16 %v1382, %v1381
    %1387 = vmatprep.subr.bf16.mxu0 0
    %1388 = vmatpush1.bf16.msra.mxu0 %v1383
    %1389 = vmatprep.subr.bf16.mxu0 0
    %1390 = vmatpush1.bf16.msra.mxu0 %v1384
    %1391 = vmatprep.subr.bf16.mxu0 0
    %1392 = vmatpush1.bf16.msra.mxu0 0
    %1393 = vmatprep.subr.bf16.mxu0 0
    %1394 = vmatpush1.bf16.msra.mxu0 0
    %1395 = vmatprep.subr.bf16.mxu0 0
    %1396 = vmatpush1.bf16.msra.mxu0 0
    %1397 = vmatprep.subr.bf16.mxu0 0
    %1398 = vmatpush1.bf16.msra.mxu0 0
    %1399 = vmatprep.subr.bf16.mxu0 0
    %1400 = vmatpush1.bf16.msra.mxu0 0
    %1401 = vmatprep.subr.bf16.mxu0 0
    %1402 = vmatpush1.bf16.msra.mxu0 0
    %1403 = vmatprep.subr.bf16.mxu0 0
    %1404 = vmatpush1.bf16.msra.mxu0 0
    %1405 = vmatprep.subr.bf16.mxu0 0
    %1406 = vmatpush1.bf16.msra.mxu0 0
    %1407 = vmatprep.subr.bf16.mxu0 0
    %1408 = vmatpush1.bf16.msra.mxu0 0
    %1409 = vmatprep.subr.bf16.mxu0 0
    %1410 = vmatpush1.bf16.msra.mxu0 0
    %1411 = vmatprep.subr.bf16.mxu0 0
    %1412 = vmatpush1.bf16.msra.mxu0 0
    %1413 = vmatprep.subr.bf16.mxu0 0
    %1414 = vmatpush1.bf16.msra.mxu0 0
    %1415 = vmatprep.subr.bf16.mxu0 0
    %1416 = vmatpush1.bf16.msra.mxu0 0
    %1417 = vmatprep.subr.bf16.mxu0 0
    %1418 = vmatpush1.bf16.msra.mxu0 0
    %1419 = vmatprep.mubr.bf16.mxu0 0
    %1420 = vmatmul.mubr.bf16.gmra.mrb[0].mxu0 %v52
    %v1421 = vpop.f32.mrb[0].mxu0
    %v1422 = vadd.f32 0.0, %v1421
    %v1423 = vpop.f32.mrb[0].mxu0
    %v1424 = vpop.f32.mrb[0].mxu0
    %v1425 = vadd.f32 0.0, %v1424
    %v1426 = vpop.f32.mrb[0].mxu0
    %1427 = vdwg.mxu0
    %s1428 = scalar_lea.vmem %s2, 48
    %v1429 = vld [vmem:[%s1428] sm:$0xf]
    %v1430 = vld [vmem:[%s1428 + $0x4] sm:$0xf]
    %v1431 = vld [vmem:[%s1428 + $0x8] sm:$0xf]
    %v1432 = vld [vmem:[%s1428 + $0xc] sm:$0xf]
    %v1437 = vunpack.c.l.b16 %v1429
    %v1438 = vunpack.c.l.b16 %v1430
    %v1439 = vunpack.c.l.b16 %v1431
    %v1440 = vunpack.c.l.b16 %v1432
    %v1441 = vpack.c.b16 %v1438, %v1437
    %v1442 = vpack.c.b16 %v1440, %v1439
    %1445 = vmatprep.subr.bf16.mxu0 0
    %1446 = vmatpush1.bf16.msra.mxu0 %v1441
    %1447 = vmatprep.subr.bf16.mxu0 0
    %1448 = vmatpush1.bf16.msra.mxu0 %v1442
    %1449 = vmatprep.subr.bf16.mxu0 0
    %1450 = vmatpush1.bf16.msra.mxu0 0
    %1451 = vmatprep.subr.bf16.mxu0 0
    %1452 = vmatpush1.bf16.msra.mxu0 0
    %1453 = vmatprep.subr.bf16.mxu0 0
    %1454 = vmatpush1.bf16.msra.mxu0 0
    %1455 = vmatprep.subr.bf16.mxu0 0
    %1456 = vmatpush1.bf16.msra.mxu0 0
    %1457 = vmatprep.subr.bf16.mxu0 0
    %1458 = vmatpush1.bf16.msra.mxu0 0
    %1459 = vmatprep.subr.bf16.mxu0 0
    %1460 = vmatpush1.bf16.msra.mxu0 0
    %1461 = vmatprep.subr.bf16.mxu0 0
    %1462 = vmatpush1.bf16.msra.mxu0 0
    %1463 = vmatprep.subr.bf16.mxu0 0
    %1464 = vmatpush1.bf16.msra.mxu0 0
    %1465 = vmatprep.subr.bf16.mxu0 0
    %1466 = vmatpush1.bf16.msra.mxu0 0
    %1467 = vmatprep.subr.bf16.mxu0 0
    %1468 = vmatpush1.bf16.msra.mxu0 0
    %1469 = vmatprep.subr.bf16.mxu0 0
    %1470 = vmatpush1.bf16.msra.mxu0 0
    %1471 = vmatprep.subr.bf16.mxu0 0
    %1472 = vmatpush1.bf16.msra.mxu0 0
    %1473 = vmatprep.subr.bf16.mxu0 0
    %1474 = vmatpush1.bf16.msra.mxu0 0
    %1475 = vmatprep.subr.bf16.mxu0 0
    %1476 = vmatpush1.bf16.msra.mxu0 0
    %1477 = vmatprep.mubr.bf16.mxu0 0
    %1478 = vmatmul.mubr.bf16.gmra.mrb[0].mxu0 %v52
    %v1479 = vpop.f32.mrb[0].mxu0
    %v1480 = vadd.f32 0.0, %v1479
    %v1481 = vpop.f32.mrb[0].mxu0
    %v1482 = vpop.f32.mrb[0].mxu0
    %v1483 = vadd.f32 0.0, %v1482
    %v1484 = vpop.f32.mrb[0].mxu0
    %1485 = vdwg.mxu0
    %s1486 = scalar_lea.vmem %s3, 48
    %v1487 = vld [vmem:[%s1486] sm:$0xf]
    %v1488 = vld [vmem:[%s1486 + $0x4] sm:$0xf]
    %v1489 = vld [vmem:[%s1486 + $0x8] sm:$0xf]
    %v1490 = vld [vmem:[%s1486 + $0xc] sm:$0xf]
    %v1495 = vunpack.c.l.b16 %v1487
    %v1496 = vunpack.c.l.b16 %v1488
    %v1497 = vunpack.c.l.b16 %v1489
    %v1498 = vunpack.c.l.b16 %v1490
    %v1499 = vpack.c.b16 %v1496, %v1495
    %v1500 = vpack.c.b16 %v1498, %v1497
    %1503 = vmatprep.subr.bf16.mxu0 0
    %1504 = vmatpush1.bf16.msra.mxu0 %v1499
    %1505 = vmatprep.subr.bf16.mxu0 0
    %1506 = vmatpush1.bf16.msra.mxu0 %v1500
    %1507 = vmatprep.subr.bf16.mxu0 0
    %1508 = vmatpush1.bf16.msra.mxu0 0
    %1509 = vmatprep.subr.bf16.mxu0 0
    %1510 = vmatpush1.bf16.msra.mxu0 0
    %1511 = vmatprep.subr.bf16.mxu0 0
    %1512 = vmatpush1.bf16.msra.mxu0 0
    %1513 = vmatprep.subr.bf16.mxu0 0
    %1514 = vmatpush1.bf16.msra.mxu0 0
    %1515 = vmatprep.subr.bf16.mxu0 0
    %1516 = vmatpush1.bf16.msra.mxu0 0
    %1517 = vmatprep.subr.bf16.mxu0 0
    %1518 = vmatpush1.bf16.msra.mxu0 0
    %1519 = vmatprep.subr.bf16.mxu0 0
    %1520 = vmatpush1.bf16.msra.mxu0 0
    %1521 = vmatprep.subr.bf16.mxu0 0
    %1522 = vmatpush1.bf16.msra.mxu0 0
    %1523 = vmatprep.subr.bf16.mxu0 0
    %1524 = vmatpush1.bf16.msra.mxu0 0
    %1525 = vmatprep.subr.bf16.mxu0 0
    %1526 = vmatpush1.bf16.msra.mxu0 0
    %1527 = vmatprep.subr.bf16.mxu0 0
    %1528 = vmatpush1.bf16.msra.mxu0 0
    %1529 = vmatprep.subr.bf16.mxu0 0
    %1530 = vmatpush1.bf16.msra.mxu0 0
    %1531 = vmatprep.subr.bf16.mxu0 0
    %1532 = vmatpush1.bf16.msra.mxu0 0
    %1533 = vmatprep.subr.bf16.mxu0 0
    %1534 = vmatpush1.bf16.msra.mxu0 0
    %1535 = vmatprep.mubr.bf16.mxu0 0
    %1536 = vmatmul.mubr.bf16.gmra.mrb[0].mxu0 %v52
    %v1537 = vpop.f32.mrb[0].mxu0
    %v1538 = vadd.f32 0.0, %v1537
    %v1539 = vpop.f32.mrb[0].mxu0
    %v1540 = vpop.f32.mrb[0].mxu0
    %v1541 = vadd.f32 0.0, %v1540
    %v1542 = vpop.f32.mrb[0].mxu0
    %1543 = vdwg.mxu0
    %v1544 = vpack.c.bf16 %v1422, %v1422
    %v1545 = vpack.c.bf16 %v1425, %v1425
    %v1546 = vpack.c.bf16 %v1480, %v1480
    %v1547 = vpack.c.bf16 %v1483, %v1483
    %v1548 = vpack.c.bf16 %v1538, %v1538
    %v1549 = vpack.c.bf16 %v1541, %v1541
    %v1551 = vsel %vm215, %v1544, 0
    %v1554 = vsel %vm215, %v1546, 0
    %1556 = vmatprep.subr.bf16.mxu0 0
    %1557 = vmatpush1.bf16.xpose.msra.mxu0 %v1554
    %1558 = vmatprep.subr.bf16.mxu0 0
    %1559 = vmatpush1.bf16.xpose.msra.mxu0 0
    %1560 = vmatprep.subr.bf16.mxu0 0
    %1561 = vmatpush1.bf16.xpose.msra.mxu0 0
    %1562 = vmatprep.subr.bf16.mxu0 0
    %1563 = vmatpush1.bf16.xpose.msra.mxu0 0
    %1564 = vmatprep.subr.bf16.mxu0 0
    %1565 = vmatpush1.bf16.xpose.msra.mxu0 0
    %1566 = vmatprep.subr.bf16.mxu0 0
    %1567 = vmatpush1.bf16.xpose.msra.mxu0 0
    %1568 = vmatprep.subr.bf16.mxu0 0
    %1569 = vmatpush1.bf16.xpose.msra.mxu0 0
    %1570 = vmatprep.subr.bf16.mxu0 0
    %1571 = vmatpush1.bf16.xpose.msra.mxu0 0
    %1572 = vmatprep.subr.bf16.mxu0 0
    %1573 = vmatpush1.bf16.xpose.msra.mxu0 0
    %1574 = vmatprep.subr.bf16.mxu0 0
    %1575 = vmatpush1.bf16.xpose.msra.mxu0 0
    %1576 = vmatprep.subr.bf16.mxu0 0
    %1577 = vmatpush1.bf16.xpose.msra.mxu0 0
    %1578 = vmatprep.subr.bf16.mxu0 0
    %1579 = vmatpush1.bf16.xpose.msra.mxu0 0
    %1580 = vmatprep.subr.bf16.mxu0 0
    %1581 = vmatpush1.bf16.xpose.msra.mxu0 0
    %1582 = vmatprep.subr.bf16.mxu0 0
    %1583 = vmatpush1.bf16.xpose.msra.mxu0 0
    %1584 = vmatprep.subr.bf16.mxu0 0
    %1585 = vmatpush1.bf16.xpose.msra.mxu0 0
    %1586 = vmatprep.subr.bf16.mxu0 0
    %1587 = vmatpush1.bf16.xpose.msra.mxu0 0
    %1588 = vmatprep.mubr.bf16.mxu0 0
    %1589 = vmatmul.mubr.bf16.gmra.mrb[0].mxu0 %v1551
    %v1590 = vpop.f32.mrb[0].mxu0
    %v1591 = vadd.f32 0.0, %v1590
    %v1592 = vpop.f32.mrb[0].mxu0
    %v1593 = vpop.f32.mrb[0].mxu0
    %v1594 = vpop.f32.mrb[0].mxu0
    %1595 = vdwg.mxu0
    %v1597 = vsel %vm215, %v1545, 0
    %v1600 = vsel %vm215, %v1547, 0
    %1602 = vmatprep.subr.bf16.mxu0 0
    %1603 = vmatpush1.bf16.xpose.msra.mxu0 %v1600
    %1604 = vmatprep.subr.bf16.mxu0 0
    %1605 = vmatpush1.bf16.xpose.msra.mxu0 0
    %1606 = vmatprep.subr.bf16.mxu0 0
    %1607 = vmatpush1.bf16.xpose.msra.mxu0 0
    %1608 = vmatprep.subr.bf16.mxu0 0
    %1609 = vmatpush1.bf16.xpose.msra.mxu0 0
    %1610 = vmatprep.subr.bf16.mxu0 0
    %1611 = vmatpush1.bf16.xpose.msra.mxu0 0
    %1612 = vmatprep.subr.bf16.mxu0 0
    %1613 = vmatpush1.bf16.xpose.msra.mxu0 0
    %1614 = vmatprep.subr.bf16.mxu0 0
    %1615 = vmatpush1.bf16.xpose.msra.mxu0 0
    %1616 = vmatprep.subr.bf16.mxu0 0
    %1617 = vmatpush1.bf16.xpose.msra.mxu0 0
    %1618 = vmatprep.subr.bf16.mxu0 0
    %1619 = vmatpush1.bf16.xpose.msra.mxu0 0
    %1620 = vmatprep.subr.bf16.mxu0 0
    %1621 = vmatpush1.bf16.xpose.msra.mxu0 0
    %1622 = vmatprep.subr.bf16.mxu0 0
    %1623 = vmatpush1.bf16.xpose.msra.mxu0 0
    %1624 = vmatprep.subr.bf16.mxu0 0
    %1625 = vmatpush1.bf16.xpose.msra.mxu0 0
    %1626 = vmatprep.subr.bf16.mxu0 0
    %1627 = vmatpush1.bf16.xpose.msra.mxu0 0
    %1628 = vmatprep.subr.bf16.mxu0 0
    %1629 = vmatpush1.bf16.xpose.msra.mxu0 0
    %1630 = vmatprep.subr.bf16.mxu0 0
    %1631 = vmatpush1.bf16.xpose.msra.mxu0 0
    %1632 = vmatprep.subr.bf16.mxu0 0
    %1633 = vmatpush1.bf16.xpose.msra.mxu0 0
    %1634 = vmatprep.mubr.bf16.mxu0 0
    %1635 = vmatmul.mubr.bf16.gmra.mrb[0].mxu0 %v1597
    %v1636 = vpop.f32.mrb[0].mxu0
    %v1637 = vadd.f32 0.0, %v1636
    %v1638 = vpop.f32.mrb[0].mxu0
    %v1639 = vpop.f32.mrb[0].mxu0
    %v1640 = vpop.f32.mrb[0].mxu0
    %1641 = vdwg.mxu0
    %v1642 = vsel %vm308, %v1591, -inf
    %1643 = vmax.xlane.f32.xlu0 %v1642
    %v1644 = vpop.xlane.xlu0 %1643
    %v1645 = vsel %vm308, %v1637, -inf
    %1646 = vmax.xlane.f32.xlu0 %v1645
    %v1647 = vpop.xlane.xlu0 %1646
    %v1648 = vsub.f32 %v1591, %v1644
    %v1649 = vsub.f32 %v1637, %v1647
    %v1650 = vmul.f32 %v1648, 1.442695
    %v1651 = vpow.pop %v1650
    %v1652 = vmul.f32 %v1649, 1.442695
    %v1653 = vpow.pop %v1652
    %v1654 = vsel %vm308, %v1651, 0.0
    %1655 = vadd.xlane.f32.xlu0 %v1654
    %v1656 = vpop.xlane.xlu0 %1655
    %v1657 = vsel %vm308, %v1653, 0.0
    %1658 = vadd.xlane.f32.xlu0 %v1657
    %v1659 = vpop.xlane.xlu0 %1658
    %v1660 = vpack.c.bf16 %v1651, %v1651
    %v1661 = vpack.c.bf16 %v1653, %v1653
    %v1663 = vsel %vm308, %v1660, 0
    %v1666 = vsel %vm332, %v1548, 0
    %1668 = vmatprep.subr.bf16.mxu0 0
    %1669 = vmatpush1.bf16.msra.mxu0 %v1666
    %1670 = vmatprep.subr.bf16.mxu0 0
    %1671 = vmatpush1.bf16.msra.mxu0 0
    %1672 = vmatprep.subr.bf16.mxu0 0
    %1673 = vmatpush1.bf16.msra.mxu0 0
    %1674 = vmatprep.subr.bf16.mxu0 0
    %1675 = vmatpush1.bf16.msra.mxu0 0
    %1676 = vmatprep.subr.bf16.mxu0 0
    %1677 = vmatpush1.bf16.msra.mxu0 0
    %1678 = vmatprep.subr.bf16.mxu0 0
    %1679 = vmatpush1.bf16.msra.mxu0 0
    %1680 = vmatprep.subr.bf16.mxu0 0
    %1681 = vmatpush1.bf16.msra.mxu0 0
    %1682 = vmatprep.subr.bf16.mxu0 0
    %1683 = vmatpush1.bf16.msra.mxu0 0
    %1684 = vmatprep.subr.bf16.mxu0 0
    %1685 = vmatpush1.bf16.msra.mxu0 0
    %1686 = vmatprep.subr.bf16.mxu0 0
    %1687 = vmatpush1.bf16.msra.mxu0 0
    %1688 = vmatprep.subr.bf16.mxu0 0
    %1689 = vmatpush1.bf16.msra.mxu0 0
    %1690 = vmatprep.subr.bf16.mxu0 0
    %1691 = vmatpush1.bf16.msra.mxu0 0
    %1692 = vmatprep.subr.bf16.mxu0 0
    %1693 = vmatpush1.bf16.msra.mxu0 0
    %1694 = vmatprep.subr.bf16.mxu0 0
    %1695 = vmatpush1.bf16.msra.mxu0 0
    %1696 = vmatprep.subr.bf16.mxu0 0
    %1697 = vmatpush1.bf16.msra.mxu0 0
    %1698 = vmatprep.subr.bf16.mxu0 0
    %1699 = vmatpush1.bf16.msra.mxu0 0
    %1700 = vmatprep.mubr.bf16.mxu0 0
    %1701 = vmatmul.mubr.bf16.gmra.mrb[0].mxu0 %v1663
    %v1702 = vpop.f32.mrb[0].mxu0
    %v1703 = vadd.f32 0.0, %v1702
    %v1704 = vpop.f32.mrb[0].mxu0
    %v1705 = vpop.f32.mrb[0].mxu0
    %v1706 = vpop.f32.mrb[0].mxu0
    %1707 = vdwg.mxu0
    %v1709 = vsel %vm308, %v1661, 0
    %v1712 = vsel %vm332, %v1549, 0
    %1714 = vmatprep.subr.bf16.mxu0 0
    %1715 = vmatpush1.bf16.msra.mxu0 %v1712
    %1716 = vmatprep.subr.bf16.mxu0 0
    %1717 = vmatpush1.bf16.msra.mxu0 0
    %1718 = vmatprep.subr.bf16.mxu0 0
    %1719 = vmatpush1.bf16.msra.mxu0 0
    %1720 = vmatprep.subr.bf16.mxu0 0
    %1721 = vmatpush1.bf16.msra.mxu0 0
    %1722 = vmatprep.subr.bf16.mxu0 0
    %1723 = vmatpush1.bf16.msra.mxu0 0
    %1724 = vmatprep.subr.bf16.mxu0 0
    %1725 = vmatpush1.bf16.msra.mxu0 0
    %1726 = vmatprep.subr.bf16.mxu0 0
    %1727 = vmatpush1.bf16.msra.mxu0 0
    %1728 = vmatprep.subr.bf16.mxu0 0
    %1729 = vmatpush1.bf16.msra.mxu0 0
    %1730 = vmatprep.subr.bf16.mxu0 0
    %1731 = vmatpush1.bf16.msra.mxu0 0
    %1732 = vmatprep.subr.bf16.mxu0 0
    %1733 = vmatpush1.bf16.msra.mxu0 0
    %1734 = vmatprep.subr.bf16.mxu0 0
    %1735 = vmatpush1.bf16.msra.mxu0 0
    %1736 = vmatprep.subr.bf16.mxu0 0
    %1737 = vmatpush1.bf16.msra.mxu0 0
    %1738 = vmatprep.subr.bf16.mxu0 0
    %1739 = vmatpush1.bf16.msra.mxu0 0
    %1740 = vmatprep.subr.bf16.mxu0 0
    %1741 = vmatpush1.bf16.msra.mxu0 0
    %1742 = vmatprep.subr.bf16.mxu0 0
    %1743 = vmatpush1.bf16.msra.mxu0 0
    %1744 = vmatprep.subr.bf16.mxu0 0
    %1745 = vmatpush1.bf16.msra.mxu0 0
    %1746 = vmatprep.mubr.bf16.mxu0 0
    %1747 = vmatmul.mubr.bf16.gmra.mrb[0].mxu0 %v1709
    %v1748 = vpop.f32.mrb[0].mxu0
    %v1749 = vadd.f32 0.0, %v1748
    %v1750 = vpop.f32.mrb[0].mxu0
    %v1751 = vpop.f32.mrb[0].mxu0
    %v1752 = vpop.f32.mrb[0].mxu0
    %1753 = vdwg.mxu0
    %v1754 = vrcp.pop %v1656
    %v1755 = vrcp.pop %v1659
    %v1756 = vmul.f32 %v1703, %v1754
    %v1757 = vmul.f32 %v1749, %v1755
    %v1758 = vld [vmem:[#allocation2] sm:$0xff]
    %v1759 = vld [vmem:[#allocation2 + $0x8] sm:$0xff]
    %v1760 = vpack.c.bf16 %v1757, %v1756
    %s1761 = scalar_lea.vmem %s4, 6
    %v1762 = vld [vmem:[%s1761] sm:$0x3]
    %v1764 = vsel %vm215, %v1760, 0
    %v1767 = vsel %vm433, %v1762, 0
    %1769 = vmatprep.subr.bf16.mxu0 0
    %1770 = vmatpush1.bf16.msra.mxu0 %v1767
    %1771 = vmatprep.subr.bf16.mxu0 0
    %1772 = vmatpush1.bf16.msra.mxu0 0
    %1773 = vmatprep.subr.bf16.mxu0 0
    %1774 = vmatpush1.bf16.msra.mxu0 0
    %1775 = vmatprep.subr.bf16.mxu0 0
    %1776 = vmatpush1.bf16.msra.mxu0 0
    %1777 = vmatprep.subr.bf16.mxu0 0
    %1778 = vmatpush1.bf16.msra.mxu0 0
    %1779 = vmatprep.subr.bf16.mxu0 0
    %1780 = vmatpush1.bf16.msra.mxu0 0
    %1781 = vmatprep.subr.bf16.mxu0 0
    %1782 = vmatpush1.bf16.msra.mxu0 0
    %1783 = vmatprep.subr.bf16.mxu0 0
    %1784 = vmatpush1.bf16.msra.mxu0 0
    %1785 = vmatprep.subr.bf16.mxu0 0
    %1786 = vmatpush1.bf16.msra.mxu0 0
    %1787 = vmatprep.subr.bf16.mxu0 0
    %1788 = vmatpush1.bf16.msra.mxu0 0
    %1789 = vmatprep.subr.bf16.mxu0 0
    %1790 = vmatpush1.bf16.msra.mxu0 0
    %1791 = vmatprep.subr.bf16.mxu0 0
    %1792 = vmatpush1.bf16.msra.mxu0 0
    %1793 = vmatprep.subr.bf16.mxu0 0
    %1794 = vmatpush1.bf16.msra.mxu0 0
    %1795 = vmatprep.subr.bf16.mxu0 0
    %1796 = vmatpush1.bf16.msra.mxu0 0
    %1797 = vmatprep.subr.bf16.mxu0 0
    %1798 = vmatpush1.bf16.msra.mxu0 0
    %1799 = vmatprep.subr.bf16.mxu0 0
    %1800 = vmatpush1.bf16.msra.mxu0 0
    %1801 = vmatprep.mubr.bf16.mxu0 0
    %1802 = vmatmul.mubr.bf16.gmra.mrb[0].mxu0 %v1764
    %v1803 = vpop.f32.mrb[0].mxu0
    %v1804 = vadd.f32 0.0, %v1803
    %v1805 = vpop.f32.mrb[0].mxu0
    %v1806 = vpop.f32.mrb[0].mxu0
    %v1807 = vadd.f32 0.0, %v1806
    %v1808 = vpop.f32.mrb[0].mxu0
    %1809 = vdwg.mxu0
    %v1810 = vadd.f32 %v1758, %v1804
    %v1811 = vadd.f32 %v1759, %v1807
    %1812 = vst.msk [vmem:[#allocation2] sm:$0xff] %vm27, %v1810
    %1813 = vst.msk [vmem:[#allocation2 + $0x8] sm:$0xff] %vm27, %v1811
    %s1814 = scalar_lea.vmem %s1, 64
    %v1815 = vld [vmem:[%s1814] sm:$0xf]
    %v1816 = vld [vmem:[%s1814 + $0x4] sm:$0xf]
    %v1817 = vld [vmem:[%s1814 + $0x8] sm:$0xf]
    %v1818 = vld [vmem:[%s1814 + $0xc] sm:$0xf]
    %v1823 = vunpack.c.l.b16 %v1815
    %v1824 = vunpack.c.l.b16 %v1816
    %v1825 = vunpack.c.l.b16 %v1817
    %v1826 = vunpack.c.l.b16 %v1818
    %v1827 = vpack.c.b16 %v1824, %v1823
    %v1828 = vpack.c.b16 %v1826, %v1825
    %1831 = vmatprep.subr.bf16.mxu0 0
    %1832 = vmatpush1.bf16.msra.mxu0 %v1827
    %1833 = vmatprep.subr.bf16.mxu0 0
    %1834 = vmatpush1.bf16.msra.mxu0 %v1828
    %1835 = vmatprep.subr.bf16.mxu0 0
    %1836 = vmatpush1.bf16.msra.mxu0 0
    %1837 = vmatprep.subr.bf16.mxu0 0
    %1838 = vmatpush1.bf16.msra.mxu0 0
    %1839 = vmatprep.subr.bf16.mxu0 0
    %1840 = vmatpush1.bf16.msra.mxu0 0
    %1841 = vmatprep.subr.bf16.mxu0 0
    %1842 = vmatpush1.bf16.msra.mxu0 0
    %1843 = vmatprep.subr.bf16.mxu0 0
    %1844 = vmatpush1.bf16.msra.mxu0 0
    %1845 = vmatprep.subr.bf16.mxu0 0
    %1846 = vmatpush1.bf16.msra.mxu0 0
    %1847 = vmatprep.subr.bf16.mxu0 0
    %1848 = vmatpush1.bf16.msra.mxu0 0
    %1849 = vmatprep.subr.bf16.mxu0 0
    %1850 = vmatpush1.bf16.msra.mxu0 0
    %1851 = vmatprep.subr.bf16.mxu0 0
    %1852 = vmatpush1.bf16.msra.mxu0 0
    %1853 = vmatprep.subr.bf16.mxu0 0
    %1854 = vmatpush1.bf16.msra.mxu0 0
    %1855 = vmatprep.subr.bf16.mxu0 0
    %1856 = vmatpush1.bf16.msra.mxu0 0
    %1857 = vmatprep.subr.bf16.mxu0 0
    %1858 = vmatpush1.bf16.msra.mxu0 0
    %1859 = vmatprep.subr.bf16.mxu0 0
    %1860 = vmatpush1.bf16.msra.mxu0 0
    %1861 = vmatprep.subr.bf16.mxu0 0
    %1862 = vmatpush1.bf16.msra.mxu0 0
    %1863 = vmatprep.mubr.bf16.mxu0 0
    %1864 = vmatmul.mubr.bf16.gmra.mrb[0].mxu0 %v52
    %v1865 = vpop.f32.mrb[0].mxu0
    %v1866 = vadd.f32 0.0, %v1865
    %v1867 = vpop.f32.mrb[0].mxu0
    %v1868 = vpop.f32.mrb[0].mxu0
    %v1869 = vadd.f32 0.0, %v1868
    %v1870 = vpop.f32.mrb[0].mxu0
    %1871 = vdwg.mxu0
    %s1872 = scalar_lea.vmem %s2, 64
    %v1873 = vld [vmem:[%s1872] sm:$0xf]
    %v1874 = vld [vmem:[%s1872 + $0x4] sm:$0xf]
    %v1875 = vld [vmem:[%s1872 + $0x8] sm:$0xf]
    %v1876 = vld [vmem:[%s1872 + $0xc] sm:$0xf]
    %v1881 = vunpack.c.l.b16 %v1873
    %v1882 = vunpack.c.l.b16 %v1874
    %v1883 = vunpack.c.l.b16 %v1875
    %v1884 = vunpack.c.l.b16 %v1876
    %v1885 = vpack.c.b16 %v1882, %v1881
    %v1886 = vpack.c.b16 %v1884, %v1883
    %1889 = vmatprep.subr.bf16.mxu0 0
    %1890 = vmatpush1.bf16.msra.mxu0 %v1885
    %1891 = vmatprep.subr.bf16.mxu0 0
    %1892 = vmatpush1.bf16.msra.mxu0 %v1886
    %1893 = vmatprep.subr.bf16.mxu0 0
    %1894 = vmatpush1.bf16.msra.mxu0 0
    %1895 = vmatprep.subr.bf16.mxu0 0
    %1896 = vmatpush1.bf16.msra.mxu0 0
    %1897 = vmatprep.subr.bf16.mxu0 0
    %1898 = vmatpush1.bf16.msra.mxu0 0
    %1899 = vmatprep.subr.bf16.mxu0 0
    %1900 = vmatpush1.bf16.msra.mxu0 0
    %1901 = vmatprep.subr.bf16.mxu0 0
    %1902 = vmatpush1.bf16.msra.mxu0 0
    %1903 = vmatprep.subr.bf16.mxu0 0
    %1904 = vmatpush1.bf16.msra.mxu0 0
    %1905 = vmatprep.subr.bf16.mxu0 0
    %1906 = vmatpush1.bf16.msra.mxu0 0
    %1907 = vmatprep.subr.bf16.mxu0 0
    %1908 = vmatpush1.bf16.msra.mxu0 0
    %1909 = vmatprep.subr.bf16.mxu0 0
    %1910 = vmatpush1.bf16.msra.mxu0 0
    %1911 = vmatprep.subr.bf16.mxu0 0
    %1912 = vmatpush1.bf16.msra.mxu0 0
    %1913 = vmatprep.subr.bf16.mxu0 0
    %1914 = vmatpush1.bf16.msra.mxu0 0
    %1915 = vmatprep.subr.bf16.mxu0 0
    %1916 = vmatpush1.bf16.msra.mxu0 0
    %1917 = vmatprep.subr.bf16.mxu0 0
    %1918 = vmatpush1.bf16.msra.mxu0 0
    %1919 = vmatprep.subr.bf16.mxu0 0
    %1920 = vmatpush1.bf16.msra.mxu0 0
    %1921 = vmatprep.mubr.bf16.mxu0 0
    %1922 = vmatmul.mubr.bf16.gmra.mrb[0].mxu0 %v52
    %v1923 = vpop.f32.mrb[0].mxu0
    %v1924 = vadd.f32 0.0, %v1923
    %v1925 = vpop.f32.mrb[0].mxu0
    %v1926 = vpop.f32.mrb[0].mxu0
    %v1927 = vadd.f32 0.0, %v1926
    %v1928 = vpop.f32.mrb[0].mxu0
    %1929 = vdwg.mxu0
    %s1930 = scalar_lea.vmem %s3, 64
    %v1931 = vld [vmem:[%s1930] sm:$0xf]
    %v1932 = vld [vmem:[%s1930 + $0x4] sm:$0xf]
    %v1933 = vld [vmem:[%s1930 + $0x8] sm:$0xf]
    %v1934 = vld [vmem:[%s1930 + $0xc] sm:$0xf]
    %v1939 = vunpack.c.l.b16 %v1931
    %v1940 = vunpack.c.l.b16 %v1932
    %v1941 = vunpack.c.l.b16 %v1933
    %v1942 = vunpack.c.l.b16 %v1934
    %v1943 = vpack.c.b16 %v1940, %v1939
    %v1944 = vpack.c.b16 %v1942, %v1941
    %1947 = vmatprep.subr.bf16.mxu0 0
    %1948 = vmatpush1.bf16.msra.mxu0 %v1943
    %1949 = vmatprep.subr.bf16.mxu0 0
    %1950 = vmatpush1.bf16.msra.mxu0 %v1944
    %1951 = vmatprep.subr.bf16.mxu0 0
    %1952 = vmatpush1.bf16.msra.mxu0 0
    %1953 = vmatprep.subr.bf16.mxu0 0
    %1954 = vmatpush1.bf16.msra.mxu0 0
    %1955 = vmatprep.subr.bf16.mxu0 0
    %1956 = vmatpush1.bf16.msra.mxu0 0
    %1957 = vmatprep.subr.bf16.mxu0 0
    %1958 = vmatpush1.bf16.msra.mxu0 0
    %1959 = vmatprep.subr.bf16.mxu0 0
    %1960 = vmatpush1.bf16.msra.mxu0 0
    %1961 = vmatprep.subr.bf16.mxu0 0
    %1962 = vmatpush1.bf16.msra.mxu0 0
    %1963 = vmatprep.subr.bf16.mxu0 0
    %1964 = vmatpush1.bf16.msra.mxu0 0
    %1965 = vmatprep.subr.bf16.mxu0 0
    %1966 = vmatpush1.bf16.msra.mxu0 0
    %1967 = vmatprep.subr.bf16.mxu0 0
    %1968 = vmatpush1.bf16.msra.mxu0 0
    %1969 = vmatprep.subr.bf16.mxu0 0
    %1970 = vmatpush1.bf16.msra.mxu0 0
    %1971 = vmatprep.subr.bf16.mxu0 0
    %1972 = vmatpush1.bf16.msra.mxu0 0
    %1973 = vmatprep.subr.bf16.mxu0 0
    %1974 = vmatpush1.bf16.msra.mxu0 0
    %1975 = vmatprep.subr.bf16.mxu0 0
    %1976 = vmatpush1.bf16.msra.mxu0 0
    %1977 = vmatprep.subr.bf16.mxu0 0
    %1978 = vmatpush1.bf16.msra.mxu0 0
    %1979 = vmatprep.mubr.bf16.mxu0 0
    %1980 = vmatmul.mubr.bf16.gmra.mrb[0].mxu0 %v52
    %v1981 = vpop.f32.mrb[0].mxu0
    %v1982 = vadd.f32 0.0, %v1981
    %v1983 = vpop.f32.mrb[0].mxu0
    %v1984 = vpop.f32.mrb[0].mxu0
    %v1985 = vadd.f32 0.0, %v1984
    %v1986 = vpop.f32.mrb[0].mxu0
    %1987 = vdwg.mxu0
    %v1988 = vpack.c.bf16 %v1866, %v1866
    %v1989 = vpack.c.bf16 %v1869, %v1869
    %v1990 = vpack.c.bf16 %v1924, %v1924
    %v1991 = vpack.c.bf16 %v1927, %v1927
    %v1992 = vpack.c.bf16 %v1982, %v1982
    %v1993 = vpack.c.bf16 %v1985, %v1985
    %v1995 = vsel %vm215, %v1988, 0
    %v1998 = vsel %vm215, %v1990, 0
    %2000 = vmatprep.subr.bf16.mxu0 0
    %2001 = vmatpush1.bf16.xpose.msra.mxu0 %v1998
    %2002 = vmatprep.subr.bf16.mxu0 0
    %2003 = vmatpush1.bf16.xpose.msra.mxu0 0
    %2004 = vmatprep.subr.bf16.mxu0 0
    %2005 = vmatpush1.bf16.xpose.msra.mxu0 0
    %2006 = vmatprep.subr.bf16.mxu0 0
    %2007 = vmatpush1.bf16.xpose.msra.mxu0 0
    %2008 = vmatprep.subr.bf16.mxu0 0
    %2009 = vmatpush1.bf16.xpose.msra.mxu0 0
    %2010 = vmatprep.subr.bf16.mxu0 0
    %2011 = vmatpush1.bf16.xpose.msra.mxu0 0
    %2012 = vmatprep.subr.bf16.mxu0 0
    %2013 = vmatpush1.bf16.xpose.msra.mxu0 0
    %2014 = vmatprep.subr.bf16.mxu0 0
    %2015 = vmatpush1.bf16.xpose.msra.mxu0 0
    %2016 = vmatprep.subr.bf16.mxu0 0
    %2017 = vmatpush1.bf16.xpose.msra.mxu0 0
    %2018 = vmatprep.subr.bf16.mxu0 0
    %2019 = vmatpush1.bf16.xpose.msra.mxu0 0
    %2020 = vmatprep.subr.bf16.mxu0 0
    %2021 = vmatpush1.bf16.xpose.msra.mxu0 0
    %2022 = vmatprep.subr.bf16.mxu0 0
    %2023 = vmatpush1.bf16.xpose.msra.mxu0 0
    %2024 = vmatprep.subr.bf16.mxu0 0
    %2025 = vmatpush1.bf16.xpose.msra.mxu0 0
    %2026 = vmatprep.subr.bf16.mxu0 0
    %2027 = vmatpush1.bf16.xpose.msra.mxu0 0
    %2028 = vmatprep.subr.bf16.mxu0 0
    %2029 = vmatpush1.bf16.xpose.msra.mxu0 0
    %2030 = vmatprep.subr.bf16.mxu0 0
    %2031 = vmatpush1.bf16.xpose.msra.mxu0 0
    %2032 = vmatprep.mubr.bf16.mxu0 0
    %2033 = vmatmul.mubr.bf16.gmra.mrb[0].mxu0 %v1995
    %v2034 = vpop.f32.mrb[0].mxu0
    %v2035 = vadd.f32 0.0, %v2034
    %v2036 = vpop.f32.mrb[0].mxu0
    %v2037 = vpop.f32.mrb[0].mxu0
    %v2038 = vpop.f32.mrb[0].mxu0
    %2039 = vdwg.mxu0
    %v2041 = vsel %vm215, %v1989, 0
    %v2044 = vsel %vm215, %v1991, 0
    %2046 = vmatprep.subr.bf16.mxu0 0
    %2047 = vmatpush1.bf16.xpose.msra.mxu0 %v2044
    %2048 = vmatprep.subr.bf16.mxu0 0
    %2049 = vmatpush1.bf16.xpose.msra.mxu0 0
    %2050 = vmatprep.subr.bf16.mxu0 0
    %2051 = vmatpush1.bf16.xpose.msra.mxu0 0
    %2052 = vmatprep.subr.bf16.mxu0 0
    %2053 = vmatpush1.bf16.xpose.msra.mxu0 0
    %2054 = vmatprep.subr.bf16.mxu0 0
    %2055 = vmatpush1.bf16.xpose.msra.mxu0 0
    %2056 = vmatprep.subr.bf16.mxu0 0
    %2057 = vmatpush1.bf16.xpose.msra.mxu0 0
    %2058 = vmatprep.subr.bf16.mxu0 0
    %2059 = vmatpush1.bf16.xpose.msra.mxu0 0
    %2060 = vmatprep.subr.bf16.mxu0 0
    %2061 = vmatpush1.bf16.xpose.msra.mxu0 0
    %2062 = vmatprep.subr.bf16.mxu0 0
    %2063 = vmatpush1.bf16.xpose.msra.mxu0 0
    %2064 = vmatprep.subr.bf16.mxu0 0
    %2065 = vmatpush1.bf16.xpose.msra.mxu0 0
    %2066 = vmatprep.subr.bf16.mxu0 0
    %2067 = vmatpush1.bf16.xpose.msra.mxu0 0
    %2068 = vmatprep.subr.bf16.mxu0 0
    %2069 = vmatpush1.bf16.xpose.msra.mxu0 0
    %2070 = vmatprep.subr.bf16.mxu0 0
    %2071 = vmatpush1.bf16.xpose.msra.mxu0 0
    %2072 = vmatprep.subr.bf16.mxu0 0
    %2073 = vmatpush1.bf16.xpose.msra.mxu0 0
    %2074 = vmatprep.subr.bf16.mxu0 0
    %2075 = vmatpush1.bf16.xpose.msra.mxu0 0
    %2076 = vmatprep.subr.bf16.mxu0 0
    %2077 = vmatpush1.bf16.xpose.msra.mxu0 0
    %2078 = vmatprep.mubr.bf16.mxu0 0
    %2079 = vmatmul.mubr.bf16.gmra.mrb[0].mxu0 %v2041
    %v2080 = vpop.f32.mrb[0].mxu0
    %v2081 = vadd.f32 0.0, %v2080
    %v2082 = vpop.f32.mrb[0].mxu0
    %v2083 = vpop.f32.mrb[0].mxu0
    %v2084 = vpop.f32.mrb[0].mxu0
    %2085 = vdwg.mxu0
    %v2086 = vsel %vm308, %v2035, -inf
    %2087 = vmax.xlane.f32.xlu0 %v2086
    %v2088 = vpop.xlane.xlu0 %2087
    %v2089 = vsel %vm308, %v2081, -inf
    %2090 = vmax.xlane.f32.xlu0 %v2089
    %v2091 = vpop.xlane.xlu0 %2090
    %v2092 = vsub.f32 %v2035, %v2088
    %v2093 = vsub.f32 %v2081, %v2091
    %v2094 = vmul.f32 %v2092, 1.442695
    %v2095 = vpow.pop %v2094
    %v2096 = vmul.f32 %v2093, 1.442695
    %v2097 = vpow.pop %v2096
    %v2098 = vsel %vm308, %v2095, 0.0
    %2099 = vadd.xlane.f32.xlu0 %v2098
    %v2100 = vpop.xlane.xlu0 %2099
    %v2101 = vsel %vm308, %v2097, 0.0
    %2102 = vadd.xlane.f32.xlu0 %v2101
    %v2103 = vpop.xlane.xlu0 %2102
    %v2104 = vpack.c.bf16 %v2095, %v2095
    %v2105 = vpack.c.bf16 %v2097, %v2097
    %v2107 = vsel %vm308, %v2104, 0
    %v2110 = vsel %vm332, %v1992, 0
    %2112 = vmatprep.subr.bf16.mxu0 0
    %2113 = vmatpush1.bf16.msra.mxu0 %v2110
    %2114 = vmatprep.subr.bf16.mxu0 0
    %2115 = vmatpush1.bf16.msra.mxu0 0
    %2116 = vmatprep.subr.bf16.mxu0 0
    %2117 = vmatpush1.bf16.msra.mxu0 0
    %2118 = vmatprep.subr.bf16.mxu0 0
    %2119 = vmatpush1.bf16.msra.mxu0 0
    %2120 = vmatprep.subr.bf16.mxu0 0
    %2121 = vmatpush1.bf16.msra.mxu0 0
    %2122 = vmatprep.subr.bf16.mxu0 0
    %2123 = vmatpush1.bf16.msra.mxu0 0
    %2124 = vmatprep.subr.bf16.mxu0 0
    %2125 = vmatpush1.bf16.msra.mxu0 0
    %2126 = vmatprep.subr.bf16.mxu0 0
    %2127 = vmatpush1.bf16.msra.mxu0 0
    %2128 = vmatprep.subr.bf16.mxu0 0
    %2129 = vmatpush1.bf16.msra.mxu0 0
    %2130 = vmatprep.subr.bf16.mxu0 0
    %2131 = vmatpush1.bf16.msra.mxu0 0
    %2132 = vmatprep.subr.bf16.mxu0 0
    %2133 = vmatpush1.bf16.msra.mxu0 0
    %2134 = vmatprep.subr.bf16.mxu0 0
    %2135 = vmatpush1.bf16.msra.mxu0 0
    %2136 = vmatprep.subr.bf16.mxu0 0
    %2137 = vmatpush1.bf16.msra.mxu0 0
    %2138 = vmatprep.subr.bf16.mxu0 0
    %2139 = vmatpush1.bf16.msra.mxu0 0
    %2140 = vmatprep.subr.bf16.mxu0 0
    %2141 = vmatpush1.bf16.msra.mxu0 0
    %2142 = vmatprep.subr.bf16.mxu0 0
    %2143 = vmatpush1.bf16.msra.mxu0 0
    %2144 = vmatprep.mubr.bf16.mxu0 0
    %2145 = vmatmul.mubr.bf16.gmra.mrb[0].mxu0 %v2107
    %v2146 = vpop.f32.mrb[0].mxu0
    %v2147 = vadd.f32 0.0, %v2146
    %v2148 = vpop.f32.mrb[0].mxu0
    %v2149 = vpop.f32.mrb[0].mxu0
    %v2150 = vpop.f32.mrb[0].mxu0
    %2151 = vdwg.mxu0
    %v2153 = vsel %vm308, %v2105, 0
    %v2156 = vsel %vm332, %v1993, 0
    %2158 = vmatprep.subr.bf16.mxu0 0
    %2159 = vmatpush1.bf16.msra.mxu0 %v2156
    %2160 = vmatprep.subr.bf16.mxu0 0
    %2161 = vmatpush1.bf16.msra.mxu0 0
    %2162 = vmatprep.subr.bf16.mxu0 0
    %2163 = vmatpush1.bf16.msra.mxu0 0
    %2164 = vmatprep.subr.bf16.mxu0 0
    %2165 = vmatpush1.bf16.msra.mxu0 0
    %2166 = vmatprep.subr.bf16.mxu0 0
    %2167 = vmatpush1.bf16.msra.mxu0 0
    %2168 = vmatprep.subr.bf16.mxu0 0
    %2169 = vmatpush1.bf16.msra.mxu0 0
    %2170 = vmatprep.subr.bf16.mxu0 0
    %2171 = vmatpush1.bf16.msra.mxu0 0
    %2172 = vmatprep.subr.bf16.mxu0 0
    %2173 = vmatpush1.bf16.msra.mxu0 0
    %2174 = vmatprep.subr.bf16.mxu0 0
    %2175 = vmatpush1.bf16.msra.mxu0 0
    %2176 = vmatprep.subr.bf16.mxu0 0
    %2177 = vmatpush1.bf16.msra.mxu0 0
    %2178 = vmatprep.subr.bf16.mxu0 0
    %2179 = vmatpush1.bf16.msra.mxu0 0
    %2180 = vmatprep.subr.bf16.mxu0 0
    %2181 = vmatpush1.bf16.msra.mxu0 0
    %2182 = vmatprep.subr.bf16.mxu0 0
    %2183 = vmatpush1.bf16.msra.mxu0 0
    %2184 = vmatprep.subr.bf16.mxu0 0
    %2185 = vmatpush1.bf16.msra.mxu0 0
    %2186 = vmatprep.subr.bf16.mxu0 0
    %2187 = vmatpush1.bf16.msra.mxu0 0
    %2188 = vmatprep.subr.bf16.mxu0 0
    %2189 = vmatpush1.bf16.msra.mxu0 0
    %2190 = vmatprep.mubr.bf16.mxu0 0
    %2191 = vmatmul.mubr.bf16.gmra.mrb[0].mxu0 %v2153
    %v2192 = vpop.f32.mrb[0].mxu0
    %v2193 = vadd.f32 0.0, %v2192
    %v2194 = vpop.f32.mrb[0].mxu0
    %v2195 = vpop.f32.mrb[0].mxu0
    %v2196 = vpop.f32.mrb[0].mxu0
    %2197 = vdwg.mxu0
    %v2198 = vrcp.pop %v2100
    %v2199 = vrcp.pop %v2103
    %v2200 = vmul.f32 %v2147, %v2198
    %v2201 = vmul.f32 %v2193, %v2199
    %v2202 = vld [vmem:[#allocation2] sm:$0xff]
    %v2203 = vld [vmem:[#allocation2 + $0x8] sm:$0xff]
    %v2204 = vpack.c.bf16 %v2201, %v2200
    %s2205 = scalar_lea.vmem %s4, 8
    %v2206 = vld [vmem:[%s2205] sm:$0x3]
    %v2208 = vsel %vm215, %v2204, 0
    %v2211 = vsel %vm433, %v2206, 0
    %2213 = vmatprep.subr.bf16.mxu0 0
    %2214 = vmatpush1.bf16.msra.mxu0 %v2211
    %2215 = vmatprep.subr.bf16.mxu0 0
    %2216 = vmatpush1.bf16.msra.mxu0 0
    %2217 = vmatprep.subr.bf16.mxu0 0
    %2218 = vmatpush1.bf16.msra.mxu0 0
    %2219 = vmatprep.subr.bf16.mxu0 0
    %2220 = vmatpush1.bf16.msra.mxu0 0
    %2221 = vmatprep.subr.bf16.mxu0 0
    %2222 = vmatpush1.bf16.msra.mxu0 0
    %2223 = vmatprep.subr.bf16.mxu0 0
    %2224 = vmatpush1.bf16.msra.mxu0 0
    %2225 = vmatprep.subr.bf16.mxu0 0
    %2226 = vmatpush1.bf16.msra.mxu0 0
    %2227 = vmatprep.subr.bf16.mxu0 0
    %2228 = vmatpush1.bf16.msra.mxu0 0
    %2229 = vmatprep.subr.bf16.mxu0 0
    %2230 = vmatpush1.bf16.msra.mxu0 0
    %2231 = vmatprep.subr.bf16.mxu0 0
    %2232 = vmatpush1.bf16.msra.mxu0 0
    %2233 = vmatprep.subr.bf16.mxu0 0
    %2234 = vmatpush1.bf16.msra.mxu0 0
    %2235 = vmatprep.subr.bf16.mxu0 0
    %2236 = vmatpush1.bf16.msra.mxu0 0
    %2237 = vmatprep.subr.bf16.mxu0 0
    %2238 = vmatpush1.bf16.msra.mxu0 0
    %2239 = vmatprep.subr.bf16.mxu0 0
    %2240 = vmatpush1.bf16.msra.mxu0 0
    %2241 = vmatprep.subr.bf16.mxu0 0
    %2242 = vmatpush1.bf16.msra.mxu0 0
    %2243 = vmatprep.subr.bf16.mxu0 0
    %2244 = vmatpush1.bf16.msra.mxu0 0
    %2245 = vmatprep.mubr.bf16.mxu0 0
    %2246 = vmatmul.mubr.bf16.gmra.mrb[0].mxu0 %v2208
    %v2247 = vpop.f32.mrb[0].mxu0
    %v2248 = vadd.f32 0.0, %v2247
    %v2249 = vpop.f32.mrb[0].mxu0
    %v2250 = vpop.f32.mrb[0].mxu0
    %v2251 = vadd.f32 0.0, %v2250
    %v2252 = vpop.f32.mrb[0].mxu0
    %2253 = vdwg.mxu0
    %v2254 = vadd.f32 %v2202, %v2248
    %v2255 = vadd.f32 %v2203, %v2251
    %2256 = vst.msk [vmem:[#allocation2] sm:$0xff] %vm27, %v2254
    %2257 = vst.msk [vmem:[#allocation2 + $0x8] sm:$0xff] %vm27, %v2255
    %s2258 = scalar_lea.vmem %s1, 80
    %v2259 = vld [vmem:[%s2258] sm:$0xf]
    %v2260 = vld [vmem:[%s2258 + $0x4] sm:$0xf]
    %v2261 = vld [vmem:[%s2258 + $0x8] sm:$0xf]
    %v2262 = vld [vmem:[%s2258 + $0xc] sm:$0xf]
    %v2267 = vunpack.c.l.b16 %v2259
    %v2268 = vunpack.c.l.b16 %v2260
    %v2269 = vunpack.c.l.b16 %v2261
    %v2270 = vunpack.c.l.b16 %v2262
    %v2271 = vpack.c.b16 %v2268, %v2267
    %v2272 = vpack.c.b16 %v2270, %v2269
    %2275 = vmatprep.subr.bf16.mxu0 0
    %2276 = vmatpush1.bf16.msra.mxu0 %v2271
    %2277 = vmatprep.subr.bf16.mxu0 0
    %2278 = vmatpush1.bf16.msra.mxu0 %v2272
    %2279 = vmatprep.subr.bf16.mxu0 0
    %2280 = vmatpush1.bf16.msra.mxu0 0
    %2281 = vmatprep.subr.bf16.mxu0 0
    %2282 = vmatpush1.bf16.msra.mxu0 0
    %2283 = vmatprep.subr.bf16.mxu0 0
    %2284 = vmatpush1.bf16.msra.mxu0 0
    %2285 = vmatprep.subr.bf16.mxu0 0
    %2286 = vmatpush1.bf16.msra.mxu0 0
    %2287 = vmatprep.subr.bf16.mxu0 0
    %2288 = vmatpush1.bf16.msra.mxu0 0
    %2289 = vmatprep.subr.bf16.mxu0 0
    %2290 = vmatpush1.bf16.msra.mxu0 0
    %2291 = vmatprep.subr.bf16.mxu0 0
    %2292 = vmatpush1.bf16.msra.mxu0 0
    %2293 = vmatprep.subr.bf16.mxu0 0
    %2294 = vmatpush1.bf16.msra.mxu0 0
    %2295 = vmatprep.subr.bf16.mxu0 0
    %2296 = vmatpush1.bf16.msra.mxu0 0
    %2297 = vmatprep.subr.bf16.mxu0 0
    %2298 = vmatpush1.bf16.msra.mxu0 0
    %2299 = vmatprep.subr.bf16.mxu0 0
    %2300 = vmatpush1.bf16.msra.mxu0 0
    %2301 = vmatprep.subr.bf16.mxu0 0
    %2302 = vmatpush1.bf16.msra.mxu0 0
    %2303 = vmatprep.subr.bf16.mxu0 0
    %2304 = vmatpush1.bf16.msra.mxu0 0
    %2305 = vmatprep.subr.bf16.mxu0 0
    %2306 = vmatpush1.bf16.msra.mxu0 0
    %2307 = vmatprep.mubr.bf16.mxu0 0
    %2308 = vmatmul.mubr.bf16.gmra.mrb[0].mxu0 %v52
    %v2309 = vpop.f32.mrb[0].mxu0
    %v2310 = vadd.f32 0.0, %v2309
    %v2311 = vpop.f32.mrb[0].mxu0
    %v2312 = vpop.f32.mrb[0].mxu0
    %v2313 = vadd.f32 0.0, %v2312
    %v2314 = vpop.f32.mrb[0].mxu0
    %2315 = vdwg.mxu0
    %s2316 = scalar_lea.vmem %s2, 80
    %v2317 = vld [vmem:[%s2316] sm:$0xf]
    %v2318 = vld [vmem:[%s2316 + $0x4] sm:$0xf]
    %v2319 = vld [vmem:[%s2316 + $0x8] sm:$0xf]
    %v2320 = vld [vmem:[%s2316 + $0xc] sm:$0xf]
    %v2325 = vunpack.c.l.b16 %v2317
    %v2326 = vunpack.c.l.b16 %v2318
    %v2327 = vunpack.c.l.b16 %v2319
    %v2328 = vunpack.c.l.b16 %v2320
    %v2329 = vpack.c.b16 %v2326, %v2325
    %v2330 = vpack.c.b16 %v2328, %v2327
    %2333 = vmatprep.subr.bf16.mxu0 0
    %2334 = vmatpush1.bf16.msra.mxu0 %v2329
    %2335 = vmatprep.subr.bf16.mxu0 0
    %2336 = vmatpush1.bf16.msra.mxu0 %v2330
    %2337 = vmatprep.subr.bf16.mxu0 0
    %2338 = vmatpush1.bf16.msra.mxu0 0
    %2339 = vmatprep.subr.bf16.mxu0 0
    %2340 = vmatpush1.bf16.msra.mxu0 0
    %2341 = vmatprep.subr.bf16.mxu0 0
    %2342 = vmatpush1.bf16.msra.mxu0 0
    %2343 = vmatprep.subr.bf16.mxu0 0
    %2344 = vmatpush1.bf16.msra.mxu0 0
    %2345 = vmatprep.subr.bf16.mxu0 0
    %2346 = vmatpush1.bf16.msra.mxu0 0
    %2347 = vmatprep.subr.bf16.mxu0 0
    %2348 = vmatpush1.bf16.msra.mxu0 0
    %2349 = vmatprep.subr.bf16.mxu0 0
    %2350 = vmatpush1.bf16.msra.mxu0 0
    %2351 = vmatprep.subr.bf16.mxu0 0
    %2352 = vmatpush1.bf16.msra.mxu0 0
    %2353 = vmatprep.subr.bf16.mxu0 0
    %2354 = vmatpush1.bf16.msra.mxu0 0
    %2355 = vmatprep.subr.bf16.mxu0 0
    %2356 = vmatpush1.bf16.msra.mxu0 0
    %2357 = vmatprep.subr.bf16.mxu0 0
    %2358 = vmatpush1.bf16.msra.mxu0 0
    %2359 = vmatprep.subr.bf16.mxu0 0
    %2360 = vmatpush1.bf16.msra.mxu0 0
    %2361 = vmatprep.subr.bf16.mxu0 0
    %2362 = vmatpush1.bf16.msra.mxu0 0
    %2363 = vmatprep.subr.bf16.mxu0 0
    %2364 = vmatpush1.bf16.msra.mxu0 0
    %2365 = vmatprep.mubr.bf16.mxu0 0
    %2366 = vmatmul.mubr.bf16.gmra.mrb[0].mxu0 %v52
    %v2367 = vpop.f32.mrb[0].mxu0
    %v2368 = vadd.f32 0.0, %v2367
    %v2369 = vpop.f32.mrb[0].mxu0
    %v2370 = vpop.f32.mrb[0].mxu0
    %v2371 = vadd.f32 0.0, %v2370
    %v2372 = vpop.f32.mrb[0].mxu0
    %2373 = vdwg.mxu0
    %s2374 = scalar_lea.vmem %s3, 80
    %v2375 = vld [vmem:[%s2374] sm:$0xf]
    %v2376 = vld [vmem:[%s2374 + $0x4] sm:$0xf]
    %v2377 = vld [vmem:[%s2374 + $0x8] sm:$0xf]
    %v2378 = vld [vmem:[%s2374 + $0xc] sm:$0xf]
    %v2383 = vunpack.c.l.b16 %v2375
    %v2384 = vunpack.c.l.b16 %v2376
    %v2385 = vunpack.c.l.b16 %v2377
    %v2386 = vunpack.c.l.b16 %v2378
    %v2387 = vpack.c.b16 %v2384, %v2383
    %v2388 = vpack.c.b16 %v2386, %v2385
    %2391 = vmatprep.subr.bf16.mxu0 0
    %2392 = vmatpush1.bf16.msra.mxu0 %v2387
    %2393 = vmatprep.subr.bf16.mxu0 0
    %2394 = vmatpush1.bf16.msra.mxu0 %v2388
    %2395 = vmatprep.subr.bf16.mxu0 0
    %2396 = vmatpush1.bf16.msra.mxu0 0
    %2397 = vmatprep.subr.bf16.mxu0 0
    %2398 = vmatpush1.bf16.msra.mxu0 0
    %2399 = vmatprep.subr.bf16.mxu0 0
    %2400 = vmatpush1.bf16.msra.mxu0 0
    %2401 = vmatprep.subr.bf16.mxu0 0
    %2402 = vmatpush1.bf16.msra.mxu0 0
    %2403 = vmatprep.subr.bf16.mxu0 0
    %2404 = vmatpush1.bf16.msra.mxu0 0
    %2405 = vmatprep.subr.bf16.mxu0 0
    %2406 = vmatpush1.bf16.msra.mxu0 0
    %2407 = vmatprep.subr.bf16.mxu0 0
    %2408 = vmatpush1.bf16.msra.mxu0 0
    %2409 = vmatprep.subr.bf16.mxu0 0
    %2410 = vmatpush1.bf16.msra.mxu0 0
    %2411 = vmatprep.subr.bf16.mxu0 0
    %2412 = vmatpush1.bf16.msra.mxu0 0
    %2413 = vmatprep.subr.bf16.mxu0 0
    %2414 = vmatpush1.bf16.msra.mxu0 0
    %2415 = vmatprep.subr.bf16.mxu0 0
    %2416 = vmatpush1.bf16.msra.mxu0 0
    %2417 = vmatprep.subr.bf16.mxu0 0
    %2418 = vmatpush1.bf16.msra.mxu0 0
    %2419 = vmatprep.subr.bf16.mxu0 0
    %2420 = vmatpush1.bf16.msra.mxu0 0
    %2421 = vmatprep.subr.bf16.mxu0 0
    %2422 = vmatpush1.bf16.msra.mxu0 0
    %2423 = vmatprep.mubr.bf16.mxu0 0
    %2424 = vmatmul.mubr.bf16.gmra.mrb[0].mxu0 %v52
    %v2425 = vpop.f32.mrb[0].mxu0
    %v2426 = vadd.f32 0.0, %v2425
    %v2427 = vpop.f32.mrb[0].mxu0
    %v2428 = vpop.f32.mrb[0].mxu0
    %v2429 = vadd.f32 0.0, %v2428
    %v2430 = vpop.f32.mrb[0].mxu0
    %2431 = vdwg.mxu0
    %v2432 = vpack.c.bf16 %v2310, %v2310
    %v2433 = vpack.c.bf16 %v2313, %v2313
    %v2434 = vpack.c.bf16 %v2368, %v2368
    %v2435 = vpack.c.bf16 %v2371, %v2371
    %v2436 = vpack.c.bf16 %v2426, %v2426
    %v2437 = vpack.c.bf16 %v2429, %v2429
    %v2439 = vsel %vm215, %v2432, 0
    %v2442 = vsel %vm215, %v2434, 0
    %2444 = vmatprep.subr.bf16.mxu0 0
    %2445 = vmatpush1.bf16.xpose.msra.mxu0 %v2442
    %2446 = vmatprep.subr.bf16.mxu0 0
    %2447 = vmatpush1.bf16.xpose.msra.mxu0 0
    %2448 = vmatprep.subr.bf16.mxu0 0
    %2449 = vmatpush1.bf16.xpose.msra.mxu0 0
    %2450 = vmatprep.subr.bf16.mxu0 0
    %2451 = vmatpush1.bf16.xpose.msra.mxu0 0
    %2452 = vmatprep.subr.bf16.mxu0 0
    %2453 = vmatpush1.bf16.xpose.msra.mxu0 0
    %2454 = vmatprep.subr.bf16.mxu0 0
    %2455 = vmatpush1.bf16.xpose.msra.mxu0 0
    %2456 = vmatprep.subr.bf16.mxu0 0
    %2457 = vmatpush1.bf16.xpose.msra.mxu0 0
    %2458 = vmatprep.subr.bf16.mxu0 0
    %2459 = vmatpush1.bf16.xpose.msra.mxu0 0
    %2460 = vmatprep.subr.bf16.mxu0 0
    %2461 = vmatpush1.bf16.xpose.msra.mxu0 0
    %2462 = vmatprep.subr.bf16.mxu0 0
    %2463 = vmatpush1.bf16.xpose.msra.mxu0 0
    %2464 = vmatprep.subr.bf16.mxu0 0
    %2465 = vmatpush1.bf16.xpose.msra.mxu0 0
    %2466 = vmatprep.subr.bf16.mxu0 0
    %2467 = vmatpush1.bf16.xpose.msra.mxu0 0
    %2468 = vmatprep.subr.bf16.mxu0 0
    %2469 = vmatpush1.bf16.xpose.msra.mxu0 0
    %2470 = vmatprep.subr.bf16.mxu0 0
    %2471 = vmatpush1.bf16.xpose.msra.mxu0 0
    %2472 = vmatprep.subr.bf16.mxu0 0
    %2473 = vmatpush1.bf16.xpose.msra.mxu0 0
    %2474 = vmatprep.subr.bf16.mxu0 0
    %2475 = vmatpush1.bf16.xpose.msra.mxu0 0
    %2476 = vmatprep.mubr.bf16.mxu0 0
    %2477 = vmatmul.mubr.bf16.gmra.mrb[0].mxu0 %v2439
    %v2478 = vpop.f32.mrb[0].mxu0
    %v2479 = vadd.f32 0.0, %v2478
    %v2480 = vpop.f32.mrb[0].mxu0
    %v2481 = vpop.f32.mrb[0].mxu0
    %v2482 = vpop.f32.mrb[0].mxu0
    %2483 = vdwg.mxu0
    %v2485 = vsel %vm215, %v2433, 0
    %v2488 = vsel %vm215, %v2435, 0
    %2490 = vmatprep.subr.bf16.mxu0 0
    %2491 = vmatpush1.bf16.xpose.msra.mxu0 %v2488
    %2492 = vmatprep.subr.bf16.mxu0 0
    %2493 = vmatpush1.bf16.xpose.msra.mxu0 0
    %2494 = vmatprep.subr.bf16.mxu0 0
    %2495 = vmatpush1.bf16.xpose.msra.mxu0 0
    %2496 = vmatprep.subr.bf16.mxu0 0
    %2497 = vmatpush1.bf16.xpose.msra.mxu0 0
    %2498 = vmatprep.subr.bf16.mxu0 0
    %2499 = vmatpush1.bf16.xpose.msra.mxu0 0
    %2500 = vmatprep.subr.bf16.mxu0 0
    %2501 = vmatpush1.bf16.xpose.msra.mxu0 0
    %2502 = vmatprep.subr.bf16.mxu0 0
    %2503 = vmatpush1.bf16.xpose.msra.mxu0 0
    %2504 = vmatprep.subr.bf16.mxu0 0
    %2505 = vmatpush1.bf16.xpose.msra.mxu0 0
    %2506 = vmatprep.subr.bf16.mxu0 0
    %2507 = vmatpush1.bf16.xpose.msra.mxu0 0
    %2508 = vmatprep.subr.bf16.mxu0 0
    %2509 = vmatpush1.bf16.xpose.msra.mxu0 0
    %2510 = vmatprep.subr.bf16.mxu0 0
    %2511 = vmatpush1.bf16.xpose.msra.mxu0 0
    %2512 = vmatprep.subr.bf16.mxu0 0
    %2513 = vmatpush1.bf16.xpose.msra.mxu0 0
    %2514 = vmatprep.subr.bf16.mxu0 0
    %2515 = vmatpush1.bf16.xpose.msra.mxu0 0
    %2516 = vmatprep.subr.bf16.mxu0 0
    %2517 = vmatpush1.bf16.xpose.msra.mxu0 0
    %2518 = vmatprep.subr.bf16.mxu0 0
    %2519 = vmatpush1.bf16.xpose.msra.mxu0 0
    %2520 = vmatprep.subr.bf16.mxu0 0
    %2521 = vmatpush1.bf16.xpose.msra.mxu0 0
    %2522 = vmatprep.mubr.bf16.mxu0 0
    %2523 = vmatmul.mubr.bf16.gmra.mrb[0].mxu0 %v2485
    %v2524 = vpop.f32.mrb[0].mxu0
    %v2525 = vadd.f32 0.0, %v2524
    %v2526 = vpop.f32.mrb[0].mxu0
    %v2527 = vpop.f32.mrb[0].mxu0
    %v2528 = vpop.f32.mrb[0].mxu0
    %2529 = vdwg.mxu0
    %v2530 = vsel %vm308, %v2479, -inf
    %2531 = vmax.xlane.f32.xlu0 %v2530
    %v2532 = vpop.xlane.xlu0 %2531
    %v2533 = vsel %vm308, %v2525, -inf
    %2534 = vmax.xlane.f32.xlu0 %v2533
    %v2535 = vpop.xlane.xlu0 %2534
    %v2536 = vsub.f32 %v2479, %v2532
    %v2537 = vsub.f32 %v2525, %v2535
    %v2538 = vmul.f32 %v2536, 1.442695
    %v2539 = vpow.pop %v2538
    %v2540 = vmul.f32 %v2537, 1.442695
    %v2541 = vpow.pop %v2540
    %v2542 = vsel %vm308, %v2539, 0.0
    %2543 = vadd.xlane.f32.xlu0 %v2542
    %v2544 = vpop.xlane.xlu0 %2543
    %v2545 = vsel %vm308, %v2541, 0.0
    %2546 = vadd.xlane.f32.xlu0 %v2545
    %v2547 = vpop.xlane.xlu0 %2546
    %v2548 = vpack.c.bf16 %v2539, %v2539
    %v2549 = vpack.c.bf16 %v2541, %v2541
    %v2551 = vsel %vm308, %v2548, 0
    %v2554 = vsel %vm332, %v2436, 0
    %2556 = vmatprep.subr.bf16.mxu0 0
    %2557 = vmatpush1.bf16.msra.mxu0 %v2554
    %2558 = vmatprep.subr.bf16.mxu0 0
    %2559 = vmatpush1.bf16.msra.mxu0 0
    %2560 = vmatprep.subr.bf16.mxu0 0
    %2561 = vmatpush1.bf16.msra.mxu0 0
    %2562 = vmatprep.subr.bf16.mxu0 0
    %2563 = vmatpush1.bf16.msra.mxu0 0
    %2564 = vmatprep.subr.bf16.mxu0 0
    %2565 = vmatpush1.bf16.msra.mxu0 0
    %2566 = vmatprep.subr.bf16.mxu0 0
    %2567 = vmatpush1.bf16.msra.mxu0 0
    %2568 = vmatprep.subr.bf16.mxu0 0
    %2569 = vmatpush1.bf16.msra.mxu0 0
    %2570 = vmatprep.subr.bf16.mxu0 0
    %2571 = vmatpush1.bf16.msra.mxu0 0
    %2572 = vmatprep.subr.bf16.mxu0 0
    %2573 = vmatpush1.bf16.msra.mxu0 0
    %2574 = vmatprep.subr.bf16.mxu0 0
    %2575 = vmatpush1.bf16.msra.mxu0 0
    %2576 = vmatprep.subr.bf16.mxu0 0
    %2577 = vmatpush1.bf16.msra.mxu0 0
    %2578 = vmatprep.subr.bf16.mxu0 0
    %2579 = vmatpush1.bf16.msra.mxu0 0
    %2580 = vmatprep.subr.bf16.mxu0 0
    %2581 = vmatpush1.bf16.msra.mxu0 0
    %2582 = vmatprep.subr.bf16.mxu0 0
    %2583 = vmatpush1.bf16.msra.mxu0 0
    %2584 = vmatprep.subr.bf16.mxu0 0
    %2585 = vmatpush1.bf16.msra.mxu0 0
    %2586 = vmatprep.subr.bf16.mxu0 0
    %2587 = vmatpush1.bf16.msra.mxu0 0
    %2588 = vmatprep.mubr.bf16.mxu0 0
    %2589 = vmatmul.mubr.bf16.gmra.mrb[0].mxu0 %v2551
    %v2590 = vpop.f32.mrb[0].mxu0
    %v2591 = vadd.f32 0.0, %v2590
    %v2592 = vpop.f32.mrb[0].mxu0
    %v2593 = vpop.f32.mrb[0].mxu0
    %v2594 = vpop.f32.mrb[0].mxu0
    %2595 = vdwg.mxu0
    %v2597 = vsel %vm308, %v2549, 0
    %v2600 = vsel %vm332, %v2437, 0
    %2602 = vmatprep.subr.bf16.mxu0 0
    %2603 = vmatpush1.bf16.msra.mxu0 %v2600
    %2604 = vmatprep.subr.bf16.mxu0 0
    %2605 = vmatpush1.bf16.msra.mxu0 0
    %2606 = vmatprep.subr.bf16.mxu0 0
    %2607 = vmatpush1.bf16.msra.mxu0 0
    %2608 = vmatprep.subr.bf16.mxu0 0
    %2609 = vmatpush1.bf16.msra.mxu0 0
    %2610 = vmatprep.subr.bf16.mxu0 0
    %2611 = vmatpush1.bf16.msra.mxu0 0
    %2612 = vmatprep.subr.bf16.mxu0 0
    %2613 = vmatpush1.bf16.msra.mxu0 0
    %2614 = vmatprep.subr.bf16.mxu0 0
    %2615 = vmatpush1.bf16.msra.mxu0 0
    %2616 = vmatprep.subr.bf16.mxu0 0
    %2617 = vmatpush1.bf16.msra.mxu0 0
    %2618 = vmatprep.subr.bf16.mxu0 0
    %2619 = vmatpush1.bf16.msra.mxu0 0
    %2620 = vmatprep.subr.bf16.mxu0 0
    %2621 = vmatpush1.bf16.msra.mxu0 0
    %2622 = vmatprep.subr.bf16.mxu0 0
    %2623 = vmatpush1.bf16.msra.mxu0 0
    %2624 = vmatprep.subr.bf16.mxu0 0
    %2625 = vmatpush1.bf16.msra.mxu0 0
    %2626 = vmatprep.subr.bf16.mxu0 0
    %2627 = vmatpush1.bf16.msra.mxu0 0
    %2628 = vmatprep.subr.bf16.mxu0 0
    %2629 = vmatpush1.bf16.msra.mxu0 0
    %2630 = vmatprep.subr.bf16.mxu0 0
    %2631 = vmatpush1.bf16.msra.mxu0 0
    %2632 = vmatprep.subr.bf16.mxu0 0
    %2633 = vmatpush1.bf16.msra.mxu0 0
    %2634 = vmatprep.mubr.bf16.mxu0 0
    %2635 = vmatmul.mubr.bf16.gmra.mrb[0].mxu0 %v2597
    %v2636 = vpop.f32.mrb[0].mxu0
    %v2637 = vadd.f32 0.0, %v2636
    %v2638 = vpop.f32.mrb[0].mxu0
    %v2639 = vpop.f32.mrb[0].mxu0
    %v2640 = vpop.f32.mrb[0].mxu0
    %2641 = vdwg.mxu0
    %v2642 = vrcp.pop %v2544
    %v2643 = vrcp.pop %v2547
    %v2644 = vmul.f32 %v2591, %v2642
    %v2645 = vmul.f32 %v2637, %v2643
    %v2646 = vld [vmem:[#allocation2] sm:$0xff]
    %v2647 = vld [vmem:[#allocation2 + $0x8] sm:$0xff]
    %v2648 = vpack.c.bf16 %v2645, %v2644
    %s2649 = scalar_lea.vmem %s4, 10
    %v2650 = vld [vmem:[%s2649] sm:$0x3]
    %v2652 = vsel %vm215, %v2648, 0
    %v2655 = vsel %vm433, %v2650, 0
    %2657 = vmatprep.subr.bf16.mxu0 0
    %2658 = vmatpush1.bf16.msra.mxu0 %v2655
    %2659 = vmatprep.subr.bf16.mxu0 0
    %2660 = vmatpush1.bf16.msra.mxu0 0
    %2661 = vmatprep.subr.bf16.mxu0 0
    %2662 = vmatpush1.bf16.msra.mxu0 0
    %2663 = vmatprep.subr.bf16.mxu0 0
    %2664 = vmatpush1.bf16.msra.mxu0 0
    %2665 = vmatprep.subr.bf16.mxu0 0
    %2666 = vmatpush1.bf16.msra.mxu0 0
    %2667 = vmatprep.subr.bf16.mxu0 0
    %2668 = vmatpush1.bf16.msra.mxu0 0
    %2669 = vmatprep.subr.bf16.mxu0 0
    %2670 = vmatpush1.bf16.msra.mxu0 0
    %2671 = vmatprep.subr.bf16.mxu0 0
    %2672 = vmatpush1.bf16.msra.mxu0 0
    %2673 = vmatprep.subr.bf16.mxu0 0
    %2674 = vmatpush1.bf16.msra.mxu0 0
    %2675 = vmatprep.subr.bf16.mxu0 0
    %2676 = vmatpush1.bf16.msra.mxu0 0
    %2677 = vmatprep.subr.bf16.mxu0 0
    %2678 = vmatpush1.bf16.msra.mxu0 0
    %2679 = vmatprep.subr.bf16.mxu0 0
    %2680 = vmatpush1.bf16.msra.mxu0 0
    %2681 = vmatprep.subr.bf16.mxu0 0
    %2682 = vmatpush1.bf16.msra.mxu0 0
    %2683 = vmatprep.subr.bf16.mxu0 0
    %2684 = vmatpush1.bf16.msra.mxu0 0
    %2685 = vmatprep.subr.bf16.mxu0 0
    %2686 = vmatpush1.bf16.msra.mxu0 0
    %2687 = vmatprep.subr.bf16.mxu0 0
    %2688 = vmatpush1.bf16.msra.mxu0 0
    %2689 = vmatprep.mubr.bf16.mxu0 0
    %2690 = vmatmul.mubr.bf16.gmra.mrb[0].mxu0 %v2652
    %v2691 = vpop.f32.mrb[0].mxu0
    %v2692 = vadd.f32 0.0, %v2691
    %v2693 = vpop.f32.mrb[0].mxu0
    %v2694 = vpop.f32.mrb[0].mxu0
    %v2695 = vadd.f32 0.0, %v2694
    %v2696 = vpop.f32.mrb[0].mxu0
    %2697 = vdwg.mxu0
    %v2698 = vadd.f32 %v2646, %v2692
    %v2699 = vadd.f32 %v2647, %v2695
    %2700 = vst.msk [vmem:[#allocation2] sm:$0xff] %vm27, %v2698
    %2701 = vst.msk [vmem:[#allocation2 + $0x8] sm:$0xff] %vm27, %v2699
    %s2702 = scalar_lea.vmem %s1, 96
    %v2703 = vld [vmem:[%s2702] sm:$0xf]
    %v2704 = vld [vmem:[%s2702 + $0x4] sm:$0xf]
    %v2705 = vld [vmem:[%s2702 + $0x8] sm:$0xf]
    %v2706 = vld [vmem:[%s2702 + $0xc] sm:$0xf]
    %v2711 = vunpack.c.l.b16 %v2703
    %v2712 = vunpack.c.l.b16 %v2704
    %v2713 = vunpack.c.l.b16 %v2705
    %v2714 = vunpack.c.l.b16 %v2706
    %v2715 = vpack.c.b16 %v2712, %v2711
    %v2716 = vpack.c.b16 %v2714, %v2713
    %2719 = vmatprep.subr.bf16.mxu0 0
    %2720 = vmatpush1.bf16.msra.mxu0 %v2715
    %2721 = vmatprep.subr.bf16.mxu0 0
    %2722 = vmatpush1.bf16.msra.mxu0 %v2716
    %2723 = vmatprep.subr.bf16.mxu0 0
    %2724 = vmatpush1.bf16.msra.mxu0 0
    %2725 = vmatprep.subr.bf16.mxu0 0
    %2726 = vmatpush1.bf16.msra.mxu0 0
    %2727 = vmatprep.subr.bf16.mxu0 0
    %2728 = vmatpush1.bf16.msra.mxu0 0
    %2729 = vmatprep.subr.bf16.mxu0 0
    %2730 = vmatpush1.bf16.msra.mxu0 0
    %2731 = vmatprep.subr.bf16.mxu0 0
    %2732 = vmatpush1.bf16.msra.mxu0 0
    %2733 = vmatprep.subr.bf16.mxu0 0
    %2734 = vmatpush1.bf16.msra.mxu0 0
    %2735 = vmatprep.subr.bf16.mxu0 0
    %2736 = vmatpush1.bf16.msra.mxu0 0
    %2737 = vmatprep.subr.bf16.mxu0 0
    %2738 = vmatpush1.bf16.msra.mxu0 0
    %2739 = vmatprep.subr.bf16.mxu0 0
    %2740 = vmatpush1.bf16.msra.mxu0 0
    %2741 = vmatprep.subr.bf16.mxu0 0
    %2742 = vmatpush1.bf16.msra.mxu0 0
    %2743 = vmatprep.subr.bf16.mxu0 0
    %2744 = vmatpush1.bf16.msra.mxu0 0
    %2745 = vmatprep.subr.bf16.mxu0 0
    %2746 = vmatpush1.bf16.msra.mxu0 0
    %2747 = vmatprep.subr.bf16.mxu0 0
    %2748 = vmatpush1.bf16.msra.mxu0 0
    %2749 = vmatprep.subr.bf16.mxu0 0
    %2750 = vmatpush1.bf16.msra.mxu0 0
    %2751 = vmatprep.mubr.bf16.mxu0 0
    %2752 = vmatmul.mubr.bf16.gmra.mrb[0].mxu0 %v52
    %v2753 = vpop.f32.mrb[0].mxu0
    %v2754 = vadd.f32 0.0, %v2753
    %v2755 = vpop.f32.mrb[0].mxu0
    %v2756 = vpop.f32.mrb[0].mxu0
    %v2757 = vadd.f32 0.0, %v2756
    %v2758 = vpop.f32.mrb[0].mxu0
    %2759 = vdwg.mxu0
    %s2760 = scalar_lea.vmem %s2, 96
    %v2761 = vld [vmem:[%s2760] sm:$0xf]
    %v2762 = vld [vmem:[%s2760 + $0x4] sm:$0xf]
    %v2763 = vld [vmem:[%s2760 + $0x8] sm:$0xf]
    %v2764 = vld [vmem:[%s2760 + $0xc] sm:$0xf]
    %v2769 = vunpack.c.l.b16 %v2761
    %v2770 = vunpack.c.l.b16 %v2762
    %v2771 = vunpack.c.l.b16 %v2763
    %v2772 = vunpack.c.l.b16 %v2764
    %v2773 = vpack.c.b16 %v2770, %v2769
    %v2774 = vpack.c.b16 %v2772, %v2771
    %2777 = vmatprep.subr.bf16.mxu0 0
    %2778 = vmatpush1.bf16.msra.mxu0 %v2773
    %2779 = vmatprep.subr.bf16.mxu0 0
    %2780 = vmatpush1.bf16.msra.mxu0 %v2774
    %2781 = vmatprep.subr.bf16.mxu0 0
    %2782 = vmatpush1.bf16.msra.mxu0 0
    %2783 = vmatprep.subr.bf16.mxu0 0
    %2784 = vmatpush1.bf16.msra.mxu0 0
    %2785 = vmatprep.subr.bf16.mxu0 0
    %2786 = vmatpush1.bf16.msra.mxu0 0
    %2787 = vmatprep.subr.bf16.mxu0 0
    %2788 = vmatpush1.bf16.msra.mxu0 0
    %2789 = vmatprep.subr.bf16.mxu0 0
    %2790 = vmatpush1.bf16.msra.mxu0 0
    %2791 = vmatprep.subr.bf16.mxu0 0
    %2792 = vmatpush1.bf16.msra.mxu0 0
    %2793 = vmatprep.subr.bf16.mxu0 0
    %2794 = vmatpush1.bf16.msra.mxu0 0
    %2795 = vmatprep.subr.bf16.mxu0 0
    %2796 = vmatpush1.bf16.msra.mxu0 0
    %2797 = vmatprep.subr.bf16.mxu0 0
    %2798 = vmatpush1.bf16.msra.mxu0 0
    %2799 = vmatprep.subr.bf16.mxu0 0
    %2800 = vmatpush1.bf16.msra.mxu0 0
    %2801 = vmatprep.subr.bf16.mxu0 0
    %2802 = vmatpush1.bf16.msra.mxu0 0
    %2803 = vmatprep.subr.bf16.mxu0 0
    %2804 = vmatpush1.bf16.msra.mxu0 0
    %2805 = vmatprep.subr.bf16.mxu0 0
    %2806 = vmatpush1.bf16.msra.mxu0 0
    %2807 = vmatprep.subr.bf16.mxu0 0
    %2808 = vmatpush1.bf16.msra.mxu0 0
    %2809 = vmatprep.mubr.bf16.mxu0 0
    %2810 = vmatmul.mubr.bf16.gmra.mrb[0].mxu0 %v52
    %v2811 = vpop.f32.mrb[0].mxu0
    %v2812 = vadd.f32 0.0, %v2811
    %v2813 = vpop.f32.mrb[0].mxu0
    %v2814 = vpop.f32.mrb[0].mxu0
    %v2815 = vadd.f32 0.0, %v2814
    %v2816 = vpop.f32.mrb[0].mxu0
    %2817 = vdwg.mxu0
    %s2818 = scalar_lea.vmem %s3, 96
    %v2819 = vld [vmem:[%s2818] sm:$0xf]
    %v2820 = vld [vmem:[%s2818 + $0x4] sm:$0xf]
    %v2821 = vld [vmem:[%s2818 + $0x8] sm:$0xf]
    %v2822 = vld [vmem:[%s2818 + $0xc] sm:$0xf]
    %v2827 = vunpack.c.l.b16 %v2819
    %v2828 = vunpack.c.l.b16 %v2820
    %v2829 = vunpack.c.l.b16 %v2821
    %v2830 = vunpack.c.l.b16 %v2822
    %v2831 = vpack.c.b16 %v2828, %v2827
    %v2832 = vpack.c.b16 %v2830, %v2829
    %2835 = vmatprep.subr.bf16.mxu0 0
    %2836 = vmatpush1.bf16.msra.mxu0 %v2831
    %2837 = vmatprep.subr.bf16.mxu0 0
    %2838 = vmatpush1.bf16.msra.mxu0 %v2832
    %2839 = vmatprep.subr.bf16.mxu0 0
    %2840 = vmatpush1.bf16.msra.mxu0 0
    %2841 = vmatprep.subr.bf16.mxu0 0
    %2842 = vmatpush1.bf16.msra.mxu0 0
    %2843 = vmatprep.subr.bf16.mxu0 0
    %2844 = vmatpush1.bf16.msra.mxu0 0
    %2845 = vmatprep.subr.bf16.mxu0 0
    %2846 = vmatpush1.bf16.msra.mxu0 0
    %2847 = vmatprep.subr.bf16.mxu0 0
    %2848 = vmatpush1.bf16.msra.mxu0 0
    %2849 = vmatprep.subr.bf16.mxu0 0
    %2850 = vmatpush1.bf16.msra.mxu0 0
    %2851 = vmatprep.subr.bf16.mxu0 0
    %2852 = vmatpush1.bf16.msra.mxu0 0
    %2853 = vmatprep.subr.bf16.mxu0 0
    %2854 = vmatpush1.bf16.msra.mxu0 0
    %2855 = vmatprep.subr.bf16.mxu0 0
    %2856 = vmatpush1.bf16.msra.mxu0 0
    %2857 = vmatprep.subr.bf16.mxu0 0
    %2858 = vmatpush1.bf16.msra.mxu0 0
    %2859 = vmatprep.subr.bf16.mxu0 0
    %2860 = vmatpush1.bf16.msra.mxu0 0
    %2861 = vmatprep.subr.bf16.mxu0 0
    %2862 = vmatpush1.bf16.msra.mxu0 0
    %2863 = vmatprep.subr.bf16.mxu0 0
    %2864 = vmatpush1.bf16.msra.mxu0 0
    %2865 = vmatprep.subr.bf16.mxu0 0
    %2866 = vmatpush1.bf16.msra.mxu0 0
    %2867 = vmatprep.mubr.bf16.mxu0 0
    %2868 = vmatmul.mubr.bf16.gmra.mrb[0].mxu0 %v52
    %v2869 = vpop.f32.mrb[0].mxu0
    %v2870 = vadd.f32 0.0, %v2869
    %v2871 = vpop.f32.mrb[0].mxu0
    %v2872 = vpop.f32.mrb[0].mxu0
    %v2873 = vadd.f32 0.0, %v2872
    %v2874 = vpop.f32.mrb[0].mxu0
    %2875 = vdwg.mxu0
    %v2876 = vpack.c.bf16 %v2754, %v2754
    %v2877 = vpack.c.bf16 %v2757, %v2757
    %v2878 = vpack.c.bf16 %v2812, %v2812
    %v2879 = vpack.c.bf16 %v2815, %v2815
    %v2880 = vpack.c.bf16 %v2870, %v2870
    %v2881 = vpack.c.bf16 %v2873, %v2873
    %v2883 = vsel %vm215, %v2876, 0
    %v2886 = vsel %vm215, %v2878, 0
    %2888 = vmatprep.subr.bf16.mxu0 0
    %2889 = vmatpush1.bf16.xpose.msra.mxu0 %v2886
    %2890 = vmatprep.subr.bf16.mxu0 0
    %2891 = vmatpush1.bf16.xpose.msra.mxu0 0
    %2892 = vmatprep.subr.bf16.mxu0 0
    %2893 = vmatpush1.bf16.xpose.msra.mxu0 0
    %2894 = vmatprep.subr.bf16.mxu0 0
    %2895 = vmatpush1.bf16.xpose.msra.mxu0 0
    %2896 = vmatprep.subr.bf16.mxu0 0
    %2897 = vmatpush1.bf16.xpose.msra.mxu0 0
    %2898 = vmatprep.subr.bf16.mxu0 0
    %2899 = vmatpush1.bf16.xpose.msra.mxu0 0
    %2900 = vmatprep.subr.bf16.mxu0 0
    %2901 = vmatpush1.bf16.xpose.msra.mxu0 0
    %2902 = vmatprep.subr.bf16.mxu0 0
    %2903 = vmatpush1.bf16.xpose.msra.mxu0 0
    %2904 = vmatprep.subr.bf16.mxu0 0
    %2905 = vmatpush1.bf16.xpose.msra.mxu0 0
    %2906 = vmatprep.subr.bf16.mxu0 0
    %2907 = vmatpush1.bf16.xpose.msra.mxu0 0
    %2908 = vmatprep.subr.bf16.mxu0 0
    %2909 = vmatpush1.bf16.xpose.msra.mxu0 0
    %2910 = vmatprep.subr.bf16.mxu0 0
    %2911 = vmatpush1.bf16.xpose.msra.mxu0 0
    %2912 = vmatprep.subr.bf16.mxu0 0
    %2913 = vmatpush1.bf16.xpose.msra.mxu0 0
    %2914 = vmatprep.subr.bf16.mxu0 0
    %2915 = vmatpush1.bf16.xpose.msra.mxu0 0
    %2916 = vmatprep.subr.bf16.mxu0 0
    %2917 = vmatpush1.bf16.xpose.msra.mxu0 0
    %2918 = vmatprep.subr.bf16.mxu0 0
    %2919 = vmatpush1.bf16.xpose.msra.mxu0 0
    %2920 = vmatprep.mubr.bf16.mxu0 0
    %2921 = vmatmul.mubr.bf16.gmra.mrb[0].mxu0 %v2883
    %v2922 = vpop.f32.mrb[0].mxu0
    %v2923 = vadd.f32 0.0, %v2922
    %v2924 = vpop.f32.mrb[0].mxu0
    %v2925 = vpop.f32.mrb[0].mxu0
    %v2926 = vpop.f32.mrb[0].mxu0
    %2927 = vdwg.mxu0
    %v2929 = vsel %vm215, %v2877, 0
    %v2932 = vsel %vm215, %v2879, 0
    %2934 = vmatprep.subr.bf16.mxu0 0
    %2935 = vmatpush1.bf16.xpose.msra.mxu0 %v2932
    %2936 = vmatprep.subr.bf16.mxu0 0
    %2937 = vmatpush1.bf16.xpose.msra.mxu0 0
    %2938 = vmatprep.subr.bf16.mxu0 0
    %2939 = vmatpush1.bf16.xpose.msra.mxu0 0
    %2940 = vmatprep.subr.bf16.mxu0 0
    %2941 = vmatpush1.bf16.xpose.msra.mxu0 0
    %2942 = vmatprep.subr.bf16.mxu0 0
    %2943 = vmatpush1.bf16.xpose.msra.mxu0 0
    %2944 = vmatprep.subr.bf16.mxu0 0
    %2945 = vmatpush1.bf16.xpose.msra.mxu0 0
    %2946 = vmatprep.subr.bf16.mxu0 0
    %2947 = vmatpush1.bf16.xpose.msra.mxu0 0
    %2948 = vmatprep.subr.bf16.mxu0 0
    %2949 = vmatpush1.bf16.xpose.msra.mxu0 0
    %2950 = vmatprep.subr.bf16.mxu0 0
    %2951 = vmatpush1.bf16.xpose.msra.mxu0 0
    %2952 = vmatprep.subr.bf16.mxu0 0
    %2953 = vmatpush1.bf16.xpose.msra.mxu0 0
    %2954 = vmatprep.subr.bf16.mxu0 0
    %2955 = vmatpush1.bf16.xpose.msra.mxu0 0
    %2956 = vmatprep.subr.bf16.mxu0 0
    %2957 = vmatpush1.bf16.xpose.msra.mxu0 0
    %2958 = vmatprep.subr.bf16.mxu0 0
    %2959 = vmatpush1.bf16.xpose.msra.mxu0 0
    %2960 = vmatprep.subr.bf16.mxu0 0
    %2961 = vmatpush1.bf16.xpose.msra.mxu0 0
    %2962 = vmatprep.subr.bf16.mxu0 0
    %2963 = vmatpush1.bf16.xpose.msra.mxu0 0
    %2964 = vmatprep.subr.bf16.mxu0 0
    %2965 = vmatpush1.bf16.xpose.msra.mxu0 0
    %2966 = vmatprep.mubr.bf16.mxu0 0
    %2967 = vmatmul.mubr.bf16.gmra.mrb[0].mxu0 %v2929
    %v2968 = vpop.f32.mrb[0].mxu0
    %v2969 = vadd.f32 0.0, %v2968
    %v2970 = vpop.f32.mrb[0].mxu0
    %v2971 = vpop.f32.mrb[0].mxu0
    %v2972 = vpop.f32.mrb[0].mxu0
    %2973 = vdwg.mxu0
    %v2974 = vsel %vm308, %v2923, -inf
    %2975 = vmax.xlane.f32.xlu0 %v2974
    %v2976 = vpop.xlane.xlu0 %2975
    %v2977 = vsel %vm308, %v2969, -inf
    %2978 = vmax.xlane.f32.xlu0 %v2977
    %v2979 = vpop.xlane.xlu0 %2978
    %v2980 = vsub.f32 %v2923, %v2976
    %v2981 = vsub.f32 %v2969, %v2979
    %v2982 = vmul.f32 %v2980, 1.442695
    %v2983 = vpow.pop %v2982
    %v2984 = vmul.f32 %v2981, 1.442695
    %v2985 = vpow.pop %v2984
    %v2986 = vsel %vm308, %v2983, 0.0
    %2987 = vadd.xlane.f32.xlu0 %v2986
    %v2988 = vpop.xlane.xlu0 %2987
    %v2989 = vsel %vm308, %v2985, 0.0
    %2990 = vadd.xlane.f32.xlu0 %v2989
    %v2991 = vpop.xlane.xlu0 %2990
    %v2992 = vpack.c.bf16 %v2983, %v2983
    %v2993 = vpack.c.bf16 %v2985, %v2985
    %v2995 = vsel %vm308, %v2992, 0
    %v2998 = vsel %vm332, %v2880, 0
    %3000 = vmatprep.subr.bf16.mxu0 0
    %3001 = vmatpush1.bf16.msra.mxu0 %v2998
    %3002 = vmatprep.subr.bf16.mxu0 0
    %3003 = vmatpush1.bf16.msra.mxu0 0
    %3004 = vmatprep.subr.bf16.mxu0 0
    %3005 = vmatpush1.bf16.msra.mxu0 0
    %3006 = vmatprep.subr.bf16.mxu0 0
    %3007 = vmatpush1.bf16.msra.mxu0 0
    %3008 = vmatprep.subr.bf16.mxu0 0
    %3009 = vmatpush1.bf16.msra.mxu0 0
    %3010 = vmatprep.subr.bf16.mxu0 0
    %3011 = vmatpush1.bf16.msra.mxu0 0
    %3012 = vmatprep.subr.bf16.mxu0 0
    %3013 = vmatpush1.bf16.msra.mxu0 0
    %3014 = vmatprep.subr.bf16.mxu0 0
    %3015 = vmatpush1.bf16.msra.mxu0 0
    %3016 = vmatprep.subr.bf16.mxu0 0
    %3017 = vmatpush1.bf16.msra.mxu0 0
    %3018 = vmatprep.subr.bf16.mxu0 0
    %3019 = vmatpush1.bf16.msra.mxu0 0
    %3020 = vmatprep.subr.bf16.mxu0 0
    %3021 = vmatpush1.bf16.msra.mxu0 0
    %3022 = vmatprep.subr.bf16.mxu0 0
    %3023 = vmatpush1.bf16.msra.mxu0 0
    %3024 = vmatprep.subr.bf16.mxu0 0
    %3025 = vmatpush1.bf16.msra.mxu0 0
    %3026 = vmatprep.subr.bf16.mxu0 0
    %3027 = vmatpush1.bf16.msra.mxu0 0
    %3028 = vmatprep.subr.bf16.mxu0 0
    %3029 = vmatpush1.bf16.msra.mxu0 0
    %3030 = vmatprep.subr.bf16.mxu0 0
    %3031 = vmatpush1.bf16.msra.mxu0 0
    %3032 = vmatprep.mubr.bf16.mxu0 0
    %3033 = vmatmul.mubr.bf16.gmra.mrb[0].mxu0 %v2995
    %v3034 = vpop.f32.mrb[0].mxu0
    %v3035 = vadd.f32 0.0, %v3034
    %v3036 = vpop.f32.mrb[0].mxu0
    %v3037 = vpop.f32.mrb[0].mxu0
    %v3038 = vpop.f32.mrb[0].mxu0
    %3039 = vdwg.mxu0
    %v3041 = vsel %vm308, %v2993, 0
    %v3044 = vsel %vm332, %v2881, 0
    %3046 = vmatprep.subr.bf16.mxu0 0
    %3047 = vmatpush1.bf16.msra.mxu0 %v3044
    %3048 = vmatprep.subr.bf16.mxu0 0
    %3049 = vmatpush1.bf16.msra.mxu0 0
    %3050 = vmatprep.subr.bf16.mxu0 0
    %3051 = vmatpush1.bf16.msra.mxu0 0
    %3052 = vmatprep.subr.bf16.mxu0 0
    %3053 = vmatpush1.bf16.msra.mxu0 0
    %3054 = vmatprep.subr.bf16.mxu0 0
    %3055 = vmatpush1.bf16.msra.mxu0 0
    %3056 = vmatprep.subr.bf16.mxu0 0
    %3057 = vmatpush1.bf16.msra.mxu0 0
    %3058 = vmatprep.subr.bf16.mxu0 0
    %3059 = vmatpush1.bf16.msra.mxu0 0
    %3060 = vmatprep.subr.bf16.mxu0 0
    %3061 = vmatpush1.bf16.msra.mxu0 0
    %3062 = vmatprep.subr.bf16.mxu0 0
    %3063 = vmatpush1.bf16.msra.mxu0 0
    %3064 = vmatprep.subr.bf16.mxu0 0
    %3065 = vmatpush1.bf16.msra.mxu0 0
    %3066 = vmatprep.subr.bf16.mxu0 0
    %3067 = vmatpush1.bf16.msra.mxu0 0
    %3068 = vmatprep.subr.bf16.mxu0 0
    %3069 = vmatpush1.bf16.msra.mxu0 0
    %3070 = vmatprep.subr.bf16.mxu0 0
    %3071 = vmatpush1.bf16.msra.mxu0 0
    %3072 = vmatprep.subr.bf16.mxu0 0
    %3073 = vmatpush1.bf16.msra.mxu0 0
    %3074 = vmatprep.subr.bf16.mxu0 0
    %3075 = vmatpush1.bf16.msra.mxu0 0
    %3076 = vmatprep.subr.bf16.mxu0 0
    %3077 = vmatpush1.bf16.msra.mxu0 0
    %3078 = vmatprep.mubr.bf16.mxu0 0
    %3079 = vmatmul.mubr.bf16.gmra.mrb[0].mxu0 %v3041
    %v3080 = vpop.f32.mrb[0].mxu0
    %v3081 = vadd.f32 0.0, %v3080
    %v3082 = vpop.f32.mrb[0].mxu0
    %v3083 = vpop.f32.mrb[0].mxu0
    %v3084 = vpop.f32.mrb[0].mxu0
    %3085 = vdwg.mxu0
    %v3086 = vrcp.pop %v2988
    %v3087 = vrcp.pop %v2991
    %v3088 = vmul.f32 %v3035, %v3086
    %v3089 = vmul.f32 %v3081, %v3087
    %v3090 = vld [vmem:[#allocation2] sm:$0xff]
    %v3091 = vld [vmem:[#allocation2 + $0x8] sm:$0xff]
    %v3092 = vpack.c.bf16 %v3089, %v3088
    %s3093 = scalar_lea.vmem %s4, 12
    %v3094 = vld [vmem:[%s3093] sm:$0x3]
    %v3096 = vsel %vm215, %v3092, 0
    %v3099 = vsel %vm433, %v3094, 0
    %3101 = vmatprep.subr.bf16.mxu0 0
    %3102 = vmatpush1.bf16.msra.mxu0 %v3099
    %3103 = vmatprep.subr.bf16.mxu0 0
    %3104 = vmatpush1.bf16.msra.mxu0 0
    %3105 = vmatprep.subr.bf16.mxu0 0
    %3106 = vmatpush1.bf16.msra.mxu0 0
    %3107 = vmatprep.subr.bf16.mxu0 0
    %3108 = vmatpush1.bf16.msra.mxu0 0
    %3109 = vmatprep.subr.bf16.mxu0 0
    %3110 = vmatpush1.bf16.msra.mxu0 0
    %3111 = vmatprep.subr.bf16.mxu0 0
    %3112 = vmatpush1.bf16.msra.mxu0 0
    %3113 = vmatprep.subr.bf16.mxu0 0
    %3114 = vmatpush1.bf16.msra.mxu0 0
    %3115 = vmatprep.subr.bf16.mxu0 0
    %3116 = vmatpush1.bf16.msra.mxu0 0
    %3117 = vmatprep.subr.bf16.mxu0 0
    %3118 = vmatpush1.bf16.msra.mxu0 0
    %3119 = vmatprep.subr.bf16.mxu0 0
    %3120 = vmatpush1.bf16.msra.mxu0 0
    %3121 = vmatprep.subr.bf16.mxu0 0
    %3122 = vmatpush1.bf16.msra.mxu0 0
    %3123 = vmatprep.subr.bf16.mxu0 0
    %3124 = vmatpush1.bf16.msra.mxu0 0
    %3125 = vmatprep.subr.bf16.mxu0 0
    %3126 = vmatpush1.bf16.msra.mxu0 0
    %3127 = vmatprep.subr.bf16.mxu0 0
    %3128 = vmatpush1.bf16.msra.mxu0 0
    %3129 = vmatprep.subr.bf16.mxu0 0
    %3130 = vmatpush1.bf16.msra.mxu0 0
    %3131 = vmatprep.subr.bf16.mxu0 0
    %3132 = vmatpush1.bf16.msra.mxu0 0
    %3133 = vmatprep.mubr.bf16.mxu0 0
    %3134 = vmatmul.mubr.bf16.gmra.mrb[0].mxu0 %v3096
    %v3135 = vpop.f32.mrb[0].mxu0
    %v3136 = vadd.f32 0.0, %v3135
    %v3137 = vpop.f32.mrb[0].mxu0
    %v3138 = vpop.f32.mrb[0].mxu0
    %v3139 = vadd.f32 0.0, %v3138
    %v3140 = vpop.f32.mrb[0].mxu0
    %3141 = vdwg.mxu0
    %v3142 = vadd.f32 %v3090, %v3136
    %v3143 = vadd.f32 %v3091, %v3139
    %3144 = vst.msk [vmem:[#allocation2] sm:$0xff] %vm27, %v3142
    %3145 = vst.msk [vmem:[#allocation2 + $0x8] sm:$0xff] %vm27, %v3143
    %s3146 = scalar_lea.vmem %s1, 112
    %v3147 = vld [vmem:[%s3146] sm:$0xf]
    %v3148 = vld [vmem:[%s3146 + $0x4] sm:$0xf]
    %v3149 = vld [vmem:[%s3146 + $0x8] sm:$0xf]
    %v3150 = vld [vmem:[%s3146 + $0xc] sm:$0xf]
    %v3155 = vunpack.c.l.b16 %v3147
    %v3156 = vunpack.c.l.b16 %v3148
    %v3157 = vunpack.c.l.b16 %v3149
    %v3158 = vunpack.c.l.b16 %v3150
    %v3159 = vpack.c.b16 %v3156, %v3155
    %v3160 = vpack.c.b16 %v3158, %v3157
    %3163 = vmatprep.subr.bf16.mxu0 0
    %3164 = vmatpush1.bf16.msra.mxu0 %v3159
    %3165 = vmatprep.subr.bf16.mxu0 0
    %3166 = vmatpush1.bf16.msra.mxu0 %v3160
    %3167 = vmatprep.subr.bf16.mxu0 0
    %3168 = vmatpush1.bf16.msra.mxu0 0
    %3169 = vmatprep.subr.bf16.mxu0 0
    %3170 = vmatpush1.bf16.msra.mxu0 0
    %3171 = vmatprep.subr.bf16.mxu0 0
    %3172 = vmatpush1.bf16.msra.mxu0 0
    %3173 = vmatprep.subr.bf16.mxu0 0
    %3174 = vmatpush1.bf16.msra.mxu0 0
    %3175 = vmatprep.subr.bf16.mxu0 0
    %3176 = vmatpush1.bf16.msra.mxu0 0
    %3177 = vmatprep.subr.bf16.mxu0 0
    %3178 = vmatpush1.bf16.msra.mxu0 0
    %3179 = vmatprep.subr.bf16.mxu0 0
    %3180 = vmatpush1.bf16.msra.mxu0 0
    %3181 = vmatprep.subr.bf16.mxu0 0
    %3182 = vmatpush1.bf16.msra.mxu0 0
    %3183 = vmatprep.subr.bf16.mxu0 0
    %3184 = vmatpush1.bf16.msra.mxu0 0
    %3185 = vmatprep.subr.bf16.mxu0 0
    %3186 = vmatpush1.bf16.msra.mxu0 0
    %3187 = vmatprep.subr.bf16.mxu0 0
    %3188 = vmatpush1.bf16.msra.mxu0 0
    %3189 = vmatprep.subr.bf16.mxu0 0
    %3190 = vmatpush1.bf16.msra.mxu0 0
    %3191 = vmatprep.subr.bf16.mxu0 0
    %3192 = vmatpush1.bf16.msra.mxu0 0
    %3193 = vmatprep.subr.bf16.mxu0 0
    %3194 = vmatpush1.bf16.msra.mxu0 0
    %3195 = vmatprep.mubr.bf16.mxu0 0
    %3196 = vmatmul.mubr.bf16.gmra.mrb[0].mxu0 %v52
    %v3197 = vpop.f32.mrb[0].mxu0
    %v3198 = vadd.f32 0.0, %v3197
    %v3199 = vpop.f32.mrb[0].mxu0
    %v3200 = vpop.f32.mrb[0].mxu0
    %v3201 = vadd.f32 0.0, %v3200
    %v3202 = vpop.f32.mrb[0].mxu0
    %3203 = vdwg.mxu0
    %s3204 = scalar_lea.vmem %s2, 112
    %v3205 = vld [vmem:[%s3204] sm:$0xf]
    %v3206 = vld [vmem:[%s3204 + $0x4] sm:$0xf]
    %v3207 = vld [vmem:[%s3204 + $0x8] sm:$0xf]
    %v3208 = vld [vmem:[%s3204 + $0xc] sm:$0xf]
    %v3213 = vunpack.c.l.b16 %v3205
    %v3214 = vunpack.c.l.b16 %v3206
    %v3215 = vunpack.c.l.b16 %v3207
    %v3216 = vunpack.c.l.b16 %v3208
    %v3217 = vpack.c.b16 %v3214, %v3213
    %v3218 = vpack.c.b16 %v3216, %v3215
    %3221 = vmatprep.subr.bf16.mxu0 0
    %3222 = vmatpush1.bf16.msra.mxu0 %v3217
    %3223 = vmatprep.subr.bf16.mxu0 0
    %3224 = vmatpush1.bf16.msra.mxu0 %v3218
    %3225 = vmatprep.subr.bf16.mxu0 0
    %3226 = vmatpush1.bf16.msra.mxu0 0
    %3227 = vmatprep.subr.bf16.mxu0 0
    %3228 = vmatpush1.bf16.msra.mxu0 0
    %3229 = vmatprep.subr.bf16.mxu0 0
    %3230 = vmatpush1.bf16.msra.mxu0 0
    %3231 = vmatprep.subr.bf16.mxu0 0
    %3232 = vmatpush1.bf16.msra.mxu0 0
    %3233 = vmatprep.subr.bf16.mxu0 0
    %3234 = vmatpush1.bf16.msra.mxu0 0
    %3235 = vmatprep.subr.bf16.mxu0 0
    %3236 = vmatpush1.bf16.msra.mxu0 0
    %3237 = vmatprep.subr.bf16.mxu0 0
    %3238 = vmatpush1.bf16.msra.mxu0 0
    %3239 = vmatprep.subr.bf16.mxu0 0
    %3240 = vmatpush1.bf16.msra.mxu0 0
    %3241 = vmatprep.subr.bf16.mxu0 0
    %3242 = vmatpush1.bf16.msra.mxu0 0
    %3243 = vmatprep.subr.bf16.mxu0 0
    %3244 = vmatpush1.bf16.msra.mxu0 0
    %3245 = vmatprep.subr.bf16.mxu0 0
    %3246 = vmatpush1.bf16.msra.mxu0 0
    %3247 = vmatprep.subr.bf16.mxu0 0
    %3248 = vmatpush1.bf16.msra.mxu0 0
    %3249 = vmatprep.subr.bf16.mxu0 0
    %3250 = vmatpush1.bf16.msra.mxu0 0
    %3251 = vmatprep.subr.bf16.mxu0 0
    %3252 = vmatpush1.bf16.msra.mxu0 0
    %3253 = vmatprep.mubr.bf16.mxu0 0
    %3254 = vmatmul.mubr.bf16.gmra.mrb[0].mxu0 %v52
    %v3255 = vpop.f32.mrb[0].mxu0
    %v3256 = vadd.f32 0.0, %v3255
    %v3257 = vpop.f32.mrb[0].mxu0
    %v3258 = vpop.f32.mrb[0].mxu0
    %v3259 = vadd.f32 0.0, %v3258
    %v3260 = vpop.f32.mrb[0].mxu0
    %3261 = vdwg.mxu0
    %s3262 = scalar_lea.vmem %s3, 112
    %v3263 = vld [vmem:[%s3262] sm:$0xf]
    %v3264 = vld [vmem:[%s3262 + $0x4] sm:$0xf]
    %v3265 = vld [vmem:[%s3262 + $0x8] sm:$0xf]
    %v3266 = vld [vmem:[%s3262 + $0xc] sm:$0xf]
    %v3271 = vunpack.c.l.b16 %v3263
    %v3272 = vunpack.c.l.b16 %v3264
    %v3273 = vunpack.c.l.b16 %v3265
    %v3274 = vunpack.c.l.b16 %v3266
    %v3275 = vpack.c.b16 %v3272, %v3271
    %v3276 = vpack.c.b16 %v3274, %v3273
    %3279 = vmatprep.subr.bf16.mxu0 0
    %3280 = vmatpush1.bf16.msra.mxu0 %v3275
    %3281 = vmatprep.subr.bf16.mxu0 0
    %3282 = vmatpush1.bf16.msra.mxu0 %v3276
    %3283 = vmatprep.subr.bf16.mxu0 0
    %3284 = vmatpush1.bf16.msra.mxu0 0
    %3285 = vmatprep.subr.bf16.mxu0 0
    %3286 = vmatpush1.bf16.msra.mxu0 0
    %3287 = vmatprep.subr.bf16.mxu0 0
    %3288 = vmatpush1.bf16.msra.mxu0 0
    %3289 = vmatprep.subr.bf16.mxu0 0
    %3290 = vmatpush1.bf16.msra.mxu0 0
    %3291 = vmatprep.subr.bf16.mxu0 0
    %3292 = vmatpush1.bf16.msra.mxu0 0
    %3293 = vmatprep.subr.bf16.mxu0 0
    %3294 = vmatpush1.bf16.msra.mxu0 0
    %3295 = vmatprep.subr.bf16.mxu0 0
    %3296 = vmatpush1.bf16.msra.mxu0 0
    %3297 = vmatprep.subr.bf16.mxu0 0
    %3298 = vmatpush1.bf16.msra.mxu0 0
    %3299 = vmatprep.subr.bf16.mxu0 0
    %3300 = vmatpush1.bf16.msra.mxu0 0
    %3301 = vmatprep.subr.bf16.mxu0 0
    %3302 = vmatpush1.bf16.msra.mxu0 0
    %3303 = vmatprep.subr.bf16.mxu0 0
    %3304 = vmatpush1.bf16.msra.mxu0 0
    %3305 = vmatprep.subr.bf16.mxu0 0
    %3306 = vmatpush1.bf16.msra.mxu0 0
    %3307 = vmatprep.subr.bf16.mxu0 0
    %3308 = vmatpush1.bf16.msra.mxu0 0
    %3309 = vmatprep.subr.bf16.mxu0 0
    %3310 = vmatpush1.bf16.msra.mxu0 0
    %3311 = vmatprep.mubr.bf16.mxu0 0
    %3312 = vmatmul.mubr.bf16.gmra.mrb[0].mxu0 %v52
    %v3313 = vpop.f32.mrb[0].mxu0
    %v3314 = vadd.f32 0.0, %v3313
    %v3315 = vpop.f32.mrb[0].mxu0
    %v3316 = vpop.f32.mrb[0].mxu0
    %v3317 = vadd.f32 0.0, %v3316
    %v3318 = vpop.f32.mrb[0].mxu0
    %3319 = vdwg.mxu0
    %v3320 = vpack.c.bf16 %v3198, %v3198
    %v3321 = vpack.c.bf16 %v3201, %v3201
    %v3322 = vpack.c.bf16 %v3256, %v3256
    %v3323 = vpack.c.bf16 %v3259, %v3259
    %v3324 = vpack.c.bf16 %v3314, %v3314
    %v3325 = vpack.c.bf16 %v3317, %v3317
    %v3327 = vsel %vm215, %v3320, 0
    %v3330 = vsel %vm215, %v3322, 0
    %3332 = vmatprep.subr.bf16.mxu0 0
    %3333 = vmatpush1.bf16.xpose.msra.mxu0 %v3330
    %3334 = vmatprep.subr.bf16.mxu0 0
    %3335 = vmatpush1.bf16.xpose.msra.mxu0 0
    %3336 = vmatprep.subr.bf16.mxu0 0
    %3337 = vmatpush1.bf16.xpose.msra.mxu0 0
    %3338 = vmatprep.subr.bf16.mxu0 0
    %3339 = vmatpush1.bf16.xpose.msra.mxu0 0
    %3340 = vmatprep.subr.bf16.mxu0 0
    %3341 = vmatpush1.bf16.xpose.msra.mxu0 0
    %3342 = vmatprep.subr.bf16.mxu0 0
    %3343 = vmatpush1.bf16.xpose.msra.mxu0 0
    %3344 = vmatprep.subr.bf16.mxu0 0
    %3345 = vmatpush1.bf16.xpose.msra.mxu0 0
    %3346 = vmatprep.subr.bf16.mxu0 0
    %3347 = vmatpush1.bf16.xpose.msra.mxu0 0
    %3348 = vmatprep.subr.bf16.mxu0 0
    %3349 = vmatpush1.bf16.xpose.msra.mxu0 0
    %3350 = vmatprep.subr.bf16.mxu0 0
    %3351 = vmatpush1.bf16.xpose.msra.mxu0 0
    %3352 = vmatprep.subr.bf16.mxu0 0
    %3353 = vmatpush1.bf16.xpose.msra.mxu0 0
    %3354 = vmatprep.subr.bf16.mxu0 0
    %3355 = vmatpush1.bf16.xpose.msra.mxu0 0
    %3356 = vmatprep.subr.bf16.mxu0 0
    %3357 = vmatpush1.bf16.xpose.msra.mxu0 0
    %3358 = vmatprep.subr.bf16.mxu0 0
    %3359 = vmatpush1.bf16.xpose.msra.mxu0 0
    %3360 = vmatprep.subr.bf16.mxu0 0
    %3361 = vmatpush1.bf16.xpose.msra.mxu0 0
    %3362 = vmatprep.subr.bf16.mxu0 0
    %3363 = vmatpush1.bf16.xpose.msra.mxu0 0
    %3364 = vmatprep.mubr.bf16.mxu0 0
    %3365 = vmatmul.mubr.bf16.gmra.mrb[0].mxu0 %v3327
    %v3366 = vpop.f32.mrb[0].mxu0
    %v3367 = vadd.f32 0.0, %v3366
    %v3368 = vpop.f32.mrb[0].mxu0
    %v3369 = vpop.f32.mrb[0].mxu0
    %v3370 = vpop.f32.mrb[0].mxu0
    %3371 = vdwg.mxu0
    %v3373 = vsel %vm215, %v3321, 0
    %v3376 = vsel %vm215, %v3323, 0
    %3378 = vmatprep.subr.bf16.mxu0 0
    %3379 = vmatpush1.bf16.xpose.msra.mxu0 %v3376
    %3380 = vmatprep.subr.bf16.mxu0 0
    %3381 = vmatpush1.bf16.xpose.msra.mxu0 0
    %3382 = vmatprep.subr.bf16.mxu0 0
    %3383 = vmatpush1.bf16.xpose.msra.mxu0 0
    %3384 = vmatprep.subr.bf16.mxu0 0
    %3385 = vmatpush1.bf16.xpose.msra.mxu0 0
    %3386 = vmatprep.subr.bf16.mxu0 0
    %3387 = vmatpush1.bf16.xpose.msra.mxu0 0
    %3388 = vmatprep.subr.bf16.mxu0 0
    %3389 = vmatpush1.bf16.xpose.msra.mxu0 0
    %3390 = vmatprep.subr.bf16.mxu0 0
    %3391 = vmatpush1.bf16.xpose.msra.mxu0 0
    %3392 = vmatprep.subr.bf16.mxu0 0
    %3393 = vmatpush1.bf16.xpose.msra.mxu0 0
    %3394 = vmatprep.subr.bf16.mxu0 0
    %3395 = vmatpush1.bf16.xpose.msra.mxu0 0
    %3396 = vmatprep.subr.bf16.mxu0 0
    %3397 = vmatpush1.bf16.xpose.msra.mxu0 0
    %3398 = vmatprep.subr.bf16.mxu0 0
    %3399 = vmatpush1.bf16.xpose.msra.mxu0 0
    %3400 = vmatprep.subr.bf16.mxu0 0
    %3401 = vmatpush1.bf16.xpose.msra.mxu0 0
    %3402 = vmatprep.subr.bf16.mxu0 0
    %3403 = vmatpush1.bf16.xpose.msra.mxu0 0
    %3404 = vmatprep.subr.bf16.mxu0 0
    %3405 = vmatpush1.bf16.xpose.msra.mxu0 0
    %3406 = vmatprep.subr.bf16.mxu0 0
    %3407 = vmatpush1.bf16.xpose.msra.mxu0 0
    %3408 = vmatprep.subr.bf16.mxu0 0
    %3409 = vmatpush1.bf16.xpose.msra.mxu0 0
    %3410 = vmatprep.mubr.bf16.mxu0 0
    %3411 = vmatmul.mubr.bf16.gmra.mrb[0].mxu0 %v3373
    %v3412 = vpop.f32.mrb[0].mxu0
    %v3413 = vadd.f32 0.0, %v3412
    %v3414 = vpop.f32.mrb[0].mxu0
    %v3415 = vpop.f32.mrb[0].mxu0
    %v3416 = vpop.f32.mrb[0].mxu0
    %3417 = vdwg.mxu0
    %v3418 = vsel %vm308, %v3367, -inf
    %3419 = vmax.xlane.f32.xlu0 %v3418
    %v3420 = vpop.xlane.xlu0 %3419
    %v3421 = vsel %vm308, %v3413, -inf
    %3422 = vmax.xlane.f32.xlu0 %v3421
    %v3423 = vpop.xlane.xlu0 %3422
    %v3424 = vsub.f32 %v3367, %v3420
    %v3425 = vsub.f32 %v3413, %v3423
    %v3426 = vmul.f32 %v3424, 1.442695
    %v3427 = vpow.pop %v3426
    %v3428 = vmul.f32 %v3425, 1.442695
    %v3429 = vpow.pop %v3428
    %v3430 = vsel %vm308, %v3427, 0.0
    %3431 = vadd.xlane.f32.xlu0 %v3430
    %v3432 = vpop.xlane.xlu0 %3431
    %v3433 = vsel %vm308, %v3429, 0.0
    %3434 = vadd.xlane.f32.xlu0 %v3433
    %v3435 = vpop.xlane.xlu0 %3434
    %v3436 = vpack.c.bf16 %v3427, %v3427
    %v3437 = vpack.c.bf16 %v3429, %v3429
    %v3439 = vsel %vm308, %v3436, 0
    %v3442 = vsel %vm332, %v3324, 0
    %3444 = vmatprep.subr.bf16.mxu0 0
    %3445 = vmatpush1.bf16.msra.mxu0 %v3442
    %3446 = vmatprep.subr.bf16.mxu0 0
    %3447 = vmatpush1.bf16.msra.mxu0 0
    %3448 = vmatprep.subr.bf16.mxu0 0
    %3449 = vmatpush1.bf16.msra.mxu0 0
    %3450 = vmatprep.subr.bf16.mxu0 0
    %3451 = vmatpush1.bf16.msra.mxu0 0
    %3452 = vmatprep.subr.bf16.mxu0 0
    %3453 = vmatpush1.bf16.msra.mxu0 0
    %3454 = vmatprep.subr.bf16.mxu0 0
    %3455 = vmatpush1.bf16.msra.mxu0 0
    %3456 = vmatprep.subr.bf16.mxu0 0
    %3457 = vmatpush1.bf16.msra.mxu0 0
    %3458 = vmatprep.subr.bf16.mxu0 0
    %3459 = vmatpush1.bf16.msra.mxu0 0
    %3460 = vmatprep.subr.bf16.mxu0 0
    %3461 = vmatpush1.bf16.msra.mxu0 0
    %3462 = vmatprep.subr.bf16.mxu0 0
    %3463 = vmatpush1.bf16.msra.mxu0 0
    %3464 = vmatprep.subr.bf16.mxu0 0
    %3465 = vmatpush1.bf16.msra.mxu0 0
    %3466 = vmatprep.subr.bf16.mxu0 0
    %3467 = vmatpush1.bf16.msra.mxu0 0
    %3468 = vmatprep.subr.bf16.mxu0 0
    %3469 = vmatpush1.bf16.msra.mxu0 0
    %3470 = vmatprep.subr.bf16.mxu0 0
    %3471 = vmatpush1.bf16.msra.mxu0 0
    %3472 = vmatprep.subr.bf16.mxu0 0
    %3473 = vmatpush1.bf16.msra.mxu0 0
    %3474 = vmatprep.subr.bf16.mxu0 0
    %3475 = vmatpush1.bf16.msra.mxu0 0
    %3476 = vmatprep.mubr.bf16.mxu0 0
    %3477 = vmatmul.mubr.bf16.gmra.mrb[0].mxu0 %v3439
    %v3478 = vpop.f32.mrb[0].mxu0
    %v3479 = vadd.f32 0.0, %v3478
    %v3480 = vpop.f32.mrb[0].mxu0
    %v3481 = vpop.f32.mrb[0].mxu0
    %v3482 = vpop.f32.mrb[0].mxu0
    %3483 = vdwg.mxu0
    %v3485 = vsel %vm308, %v3437, 0
    %v3488 = vsel %vm332, %v3325, 0
    %3490 = vmatprep.subr.bf16.mxu0 0
    %3491 = vmatpush1.bf16.msra.mxu0 %v3488
    %3492 = vmatprep.subr.bf16.mxu0 0
    %3493 = vmatpush1.bf16.msra.mxu0 0
    %3494 = vmatprep.subr.bf16.mxu0 0
    %3495 = vmatpush1.bf16.msra.mxu0 0
    %3496 = vmatprep.subr.bf16.mxu0 0
    %3497 = vmatpush1.bf16.msra.mxu0 0
    %3498 = vmatprep.subr.bf16.mxu0 0
    %3499 = vmatpush1.bf16.msra.mxu0 0
    %3500 = vmatprep.subr.bf16.mxu0 0
    %3501 = vmatpush1.bf16.msra.mxu0 0
    %3502 = vmatprep.subr.bf16.mxu0 0
    %3503 = vmatpush1.bf16.msra.mxu0 0
    %3504 = vmatprep.subr.bf16.mxu0 0
    %3505 = vmatpush1.bf16.msra.mxu0 0
    %3506 = vmatprep.subr.bf16.mxu0 0
    %3507 = vmatpush1.bf16.msra.mxu0 0
    %3508 = vmatprep.subr.bf16.mxu0 0
    %3509 = vmatpush1.bf16.msra.mxu0 0
    %3510 = vmatprep.subr.bf16.mxu0 0
    %3511 = vmatpush1.bf16.msra.mxu0 0
    %3512 = vmatprep.subr.bf16.mxu0 0
    %3513 = vmatpush1.bf16.msra.mxu0 0
    %3514 = vmatprep.subr.bf16.mxu0 0
    %3515 = vmatpush1.bf16.msra.mxu0 0
    %3516 = vmatprep.subr.bf16.mxu0 0
    %3517 = vmatpush1.bf16.msra.mxu0 0
    %3518 = vmatprep.subr.bf16.mxu0 0
    %3519 = vmatpush1.bf16.msra.mxu0 0
    %3520 = vmatprep.subr.bf16.mxu0 0
    %3521 = vmatpush1.bf16.msra.mxu0 0
    %3522 = vmatprep.mubr.bf16.mxu0 0
    %3523 = vmatmul.mubr.bf16.gmra.mrb[0].mxu0 %v3485
    %v3524 = vpop.f32.mrb[0].mxu0
    %v3525 = vadd.f32 0.0, %v3524
    %v3526 = vpop.f32.mrb[0].mxu0
    %v3527 = vpop.f32.mrb[0].mxu0
    %v3528 = vpop.f32.mrb[0].mxu0
    %3529 = vdwg.mxu0
    %v3530 = vrcp.pop %v3432
    %v3531 = vrcp.pop %v3435
    %v3532 = vmul.f32 %v3479, %v3530
    %v3533 = vmul.f32 %v3525, %v3531
    %v3534 = vld [vmem:[#allocation2] sm:$0xff]
    %v3535 = vld [vmem:[#allocation2 + $0x8] sm:$0xff]
    %v3536 = vpack.c.bf16 %v3533, %v3532
    %s3537 = scalar_lea.vmem %s4, 14
    %v3538 = vld [vmem:[%s3537] sm:$0x3]
    %v3540 = vsel %vm215, %v3536, 0
    %v3543 = vsel %vm433, %v3538, 0
    %3545 = vmatprep.subr.bf16.mxu0 0
    %3546 = vmatpush1.bf16.msra.mxu0 %v3543
    %3547 = vmatprep.subr.bf16.mxu0 0
    %3548 = vmatpush1.bf16.msra.mxu0 0
    %3549 = vmatprep.subr.bf16.mxu0 0
    %3550 = vmatpush1.bf16.msra.mxu0 0
    %3551 = vmatprep.subr.bf16.mxu0 0
    %3552 = vmatpush1.bf16.msra.mxu0 0
    %3553 = vmatprep.subr.bf16.mxu0 0
    %3554 = vmatpush1.bf16.msra.mxu0 0
    %3555 = vmatprep.subr.bf16.mxu0 0
    %3556 = vmatpush1.bf16.msra.mxu0 0
    %3557 = vmatprep.subr.bf16.mxu0 0
    %3558 = vmatpush1.bf16.msra.mxu0 0
    %3559 = vmatprep.subr.bf16.mxu0 0
    %3560 = vmatpush1.bf16.msra.mxu0 0
    %3561 = vmatprep.subr.bf16.mxu0 0
    %3562 = vmatpush1.bf16.msra.mxu0 0
    %3563 = vmatprep.subr.bf16.mxu0 0
    %3564 = vmatpush1.bf16.msra.mxu0 0
    %3565 = vmatprep.subr.bf16.mxu0 0
    %3566 = vmatpush1.bf16.msra.mxu0 0
    %3567 = vmatprep.subr.bf16.mxu0 0
    %3568 = vmatpush1.bf16.msra.mxu0 0
    %3569 = vmatprep.subr.bf16.mxu0 0
    %3570 = vmatpush1.bf16.msra.mxu0 0
    %3571 = vmatprep.subr.bf16.mxu0 0
    %3572 = vmatpush1.bf16.msra.mxu0 0
    %3573 = vmatprep.subr.bf16.mxu0 0
    %3574 = vmatpush1.bf16.msra.mxu0 0
    %3575 = vmatprep.subr.bf16.mxu0 0
    %3576 = vmatpush1.bf16.msra.mxu0 0
    %3577 = vmatprep.mubr.bf16.mxu0 0
    %3578 = vmatmul.mubr.bf16.gmra.mrb[0].mxu0 %v3540
    %v3579 = vpop.f32.mrb[0].mxu0
    %v3580 = vadd.f32 0.0, %v3579
    %v3581 = vpop.f32.mrb[0].mxu0
    %v3582 = vpop.f32.mrb[0].mxu0
    %v3583 = vadd.f32 0.0, %v3582
    %v3584 = vpop.f32.mrb[0].mxu0
    %3585 = vdwg.mxu0
    %v3586 = vadd.f32 %v3534, %v3580
    %v3587 = vadd.f32 %v3535, %v3583
    %3588 = vst.msk [vmem:[#allocation2] sm:$0xff] %vm27, %v3586
    %3589 = vst.msk [vmem:[#allocation2 + $0x8] sm:$0xff] %vm27, %v3587
    %v3590 = vld [vmem:[#allocation2] sm:$0xff]
    %v3591 = vld [vmem:[#allocation2 + $0x8] sm:$0xff]
    %v3592 = vld [vmem:[%s5] sm:$0x1]
    %v3594 = vlaneseq
    %v3595 = vshrl.u32 %v3594, 7
    %v3596 = vsub.s32 0, %v3595
    %v3597 = vrot.slane %v3592, %v3596
    %v3599 = vadd.f32 %v3590, %v3597
    %v3600 = vadd.f32 %v3591, %v3597
    %3601 = vst.msk [vmem:[#allocation3] sm:$0xff] %vm27, %v3599
    %3602 = vst.msk [vmem:[#allocation3 + $0x8] sm:$0xff] %vm27, %v3600
    // Predicated region
    $region26: #{tpu_custom_call.1} parent=1 // pred_check
      _
    $region27: #{tpu_custom_call.1} parent=1 // pred_check_branch
      %3604 = sbr.rel (0) target = $region29
    $region28: #{tpu_custom_call.1} parent=1 // pred_region
      %s3606 = ssub.s32 256, 256
      %3607 = vsyncadd [#allocation4], %s3606
      %s3608 = sshll.u32 [#allocation3], 4
      %s3609 = int_to_ptr.vmem [resolvable:$true] %s3608
      %3614 = dma.vmem_to_hbm [thread:$0]  %s3609, 256, %s6, [#allocation4], 128, 128, 8
    $region29: #{tpu_custom_call.1} parent=1 // pred_fallthru
      _
    // Predicated region
    $region30: #{tpu_custom_call.1} parent=1 // pred_check
      _
    $region31: #{tpu_custom_call.1} parent=1 // pred_check_branch
      %3616 = sbr.rel (0) target = $region33
    $region32: #{tpu_custom_call.1} parent=1 // pred_region
      %3617 = dma.done [#allocation4], 256
    $region33: #{tpu_custom_call.1} parent=1 // pred_fallthru
      _
    %3618 = vsyncpa [#allocation4], 1

// kernel: tpu_custom_call.1
$region0: #{tpu_custom_call.1}
  #allocation0 [shape = 'u32[]', space=smem, size = 0x4, offset = 0x4, fixed_abs, tag = 'smem constant byte address 0x4 - core index']
  #allocation1 [shape = 'u32[144,128]{1,0:T(1,128)}', space=vmem, size = 0x12000, scoped, tag = 'internal scratch']
  #allocation2 [shape = 'f32[16,32]{1,0:T(8,128)}', space=vmem, size = 0x2000, scoped, tag = 'scratch operand']
  %s0 = inlined_call_operand.vmem [shape: bf16[2,8,32], index: 0, kind: input, shape index: {}]
  %s1 = inlined_call_operand.vmem [shape: bf16[8,32,4], index: 1, kind: input, shape index: {}]
  %s2 = inlined_call_operand.vmem [shape: bf16[8,32,4], index: 2, kind: input, shape index: {}]
  %s3 = inlined_call_operand.vmem [shape: bf16[8,32,4], index: 3, kind: input, shape index: {}]
  %s4 = inlined_call_operand.vmem [shape: bf16[8,4,32], index: 4, kind: input, shape index: {}]
  %s5 = inlined_call_operand.vmem [shape: f32[1,32], index: 5, kind: input, shape index: {}]
  %s6 = inlined_call_operand.hbm [shape: f32[2,8,32], index: 6, kind: output, shape index: {}]
  %s7 = sld [smem:[#allocation0]]
  $region34: #{tpu_custom_call.1} parent=0
    _
  %s9 = ssub.s32 1, %s7
  %s10 = scalar_select 0, %s9, %s7
  $region1: #{tpu_custom_call.1} parent=0
    #allocation3 [shape = 'u8[8192]{0}', space=vmem, size = 0x2000, scoped, tag = 'output window, operand 0, single buffered']
    #allocation4 [shape = 's32[1]{0}', space=sflag, size = 0x4, scoped, tag = 'scoped memory for tpu_custom_call.1']
    %11 = vsyncpa [#allocation4], 0
    // Predicated region
    $region2: #{tpu_custom_call.1} parent=1 // pred_check
      _
    $region3: #{tpu_custom_call.1} parent=1 // pred_check_branch
      %13 = sbr.rel (0) target = $region5
    $region4: #{tpu_custom_call.1} parent=1 // pred_region
      _
    $region5: #{tpu_custom_call.1} parent=1 // pred_fallthru
      _
    // Predicated region
    $region6: #{tpu_custom_call.1} parent=1 // pred_check
      _
    $region7: #{tpu_custom_call.1} parent=1 // pred_check_branch
      %15 = sbr.rel (0) target = $region9
    $region8: #{tpu_custom_call.1} parent=1 // pred_region
      _
    $region9: #{tpu_custom_call.1} parent=1 // pred_fallthru
      _
    // Predicated region
    $region10: #{tpu_custom_call.1} parent=1 // pred_check
      _
    $region11: #{tpu_custom_call.1} parent=1 // pred_check_branch
      %17 = sbr.rel (0) target = $region13
    $region12: #{tpu_custom_call.1} parent=1 // pred_region
      _
    $region13: #{tpu_custom_call.1} parent=1 // pred_fallthru
      _
    // Predicated region
    $region14: #{tpu_custom_call.1} parent=1 // pred_check
      _
    $region15: #{tpu_custom_call.1} parent=1 // pred_check_branch
      %19 = sbr.rel (0) target = $region17
    $region16: #{tpu_custom_call.1} parent=1 // pred_region
      _
    $region17: #{tpu_custom_call.1} parent=1 // pred_fallthru
      _
    // Predicated region
    $region18: #{tpu_custom_call.1} parent=1 // pred_check
      _
    $region19: #{tpu_custom_call.1} parent=1 // pred_check_branch
      %21 = sbr.rel (0) target = $region21
    $region20: #{tpu_custom_call.1} parent=1 // pred_region
      _
    $region21: #{tpu_custom_call.1} parent=1 // pred_fallthru
      _
    // Predicated region
    $region22: #{tpu_custom_call.1} parent=1 // pred_check
      _
    $region23: #{tpu_custom_call.1} parent=1 // pred_check_branch
      %23 = sbr.rel (0) target = $region25
    $region24: #{tpu_custom_call.1} parent=1 // pred_region
      _
    $region25: #{tpu_custom_call.1} parent=1 // pred_fallthru
      _
    %v25 = vld [vmem:[%s0] sm:$0xf]
    %v26 = vld [vmem:[%s0 + $0x4] sm:$0xf]
    %vm27 = vcmask 261120
    %28 = vst.msk [vmem:[#allocation2] sm:$0xff] %vm27, 0.0
    %29 = vst.msk [vmem:[#allocation2 + $0x8] sm:$0xff] %vm27, 0.0
    %v30 = vld [vmem:[%s1] sm:$0xf]
    %v31 = vld [vmem:[%s1 + $0x4] sm:$0xf]
    %v32 = vld [vmem:[%s1 + $0x8] sm:$0xf]
    %v33 = vld [vmem:[%s1 + $0xc] sm:$0xf]
    %v36 = vunpack.c.l.b16 %v25
    %v37 = vunpack.c.l.b16 %v26
    %v38 = vpack.c.b16 %v37, %v36
    %v43 = vunpack.c.l.b16 %v30
    %v44 = vunpack.c.l.b16 %v31
    %v45 = vunpack.c.l.b16 %v32
    %v46 = vunpack.c.l.b16 %v33
    %v47 = vpack.c.b16 %v44, %v43
    %v48 = vpack.c.b16 %v46, %v45
    %v52 = vsel %vm27, %v38, 0
    %54 = vmatprep.subr.bf16.mxu0 0
    %55 = vmatpush1.bf16.msra.mxu0 %v47
    %56 = vmatprep.subr.bf16.mxu0 0
    %57 = vmatpush1.bf16.msra.mxu0 %v48
    %58 = vmatprep.subr.bf16.mxu0 0
    %59 = vmatpush1.bf16.msra.mxu0 0
    %60 = vmatprep.subr.bf16.mxu0 0
    %61 = vmatpush1.bf16.msra.mxu0 0
    %62 = vmatprep.subr.bf16.mxu0 0
    %63 = vmatpush1.bf16.msra.mxu0 0
    %64 = vmatprep.subr.bf16.mxu0 0
    %65 = vmatpush1.bf16.msra.mxu0 0
    %66 = vmatprep.subr.bf16.mxu0 0
    %67 = vmatpush1.bf16.msra.mxu0 0
    %68 = vmatprep.subr.bf16.mxu0 0
    %69 = vmatpush1.bf16.msra.mxu0 0
    %70 = vmatprep.subr.bf16.mxu0 0
    %71 = vmatpush1.bf16.msra.mxu0 0
    %72 = vmatprep.subr.bf16.mxu0 0
    %73 = vmatpush1.bf16.msra.mxu0 0
    %74 = vmatprep.subr.bf16.mxu0 0
    %75 = vmatpush1.bf16.msra.mxu0 0
    %76 = vmatprep.subr.bf16.mxu0 0
    %77 = vmatpush1.bf16.msra.mxu0 0
    %78 = vmatprep.subr.bf16.mxu0 0
    %79 = vmatpush1.bf16.msra.mxu0 0
    %80 = vmatprep.subr.bf16.mxu0 0
    %81 = vmatpush1.bf16.msra.mxu0 0
    %82 = vmatprep.subr.bf16.mxu0 0
    %83 = vmatpush1.bf16.msra.mxu0 0
    %84 = vmatprep.subr.bf16.mxu0 0
    %85 = vmatpush1.bf16.msra.mxu0 0
    %86 = vmatprep.mubr.bf16.mxu0 0
    %87 = vmatmul.mubr.bf16.gmra.mrb[0].mxu0 %v52
    %v88 = vpop.f32.mrb[0].mxu0
    %v89 = vadd.f32 0.0, %v88
    %v90 = vpop.f32.mrb[0].mxu0
    %v91 = vpop.f32.mrb[0].mxu0
    %v92 = vadd.f32 0.0, %v91
    %v93 = vpop.f32.mrb[0].mxu0
    %94 = vdwg.mxu0
    %v95 = vld [vmem:[%s2] sm:$0xf]
    %v96 = vld [vmem:[%s2 + $0x4] sm:$0xf]
    %v97 = vld [vmem:[%s2 + $0x8] sm:$0xf]
    %v98 = vld [vmem:[%s2 + $0xc] sm:$0xf]
    %v103 = vunpack.c.l.b16 %v95
    %v104 = vunpack.c.l.b16 %v96
    %v105 = vunpack.c.l.b16 %v97
    %v106 = vunpack.c.l.b16 %v98
    %v107 = vpack.c.b16 %v104, %v103
    %v108 = vpack.c.b16 %v106, %v105
    %111 = vmatprep.subr.bf16.mxu0 0
    %112 = vmatpush1.bf16.msra.mxu0 %v107
    %113 = vmatprep.subr.bf16.mxu0 0
    %114 = vmatpush1.bf16.msra.mxu0 %v108
    %115 = vmatprep.subr.bf16.mxu0 0
    %116 = vmatpush1.bf16.msra.mxu0 0
    %117 = vmatprep.subr.bf16.mxu0 0
    %118 = vmatpush1.bf16.msra.mxu0 0
    %119 = vmatprep.subr.bf16.mxu0 0
    %120 = vmatpush1.bf16.msra.mxu0 0
    %121 = vmatprep.subr.bf16.mxu0 0
    %122 = vmatpush1.bf16.msra.mxu0 0
    %123 = vmatprep.subr.bf16.mxu0 0
    %124 = vmatpush1.bf16.msra.mxu0 0
    %125 = vmatprep.subr.bf16.mxu0 0
    %126 = vmatpush1.bf16.msra.mxu0 0
    %127 = vmatprep.subr.bf16.mxu0 0
    %128 = vmatpush1.bf16.msra.mxu0 0
    %129 = vmatprep.subr.bf16.mxu0 0
    %130 = vmatpush1.bf16.msra.mxu0 0
    %131 = vmatprep.subr.bf16.mxu0 0
    %132 = vmatpush1.bf16.msra.mxu0 0
    %133 = vmatprep.subr.bf16.mxu0 0
    %134 = vmatpush1.bf16.msra.mxu0 0
    %135 = vmatprep.subr.bf16.mxu0 0
    %136 = vmatpush1.bf16.msra.mxu0 0
    %137 = vmatprep.subr.bf16.mxu0 0
    %138 = vmatpush1.bf16.msra.mxu0 0
    %139 = vmatprep.subr.bf16.mxu0 0
    %140 = vmatpush1.bf16.msra.mxu0 0
    %141 = vmatprep.subr.bf16.mxu0 0
    %142 = vmatpush1.bf16.msra.mxu0 0
    %143 = vmatprep.mubr.bf16.mxu0 0
    %144 = vmatmul.mubr.bf16.gmra.mrb[0].mxu0 %v52
    %v145 = vpop.f32.mrb[0].mxu0
    %v146 = vadd.f32 0.0, %v145
    %v147 = vpop.f32.mrb[0].mxu0
    %v148 = vpop.f32.mrb[0].mxu0
    %v149 = vadd.f32 0.0, %v148
    %v150 = vpop.f32.mrb[0].mxu0
    %151 = vdwg.mxu0
    %v152 = vld [vmem:[%s3] sm:$0xf]
    %v153 = vld [vmem:[%s3 + $0x4] sm:$0xf]
    %v154 = vld [vmem:[%s3 + $0x8] sm:$0xf]
    %v155 = vld [vmem:[%s3 + $0xc] sm:$0xf]
    %v160 = vunpack.c.l.b16 %v152
    %v161 = vunpack.c.l.b16 %v153
    %v162 = vunpack.c.l.b16 %v154
    %v163 = vunpack.c.l.b16 %v155
    %v164 = vpack.c.b16 %v161, %v160
    %v165 = vpack.c.b16 %v163, %v162
    %168 = vmatprep.subr.bf16.mxu0 0
    %169 = vmatpush1.bf16.msra.mxu0 %v164
    %170 = vmatprep.subr.bf16.mxu0 0
    %171 = vmatpush1.bf16.msra.mxu0 %v165
    %172 = vmatprep.subr.bf16.mxu0 0
    %173 = vmatpush1.bf16.msra.mxu0 0
    %174 = vmatprep.subr.bf16.mxu0 0
    %175 = vmatpush1.bf16.msra.mxu0 0
    %176 = vmatprep.subr.bf16.mxu0 0
    %177 = vmatpush1.bf16.msra.mxu0 0
    %178 = vmatprep.subr.bf16.mxu0 0
    %179 = vmatpush1.bf16.msra.mxu0 0
    %180 = vmatprep.subr.bf16.mxu0 0
    %181 = vmatpush1.bf16.msra.mxu0 0
    %182 = vmatprep.subr.bf16.mxu0 0
    %183 = vmatpush1.bf16.msra.mxu0 0
    %184 = vmatprep.subr.bf16.mxu0 0
    %185 = vmatpush1.bf16.msra.mxu0 0
    %186 = vmatprep.subr.bf16.mxu0 0
    %187 = vmatpush1.bf16.msra.mxu0 0
    %188 = vmatprep.subr.bf16.mxu0 0
    %189 = vmatpush1.bf16.msra.mxu0 0
    %190 = vmatprep.subr.bf16.mxu0 0
    %191 = vmatpush1.bf16.msra.mxu0 0
    %192 = vmatprep.subr.bf16.mxu0 0
    %193 = vmatpush1.bf16.msra.mxu0 0
    %194 = vmatprep.subr.bf16.mxu0 0
    %195 = vmatpush1.bf16.msra.mxu0 0
    %196 = vmatprep.subr.bf16.mxu0 0
    %197 = vmatpush1.bf16.msra.mxu0 0
    %198 = vmatprep.subr.bf16.mxu0 0
    %199 = vmatpush1.bf16.msra.mxu0 0
    %200 = vmatprep.mubr.bf16.mxu0 0
    %201 = vmatmul.mubr.bf16.gmra.mrb[0].mxu0 %v52
    %v202 = vpop.f32.mrb[0].mxu0
    %v203 = vadd.f32 0.0, %v202
    %v204 = vpop.f32.mrb[0].mxu0
    %v205 = vpop.f32.mrb[0].mxu0
    %v206 = vadd.f32 0.0, %v205
    %v207 = vpop.f32.mrb[0].mxu0
    %208 = vdwg.mxu0
    %v209 = vpack.c.bf16 %v89, %v89
    %v210 = vpack.c.bf16 %v92, %v92
    %v211 = vpack.c.bf16 %v146, %v146
    %v212 = vpack.c.bf16 %v149, %v149
    %v213 = vpack.c.bf16 %v203, %v203
    %v214 = vpack.c.bf16 %v206, %v206
    %vm215 = vcmask 31744
    %v217 = vsel %vm215, %v209, 0
    %v220 = vsel %vm215, %v211, 0
    %222 = vmatprep.subr.bf16.mxu0 0
    %223 = vmatpush1.bf16.xpose.msra.mxu0 %v220
    %224 = vmatprep.subr.bf16.mxu0 0
    %225 = vmatpush1.bf16.xpose.msra.mxu0 0
    %226 = vmatprep.subr.bf16.mxu0 0
    %227 = vmatpush1.bf16.xpose.msra.mxu0 0
    %228 = vmatprep.subr.bf16.mxu0 0
    %229 = vmatpush1.bf16.xpose.msra.mxu0 0
    %230 = vmatprep.subr.bf16.mxu0 0
    %231 = vmatpush1.bf16.xpose.msra.mxu0 0
    %232 = vmatprep.subr.bf16.mxu0 0
    %233 = vmatpush1.bf16.xpose.msra.mxu0 0
    %234 = vmatprep.subr.bf16.mxu0 0
    %235 = vmatpush1.bf16.xpose.msra.mxu0 0
    %236 = vmatprep.subr.bf16.mxu0 0
    %237 = vmatpush1.bf16.xpose.msra.mxu0 0
    %238 = vmatprep.subr.bf16.mxu0 0
    %239 = vmatpush1.bf16.xpose.msra.mxu0 0
    %240 = vmatprep.subr.bf16.mxu0 0
    %241 = vmatpush1.bf16.xpose.msra.mxu0 0
    %242 = vmatprep.subr.bf16.mxu0 0
    %243 = vmatpush1.bf16.xpose.msra.mxu0 0
    %244 = vmatprep.subr.bf16.mxu0 0
    %245 = vmatpush1.bf16.xpose.msra.mxu0 0
    %246 = vmatprep.subr.bf16.mxu0 0
    %247 = vmatpush1.bf16.xpose.msra.mxu0 0
    %248 = vmatprep.subr.bf16.mxu0 0
    %249 = vmatpush1.bf16.xpose.msra.mxu0 0
    %250 = vmatprep.subr.bf16.mxu0 0
    %251 = vmatpush1.bf16.xpose.msra.mxu0 0
    %252 = vmatprep.subr.bf16.mxu0 0
    %253 = vmatpush1.bf16.xpose.msra.mxu0 0
    %254 = vmatprep.mubr.bf16.mxu0 0
    %255 = vmatmul.mubr.bf16.gmra.mrb[0].mxu0 %v217
    %v256 = vpop.f32.mrb[0].mxu0
    %v257 = vadd.f32 0.0, %v256
    %v258 = vpop.f32.mrb[0].mxu0
    %v259 = vpop.f32.mrb[0].mxu0
    %v260 = vpop.f32.mrb[0].mxu0
    %261 = vdwg.mxu0
    %v263 = vsel %vm215, %v210, 0
    %v266 = vsel %vm215, %v212, 0
    %268 = vmatprep.subr.bf16.mxu0 0
    %269 = vmatpush1.bf16.xpose.msra.mxu0 %v266
    %270 = vmatprep.subr.bf16.mxu0 0
    %271 = vmatpush1.bf16.xpose.msra.mxu0 0
    %272 = vmatprep.subr.bf16.mxu0 0
    %273 = vmatpush1.bf16.xpose.msra.mxu0 0
    %274 = vmatprep.subr.bf16.mxu0 0
    %275 = vmatpush1.bf16.xpose.msra.mxu0 0
    %276 = vmatprep.subr.bf16.mxu0 0
    %277 = vmatpush1.bf16.xpose.msra.mxu0 0
    %278 = vmatprep.subr.bf16.mxu0 0
    %279 = vmatpush1.bf16.xpose.msra.mxu0 0
    %280 = vmatprep.subr.bf16.mxu0 0
    %281 = vmatpush1.bf16.xpose.msra.mxu0 0
    %282 = vmatprep.subr.bf16.mxu0 0
    %283 = vmatpush1.bf16.xpose.msra.mxu0 0
    %284 = vmatprep.subr.bf16.mxu0 0
    %285 = vmatpush1.bf16.xpose.msra.mxu0 0
    %286 = vmatprep.subr.bf16.mxu0 0
    %287 = vmatpush1.bf16.xpose.msra.mxu0 0
    %288 = vmatprep.subr.bf16.mxu0 0
    %289 = vmatpush1.bf16.xpose.msra.mxu0 0
    %290 = vmatprep.subr.bf16.mxu0 0
    %291 = vmatpush1.bf16.xpose.msra.mxu0 0
    %292 = vmatprep.subr.bf16.mxu0 0
    %293 = vmatpush1.bf16.xpose.msra.mxu0 0
    %294 = vmatprep.subr.bf16.mxu0 0
    %295 = vmatpush1.bf16.xpose.msra.mxu0 0
    %296 = vmatprep.subr.bf16.mxu0 0
    %297 = vmatpush1.bf16.xpose.msra.mxu0 0
    %298 = vmatprep.subr.bf16.mxu0 0
    %299 = vmatpush1.bf16.xpose.msra.mxu0 0
    %300 = vmatprep.mubr.bf16.mxu0 0
    %301 = vmatmul.mubr.bf16.gmra.mrb[0].mxu0 %v263
    %v302 = vpop.f32.mrb[0].mxu0
    %v303 = vadd.f32 0.0, %v302
    %v304 = vpop.f32.mrb[0].mxu0
    %v305 = vpop.f32.mrb[0].mxu0
    %v306 = vpop.f32.mrb[0].mxu0
    %307 = vdwg.mxu0
    %vm308 = vcmask 64512
    %v309 = vsel %vm308, %v257, -inf
    %310 = vmax.xlane.f32.xlu0 %v309
    %v311 = vpop.xlane.xlu0 %310
    %v312 = vsel %vm308, %v303, -inf
    %313 = vmax.xlane.f32.xlu0 %v312
    %v314 = vpop.xlane.xlu0 %313
    %v315 = vsub.f32 %v257, %v311
    %v316 = vsub.f32 %v303, %v314
    %v317 = vmul.f32 %v315, 1.442695
    %v318 = vpow.pop %v317
    %v319 = vmul.f32 %v316, 1.442695
    %v320 = vpow.pop %v319
    %v321 = vsel %vm308, %v318, 0.0
    %322 = vadd.xlane.f32.xlu0 %v321
    %v323 = vpop.xlane.xlu0 %322
    %v324 = vsel %vm308, %v320, 0.0
    %325 = vadd.xlane.f32.xlu0 %v324
    %v326 = vpop.xlane.xlu0 %325
    %v327 = vpack.c.bf16 %v318, %v318
    %v328 = vpack.c.bf16 %v320, %v320
    %v330 = vsel %vm308, %v327, 0
    %vm332 = vcmask 1043456
    %v334 = vsel %vm332, %v213, 0
    %336 = vmatprep.subr.bf16.mxu0 0
    %337 = vmatpush1.bf16.msra.mxu0 %v334
    %338 = vmatprep.subr.bf16.mxu0 0
    %339 = vmatpush1.bf16.msra.mxu0 0
    %340 = vmatprep.subr.bf16.mxu0 0
    %341 = vmatpush1.bf16.msra.mxu0 0
    %342 = vmatprep.subr.bf16.mxu0 0
    %343 = vmatpush1.bf16.msra.mxu0 0
    %344 = vmatprep.subr.bf16.mxu0 0
    %345 = vmatpush1.bf16.msra.mxu0 0
    %346 = vmatprep.subr.bf16.mxu0 0
    %347 = vmatpush1.bf16.msra.mxu0 0
    %348 = vmatprep.subr.bf16.mxu0 0
    %349 = vmatpush1.bf16.msra.mxu0 0
    %350 = vmatprep.subr.bf16.mxu0 0
    %351 = vmatpush1.bf16.msra.mxu0 0
    %352 = vmatprep.subr.bf16.mxu0 0
    %353 = vmatpush1.bf16.msra.mxu0 0
    %354 = vmatprep.subr.bf16.mxu0 0
    %355 = vmatpush1.bf16.msra.mxu0 0
    %356 = vmatprep.subr.bf16.mxu0 0
    %357 = vmatpush1.bf16.msra.mxu0 0
    %358 = vmatprep.subr.bf16.mxu0 0
    %359 = vmatpush1.bf16.msra.mxu0 0
    %360 = vmatprep.subr.bf16.mxu0 0
    %361 = vmatpush1.bf16.msra.mxu0 0
    %362 = vmatprep.subr.bf16.mxu0 0
    %363 = vmatpush1.bf16.msra.mxu0 0
    %364 = vmatprep.subr.bf16.mxu0 0
    %365 = vmatpush1.bf16.msra.mxu0 0
    %366 = vmatprep.subr.bf16.mxu0 0
    %367 = vmatpush1.bf16.msra.mxu0 0
    %368 = vmatprep.mubr.bf16.mxu0 0
    %369 = vmatmul.mubr.bf16.gmra.mrb[0].mxu0 %v330
    %v370 = vpop.f32.mrb[0].mxu0
    %v371 = vadd.f32 0.0, %v370
    %v372 = vpop.f32.mrb[0].mxu0
    %v373 = vpop.f32.mrb[0].mxu0
    %v374 = vpop.f32.mrb[0].mxu0
    %375 = vdwg.mxu0
    %v377 = vsel %vm308, %v328, 0
    %v380 = vsel %vm332, %v214, 0
    %382 = vmatprep.subr.bf16.mxu0 0
    %383 = vmatpush1.bf16.msra.mxu0 %v380
    %384 = vmatprep.subr.bf16.mxu0 0
    %385 = vmatpush1.bf16.msra.mxu0 0
    %386 = vmatprep.subr.bf16.mxu0 0
    %387 = vmatpush1.bf16.msra.mxu0 0
    %388 = vmatprep.subr.bf16.mxu0 0
    %389 = vmatpush1.bf16.msra.mxu0 0
    %390 = vmatprep.subr.bf16.mxu0 0
    %391 = vmatpush1.bf16.msra.mxu0 0
    %392 = vmatprep.subr.bf16.mxu0 0
    %393 = vmatpush1.bf16.msra.mxu0 0
    %394 = vmatprep.subr.bf16.mxu0 0
    %395 = vmatpush1.bf16.msra.mxu0 0
    %396 = vmatprep.subr.bf16.mxu0 0
    %397 = vmatpush1.bf16.msra.mxu0 0
    %398 = vmatprep.subr.bf16.mxu0 0
    %399 = vmatpush1.bf16.msra.mxu0 0
    %400 = vmatprep.subr.bf16.mxu0 0
    %401 = vmatpush1.bf16.msra.mxu0 0
    %402 = vmatprep.subr.bf16.mxu0 0
    %403 = vmatpush1.bf16.msra.mxu0 0
    %404 = vmatprep.subr.bf16.mxu0 0
    %405 = vmatpush1.bf16.msra.mxu0 0
    %406 = vmatprep.subr.bf16.mxu0 0
    %407 = vmatpush1.bf16.msra.mxu0 0
    %408 = vmatprep.subr.bf16.mxu0 0
    %409 = vmatpush1.bf16.msra.mxu0 0
    %410 = vmatprep.subr.bf16.mxu0 0
    %411 = vmatpush1.bf16.msra.mxu0 0
    %412 = vmatprep.subr.bf16.mxu0 0
    %413 = vmatpush1.bf16.msra.mxu0 0
    %414 = vmatprep.mubr.bf16.mxu0 0
    %415 = vmatmul.mubr.bf16.gmra.mrb[0].mxu0 %v377
    %v416 = vpop.f32.mrb[0].mxu0
    %v417 = vadd.f32 0.0, %v416
    %v418 = vpop.f32.mrb[0].mxu0
    %v419 = vpop.f32.mrb[0].mxu0
    %v420 = vpop.f32.mrb[0].mxu0
    %421 = vdwg.mxu0
    %v422 = vrcp.pop %v323
    %v423 = vrcp.pop %v326
    %v424 = vmul.f32 %v371, %v422
    %v425 = vmul.f32 %v417, %v423
    %v426 = vld [vmem:[#allocation2] sm:$0xff]
    %v427 = vld [vmem:[#allocation2 + $0x8] sm:$0xff]
    %v428 = vpack.c.bf16 %v425, %v424
    %v429 = vld [vmem:[%s4] sm:$0x3]
    %v431 = vsel %vm215, %v428, 0
    %vm433 = vcmask 1041408
    %v435 = vsel %vm433, %v429, 0
    %437 = vmatprep.subr.bf16.mxu0 0
    %438 = vmatpush1.bf16.msra.mxu0 %v435
    %439 = vmatprep.subr.bf16.mxu0 0
    %440 = vmatpush1.bf16.msra.mxu0 0
    %441 = vmatprep.subr.bf16.mxu0 0
    %442 = vmatpush1.bf16.msra.mxu0 0
    %443 = vmatprep.subr.bf16.mxu0 0
    %444 = vmatpush1.bf16.msra.mxu0 0
    %445 = vmatprep.subr.bf16.mxu0 0
    %446 = vmatpush1.bf16.msra.mxu0 0
    %447 = vmatprep.subr.bf16.mxu0 0
    %448 = vmatpush1.bf16.msra.mxu0 0
    %449 = vmatprep.subr.bf16.mxu0 0
    %450 = vmatpush1.bf16.msra.mxu0 0
    %451 = vmatprep.subr.bf16.mxu0 0
    %452 = vmatpush1.bf16.msra.mxu0 0
    %453 = vmatprep.subr.bf16.mxu0 0
    %454 = vmatpush1.bf16.msra.mxu0 0
    %455 = vmatprep.subr.bf16.mxu0 0
    %456 = vmatpush1.bf16.msra.mxu0 0
    %457 = vmatprep.subr.bf16.mxu0 0
    %458 = vmatpush1.bf16.msra.mxu0 0
    %459 = vmatprep.subr.bf16.mxu0 0
    %460 = vmatpush1.bf16.msra.mxu0 0
    %461 = vmatprep.subr.bf16.mxu0 0
    %462 = vmatpush1.bf16.msra.mxu0 0
    %463 = vmatprep.subr.bf16.mxu0 0
    %464 = vmatpush1.bf16.msra.mxu0 0
    %465 = vmatprep.subr.bf16.mxu0 0
    %466 = vmatpush1.bf16.msra.mxu0 0
    %467 = vmatprep.subr.bf16.mxu0 0
    %468 = vmatpush1.bf16.msra.mxu0 0
    %469 = vmatprep.mubr.bf16.mxu0 0
    %470 = vmatmul.mubr.bf16.gmra.mrb[0].mxu0 %v431
    %v471 = vpop.f32.mrb[0].mxu0
    %v472 = vadd.f32 0.0, %v471
    %v473 = vpop.f32.mrb[0].mxu0
    %v474 = vpop.f32.mrb[0].mxu0
    %v475 = vadd.f32 0.0, %v474
    %v476 = vpop.f32.mrb[0].mxu0
    %477 = vdwg.mxu0
    %v478 = vadd.f32 %v426, %v472
    %v479 = vadd.f32 %v427, %v475
    %480 = vst.msk [vmem:[#allocation2] sm:$0xff] %vm27, %v478
    %481 = vst.msk [vmem:[#allocation2 + $0x8] sm:$0xff] %vm27, %v479
    %s482 = scalar_lea.vmem %s1, 16
    %v483 = vld [vmem:[%s482] sm:$0xf]
    %v484 = vld [vmem:[%s482 + $0x4] sm:$0xf]
    %v485 = vld [vmem:[%s482 + $0x8] sm:$0xf]
    %v486 = vld [vmem:[%s482 + $0xc] sm:$0xf]
    %v491 = vunpack.c.l.b16 %v483
    %v492 = vunpack.c.l.b16 %v484
    %v493 = vunpack.c.l.b16 %v485
    %v494 = vunpack.c.l.b16 %v486
    %v495 = vpack.c.b16 %v492, %v491
    %v496 = vpack.c.b16 %v494, %v493
    %499 = vmatprep.subr.bf16.mxu0 0
    %500 = vmatpush1.bf16.msra.mxu0 %v495
    %501 = vmatprep.subr.bf16.mxu0 0
    %502 = vmatpush1.bf16.msra.mxu0 %v496
    %503 = vmatprep.subr.bf16.mxu0 0
    %504 = vmatpush1.bf16.msra.mxu0 0
    %505 = vmatprep.subr.bf16.mxu0 0
    %506 = vmatpush1.bf16.msra.mxu0 0
    %507 = vmatprep.subr.bf16.mxu0 0
    %508 = vmatpush1.bf16.msra.mxu0 0
    %509 = vmatprep.subr.bf16.mxu0 0
    %510 = vmatpush1.bf16.msra.mxu0 0
    %511 = vmatprep.subr.bf16.mxu0 0
    %512 = vmatpush1.bf16.msra.mxu0 0
    %513 = vmatprep.subr.bf16.mxu0 0
    %514 = vmatpush1.bf16.msra.mxu0 0
    %515 = vmatprep.subr.bf16.mxu0 0
    %516 = vmatpush1.bf16.msra.mxu0 0
    %517 = vmatprep.subr.bf16.mxu0 0
    %518 = vmatpush1.bf16.msra.mxu0 0
    %519 = vmatprep.subr.bf16.mxu0 0
    %520 = vmatpush1.bf16.msra.mxu0 0
    %521 = vmatprep.subr.bf16.mxu0 0
    %522 = vmatpush1.bf16.msra.mxu0 0
    %523 = vmatprep.subr.bf16.mxu0 0
    %524 = vmatpush1.bf16.msra.mxu0 0
    %525 = vmatprep.subr.bf16.mxu0 0
    %526 = vmatpush1.bf16.msra.mxu0 0
    %527 = vmatprep.subr.bf16.mxu0 0
    %528 = vmatpush1.bf16.msra.mxu0 0
    %529 = vmatprep.subr.bf16.mxu0 0
    %530 = vmatpush1.bf16.msra.mxu0 0
    %531 = vmatprep.mubr.bf16.mxu0 0
    %532 = vmatmul.mubr.bf16.gmra.mrb[0].mxu0 %v52
    %v533 = vpop.f32.mrb[0].mxu0
    %v534 = vadd.f32 0.0, %v533
    %v535 = vpop.f32.mrb[0].mxu0
    %v536 = vpop.f32.mrb[0].mxu0
    %v537 = vadd.f32 0.0, %v536
    %v538 = vpop.f32.mrb[0].mxu0
    %539 = vdwg.mxu0
    %s540 = scalar_lea.vmem %s2, 16
    %v541 = vld [vmem:[%s540] sm:$0xf]
    %v542 = vld [vmem:[%s540 + $0x4] sm:$0xf]
    %v543 = vld [vmem:[%s540 + $0x8] sm:$0xf]
    %v544 = vld [vmem:[%s540 + $0xc] sm:$0xf]
    %v549 = vunpack.c.l.b16 %v541
    %v550 = vunpack.c.l.b16 %v542
    %v551 = vunpack.c.l.b16 %v543
    %v552 = vunpack.c.l.b16 %v544
    %v553 = vpack.c.b16 %v550, %v549
    %v554 = vpack.c.b16 %v552, %v551
    %557 = vmatprep.subr.bf16.mxu0 0
    %558 = vmatpush1.bf16.msra.mxu0 %v553
    %559 = vmatprep.subr.bf16.mxu0 0
    %560 = vmatpush1.bf16.msra.mxu0 %v554
    %561 = vmatprep.subr.bf16.mxu0 0
    %562 = vmatpush1.bf16.msra.mxu0 0
    %563 = vmatprep.subr.bf16.mxu0 0
    %564 = vmatpush1.bf16.msra.mxu0 0
    %565 = vmatprep.subr.bf16.mxu0 0
    %566 = vmatpush1.bf16.msra.mxu0 0
    %567 = vmatprep.subr.bf16.mxu0 0
    %568 = vmatpush1.bf16.msra.mxu0 0
    %569 = vmatprep.subr.bf16.mxu0 0
    %570 = vmatpush1.bf16.msra.mxu0 0
    %571 = vmatprep.subr.bf16.mxu0 0
    %572 = vmatpush1.bf16.msra.mxu0 0
    %573 = vmatprep.subr.bf16.mxu0 0
    %574 = vmatpush1.bf16.msra.mxu0 0
    %575 = vmatprep.subr.bf16.mxu0 0
    %576 = vmatpush1.bf16.msra.mxu0 0
    %577 = vmatprep.subr.bf16.mxu0 0
    %578 = vmatpush1.bf16.msra.mxu0 0
    %579 = vmatprep.subr.bf16.mxu0 0
    %580 = vmatpush1.bf16.msra.mxu0 0
    %581 = vmatprep.subr.bf16.mxu0 0
    %582 = vmatpush1.bf16.msra.mxu0 0
    %583 = vmatprep.subr.bf16.mxu0 0
    %584 = vmatpush1.bf16.msra.mxu0 0
    %585 = vmatprep.subr.bf16.mxu0 0
    %586 = vmatpush1.bf16.msra.mxu0 0
    %587 = vmatprep.subr.bf16.mxu0 0
    %588 = vmatpush1.bf16.msra.mxu0 0
    %589 = vmatprep.mubr.bf16.mxu0 0
    %590 = vmatmul.mubr.bf16.gmra.mrb[0].mxu0 %v52
    %v591 = vpop.f32.mrb[0].mxu0
    %v592 = vadd.f32 0.0, %v591
    %v593 = vpop.f32.mrb[0].mxu0
    %v594 = vpop.f32.mrb[0].mxu0
    %v595 = vadd.f32 0.0, %v594
    %v596 = vpop.f32.mrb[0].mxu0
    %597 = vdwg.mxu0
    %s598 = scalar_lea.vmem %s3, 16
    %v599 = vld [vmem:[%s598] sm:$0xf]
    %v600 = vld [vmem:[%s598 + $0x4] sm:$0xf]
    %v601 = vld [vmem:[%s598 + $0x8] sm:$0xf]
    %v602 = vld [vmem:[%s598 + $0xc] sm:$0xf]
    %v607 = vunpack.c.l.b16 %v599
    %v608 = vunpack.c.l.b16 %v600
    %v609 = vunpack.c.l.b16 %v601
    %v610 = vunpack.c.l.b16 %v602
    %v611 = vpack.c.b16 %v608, %v607
    %v612 = vpack.c.b16 %v610, %v609
    %615 = vmatprep.subr.bf16.mxu0 0
    %616 = vmatpush1.bf16.msra.mxu0 %v611
    %617 = vmatprep.subr.bf16.mxu0 0
    %618 = vmatpush1.bf16.msra.mxu0 %v612
    %619 = vmatprep.subr.bf16.mxu0 0
    %620 = vmatpush1.bf16.msra.mxu0 0
    %621 = vmatprep.subr.bf16.mxu0 0
    %622 = vmatpush1.bf16.msra.mxu0 0
    %623 = vmatprep.subr.bf16.mxu0 0
    %624 = vmatpush1.bf16.msra.mxu0 0
    %625 = vmatprep.subr.bf16.mxu0 0
    %626 = vmatpush1.bf16.msra.mxu0 0
    %627 = vmatprep.subr.bf16.mxu0 0
    %628 = vmatpush1.bf16.msra.mxu0 0
    %629 = vmatprep.subr.bf16.mxu0 0
    %630 = vmatpush1.bf16.msra.mxu0 0
    %631 = vmatprep.subr.bf16.mxu0 0
    %632 = vmatpush1.bf16.msra.mxu0 0
    %633 = vmatprep.subr.bf16.mxu0 0
    %634 = vmatpush1.bf16.msra.mxu0 0
    %635 = vmatprep.subr.bf16.mxu0 0
    %636 = vmatpush1.bf16.msra.mxu0 0
    %637 = vmatprep.subr.bf16.mxu0 0
    %638 = vmatpush1.bf16.msra.mxu0 0
    %639 = vmatprep.subr.bf16.mxu0 0
    %640 = vmatpush1.bf16.msra.mxu0 0
    %641 = vmatprep.subr.bf16.mxu0 0
    %642 = vmatpush1.bf16.msra.mxu0 0
    %643 = vmatprep.subr.bf16.mxu0 0
    %644 = vmatpush1.bf16.msra.mxu0 0
    %645 = vmatprep.subr.bf16.mxu0 0
    %646 = vmatpush1.bf16.msra.mxu0 0
    %647 = vmatprep.mubr.bf16.mxu0 0
    %648 = vmatmul.mubr.bf16.gmra.mrb[0].mxu0 %v52
    %v649 = vpop.f32.mrb[0].mxu0
    %v650 = vadd.f32 0.0, %v649
    %v651 = vpop.f32.mrb[0].mxu0
    %v652 = vpop.f32.mrb[0].mxu0
    %v653 = vadd.f32 0.0, %v652
    %v654 = vpop.f32.mrb[0].mxu0
    %655 = vdwg.mxu0
    %v656 = vpack.c.bf16 %v534, %v534
    %v657 = vpack.c.bf16 %v537, %v537
    %v658 = vpack.c.bf16 %v592, %v592
    %v659 = vpack.c.bf16 %v595, %v595
    %v660 = vpack.c.bf16 %v650, %v650
    %v661 = vpack.c.bf16 %v653, %v653
    %v663 = vsel %vm215, %v656, 0
    %v666 = vsel %vm215, %v658, 0
    %668 = vmatprep.subr.bf16.mxu0 0
    %669 = vmatpush1.bf16.xpose.msra.mxu0 %v666
    %670 = vmatprep.subr.bf16.mxu0 0
    %671 = vmatpush1.bf16.xpose.msra.mxu0 0
    %672 = vmatprep.subr.bf16.mxu0 0
    %673 = vmatpush1.bf16.xpose.msra.mxu0 0
    %674 = vmatprep.subr.bf16.mxu0 0
    %675 = vmatpush1.bf16.xpose.msra.mxu0 0
    %676 = vmatprep.subr.bf16.mxu0 0
    %677 = vmatpush1.bf16.xpose.msra.mxu0 0
    %678 = vmatprep.subr.bf16.mxu0 0
    %679 = vmatpush1.bf16.xpose.msra.mxu0 0
    %680 = vmatprep.subr.bf16.mxu0 0
    %681 = vmatpush1.bf16.xpose.msra.mxu0 0
    %682 = vmatprep.subr.bf16.mxu0 0
    %683 = vmatpush1.bf16.xpose.msra.mxu0 0
    %684 = vmatprep.subr.bf16.mxu0 0
    %685 = vmatpush1.bf16.xpose.msra.mxu0 0
    %686 = vmatprep.subr.bf16.mxu0 0
    %687 = vmatpush1.bf16.xpose.msra.mxu0 0
    %688 = vmatprep.subr.bf16.mxu0 0
    %689 = vmatpush1.bf16.xpose.msra.mxu0 0
    %690 = vmatprep.subr.bf16.mxu0 0
    %691 = vmatpush1.bf16.xpose.msra.mxu0 0
    %692 = vmatprep.subr.bf16.mxu0 0
    %693 = vmatpush1.bf16.xpose.msra.mxu0 0
    %694 = vmatprep.subr.bf16.mxu0 0
    %695 = vmatpush1.bf16.xpose.msra.mxu0 0
    %696 = vmatprep.subr.bf16.mxu0 0
    %697 = vmatpush1.bf16.xpose.msra.mxu0 0
    %698 = vmatprep.subr.bf16.mxu0 0
    %699 = vmatpush1.bf16.xpose.msra.mxu0 0
    %700 = vmatprep.mubr.bf16.mxu0 0
    %701 = vmatmul.mubr.bf16.gmra.mrb[0].mxu0 %v663
    %v702 = vpop.f32.mrb[0].mxu0
    %v703 = vadd.f32 0.0, %v702
    %v704 = vpop.f32.mrb[0].mxu0
    %v705 = vpop.f32.mrb[0].mxu0
    %v706 = vpop.f32.mrb[0].mxu0
    %707 = vdwg.mxu0
    %v709 = vsel %vm215, %v657, 0
    %v712 = vsel %vm215, %v659, 0
    %714 = vmatprep.subr.bf16.mxu0 0
    %715 = vmatpush1.bf16.xpose.msra.mxu0 %v712
    %716 = vmatprep.subr.bf16.mxu0 0
    %717 = vmatpush1.bf16.xpose.msra.mxu0 0
    %718 = vmatprep.subr.bf16.mxu0 0
    %719 = vmatpush1.bf16.xpose.msra.mxu0 0
    %720 = vmatprep.subr.bf16.mxu0 0
    %721 = vmatpush1.bf16.xpose.msra.mxu0 0
    %722 = vmatprep.subr.bf16.mxu0 0
    %723 = vmatpush1.bf16.xpose.msra.mxu0 0
    %724 = vmatprep.subr.bf16.mxu0 0
    %725 = vmatpush1.bf16.xpose.msra.mxu0 0
    %726 = vmatprep.subr.bf16.mxu0 0
    %727 = vmatpush1.bf16.xpose.msra.mxu0 0
    %728 = vmatprep.subr.bf16.mxu0 0
    %729 = vmatpush1.bf16.xpose.msra.mxu0 0
    %730 = vmatprep.subr.bf16.mxu0 0
    %731 = vmatpush1.bf16.xpose.msra.mxu0 0
    %732 = vmatprep.subr.bf16.mxu0 0
    %733 = vmatpush1.bf16.xpose.msra.mxu0 0
    %734 = vmatprep.subr.bf16.mxu0 0
    %735 = vmatpush1.bf16.xpose.msra.mxu0 0
    %736 = vmatprep.subr.bf16.mxu0 0
    %737 = vmatpush1.bf16.xpose.msra.mxu0 0
    %738 = vmatprep.subr.bf16.mxu0 0
    %739 = vmatpush1.bf16.xpose.msra.mxu0 0
    %740 = vmatprep.subr.bf16.mxu0 0
    %741 = vmatpush1.bf16.xpose.msra.mxu0 0
    %742 = vmatprep.subr.bf16.mxu0 0
    %743 = vmatpush1.bf16.xpose.msra.mxu0 0
    %744 = vmatprep.subr.bf16.mxu0 0
    %745 = vmatpush1.bf16.xpose.msra.mxu0 0
    %746 = vmatprep.mubr.bf16.mxu0 0
    %747 = vmatmul.mubr.bf16.gmra.mrb[0].mxu0 %v709
    %v748 = vpop.f32.mrb[0].mxu0
    %v749 = vadd.f32 0.0, %v748
    %v750 = vpop.f32.mrb[0].mxu0
    %v751 = vpop.f32.mrb[0].mxu0
    %v752 = vpop.f32.mrb[0].mxu0
    %753 = vdwg.mxu0
    %v754 = vsel %vm308, %v703, -inf
    %755 = vmax.xlane.f32.xlu0 %v754
    %v756 = vpop.xlane.xlu0 %755
    %v757 = vsel %vm308, %v749, -inf
    %758 = vmax.xlane.f32.xlu0 %v757
    %v759 = vpop.xlane.xlu0 %758
    %v760 = vsub.f32 %v703, %v756
    %v761 = vsub.f32 %v749, %v759
    %v762 = vmul.f32 %v760, 1.442695
    %v763 = vpow.pop %v762
    %v764 = vmul.f32 %v761, 1.442695
    %v765 = vpow.pop %v764
    %v766 = vsel %vm308, %v763, 0.0
    %767 = vadd.xlane.f32.xlu0 %v766
    %v768 = vpop.xlane.xlu0 %767
    %v769 = vsel %vm308, %v765, 0.0
    %770 = vadd.xlane.f32.xlu0 %v769
    %v771 = vpop.xlane.xlu0 %770
    %v772 = vpack.c.bf16 %v763, %v763
    %v773 = vpack.c.bf16 %v765, %v765
    %v775 = vsel %vm308, %v772, 0
    %v778 = vsel %vm332, %v660, 0
    %780 = vmatprep.subr.bf16.mxu0 0
    %781 = vmatpush1.bf16.msra.mxu0 %v778
    %782 = vmatprep.subr.bf16.mxu0 0
    %783 = vmatpush1.bf16.msra.mxu0 0
    %784 = vmatprep.subr.bf16.mxu0 0
    %785 = vmatpush1.bf16.msra.mxu0 0
    %786 = vmatprep.subr.bf16.mxu0 0
    %787 = vmatpush1.bf16.msra.mxu0 0
    %788 = vmatprep.subr.bf16.mxu0 0
    %789 = vmatpush1.bf16.msra.mxu0 0
    %790 = vmatprep.subr.bf16.mxu0 0
    %791 = vmatpush1.bf16.msra.mxu0 0
    %792 = vmatprep.subr.bf16.mxu0 0
    %793 = vmatpush1.bf16.msra.mxu0 0
    %794 = vmatprep.subr.bf16.mxu0 0
    %795 = vmatpush1.bf16.msra.mxu0 0
    %796 = vmatprep.subr.bf16.mxu0 0
    %797 = vmatpush1.bf16.msra.mxu0 0
    %798 = vmatprep.subr.bf16.mxu0 0
    %799 = vmatpush1.bf16.msra.mxu0 0
    %800 = vmatprep.subr.bf16.mxu0 0
    %801 = vmatpush1.bf16.msra.mxu0 0
    %802 = vmatprep.subr.bf16.mxu0 0
    %803 = vmatpush1.bf16.msra.mxu0 0
    %804 = vmatprep.subr.bf16.mxu0 0
    %805 = vmatpush1.bf16.msra.mxu0 0
    %806 = vmatprep.subr.bf16.mxu0 0
    %807 = vmatpush1.bf16.msra.mxu0 0
    %808 = vmatprep.subr.bf16.mxu0 0
    %809 = vmatpush1.bf16.msra.mxu0 0
    %810 = vmatprep.subr.bf16.mxu0 0
    %811 = vmatpush1.bf16.msra.mxu0 0
    %812 = vmatprep.mubr.bf16.mxu0 0
    %813 = vmatmul.mubr.bf16.gmra.mrb[0].mxu0 %v775
    %v814 = vpop.f32.mrb[0].mxu0
    %v815 = vadd.f32 0.0, %v814
    %v816 = vpop.f32.mrb[0].mxu0
    %v817 = vpop.f32.mrb[0].mxu0
    %v818 = vpop.f32.mrb[0].mxu0
    %819 = vdwg.mxu0
    %v821 = vsel %vm308, %v773, 0
    %v824 = vsel %vm332, %v661, 0
    %826 = vmatprep.subr.bf16.mxu0 0
    %827 = vmatpush1.bf16.msra.mxu0 %v824
    %828 = vmatprep.subr.bf16.mxu0 0
    %829 = vmatpush1.bf16.msra.mxu0 0
    %830 = vmatprep.subr.bf16.mxu0 0
    %831 = vmatpush1.bf16.msra.mxu0 0
    %832 = vmatprep.subr.bf16.mxu0 0
    %833 = vmatpush1.bf16.msra.mxu0 0
    %834 = vmatprep.subr.bf16.mxu0 0
    %835 = vmatpush1.bf16.msra.mxu0 0
    %836 = vmatprep.subr.bf16.mxu0 0
    %837 = vmatpush1.bf16.msra.mxu0 0
    %838 = vmatprep.subr.bf16.mxu0 0
    %839 = vmatpush1.bf16.msra.mxu0 0
    %840 = vmatprep.subr.bf16.mxu0 0
    %841 = vmatpush1.bf16.msra.mxu0 0
    %842 = vmatprep.subr.bf16.mxu0 0
    %843 = vmatpush1.bf16.msra.mxu0 0
    %844 = vmatprep.subr.bf16.mxu0 0
    %845 = vmatpush1.bf16.msra.mxu0 0
    %846 = vmatprep.subr.bf16.mxu0 0
    %847 = vmatpush1.bf16.msra.mxu0 0
    %848 = vmatprep.subr.bf16.mxu0 0
    %849 = vmatpush1.bf16.msra.mxu0 0
    %850 = vmatprep.subr.bf16.mxu0 0
    %851 = vmatpush1.bf16.msra.mxu0 0
    %852 = vmatprep.subr.bf16.mxu0 0
    %853 = vmatpush1.bf16.msra.mxu0 0
    %854 = vmatprep.subr.bf16.mxu0 0
    %855 = vmatpush1.bf16.msra.mxu0 0
    %856 = vmatprep.subr.bf16.mxu0 0
    %857 = vmatpush1.bf16.msra.mxu0 0
    %858 = vmatprep.mubr.bf16.mxu0 0
    %859 = vmatmul.mubr.bf16.gmra.mrb[0].mxu0 %v821
    %v860 = vpop.f32.mrb[0].mxu0
    %v861 = vadd.f32 0.0, %v860
    %v862 = vpop.f32.mrb[0].mxu0
    %v863 = vpop.f32.mrb[0].mxu0
    %v864 = vpop.f32.mrb[0].mxu0
    %865 = vdwg.mxu0
    %v866 = vrcp.pop %v768
    %v867 = vrcp.pop %v771
    %v868 = vmul.f32 %v815, %v866
    %v869 = vmul.f32 %v861, %v867
    %v870 = vld [vmem:[#allocation2] sm:$0xff]
    %v871 = vld [vmem:[#allocation2 + $0x8] sm:$0xff]
    %v872 = vpack.c.bf16 %v869, %v868
    %s873 = scalar_lea.vmem %s4, 2
    %v874 = vld [vmem:[%s873] sm:$0x3]
    %v876 = vsel %vm215, %v872, 0
    %v879 = vsel %vm433, %v874, 0
    %881 = vmatprep.subr.bf16.mxu0 0
    %882 = vmatpush1.bf16.msra.mxu0 %v879
    %883 = vmatprep.subr.bf16.mxu0 0
    %884 = vmatpush1.bf16.msra.mxu0 0
    %885 = vmatprep.subr.bf16.mxu0 0
    %886 = vmatpush1.bf16.msra.mxu0 0
    %887 = vmatprep.subr.bf16.mxu0 0
    %888 = vmatpush1.bf16.msra.mxu0 0
    %889 = vmatprep.subr.bf16.mxu0 0
    %890 = vmatpush1.bf16.msra.mxu0 0
    %891 = vmatprep.subr.bf16.mxu0 0
    %892 = vmatpush1.bf16.msra.mxu0 0
    %893 = vmatprep.subr.bf16.mxu0 0
    %894 = vmatpush1.bf16.msra.mxu0 0
    %895 = vmatprep.subr.bf16.mxu0 0
    %896 = vmatpush1.bf16.msra.mxu0 0
    %897 = vmatprep.subr.bf16.mxu0 0
    %898 = vmatpush1.bf16.msra.mxu0 0
    %899 = vmatprep.subr.bf16.mxu0 0
    %900 = vmatpush1.bf16.msra.mxu0 0
    %901 = vmatprep.subr.bf16.mxu0 0
    %902 = vmatpush1.bf16.msra.mxu0 0
    %903 = vmatprep.subr.bf16.mxu0 0
    %904 = vmatpush1.bf16.msra.mxu0 0
    %905 = vmatprep.subr.bf16.mxu0 0
    %906 = vmatpush1.bf16.msra.mxu0 0
    %907 = vmatprep.subr.bf16.mxu0 0
    %908 = vmatpush1.bf16.msra.mxu0 0
    %909 = vmatprep.subr.bf16.mxu0 0
    %910 = vmatpush1.bf16.msra.mxu0 0
    %911 = vmatprep.subr.bf16.mxu0 0
    %912 = vmatpush1.bf16.msra.mxu0 0
    %913 = vmatprep.mubr.bf16.mxu0 0
    %914 = vmatmul.mubr.bf16.gmra.mrb[0].mxu0 %v876
    %v915 = vpop.f32.mrb[0].mxu0
    %v916 = vadd.f32 0.0, %v915
    %v917 = vpop.f32.mrb[0].mxu0
    %v918 = vpop.f32.mrb[0].mxu0
    %v919 = vadd.f32 0.0, %v918
    %v920 = vpop.f32.mrb[0].mxu0
    %921 = vdwg.mxu0
    %v922 = vadd.f32 %v870, %v916
    %v923 = vadd.f32 %v871, %v919
    %924 = vst.msk [vmem:[#allocation2] sm:$0xff] %vm27, %v922
    %925 = vst.msk [vmem:[#allocation2 + $0x8] sm:$0xff] %vm27, %v923
    %s926 = scalar_lea.vmem %s1, 32
    %v927 = vld [vmem:[%s926] sm:$0xf]
    %v928 = vld [vmem:[%s926 + $0x4] sm:$0xf]
    %v929 = vld [vmem:[%s926 + $0x8] sm:$0xf]
    %v930 = vld [vmem:[%s926 + $0xc] sm:$0xf]
    %v935 = vunpack.c.l.b16 %v927
    %v936 = vunpack.c.l.b16 %v928
    %v937 = vunpack.c.l.b16 %v929
    %v938 = vunpack.c.l.b16 %v930
    %v939 = vpack.c.b16 %v936, %v935
    %v940 = vpack.c.b16 %v938, %v937
    %943 = vmatprep.subr.bf16.mxu0 0
    %944 = vmatpush1.bf16.msra.mxu0 %v939
    %945 = vmatprep.subr.bf16.mxu0 0
    %946 = vmatpush1.bf16.msra.mxu0 %v940
    %947 = vmatprep.subr.bf16.mxu0 0
    %948 = vmatpush1.bf16.msra.mxu0 0
    %949 = vmatprep.subr.bf16.mxu0 0
    %950 = vmatpush1.bf16.msra.mxu0 0
    %951 = vmatprep.subr.bf16.mxu0 0
    %952 = vmatpush1.bf16.msra.mxu0 0
    %953 = vmatprep.subr.bf16.mxu0 0
    %954 = vmatpush1.bf16.msra.mxu0 0
    %955 = vmatprep.subr.bf16.mxu0 0
    %956 = vmatpush1.bf16.msra.mxu0 0
    %957 = vmatprep.subr.bf16.mxu0 0
    %958 = vmatpush1.bf16.msra.mxu0 0
    %959 = vmatprep.subr.bf16.mxu0 0
    %960 = vmatpush1.bf16.msra.mxu0 0
    %961 = vmatprep.subr.bf16.mxu0 0
    %962 = vmatpush1.bf16.msra.mxu0 0
    %963 = vmatprep.subr.bf16.mxu0 0
    %964 = vmatpush1.bf16.msra.mxu0 0
    %965 = vmatprep.subr.bf16.mxu0 0
    %966 = vmatpush1.bf16.msra.mxu0 0
    %967 = vmatprep.subr.bf16.mxu0 0
    %968 = vmatpush1.bf16.msra.mxu0 0
    %969 = vmatprep.subr.bf16.mxu0 0
    %970 = vmatpush1.bf16.msra.mxu0 0
    %971 = vmatprep.subr.bf16.mxu0 0
    %972 = vmatpush1.bf16.msra.mxu0 0
    %973 = vmatprep.subr.bf16.mxu0 0
    %974 = vmatpush1.bf16.msra.mxu0 0
    %975 = vmatprep.mubr.bf16.mxu0 0
    %976 = vmatmul.mubr.bf16.gmra.mrb[0].mxu0 %v52
    %v977 = vpop.f32.mrb[0].mxu0
    %v978 = vadd.f32 0.0, %v977
    %v979 = vpop.f32.mrb[0].mxu0
    %v980 = vpop.f32.mrb[0].mxu0
    %v981 = vadd.f32 0.0, %v980
    %v982 = vpop.f32.mrb[0].mxu0
    %983 = vdwg.mxu0
    %s984 = scalar_lea.vmem %s2, 32
    %v985 = vld [vmem:[%s984] sm:$0xf]
    %v986 = vld [vmem:[%s984 + $0x4] sm:$0xf]
    %v987 = vld [vmem:[%s984 + $0x8] sm:$0xf]
    %v988 = vld [vmem:[%s984 + $0xc] sm:$0xf]
    %v993 = vunpack.c.l.b16 %v985
    %v994 = vunpack.c.l.b16 %v986
    %v995 = vunpack.c.l.b16 %v987
    %v996 = vunpack.c.l.b16 %v988
    %v997 = vpack.c.b16 %v994, %v993
    %v998 = vpack.c.b16 %v996, %v995
    %1001 = vmatprep.subr.bf16.mxu0 0
    %1002 = vmatpush1.bf16.msra.mxu0 %v997
    %1003 = vmatprep.subr.bf16.mxu0 0
    %1004 = vmatpush1.bf16.msra.mxu0 %v998
    %1005 = vmatprep.subr.bf16.mxu0 0
    %1006 = vmatpush1.bf16.msra.mxu0 0
    %1007 = vmatprep.subr.bf16.mxu0 0
    %1008 = vmatpush1.bf16.msra.mxu0 0
    %1009 = vmatprep.subr.bf16.mxu0 0
    %1010 = vmatpush1.bf16.msra.mxu0 0
    %1011 = vmatprep.subr.bf16.mxu0 0
    %1012 = vmatpush1.bf16.msra.mxu0 0
    %1013 = vmatprep.subr.bf16.mxu0 0
    %1014 = vmatpush1.bf16.msra.mxu0 0
    %1015 = vmatprep.subr.bf16.mxu0 0
    %1016 = vmatpush1.bf16.msra.mxu0 0
    %1017 = vmatprep.subr.bf16.mxu0 0
    %1018 = vmatpush1.bf16.msra.mxu0 0
    %1019 = vmatprep.subr.bf16.mxu0 0
    %1020 = vmatpush1.bf16.msra.mxu0 0
    %1021 = vmatprep.subr.bf16.mxu0 0
    %1022 = vmatpush1.bf16.msra.mxu0 0
    %1023 = vmatprep.subr.bf16.mxu0 0
    %1024 = vmatpush1.bf16.msra.mxu0 0
    %1025 = vmatprep.subr.bf16.mxu0 0
    %1026 = vmatpush1.bf16.msra.mxu0 0
    %1027 = vmatprep.subr.bf16.mxu0 0
    %1028 = vmatpush1.bf16.msra.mxu0 0
    %1029 = vmatprep.subr.bf16.mxu0 0
    %1030 = vmatpush1.bf16.msra.mxu0 0
    %1031 = vmatprep.subr.bf16.mxu0 0
    %1032 = vmatpush1.bf16.msra.mxu0 0
    %1033 = vmatprep.mubr.bf16.mxu0 0
    %1034 = vmatmul.mubr.bf16.gmra.mrb[0].mxu0 %v52
    %v1035 = vpop.f32.mrb[0].mxu0
    %v1036 = vadd.f32 0.0, %v1035
    %v1037 = vpop.f32.mrb[0].mxu0
    %v1038 = vpop.f32.mrb[0].mxu0
    %v1039 = vadd.f32 0.0, %v1038
    %v1040 = vpop.f32.mrb[0].mxu0
    %1041 = vdwg.mxu0
    %s1042 = scalar_lea.vmem %s3, 32
    %v1043 = vld [vmem:[%s1042] sm:$0xf]
    %v1044 = vld [vmem:[%s1042 + $0x4] sm:$0xf]
    %v1045 = vld [vmem:[%s1042 + $0x8] sm:$0xf]
    %v1046 = vld [vmem:[%s1042 + $0xc] sm:$0xf]
    %v1051 = vunpack.c.l.b16 %v1043
    %v1052 = vunpack.c.l.b16 %v1044
    %v1053 = vunpack.c.l.b16 %v1045
    %v1054 = vunpack.c.l.b16 %v1046
    %v1055 = vpack.c.b16 %v1052, %v1051
    %v1056 = vpack.c.b16 %v1054, %v1053
    %1059 = vmatprep.subr.bf16.mxu0 0
    %1060 = vmatpush1.bf16.msra.mxu0 %v1055
    %1061 = vmatprep.subr.bf16.mxu0 0
    %1062 = vmatpush1.bf16.msra.mxu0 %v1056
    %1063 = vmatprep.subr.bf16.mxu0 0
    %1064 = vmatpush1.bf16.msra.mxu0 0
    %1065 = vmatprep.subr.bf16.mxu0 0
    %1066 = vmatpush1.bf16.msra.mxu0 0
    %1067 = vmatprep.subr.bf16.mxu0 0
    %1068 = vmatpush1.bf16.msra.mxu0 0
    %1069 = vmatprep.subr.bf16.mxu0 0
    %1070 = vmatpush1.bf16.msra.mxu0 0
    %1071 = vmatprep.subr.bf16.mxu0 0
    %1072 = vmatpush1.bf16.msra.mxu0 0
    %1073 = vmatprep.subr.bf16.mxu0 0
    %1074 = vmatpush1.bf16.msra.mxu0 0
    %1075 = vmatprep.subr.bf16.mxu0 0
    %1076 = vmatpush1.bf16.msra.mxu0 0
    %1077 = vmatprep.subr.bf16.mxu0 0
    %1078 = vmatpush1.bf16.msra.mxu0 0
    %1079 = vmatprep.subr.bf16.mxu0 0
    %1080 = vmatpush1.bf16.msra.mxu0 0
    %1081 = vmatprep.subr.bf16.mxu0 0
    %1082 = vmatpush1.bf16.msra.mxu0 0
    %1083 = vmatprep.subr.bf16.mxu0 0
    %1084 = vmatpush1.bf16.msra.mxu0 0
    %1085 = vmatprep.subr.bf16.mxu0 0
    %1086 = vmatpush1.bf16.msra.mxu0 0
    %1087 = vmatprep.subr.bf16.mxu0 0
    %1088 = vmatpush1.bf16.msra.mxu0 0
    %1089 = vmatprep.subr.bf16.mxu0 0
    %1090 = vmatpush1.bf16.msra.mxu0 0
    %1091 = vmatprep.mubr.bf16.mxu0 0
    %1092 = vmatmul.mubr.bf16.gmra.mrb[0].mxu0 %v52
    %v1093 = vpop.f32.mrb[0].mxu0
    %v1094 = vadd.f32 0.0, %v1093
    %v1095 = vpop.f32.mrb[0].mxu0
    %v1096 = vpop.f32.mrb[0].mxu0
    %v1097 = vadd.f32 0.0, %v1096
    %v1098 = vpop.f32.mrb[0].mxu0
    %1099 = vdwg.mxu0
    %v1100 = vpack.c.bf16 %v978, %v978
    %v1101 = vpack.c.bf16 %v981, %v981
    %v1102 = vpack.c.bf16 %v1036, %v1036
    %v1103 = vpack.c.bf16 %v1039, %v1039
    %v1104 = vpack.c.bf16 %v1094, %v1094
    %v1105 = vpack.c.bf16 %v1097, %v1097
    %v1107 = vsel %vm215, %v1100, 0
    %v1110 = vsel %vm215, %v1102, 0
    %1112 = vmatprep.subr.bf16.mxu0 0
    %1113 = vmatpush1.bf16.xpose.msra.mxu0 %v1110
    %1114 = vmatprep.subr.bf16.mxu0 0
    %1115 = vmatpush1.bf16.xpose.msra.mxu0 0
    %1116 = vmatprep.subr.bf16.mxu0 0
    %1117 = vmatpush1.bf16.xpose.msra.mxu0 0
    %1118 = vmatprep.subr.bf16.mxu0 0
    %1119 = vmatpush1.bf16.xpose.msra.mxu0 0
    %1120 = vmatprep.subr.bf16.mxu0 0
    %1121 = vmatpush1.bf16.xpose.msra.mxu0 0
    %1122 = vmatprep.subr.bf16.mxu0 0
    %1123 = vmatpush1.bf16.xpose.msra.mxu0 0
    %1124 = vmatprep.subr.bf16.mxu0 0
    %1125 = vmatpush1.bf16.xpose.msra.mxu0 0
    %1126 = vmatprep.subr.bf16.mxu0 0
    %1127 = vmatpush1.bf16.xpose.msra.mxu0 0
    %1128 = vmatprep.subr.bf16.mxu0 0
    %1129 = vmatpush1.bf16.xpose.msra.mxu0 0
    %1130 = vmatprep.subr.bf16.mxu0 0
    %1131 = vmatpush1.bf16.xpose.msra.mxu0 0
    %1132 = vmatprep.subr.bf16.mxu0 0
    %1133 = vmatpush1.bf16.xpose.msra.mxu0 0
    %1134 = vmatprep.subr.bf16.mxu0 0
    %1135 = vmatpush1.bf16.xpose.msra.mxu0 0
    %1136 = vmatprep.subr.bf16.mxu0 0
    %1137 = vmatpush1.bf16.xpose.msra.mxu0 0
    %1138 = vmatprep.subr.bf16.mxu0 0
    %1139 = vmatpush1.bf16.xpose.msra.mxu0 0
    %1140 = vmatprep.subr.bf16.mxu0 0
    %1141 = vmatpush1.bf16.xpose.msra.mxu0 0
    %1142 = vmatprep.subr.bf16.mxu0 0
    %1143 = vmatpush1.bf16.xpose.msra.mxu0 0
    %1144 = vmatprep.mubr.bf16.mxu0 0
    %1145 = vmatmul.mubr.bf16.gmra.mrb[0].mxu0 %v1107
    %v1146 = vpop.f32.mrb[0].mxu0
    %v1147 = vadd.f32 0.0, %v1146
    %v1148 = vpop.f32.mrb[0].mxu0
    %v1149 = vpop.f32.mrb[0].mxu0
    %v1150 = vpop.f32.mrb[0].mxu0
    %1151 = vdwg.mxu0
    %v1153 = vsel %vm215, %v1101, 0
    %v1156 = vsel %vm215, %v1103, 0
    %1158 = vmatprep.subr.bf16.mxu0 0
    %1159 = vmatpush1.bf16.xpose.msra.mxu0 %v1156
    %1160 = vmatprep.subr.bf16.mxu0 0
    %1161 = vmatpush1.bf16.xpose.msra.mxu0 0
    %1162 = vmatprep.subr.bf16.mxu0 0
    %1163 = vmatpush1.bf16.xpose.msra.mxu0 0
    %1164 = vmatprep.subr.bf16.mxu0 0
    %1165 = vmatpush1.bf16.xpose.msra.mxu0 0
    %1166 = vmatprep.subr.bf16.mxu0 0
    %1167 = vmatpush1.bf16.xpose.msra.mxu0 0
    %1168 = vmatprep.subr.bf16.mxu0 0
    %1169 = vmatpush1.bf16.xpose.msra.mxu0 0
    %1170 = vmatprep.subr.bf16.mxu0 0
    %1171 = vmatpush1.bf16.xpose.msra.mxu0 0
    %1172 = vmatprep.subr.bf16.mxu0 0
    %1173 = vmatpush1.bf16.xpose.msra.mxu0 0
    %1174 = vmatprep.subr.bf16.mxu0 0
    %1175 = vmatpush1.bf16.xpose.msra.mxu0 0
    %1176 = vmatprep.subr.bf16.mxu0 0
    %1177 = vmatpush1.bf16.xpose.msra.mxu0 0
    %1178 = vmatprep.subr.bf16.mxu0 0
    %1179 = vmatpush1.bf16.xpose.msra.mxu0 0
    %1180 = vmatprep.subr.bf16.mxu0 0
    %1181 = vmatpush1.bf16.xpose.msra.mxu0 0
    %1182 = vmatprep.subr.bf16.mxu0 0
    %1183 = vmatpush1.bf16.xpose.msra.mxu0 0
    %1184 = vmatprep.subr.bf16.mxu0 0
    %1185 = vmatpush1.bf16.xpose.msra.mxu0 0
    %1186 = vmatprep.subr.bf16.mxu0 0
    %1187 = vmatpush1.bf16.xpose.msra.mxu0 0
    %1188 = vmatprep.subr.bf16.mxu0 0
    %1189 = vmatpush1.bf16.xpose.msra.mxu0 0
    %1190 = vmatprep.mubr.bf16.mxu0 0
    %1191 = vmatmul.mubr.bf16.gmra.mrb[0].mxu0 %v1153
    %v1192 = vpop.f32.mrb[0].mxu0
    %v1193 = vadd.f32 0.0, %v1192
    %v1194 = vpop.f32.mrb[0].mxu0
    %v1195 = vpop.f32.mrb[0].mxu0
    %v1196 = vpop.f32.mrb[0].mxu0
    %1197 = vdwg.mxu0
    %v1198 = vsel %vm308, %v1147, -inf
    %1199 = vmax.xlane.f32.xlu0 %v1198
    %v1200 = vpop.xlane.xlu0 %1199
    %v1201 = vsel %vm308, %v1193, -inf
    %1202 = vmax.xlane.f32.xlu0 %v1201
    %v1203 = vpop.xlane.xlu0 %1202
    %v1204 = vsub.f32 %v1147, %v1200
    %v1205 = vsub.f32 %v1193, %v1203
    %v1206 = vmul.f32 %v1204, 1.442695
    %v1207 = vpow.pop %v1206
    %v1208 = vmul.f32 %v1205, 1.442695
    %v1209 = vpow.pop %v1208
    %v1210 = vsel %vm308, %v1207, 0.0
    %1211 = vadd.xlane.f32.xlu0 %v1210
    %v1212 = vpop.xlane.xlu0 %1211
    %v1213 = vsel %vm308, %v1209, 0.0
    %1214 = vadd.xlane.f32.xlu0 %v1213
    %v1215 = vpop.xlane.xlu0 %1214
    %v1216 = vpack.c.bf16 %v1207, %v1207
    %v1217 = vpack.c.bf16 %v1209, %v1209
    %v1219 = vsel %vm308, %v1216, 0
    %v1222 = vsel %vm332, %v1104, 0
    %1224 = vmatprep.subr.bf16.mxu0 0
    %1225 = vmatpush1.bf16.msra.mxu0 %v1222
    %1226 = vmatprep.subr.bf16.mxu0 0
    %1227 = vmatpush1.bf16.msra.mxu0 0
    %1228 = vmatprep.subr.bf16.mxu0 0
    %1229 = vmatpush1.bf16.msra.mxu0 0
    %1230 = vmatprep.subr.bf16.mxu0 0
    %1231 = vmatpush1.bf16.msra.mxu0 0
    %1232 = vmatprep.subr.bf16.mxu0 0
    %1233 = vmatpush1.bf16.msra.mxu0 0
    %1234 = vmatprep.subr.bf16.mxu0 0
    %1235 = vmatpush1.bf16.msra.mxu0 0
    %1236 = vmatprep.subr.bf16.mxu0 0
    %1237 = vmatpush1.bf16.msra.mxu0 0
    %1238 = vmatprep.subr.bf16.mxu0 0
    %1239 = vmatpush1.bf16.msra.mxu0 0
    %1240 = vmatprep.subr.bf16.mxu0 0
    %1241 = vmatpush1.bf16.msra.mxu0 0
    %1242 = vmatprep.subr.bf16.mxu0 0
    %1243 = vmatpush1.bf16.msra.mxu0 0
    %1244 = vmatprep.subr.bf16.mxu0 0
    %1245 = vmatpush1.bf16.msra.mxu0 0
    %1246 = vmatprep.subr.bf16.mxu0 0
    %1247 = vmatpush1.bf16.msra.mxu0 0
    %1248 = vmatprep.subr.bf16.mxu0 0
    %1249 = vmatpush1.bf16.msra.mxu0 0
    %1250 = vmatprep.subr.bf16.mxu0 0
    %1251 = vmatpush1.bf16.msra.mxu0 0
    %1252 = vmatprep.subr.bf16.mxu0 0
    %1253 = vmatpush1.bf16.msra.mxu0 0
    %1254 = vmatprep.subr.bf16.mxu0 0
    %1255 = vmatpush1.bf16.msra.mxu0 0
    %1256 = vmatprep.mubr.bf16.mxu0 0
    %1257 = vmatmul.mubr.bf16.gmra.mrb[0].mxu0 %v1219
    %v1258 = vpop.f32.mrb[0].mxu0
    %v1259 = vadd.f32 0.0, %v1258
    %v1260 = vpop.f32.mrb[0].mxu0
    %v1261 = vpop.f32.mrb[0].mxu0
    %v1262 = vpop.f32.mrb[0].mxu0
    %1263 = vdwg.mxu0
    %v1265 = vsel %vm308, %v1217, 0
    %v1268 = vsel %vm332, %v1105, 0
    %1270 = vmatprep.subr.bf16.mxu0 0
    %1271 = vmatpush1.bf16.msra.mxu0 %v1268
    %1272 = vmatprep.subr.bf16.mxu0 0
    %1273 = vmatpush1.bf16.msra.mxu0 0
    %1274 = vmatprep.subr.bf16.mxu0 0
    %1275 = vmatpush1.bf16.msra.mxu0 0
    %1276 = vmatprep.subr.bf16.mxu0 0
    %1277 = vmatpush1.bf16.msra.mxu0 0
    %1278 = vmatprep.subr.bf16.mxu0 0
    %1279 = vmatpush1.bf16.msra.mxu0 0
    %1280 = vmatprep.subr.bf16.mxu0 0
    %1281 = vmatpush1.bf16.msra.mxu0 0
    %1282 = vmatprep.subr.bf16.mxu0 0
    %1283 = vmatpush1.bf16.msra.mxu0 0
    %1284 = vmatprep.subr.bf16.mxu0 0
    %1285 = vmatpush1.bf16.msra.mxu0 0
    %1286 = vmatprep.subr.bf16.mxu0 0
    %1287 = vmatpush1.bf16.msra.mxu0 0
    %1288 = vmatprep.subr.bf16.mxu0 0
    %1289 = vmatpush1.bf16.msra.mxu0 0
    %1290 = vmatprep.subr.bf16.mxu0 0
    %1291 = vmatpush1.bf16.msra.mxu0 0
    %1292 = vmatprep.subr.bf16.mxu0 0
    %1293 = vmatpush1.bf16.msra.mxu0 0
    %1294 = vmatprep.subr.bf16.mxu0 0
    %1295 = vmatpush1.bf16.msra.mxu0 0
    %1296 = vmatprep.subr.bf16.mxu0 0
    %1297 = vmatpush1.bf16.msra.mxu0 0
    %1298 = vmatprep.subr.bf16.mxu0 0
    %1299 = vmatpush1.bf16.msra.mxu0 0
    %1300 = vmatprep.subr.bf16.mxu0 0
    %1301 = vmatpush1.bf16.msra.mxu0 0
    %1302 = vmatprep.mubr.bf16.mxu0 0
    %1303 = vmatmul.mubr.bf16.gmra.mrb[0].mxu0 %v1265
    %v1304 = vpop.f32.mrb[0].mxu0
    %v1305 = vadd.f32 0.0, %v1304
    %v1306 = vpop.f32.mrb[0].mxu0
    %v1307 = vpop.f32.mrb[0].mxu0
    %v1308 = vpop.f32.mrb[0].mxu0
    %1309 = vdwg.mxu0
    %v1310 = vrcp.pop %v1212
    %v1311 = vrcp.pop %v1215
    %v1312 = vmul.f32 %v1259, %v1310
    %v1313 = vmul.f32 %v1305, %v1311
    %v1314 = vld [vmem:[#allocation2] sm:$0xff]
    %v1315 = vld [vmem:[#allocation2 + $0x8] sm:$0xff]
    %v1316 = vpack.c.bf16 %v1313, %v1312
    %s1317 = scalar_lea.vmem %s4, 4
    %v1318 = vld [vmem:[%s1317] sm:$0x3]
    %v1320 = vsel %vm215, %v1316, 0
    %v1323 = vsel %vm433, %v1318, 0
    %1325 = vmatprep.subr.bf16.mxu0 0
    %1326 = vmatpush1.bf16.msra.mxu0 %v1323
    %1327 = vmatprep.subr.bf16.mxu0 0
    %1328 = vmatpush1.bf16.msra.mxu0 0
    %1329 = vmatprep.subr.bf16.mxu0 0
    %1330 = vmatpush1.bf16.msra.mxu0 0
    %1331 = vmatprep.subr.bf16.mxu0 0
    %1332 = vmatpush1.bf16.msra.mxu0 0
    %1333 = vmatprep.subr.bf16.mxu0 0
    %1334 = vmatpush1.bf16.msra.mxu0 0
    %1335 = vmatprep.subr.bf16.mxu0 0
    %1336 = vmatpush1.bf16.msra.mxu0 0
    %1337 = vmatprep.subr.bf16.mxu0 0
    %1338 = vmatpush1.bf16.msra.mxu0 0
    %1339 = vmatprep.subr.bf16.mxu0 0
    %1340 = vmatpush1.bf16.msra.mxu0 0
    %1341 = vmatprep.subr.bf16.mxu0 0
    %1342 = vmatpush1.bf16.msra.mxu0 0
    %1343 = vmatprep.subr.bf16.mxu0 0
    %1344 = vmatpush1.bf16.msra.mxu0 0
    %1345 = vmatprep.subr.bf16.mxu0 0
    %1346 = vmatpush1.bf16.msra.mxu0 0
    %1347 = vmatprep.subr.bf16.mxu0 0
    %1348 = vmatpush1.bf16.msra.mxu0 0
    %1349 = vmatprep.subr.bf16.mxu0 0
    %1350 = vmatpush1.bf16.msra.mxu0 0
    %1351 = vmatprep.subr.bf16.mxu0 0
    %1352 = vmatpush1.bf16.msra.mxu0 0
    %1353 = vmatprep.subr.bf16.mxu0 0
    %1354 = vmatpush1.bf16.msra.mxu0 0
    %1355 = vmatprep.subr.bf16.mxu0 0
    %1356 = vmatpush1.bf16.msra.mxu0 0
    %1357 = vmatprep.mubr.bf16.mxu0 0
    %1358 = vmatmul.mubr.bf16.gmra.mrb[0].mxu0 %v1320
    %v1359 = vpop.f32.mrb[0].mxu0
    %v1360 = vadd.f32 0.0, %v1359
    %v1361 = vpop.f32.mrb[0].mxu0
    %v1362 = vpop.f32.mrb[0].mxu0
    %v1363 = vadd.f32 0.0, %v1362
    %v1364 = vpop.f32.mrb[0].mxu0
    %1365 = vdwg.mxu0
    %v1366 = vadd.f32 %v1314, %v1360
    %v1367 = vadd.f32 %v1315, %v1363
    %1368 = vst.msk [vmem:[#allocation2] sm:$0xff] %vm27, %v1366
    %1369 = vst.msk [vmem:[#allocation2 + $0x8] sm:$0xff] %vm27, %v1367
    %s1370 = scalar_lea.vmem %s1, 48
    %v1371 = vld [vmem:[%s1370] sm:$0xf]
    %v1372 = vld [vmem:[%s1370 + $0x4] sm:$0xf]
    %v1373 = vld [vmem:[%s1370 + $0x8] sm:$0xf]
    %v1374 = vld [vmem:[%s1370 + $0xc] sm:$0xf]
    %v1379 = vunpack.c.l.b16 %v1371
    %v1380 = vunpack.c.l.b16 %v1372
    %v1381 = vunpack.c.l.b16 %v1373
    %v1382 = vunpack.c.l.b16 %v1374
    %v1383 = vpack.c.b16 %v1380, %v1379
    %v1384 = vpack.c.b16 %v1382, %v1381
    %1387 = vmatprep.subr.bf16.mxu0 0
    %1388 = vmatpush1.bf16.msra.mxu0 %v1383
    %1389 = vmatprep.subr.bf16.mxu0 0
    %1390 = vmatpush1.bf16.msra.mxu0 %v1384
    %1391 = vmatprep.subr.bf16.mxu0 0
    %1392 = vmatpush1.bf16.msra.mxu0 0
    %1393 = vmatprep.subr.bf16.mxu0 0
    %1394 = vmatpush1.bf16.msra.mxu0 0
    %1395 = vmatprep.subr.bf16.mxu0 0
    %1396 = vmatpush1.bf16.msra.mxu0 0
    %1397 = vmatprep.subr.bf16.mxu0 0
    %1398 = vmatpush1.bf16.msra.mxu0 0
    %1399 = vmatprep.subr.bf16.mxu0 0
    %1400 = vmatpush1.bf16.msra.mxu0 0
    %1401 = vmatprep.subr.bf16.mxu0 0
    %1402 = vmatpush1.bf16.msra.mxu0 0
    %1403 = vmatprep.subr.bf16.mxu0 0
    %1404 = vmatpush1.bf16.msra.mxu0 0
    %1405 = vmatprep.subr.bf16.mxu0 0
    %1406 = vmatpush1.bf16.msra.mxu0 0
    %1407 = vmatprep.subr.bf16.mxu0 0
    %1408 = vmatpush1.bf16.msra.mxu0 0
    %1409 = vmatprep.subr.bf16.mxu0 0
    %1410 = vmatpush1.bf16.msra.mxu0 0
    %1411 = vmatprep.subr.bf16.mxu0 0
    %1412 = vmatpush1.bf16.msra.mxu0 0
    %1413 = vmatprep.subr.bf16.mxu0 0
    %1414 = vmatpush1.bf16.msra.mxu0 0
    %1415 = vmatprep.subr.bf16.mxu0 0
    %1416 = vmatpush1.bf16.msra.mxu0 0
    %1417 = vmatprep.subr.bf16.mxu0 0
    %1418 = vmatpush1.bf16.msra.mxu0 0
    %1419 = vmatprep.mubr.bf16.mxu0 0
    %1420 = vmatmul.mubr.bf16.gmra.mrb[0].mxu0 %v52
    %v1421 = vpop.f32.mrb[0].mxu0
    %v1422 = vadd.f32 0.0, %v1421
    %v1423 = vpop.f32.mrb[0].mxu0
    %v1424 = vpop.f32.mrb[0].mxu0
    %v1425 = vadd.f32 0.0, %v1424
    %v1426 = vpop.f32.mrb[0].mxu0
    %1427 = vdwg.mxu0
    %s1428 = scalar_lea.vmem %s2, 48
    %v1429 = vld [vmem:[%s1428] sm:$0xf]
    %v1430 = vld [vmem:[%s1428 + $0x4] sm:$0xf]
    %v1431 = vld [vmem:[%s1428 + $0x8] sm:$0xf]
    %v1432 = vld [vmem:[%s1428 + $0xc] sm:$0xf]
    %v1437 = vunpack.c.l.b16 %v1429
    %v1438 = vunpack.c.l.b16 %v1430
    %v1439 = vunpack.c.l.b16 %v1431
    %v1440 = vunpack.c.l.b16 %v1432
    %v1441 = vpack.c.b16 %v1438, %v1437
    %v1442 = vpack.c.b16 %v1440, %v1439
    %1445 = vmatprep.subr.bf16.mxu0 0
    %1446 = vmatpush1.bf16.msra.mxu0 %v1441
    %1447 = vmatprep.subr.bf16.mxu0 0
    %1448 = vmatpush1.bf16.msra.mxu0 %v1442
    %1449 = vmatprep.subr.bf16.mxu0 0
    %1450 = vmatpush1.bf16.msra.mxu0 0
    %1451 = vmatprep.subr.bf16.mxu0 0
    %1452 = vmatpush1.bf16.msra.mxu0 0
    %1453 = vmatprep.subr.bf16.mxu0 0
    %1454 = vmatpush1.bf16.msra.mxu0 0
    %1455 = vmatprep.subr.bf16.mxu0 0
    %1456 = vmatpush1.bf16.msra.mxu0 0
    %1457 = vmatprep.subr.bf16.mxu0 0
    %1458 = vmatpush1.bf16.msra.mxu0 0
    %1459 = vmatprep.subr.bf16.mxu0 0
    %1460 = vmatpush1.bf16.msra.mxu0 0
    %1461 = vmatprep.subr.bf16.mxu0 0
    %1462 = vmatpush1.bf16.msra.mxu0 0
    %1463 = vmatprep.subr.bf16.mxu0 0
    %1464 = vmatpush1.bf16.msra.mxu0 0
    %1465 = vmatprep.subr.bf16.mxu0 0
    %1466 = vmatpush1.bf16.msra.mxu0 0
    %1467 = vmatprep.subr.bf16.mxu0 0
    %1468 = vmatpush1.bf16.msra.mxu0 0
    %1469 = vmatprep.subr.bf16.mxu0 0
    %1470 = vmatpush1.bf16.msra.mxu0 0
    %1471 = vmatprep.subr.bf16.mxu0 0
    %1472 = vmatpush1.bf16.msra.mxu0 0
    %1473 = vmatprep.subr.bf16.mxu0 0
    %1474 = vmatpush1.bf16.msra.mxu0 0
    %1475 = vmatprep.subr.bf16.mxu0 0
    %1476 = vmatpush1.bf16.msra.mxu0 0
    %1477 = vmatprep.mubr.bf16.mxu0 0
    %1478 = vmatmul.mubr.bf16.gmra.mrb[0].mxu0 %v52
    %v1479 = vpop.f32.mrb[0].mxu0
    %v1480 = vadd.f32 0.0, %v1479
    %v1481 = vpop.f32.mrb[0].mxu0
    %v1482 = vpop.f32.mrb[0].mxu0
    %v1483 = vadd.f32 0.0, %v1482
    %v1484 = vpop.f32.mrb[0].mxu0
    %1485 = vdwg.mxu0
    %s1486 = scalar_lea.vmem %s3, 48
    %v1487 = vld [vmem:[%s1486] sm:$0xf]
    %v1488 = vld [vmem:[%s1486 + $0x4] sm:$0xf]
    %v1489 = vld [vmem:[%s1486 + $0x8] sm:$0xf]
    %v1490 = vld [vmem:[%s1486 + $0xc] sm:$0xf]
    %v1495 = vunpack.c.l.b16 %v1487
    %v1496 = vunpack.c.l.b16 %v1488
    %v1497 = vunpack.c.l.b16 %v1489
    %v1498 = vunpack.c.l.b16 %v1490
    %v1499 = vpack.c.b16 %v1496, %v1495
    %v1500 = vpack.c.b16 %v1498, %v1497
    %1503 = vmatprep.subr.bf16.mxu0 0
    %1504 = vmatpush1.bf16.msra.mxu0 %v1499
    %1505 = vmatprep.subr.bf16.mxu0 0
    %1506 = vmatpush1.bf16.msra.mxu0 %v1500
    %1507 = vmatprep.subr.bf16.mxu0 0
    %1508 = vmatpush1.bf16.msra.mxu0 0
    %1509 = vmatprep.subr.bf16.mxu0 0
    %1510 = vmatpush1.bf16.msra.mxu0 0
    %1511 = vmatprep.subr.bf16.mxu0 0
    %1512 = vmatpush1.bf16.msra.mxu0 0
    %1513 = vmatprep.subr.bf16.mxu0 0
    %1514 = vmatpush1.bf16.msra.mxu0 0
    %1515 = vmatprep.subr.bf16.mxu0 0
    %1516 = vmatpush1.bf16.msra.mxu0 0
    %1517 = vmatprep.subr.bf16.mxu0 0
    %1518 = vmatpush1.bf16.msra.mxu0 0
    %1519 = vmatprep.subr.bf16.mxu0 0
    %1520 = vmatpush1.bf16.msra.mxu0 0
    %1521 = vmatprep.subr.bf16.mxu0 0
    %1522 = vmatpush1.bf16.msra.mxu0 0
    %1523 = vmatprep.subr.bf16.mxu0 0
    %1524 = vmatpush1.bf16.msra.mxu0 0
    %1525 = vmatprep.subr.bf16.mxu0 0
    %1526 = vmatpush1.bf16.msra.mxu0 0
    %1527 = vmatprep.subr.bf16.mxu0 0
    %1528 = vmatpush1.bf16.msra.mxu0 0
    %1529 = vmatprep.subr.bf16.mxu0 0
    %1530 = vmatpush1.bf16.msra.mxu0 0
    %1531 = vmatprep.subr.bf16.mxu0 0
    %1532 = vmatpush1.bf16.msra.mxu0 0
    %1533 = vmatprep.subr.bf16.mxu0 0
    %1534 = vmatpush1.bf16.msra.mxu0 0
    %1535 = vmatprep.mubr.bf16.mxu0 0
    %1536 = vmatmul.mubr.bf16.gmra.mrb[0].mxu0 %v52
    %v1537 = vpop.f32.mrb[0].mxu0
    %v1538 = vadd.f32 0.0, %v1537
    %v1539 = vpop.f32.mrb[0].mxu0
    %v1540 = vpop.f32.mrb[0].mxu0
    %v1541 = vadd.f32 0.0, %v1540
    %v1542 = vpop.f32.mrb[0].mxu0
    %1543 = vdwg.mxu0
    %v1544 = vpack.c.bf16 %v1422, %v1422
    %v1545 = vpack.c.bf16 %v1425, %v1425
    %v1546 = vpack.c.bf16 %v1480, %v1480
    %v1547 = vpack.c.bf16 %v1483, %v1483
    %v1548 = vpack.c.bf16 %v1538, %v1538
    %v1549 = vpack.c.bf16 %v1541, %v1541
    %v1551 = vsel %vm215, %v1544, 0
    %v1554 = vsel %vm215, %v1546, 0
    %1556 = vmatprep.subr.bf16.mxu0 0
    %1557 = vmatpush1.bf16.xpose.msra.mxu0 %v1554
    %1558 = vmatprep.subr.bf16.mxu0 0
    %1559 = vmatpush1.bf16.xpose.msra.mxu0 0
    %1560 = vmatprep.subr.bf16.mxu0 0
    %1561 = vmatpush1.bf16.xpose.msra.mxu0 0
    %1562 = vmatprep.subr.bf16.mxu0 0
    %1563 = vmatpush1.bf16.xpose.msra.mxu0 0
    %1564 = vmatprep.subr.bf16.mxu0 0
    %1565 = vmatpush1.bf16.xpose.msra.mxu0 0
    %1566 = vmatprep.subr.bf16.mxu0 0
    %1567 = vmatpush1.bf16.xpose.msra.mxu0 0
    %1568 = vmatprep.subr.bf16.mxu0 0
    %1569 = vmatpush1.bf16.xpose.msra.mxu0 0
    %1570 = vmatprep.subr.bf16.mxu0 0
    %1571 = vmatpush1.bf16.xpose.msra.mxu0 0
    %1572 = vmatprep.subr.bf16.mxu0 0
    %1573 = vmatpush1.bf16.xpose.msra.mxu0 0
    %1574 = vmatprep.subr.bf16.mxu0 0
    %1575 = vmatpush1.bf16.xpose.msra.mxu0 0
    %1576 = vmatprep.subr.bf16.mxu0 0
    %1577 = vmatpush1.bf16.xpose.msra.mxu0 0
    %1578 = vmatprep.subr.bf16.mxu0 0
    %1579 = vmatpush1.bf16.xpose.msra.mxu0 0
    %1580 = vmatprep.subr.bf16.mxu0 0
    %1581 = vmatpush1.bf16.xpose.msra.mxu0 0
    %1582 = vmatprep.subr.bf16.mxu0 0
    %1583 = vmatpush1.bf16.xpose.msra.mxu0 0
    %1584 = vmatprep.subr.bf16.mxu0 0
    %1585 = vmatpush1.bf16.xpose.msra.mxu0 0
    %1586 = vmatprep.subr.bf16.mxu0 0
    %1587 = vmatpush1.bf16.xpose.msra.mxu0 0
    %1588 = vmatprep.mubr.bf16.mxu0 0
    %1589 = vmatmul.mubr.bf16.gmra.mrb[0].mxu0 %v1551
    %v1590 = vpop.f32.mrb[0].mxu0
    %v1591 = vadd.f32 0.0, %v1590
    %v1592 = vpop.f32.mrb[0].mxu0
    %v1593 = vpop.f32.mrb[0].mxu0
    %v1594 = vpop.f32.mrb[0].mxu0
    %1595 = vdwg.mxu0
    %v1597 = vsel %vm215, %v1545, 0
    %v1600 = vsel %vm215, %v1547, 0
    %1602 = vmatprep.subr.bf16.mxu0 0
    %1603 = vmatpush1.bf16.xpose.msra.mxu0 %v1600
    %1604 = vmatprep.subr.bf16.mxu0 0
    %1605 = vmatpush1.bf16.xpose.msra.mxu0 0
    %1606 = vmatprep.subr.bf16.mxu0 0
    %1607 = vmatpush1.bf16.xpose.msra.mxu0 0
    %1608 = vmatprep.subr.bf16.mxu0 0
    %1609 = vmatpush1.bf16.xpose.msra.mxu0 0
    %1610 = vmatprep.subr.bf16.mxu0 0
    %1611 = vmatpush1.bf16.xpose.msra.mxu0 0
    %1612 = vmatprep.subr.bf16.mxu0 0
    %1613 = vmatpush1.bf16.xpose.msra.mxu0 0
    %1614 = vmatprep.subr.bf16.mxu0 0
    %1615 = vmatpush1.bf16.xpose.msra.mxu0 0
    %1616 = vmatprep.subr.bf16.mxu0 0
    %1617 = vmatpush1.bf16.xpose.msra.mxu0 0
    %1618 = vmatprep.subr.bf16.mxu0 0
    %1619 = vmatpush1.bf16.xpose.msra.mxu0 0
    %1620 = vmatprep.subr.bf16.mxu0 0
    %1621 = vmatpush1.bf16.xpose.msra.mxu0 0
    %1622 = vmatprep.subr.bf16.mxu0 0
    %1623 = vmatpush1.bf16.xpose.msra.mxu0 0
    %1624 = vmatprep.subr.bf16.mxu0 0
    %1625 = vmatpush1.bf16.xpose.msra.mxu0 0
    %1626 = vmatprep.subr.bf16.mxu0 0
    %1627 = vmatpush1.bf16.xpose.msra.mxu0 0
    %1628 = vmatprep.subr.bf16.mxu0 0
    %1629 = vmatpush1.bf16.xpose.msra.mxu0 0
    %1630 = vmatprep.subr.bf16.mxu0 0
    %1631 = vmatpush1.bf16.xpose.msra.mxu0 0
    %1632 = vmatprep.subr.bf16.mxu0 0
    %1633 = vmatpush1.bf16.xpose.msra.mxu0 0
    %1634 = vmatprep.mubr.bf16.mxu0 0
    %1635 = vmatmul.mubr.bf16.gmra.mrb[0].mxu0 %v1597
    %v1636 = vpop.f32.mrb[0].mxu0
    %v1637 = vadd.f32 0.0, %v1636
    %v1638 = vpop.f32.mrb[0].mxu0
    %v1639 = vpop.f32.mrb[0].mxu0
    %v1640 = vpop.f32.mrb[0].mxu0
    %1641 = vdwg.mxu0
    %v1642 = vsel %vm308, %v1591, -inf
    %1643 = vmax.xlane.f32.xlu0 %v1642
    %v1644 = vpop.xlane.xlu0 %1643
    %v1645 = vsel %vm308, %v1637, -inf
    %1646 = vmax.xlane.f32.xlu0 %v1645
    %v1647 = vpop.xlane.xlu0 %1646
    %v1648 = vsub.f32 %v1591, %v1644
    %v1649 = vsub.f32 %v1637, %v1647
    %v1650 = vmul.f32 %v1648, 1.442695
    %v1651 = vpow.pop %v1650
    %v1652 = vmul.f32 %v1649, 1.442695
    %v1653 = vpow.pop %v1652
    %v1654 = vsel %vm308, %v1651, 0.0
    %1655 = vadd.xlane.f32.xlu0 %v1654
    %v1656 = vpop.xlane.xlu0 %1655
    %v1657 = vsel %vm308, %v1653, 0.0
    %1658 = vadd.xlane.f32.xlu0 %v1657
    %v1659 = vpop.xlane.xlu0 %1658
    %v1660 = vpack.c.bf16 %v1651, %v1651
    %v1661 = vpack.c.bf16 %v1653, %v1653
    %v1663 = vsel %vm308, %v1660, 0
    %v1666 = vsel %vm332, %v1548, 0
    %1668 = vmatprep.subr.bf16.mxu0 0
    %1669 = vmatpush1.bf16.msra.mxu0 %v1666
    %1670 = vmatprep.subr.bf16.mxu0 0
    %1671 = vmatpush1.bf16.msra.mxu0 0
    %1672 = vmatprep.subr.bf16.mxu0 0
    %1673 = vmatpush1.bf16.msra.mxu0 0
    %1674 = vmatprep.subr.bf16.mxu0 0
    %1675 = vmatpush1.bf16.msra.mxu0 0
    %1676 = vmatprep.subr.bf16.mxu0 0
    %1677 = vmatpush1.bf16.msra.mxu0 0
    %1678 = vmatprep.subr.bf16.mxu0 0
    %1679 = vmatpush1.bf16.msra.mxu0 0
    %1680 = vmatprep.subr.bf16.mxu0 0
    %1681 = vmatpush1.bf16.msra.mxu0 0
    %1682 = vmatprep.subr.bf16.mxu0 0
    %1683 = vmatpush1.bf16.msra.mxu0 0
    %1684 = vmatprep.subr.bf16.mxu0 0
    %1685 = vmatpush1.bf16.msra.mxu0 0
    %1686 = vmatprep.subr.bf16.mxu0 0
    %1687 = vmatpush1.bf16.msra.mxu0 0
    %1688 = vmatprep.subr.bf16.mxu0 0
    %1689 = vmatpush1.bf16.msra.mxu0 0
    %1690 = vmatprep.subr.bf16.mxu0 0
    %1691 = vmatpush1.bf16.msra.mxu0 0
    %1692 = vmatprep.subr.bf16.mxu0 0
    %1693 = vmatpush1.bf16.msra.mxu0 0
    %1694 = vmatprep.subr.bf16.mxu0 0
    %1695 = vmatpush1.bf16.msra.mxu0 0
    %1696 = vmatprep.subr.bf16.mxu0 0
    %1697 = vmatpush1.bf16.msra.mxu0 0
    %1698 = vmatprep.subr.bf16.mxu0 0
    %1699 = vmatpush1.bf16.msra.mxu0 0
    %1700 = vmatprep.mubr.bf16.mxu0 0
    %1701 = vmatmul.mubr.bf16.gmra.mrb[0].mxu0 %v1663
    %v1702 = vpop.f32.mrb[0].mxu0
    %v1703 = vadd.f32 0.0, %v1702
    %v1704 = vpop.f32.mrb[0].mxu0
    %v1705 = vpop.f32.mrb[0].mxu0
    %v1706 = vpop.f32.mrb[0].mxu0
    %1707 = vdwg.mxu0
    %v1709 = vsel %vm308, %v1661, 0
    %v1712 = vsel %vm332, %v1549, 0
    %1714 = vmatprep.subr.bf16.mxu0 0
    %1715 = vmatpush1.bf16.msra.mxu0 %v1712
    %1716 = vmatprep.subr.bf16.mxu0 0
    %1717 = vmatpush1.bf16.msra.mxu0 0
    %1718 = vmatprep.subr.bf16.mxu0 0
    %1719 = vmatpush1.bf16.msra.mxu0 0
    %1720 = vmatprep.subr.bf16.mxu0 0
    %1721 = vmatpush1.bf16.msra.mxu0 0
    %1722 = vmatprep.subr.bf16.mxu0 0
    %1723 = vmatpush1.bf16.msra.mxu0 0
    %1724 = vmatprep.subr.bf16.mxu0 0
    %1725 = vmatpush1.bf16.msra.mxu0 0
    %1726 = vmatprep.subr.bf16.mxu0 0
    %1727 = vmatpush1.bf16.msra.mxu0 0
    %1728 = vmatprep.subr.bf16.mxu0 0
    %1729 = vmatpush1.bf16.msra.mxu0 0
    %1730 = vmatprep.subr.bf16.mxu0 0
    %1731 = vmatpush1.bf16.msra.mxu0 0
    %1732 = vmatprep.subr.bf16.mxu0 0
    %1733 = vmatpush1.bf16.msra.mxu0 0
    %1734 = vmatprep.subr.bf16.mxu0 0
    %1735 = vmatpush1.bf16.msra.mxu0 0
    %1736 = vmatprep.subr.bf16.mxu0 0
    %1737 = vmatpush1.bf16.msra.mxu0 0
    %1738 = vmatprep.subr.bf16.mxu0 0
    %1739 = vmatpush1.bf16.msra.mxu0 0
    %1740 = vmatprep.subr.bf16.mxu0 0
    %1741 = vmatpush1.bf16.msra.mxu0 0
    %1742 = vmatprep.subr.bf16.mxu0 0
    %1743 = vmatpush1.bf16.msra.mxu0 0
    %1744 = vmatprep.subr.bf16.mxu0 0
    %1745 = vmatpush1.bf16.msra.mxu0 0
    %1746 = vmatprep.mubr.bf16.mxu0 0
    %1747 = vmatmul.mubr.bf16.gmra.mrb[0].mxu0 %v1709
    %v1748 = vpop.f32.mrb[0].mxu0
    %v1749 = vadd.f32 0.0, %v1748
    %v1750 = vpop.f32.mrb[0].mxu0
    %v1751 = vpop.f32.mrb[0].mxu0
    %v1752 = vpop.f32.mrb[0].mxu0
    %1753 = vdwg.mxu0
    %v1754 = vrcp.pop %v1656
    %v1755 = vrcp.pop %v1659
    %v1756 = vmul.f32 %v1703, %v1754
    %v1757 = vmul.f32 %v1749, %v1755
    %v1758 = vld [vmem:[#allocation2] sm:$0xff]
    %v1759 = vld [vmem:[#allocation2 + $0x8] sm:$0xff]
    %v1760 = vpack.c.bf16 %v1757, %v1756
    %s1761 = scalar_lea.vmem %s4, 6
    %v1762 = vld [vmem:[%s1761] sm:$0x3]
    %v1764 = vsel %vm215, %v1760, 0
    %v1767 = vsel %vm433, %v1762, 0
    %1769 = vmatprep.subr.bf16.mxu0 0
    %1770 = vmatpush1.bf16.msra.mxu0 %v1767
    %1771 = vmatprep.subr.bf16.mxu0 0
    %1772 = vmatpush1.bf16.msra.mxu0 0
    %1773 = vmatprep.subr.bf16.mxu0 0
    %1774 = vmatpush1.bf16.msra.mxu0 0
    %1775 = vmatprep.subr.bf16.mxu0 0
    %1776 = vmatpush1.bf16.msra.mxu0 0
    %1777 = vmatprep.subr.bf16.mxu0 0
    %1778 = vmatpush1.bf16.msra.mxu0 0
    %1779 = vmatprep.subr.bf16.mxu0 0
    %1780 = vmatpush1.bf16.msra.mxu0 0
    %1781 = vmatprep.subr.bf16.mxu0 0
    %1782 = vmatpush1.bf16.msra.mxu0 0
    %1783 = vmatprep.subr.bf16.mxu0 0
    %1784 = vmatpush1.bf16.msra.mxu0 0
    %1785 = vmatprep.subr.bf16.mxu0 0
    %1786 = vmatpush1.bf16.msra.mxu0 0
    %1787 = vmatprep.subr.bf16.mxu0 0
    %1788 = vmatpush1.bf16.msra.mxu0 0
    %1789 = vmatprep.subr.bf16.mxu0 0
    %1790 = vmatpush1.bf16.msra.mxu0 0
    %1791 = vmatprep.subr.bf16.mxu0 0
    %1792 = vmatpush1.bf16.msra.mxu0 0
    %1793 = vmatprep.subr.bf16.mxu0 0
    %1794 = vmatpush1.bf16.msra.mxu0 0
    %1795 = vmatprep.subr.bf16.mxu0 0
    %1796 = vmatpush1.bf16.msra.mxu0 0
    %1797 = vmatprep.subr.bf16.mxu0 0
    %1798 = vmatpush1.bf16.msra.mxu0 0
    %1799 = vmatprep.subr.bf16.mxu0 0
    %1800 = vmatpush1.bf16.msra.mxu0 0
    %1801 = vmatprep.mubr.bf16.mxu0 0
    %1802 = vmatmul.mubr.bf16.gmra.mrb[0].mxu0 %v1764
    %v1803 = vpop.f32.mrb[0].mxu0
    %v1804 = vadd.f32 0.0, %v1803
    %v1805 = vpop.f32.mrb[0].mxu0
    %v1806 = vpop.f32.mrb[0].mxu0
    %v1807 = vadd.f32 0.0, %v1806
    %v1808 = vpop.f32.mrb[0].mxu0
    %1809 = vdwg.mxu0
    %v1810 = vadd.f32 %v1758, %v1804
    %v1811 = vadd.f32 %v1759, %v1807
    %1812 = vst.msk [vmem:[#allocation2] sm:$0xff] %vm27, %v1810
    %1813 = vst.msk [vmem:[#allocation2 + $0x8] sm:$0xff] %vm27, %v1811
    %s1814 = scalar_lea.vmem %s1, 64
    %v1815 = vld [vmem:[%s1814] sm:$0xf]
    %v1816 = vld [vmem:[%s1814 + $0x4] sm:$0xf]
    %v1817 = vld [vmem:[%s1814 + $0x8] sm:$0xf]
    %v1818 = vld [vmem:[%s1814 + $0xc] sm:$0xf]
    %v1823 = vunpack.c.l.b16 %v1815
    %v1824 = vunpack.c.l.b16 %v1816
    %v1825 = vunpack.c.l.b16 %v1817
    %v1826 = vunpack.c.l.b16 %v1818
    %v1827 = vpack.c.b16 %v1824, %v1823
    %v1828 = vpack.c.b16 %v1826, %v1825
    %1831 = vmatprep.subr.bf16.mxu0 0
    %1832 = vmatpush1.bf16.msra.mxu0 %v1827
    %1833 = vmatprep.subr.bf16.mxu0 0
    %1834 = vmatpush1.bf16.msra.mxu0 %v1828
    %1835 = vmatprep.subr.bf16.mxu0 0
    %1836 = vmatpush1.bf16.msra.mxu0 0
    %1837 = vmatprep.subr.bf16.mxu0 0
    %1838 = vmatpush1.bf16.msra.mxu0 0
    %1839 = vmatprep.subr.bf16.mxu0 0
    %1840 = vmatpush1.bf16.msra.mxu0 0
    %1841 = vmatprep.subr.bf16.mxu0 0
    %1842 = vmatpush1.bf16.msra.mxu0 0
    %1843 = vmatprep.subr.bf16.mxu0 0
    %1844 = vmatpush1.bf16.msra.mxu0 0
    %1845 = vmatprep.subr.bf16.mxu0 0
    %1846 = vmatpush1.bf16.msra.mxu0 0
    %1847 = vmatprep.subr.bf16.mxu0 0
    %1848 = vmatpush1.bf16.msra.mxu0 0
    %1849 = vmatprep.subr.bf16.mxu0 0
    %1850 = vmatpush1.bf16.msra.mxu0 0
    %1851 = vmatprep.subr.bf16.mxu0 0
    %1852 = vmatpush1.bf16.msra.mxu0 0
    %1853 = vmatprep.subr.bf16.mxu0 0
    %1854 = vmatpush1.bf16.msra.mxu0 0
    %1855 = vmatprep.subr.bf16.mxu0 0
    %1856 = vmatpush1.bf16.msra.mxu0 0
    %1857 = vmatprep.subr.bf16.mxu0 0
    %1858 = vmatpush1.bf16.msra.mxu0 0
    %1859 = vmatprep.subr.bf16.mxu0 0
    %1860 = vmatpush1.bf16.msra.mxu0 0
    %1861 = vmatprep.subr.bf16.mxu0 0
    %1862 = vmatpush1.bf16.msra.mxu0 0
    %1863 = vmatprep.mubr.bf16.mxu0 0
    %1864 = vmatmul.mubr.bf16.gmra.mrb[0].mxu0 %v52
    %v1865 = vpop.f32.mrb[0].mxu0
    %v1866 = vadd.f32 0.0, %v1865
    %v1867 = vpop.f32.mrb[0].mxu0
    %v1868 = vpop.f32.mrb[0].mxu0
    %v1869 = vadd.f32 0.0, %v1868
    %v1870 = vpop.f32.mrb[0].mxu0
    %1871 = vdwg.mxu0
    %s1872 = scalar_lea.vmem %s2, 64
    %v1873 = vld [vmem:[%s1872] sm:$0xf]
    %v1874 = vld [vmem:[%s1872 + $0x4] sm:$0xf]
    %v1875 = vld [vmem:[%s1872 + $0x8] sm:$0xf]
    %v1876 = vld [vmem:[%s1872 + $0xc] sm:$0xf]
    %v1881 = vunpack.c.l.b16 %v1873
    %v1882 = vunpack.c.l.b16 %v1874
    %v1883 = vunpack.c.l.b16 %v1875
    %v1884 = vunpack.c.l.b16 %v1876
    %v1885 = vpack.c.b16 %v1882, %v1881
    %v1886 = vpack.c.b16 %v1884, %v1883
    %1889 = vmatprep.subr.bf16.mxu0 0
    %1890 = vmatpush1.bf16.msra.mxu0 %v1885
    %1891 = vmatprep.subr.bf16.mxu0 0
    %1892 = vmatpush1.bf16.msra.mxu0 %v1886
    %1893 = vmatprep.subr.bf16.mxu0 0
    %1894 = vmatpush1.bf16.msra.mxu0 0
    %1895 = vmatprep.subr.bf16.mxu0 0
    %1896 = vmatpush1.bf16.msra.mxu0 0
    %1897 = vmatprep.subr.bf16.mxu0 0
    %1898 = vmatpush1.bf16.msra.mxu0 0
    %1899 = vmatprep.subr.bf16.mxu0 0
    %1900 = vmatpush1.bf16.msra.mxu0 0
    %1901 = vmatprep.subr.bf16.mxu0 0
    %1902 = vmatpush1.bf16.msra.mxu0 0
    %1903 = vmatprep.subr.bf16.mxu0 0
    %1904 = vmatpush1.bf16.msra.mxu0 0
    %1905 = vmatprep.subr.bf16.mxu0 0
    %1906 = vmatpush1.bf16.msra.mxu0 0
    %1907 = vmatprep.subr.bf16.mxu0 0
    %1908 = vmatpush1.bf16.msra.mxu0 0
    %1909 = vmatprep.subr.bf16.mxu0 0
    %1910 = vmatpush1.bf16.msra.mxu0 0
    %1911 = vmatprep.subr.bf16.mxu0 0
    %1912 = vmatpush1.bf16.msra.mxu0 0
    %1913 = vmatprep.subr.bf16.mxu0 0
    %1914 = vmatpush1.bf16.msra.mxu0 0
    %1915 = vmatprep.subr.bf16.mxu0 0
    %1916 = vmatpush1.bf16.msra.mxu0 0
    %1917 = vmatprep.subr.bf16.mxu0 0
    %1918 = vmatpush1.bf16.msra.mxu0 0
    %1919 = vmatprep.subr.bf16.mxu0 0
    %1920 = vmatpush1.bf16.msra.mxu0 0
    %1921 = vmatprep.mubr.bf16.mxu0 0
    %1922 = vmatmul.mubr.bf16.gmra.mrb[0].mxu0 %v52
    %v1923 = vpop.f32.mrb[0].mxu0
    %v1924 = vadd.f32 0.0, %v1923
    %v1925 = vpop.f32.mrb[0].mxu0
    %v1926 = vpop.f32.mrb[0].mxu0
    %v1927 = vadd.f32 0.0, %v1926
    %v1928 = vpop.f32.mrb[0].mxu0
    %1929 = vdwg.mxu0
    %s1930 = scalar_lea.vmem %s3, 64
    %v1931 = vld [vmem:[%s1930] sm:$0xf]
    %v1932 = vld [vmem:[%s1930 + $0x4] sm:$0xf]
    %v1933 = vld [vmem:[%s1930 + $0x8] sm:$0xf]
    %v1934 = vld [vmem:[%s1930 + $0xc] sm:$0xf]
    %v1939 = vunpack.c.l.b16 %v1931
    %v1940 = vunpack.c.l.b16 %v1932
    %v1941 = vunpack.c.l.b16 %v1933
    %v1942 = vunpack.c.l.b16 %v1934
    %v1943 = vpack.c.b16 %v1940, %v1939
    %v1944 = vpack.c.b16 %v1942, %v1941
    %1947 = vmatprep.subr.bf16.mxu0 0
    %1948 = vmatpush1.bf16.msra.mxu0 %v1943
    %1949 = vmatprep.subr.bf16.mxu0 0
    %1950 = vmatpush1.bf16.msra.mxu0 %v1944
    %1951 = vmatprep.subr.bf16.mxu0 0
    %1952 = vmatpush1.bf16.msra.mxu0 0
    %1953 = vmatprep.subr.bf16.mxu0 0
    %1954 = vmatpush1.bf16.msra.mxu0 0
    %1955 = vmatprep.subr.bf16.mxu0 0
    %1956 = vmatpush1.bf16.msra.mxu0 0
    %1957 = vmatprep.subr.bf16.mxu0 0
    %1958 = vmatpush1.bf16.msra.mxu0 0
    %1959 = vmatprep.subr.bf16.mxu0 0
    %1960 = vmatpush1.bf16.msra.mxu0 0
    %1961 = vmatprep.subr.bf16.mxu0 0
    %1962 = vmatpush1.bf16.msra.mxu0 0
    %1963 = vmatprep.subr.bf16.mxu0 0
    %1964 = vmatpush1.bf16.msra.mxu0 0
    %1965 = vmatprep.subr.bf16.mxu0 0
    %1966 = vmatpush1.bf16.msra.mxu0 0
    %1967 = vmatprep.subr.bf16.mxu0 0
    %1968 = vmatpush1.bf16.msra.mxu0 0
    %1969 = vmatprep.subr.bf16.mxu0 0
    %1970 = vmatpush1.bf16.msra.mxu0 0
    %1971 = vmatprep.subr.bf16.mxu0 0
    %1972 = vmatpush1.bf16.msra.mxu0 0
    %1973 = vmatprep.subr.bf16.mxu0 0
    %1974 = vmatpush1.bf16.msra.mxu0 0
    %1975 = vmatprep.subr.bf16.mxu0 0
    %1976 = vmatpush1.bf16.msra.mxu0 0
    %1977 = vmatprep.subr.bf16.mxu0 0
    %1978 = vmatpush1.bf16.msra.mxu0 0
    %1979 = vmatprep.mubr.bf16.mxu0 0
    %1980 = vmatmul.mubr.bf16.gmra.mrb[0].mxu0 %v52
    %v1981 = vpop.f32.mrb[0].mxu0
    %v1982 = vadd.f32 0.0, %v1981
    %v1983 = vpop.f32.mrb[0].mxu0
    %v1984 = vpop.f32.mrb[0].mxu0
    %v1985 = vadd.f32 0.0, %v1984
    %v1986 = vpop.f32.mrb[0].mxu0
    %1987 = vdwg.mxu0
    %v1988 = vpack.c.bf16 %v1866, %v1866
    %v1989 = vpack.c.bf16 %v1869, %v1869
    %v1990 = vpack.c.bf16 %v1924, %v1924
    %v1991 = vpack.c.bf16 %v1927, %v1927
    %v1992 = vpack.c.bf16 %v1982, %v1982
    %v1993 = vpack.c.bf16 %v1985, %v1985
    %v1995 = vsel %vm215, %v1988, 0
    %v1998 = vsel %vm215, %v1990, 0
    %2000 = vmatprep.subr.bf16.mxu0 0
    %2001 = vmatpush1.bf16.xpose.msra.mxu0 %v1998
    %2002 = vmatprep.subr.bf16.mxu0 0
    %2003 = vmatpush1.bf16.xpose.msra.mxu0 0
    %2004 = vmatprep.subr.bf16.mxu0 0
    %2005 = vmatpush1.bf16.xpose.msra.mxu0 0
    %2006 = vmatprep.subr.bf16.mxu0 0
    %2007 = vmatpush1.bf16.xpose.msra.mxu0 0
    %2008 = vmatprep.subr.bf16.mxu0 0
    %2009 = vmatpush1.bf16.xpose.msra.mxu0 0
    %2010 = vmatprep.subr.bf16.mxu0 0
    %2011 = vmatpush1.bf16.xpose.msra.mxu0 0
    %2012 = vmatprep.subr.bf16.mxu0 0
    %2013 = vmatpush1.bf16.xpose.msra.mxu0 0
    %2014 = vmatprep.subr.bf16.mxu0 0
    %2015 = vmatpush1.bf16.xpose.msra.mxu0 0
    %2016 = vmatprep.subr.bf16.mxu0 0
    %2017 = vmatpush1.bf16.xpose.msra.mxu0 0
    %2018 = vmatprep.subr.bf16.mxu0 0
    %2019 = vmatpush1.bf16.xpose.msra.mxu0 0
    %2020 = vmatprep.subr.bf16.mxu0 0
    %2021 = vmatpush1.bf16.xpose.msra.mxu0 0
    %2022 = vmatprep.subr.bf16.mxu0 0
    %2023 = vmatpush1.bf16.xpose.msra.mxu0 0
    %2024 = vmatprep.subr.bf16.mxu0 0
    %2025 = vmatpush1.bf16.xpose.msra.mxu0 0
    %2026 = vmatprep.subr.bf16.mxu0 0
    %2027 = vmatpush1.bf16.xpose.msra.mxu0 0
    %2028 = vmatprep.subr.bf16.mxu0 0
    %2029 = vmatpush1.bf16.xpose.msra.mxu0 0
    %2030 = vmatprep.subr.bf16.mxu0 0
    %2031 = vmatpush1.bf16.xpose.msra.mxu0 0
    %2032 = vmatprep.mubr.bf16.mxu0 0
    %2033 = vmatmul.mubr.bf16.gmra.mrb[0].mxu0 %v1995
    %v2034 = vpop.f32.mrb[0].mxu0
    %v2035 = vadd.f32 0.0, %v2034
    %v2036 = vpop.f32.mrb[0].mxu0
    %v2037 = vpop.f32.mrb[0].mxu0
    %v2038 = vpop.f32.mrb[0].mxu0
    %2039 = vdwg.mxu0
    %v2041 = vsel %vm215, %v1989, 0
    %v2044 = vsel %vm215, %v1991, 0
    %2046 = vmatprep.subr.bf16.mxu0 0
    %2047 = vmatpush1.bf16.xpose.msra.mxu0 %v2044
    %2048 = vmatprep.subr.bf16.mxu0 0
    %2049 = vmatpush1.bf16.xpose.msra.mxu0 0
    %2050 = vmatprep.subr.bf16.mxu0 0
    %2051 = vmatpush1.bf16.xpose.msra.mxu0 0
    %2052 = vmatprep.subr.bf16.mxu0 0
    %2053 = vmatpush1.bf16.xpose.msra.mxu0 0
    %2054 = vmatprep.subr.bf16.mxu0 0
    %2055 = vmatpush1.bf16.xpose.msra.mxu0 0
    %2056 = vmatprep.subr.bf16.mxu0 0
    %2057 = vmatpush1.bf16.xpose.msra.mxu0 0
    %2058 = vmatprep.subr.bf16.mxu0 0
    %2059 = vmatpush1.bf16.xpose.msra.mxu0 0
    %2060 = vmatprep.subr.bf16.mxu0 0
    %2061 = vmatpush1.bf16.xpose.msra.mxu0 0
    %2062 = vmatprep.subr.bf16.mxu0 0
    %2063 = vmatpush1.bf16.xpose.msra.mxu0 0
    %2064 = vmatprep.subr.bf16.mxu0 0
    %2065 = vmatpush1.bf16.xpose.msra.mxu0 0
    %2066 = vmatprep.subr.bf16.mxu0 0
    %2067 = vmatpush1.bf16.xpose.msra.mxu0 0
    %2068 = vmatprep.subr.bf16.mxu0 0
    %2069 = vmatpush1.bf16.xpose.msra.mxu0 0
    %2070 = vmatprep.subr.bf16.mxu0 0
    %2071 = vmatpush1.bf16.xpose.msra.mxu0 0
    %2072 = vmatprep.subr.bf16.mxu0 0
    %2073 = vmatpush1.bf16.xpose.msra.mxu0 0
    %2074 = vmatprep.subr.bf16.mxu0 0
    %2075 = vmatpush1.bf16.xpose.msra.mxu0 0
    %2076 = vmatprep.subr.bf16.mxu0 0
    %2077 = vmatpush1.bf16.xpose.msra.mxu0 0
    %2078 = vmatprep.mubr.bf16.mxu0 0
    %2079 = vmatmul.mubr.bf16.gmra.mrb[0].mxu0 %v2041
    %v2080 = vpop.f32.mrb[0].mxu0
    %v2081 = vadd.f32 0.0, %v2080
    %v2082 = vpop.f32.mrb[0].mxu0
    %v2083 = vpop.f32.mrb[0].mxu0
    %v2084 = vpop.f32.mrb[0].mxu0
    %2085 = vdwg.mxu0
    %v2086 = vsel %vm308, %v2035, -inf
    %2087 = vmax.xlane.f32.xlu0 %v2086
    %v2088 = vpop.xlane.xlu0 %2087
    %v2089 = vsel %vm308, %v2081, -inf
    %2090 = vmax.xlane.f32.xlu0 %v2089
    %v2091 = vpop.xlane.xlu0 %2090
    %v2092 = vsub.f32 %v2035, %v2088
    %v2093 = vsub.f32 %v2081, %v2091
    %v2094 = vmul.f32 %v2092, 1.442695
    %v2095 = vpow.pop %v2094
    %v2096 = vmul.f32 %v2093, 1.442695
    %v2097 = vpow.pop %v2096
    %v2098 = vsel %vm308, %v2095, 0.0
    %2099 = vadd.xlane.f32.xlu0 %v2098
    %v2100 = vpop.xlane.xlu0 %2099
    %v2101 = vsel %vm308, %v2097, 0.0
    %2102 = vadd.xlane.f32.xlu0 %v2101
    %v2103 = vpop.xlane.xlu0 %2102
    %v2104 = vpack.c.bf16 %v2095, %v2095
    %v2105 = vpack.c.bf16 %v2097, %v2097
    %v2107 = vsel %vm308, %v2104, 0
    %v2110 = vsel %vm332, %v1992, 0
    %2112 = vmatprep.subr.bf16.mxu0 0
    %2113 = vmatpush1.bf16.msra.mxu0 %v2110
    %2114 = vmatprep.subr.bf16.mxu0 0
    %2115 = vmatpush1.bf16.msra.mxu0 0
    %2116 = vmatprep.subr.bf16.mxu0 0
    %2117 = vmatpush1.bf16.msra.mxu0 0
    %2118 = vmatprep.subr.bf16.mxu0 0
    %2119 = vmatpush1.bf16.msra.mxu0 0
    %2120 = vmatprep.subr.bf16.mxu0 0
    %2121 = vmatpush1.bf16.msra.mxu0 0
    %2122 = vmatprep.subr.bf16.mxu0 0
    %2123 = vmatpush1.bf16.msra.mxu0 0
    %2124 = vmatprep.subr.bf16.mxu0 0
    %2125 = vmatpush1.bf16.msra.mxu0 0
    %2126 = vmatprep.subr.bf16.mxu0 0
    %2127 = vmatpush1.bf16.msra.mxu0 0
    %2128 = vmatprep.subr.bf16.mxu0 0
    %2129 = vmatpush1.bf16.msra.mxu0 0
    %2130 = vmatprep.subr.bf16.mxu0 0
    %2131 = vmatpush1.bf16.msra.mxu0 0
    %2132 = vmatprep.subr.bf16.mxu0 0
    %2133 = vmatpush1.bf16.msra.mxu0 0
    %2134 = vmatprep.subr.bf16.mxu0 0
    %2135 = vmatpush1.bf16.msra.mxu0 0
    %2136 = vmatprep.subr.bf16.mxu0 0
    %2137 = vmatpush1.bf16.msra.mxu0 0
    %2138 = vmatprep.subr.bf16.mxu0 0
    %2139 = vmatpush1.bf16.msra.mxu0 0
    %2140 = vmatprep.subr.bf16.mxu0 0
    %2141 = vmatpush1.bf16.msra.mxu0 0
    %2142 = vmatprep.subr.bf16.mxu0 0
    %2143 = vmatpush1.bf16.msra.mxu0 0
    %2144 = vmatprep.mubr.bf16.mxu0 0
    %2145 = vmatmul.mubr.bf16.gmra.mrb[0].mxu0 %v2107
    %v2146 = vpop.f32.mrb[0].mxu0
    %v2147 = vadd.f32 0.0, %v2146
    %v2148 = vpop.f32.mrb[0].mxu0
    %v2149 = vpop.f32.mrb[0].mxu0
    %v2150 = vpop.f32.mrb[0].mxu0
    %2151 = vdwg.mxu0
    %v2153 = vsel %vm308, %v2105, 0
    %v2156 = vsel %vm332, %v1993, 0
    %2158 = vmatprep.subr.bf16.mxu0 0
    %2159 = vmatpush1.bf16.msra.mxu0 %v2156
    %2160 = vmatprep.subr.bf16.mxu0 0
    %2161 = vmatpush1.bf16.msra.mxu0 0
    %2162 = vmatprep.subr.bf16.mxu0 0
    %2163 = vmatpush1.bf16.msra.mxu0 0
    %2164 = vmatprep.subr.bf16.mxu0 0
    %2165 = vmatpush1.bf16.msra.mxu0 0
    %2166 = vmatprep.subr.bf16.mxu0 0
    %2167 = vmatpush1.bf16.msra.mxu0 0
    %2168 = vmatprep.subr.bf16.mxu0 0
    %2169 = vmatpush1.bf16.msra.mxu0 0
    %2170 = vmatprep.subr.bf16.mxu0 0
    %2171 = vmatpush1.bf16.msra.mxu0 0
    %2172 = vmatprep.subr.bf16.mxu0 0
    %2173 = vmatpush1.bf16.msra.mxu0 0
    %2174 = vmatprep.subr.bf16.mxu0 0
    %2175 = vmatpush1.bf16.msra.mxu0 0
    %2176 = vmatprep.subr.bf16.mxu0 0
    %2177 = vmatpush1.bf16.msra.mxu0 0
    %2178 = vmatprep.subr.bf16.mxu0 0
    %2179 = vmatpush1.bf16.msra.mxu0 0
    %2180 = vmatprep.subr.bf16.mxu0 0
    %2181 = vmatpush1.bf16.msra.mxu0 0
    %2182 = vmatprep.subr.bf16.mxu0 0
    %2183 = vmatpush1.bf16.msra.mxu0 0
    %2184 = vmatprep.subr.bf16.mxu0 0
    %2185 = vmatpush1.bf16.msra.mxu0 0
    %2186 = vmatprep.subr.bf16.mxu0 0
    %2187 = vmatpush1.bf16.msra.mxu0 0
    %2188 = vmatprep.subr.bf16.mxu0 0
    %2189 = vmatpush1.bf16.msra.mxu0 0
    %2190 = vmatprep.mubr.bf16.mxu0 0
    %2191 = vmatmul.mubr.bf16.gmra.mrb[0].mxu0 %v2153
    %v2192 = vpop.f32.mrb[0].mxu0
    %v2193 = vadd.f32 0.0, %v2192
    %v2194 = vpop.f32.mrb[0].mxu0
    %v2195 = vpop.f32.mrb[0].mxu0
    %v2196 = vpop.f32.mrb[0].mxu0
    %2197 = vdwg.mxu0
    %v2198 = vrcp.pop %v2100
    %v2199 = vrcp.pop %v2103
    %v2200 = vmul.f32 %v2147, %v2198
    %v2201 = vmul.f32 %v2193, %v2199
    %v2202 = vld [vmem:[#allocation2] sm:$0xff]
    %v2203 = vld [vmem:[#allocation2 + $0x8] sm:$0xff]
    %v2204 = vpack.c.bf16 %v2201, %v2200
    %s2205 = scalar_lea.vmem %s4, 8
    %v2206 = vld [vmem:[%s2205] sm:$0x3]
    %v2208 = vsel %vm215, %v2204, 0
    %v2211 = vsel %vm433, %v2206, 0
    %2213 = vmatprep.subr.bf16.mxu0 0
    %2214 = vmatpush1.bf16.msra.mxu0 %v2211
    %2215 = vmatprep.subr.bf16.mxu0 0
    %2216 = vmatpush1.bf16.msra.mxu0 0
    %2217 = vmatprep.subr.bf16.mxu0 0
    %2218 = vmatpush1.bf16.msra.mxu0 0
    %2219 = vmatprep.subr.bf16.mxu0 0
    %2220 = vmatpush1.bf16.msra.mxu0 0
    %2221 = vmatprep.subr.bf16.mxu0 0
    %2222 = vmatpush1.bf16.msra.mxu0 0
    %2223 = vmatprep.subr.bf16.mxu0 0
    %2224 = vmatpush1.bf16.msra.mxu0 0
    %2225 = vmatprep.subr.bf16.mxu0 0
    %2226 = vmatpush1.bf16.msra.mxu0 0
    %2227 = vmatprep.subr.bf16.mxu0 0
    %2228 = vmatpush1.bf16.msra.mxu0 0
    %2229 = vmatprep.subr.bf16.mxu0 0
    %2230 = vmatpush1.bf16.msra.mxu0 0
    %2231 = vmatprep.subr.bf16.mxu0 0
    %2232 = vmatpush1.bf16.msra.mxu0 0
    %2233 = vmatprep.subr.bf16.mxu0 0
    %2234 = vmatpush1.bf16.msra.mxu0 0
    %2235 = vmatprep.subr.bf16.mxu0 0
    %2236 = vmatpush1.bf16.msra.mxu0 0
    %2237 = vmatprep.subr.bf16.mxu0 0
    %2238 = vmatpush1.bf16.msra.mxu0 0
    %2239 = vmatprep.subr.bf16.mxu0 0
    %2240 = vmatpush1.bf16.msra.mxu0 0
    %2241 = vmatprep.subr.bf16.mxu0 0
    %2242 = vmatpush1.bf16.msra.mxu0 0
    %2243 = vmatprep.subr.bf16.mxu0 0
    %2244 = vmatpush1.bf16.msra.mxu0 0
    %2245 = vmatprep.mubr.bf16.mxu0 0
    %2246 = vmatmul.mubr.bf16.gmra.mrb[0].mxu0 %v2208
    %v2247 = vpop.f32.mrb[0].mxu0
    %v2248 = vadd.f32 0.0, %v2247
    %v2249 = vpop.f32.mrb[0].mxu0
    %v2250 = vpop.f32.mrb[0].mxu0
    %v2251 = vadd.f32 0.0, %v2250
    %v2252 = vpop.f32.mrb[0].mxu0
    %2253 = vdwg.mxu0
    %v2254 = vadd.f32 %v2202, %v2248
    %v2255 = vadd.f32 %v2203, %v2251
    %2256 = vst.msk [vmem:[#allocation2] sm:$0xff] %vm27, %v2254
    %2257 = vst.msk [vmem:[#allocation2 + $0x8] sm:$0xff] %vm27, %v2255
    %s2258 = scalar_lea.vmem %s1, 80
    %v2259 = vld [vmem:[%s2258] sm:$0xf]
    %v2260 = vld [vmem:[%s2258 + $0x4] sm:$0xf]
    %v2261 = vld [vmem:[%s2258 + $0x8] sm:$0xf]
    %v2262 = vld [vmem:[%s2258 + $0xc] sm:$0xf]
    %v2267 = vunpack.c.l.b16 %v2259
    %v2268 = vunpack.c.l.b16 %v2260
    %v2269 = vunpack.c.l.b16 %v2261
    %v2270 = vunpack.c.l.b16 %v2262
    %v2271 = vpack.c.b16 %v2268, %v2267
    %v2272 = vpack.c.b16 %v2270, %v2269
    %2275 = vmatprep.subr.bf16.mxu0 0
    %2276 = vmatpush1.bf16.msra.mxu0 %v2271
    %2277 = vmatprep.subr.bf16.mxu0 0
    %2278 = vmatpush1.bf16.msra.mxu0 %v2272
    %2279 = vmatprep.subr.bf16.mxu0 0
    %2280 = vmatpush1.bf16.msra.mxu0 0
    %2281 = vmatprep.subr.bf16.mxu0 0
    %2282 = vmatpush1.bf16.msra.mxu0 0
    %2283 = vmatprep.subr.bf16.mxu0 0
    %2284 = vmatpush1.bf16.msra.mxu0 0
    %2285 = vmatprep.subr.bf16.mxu0 0
    %2286 = vmatpush1.bf16.msra.mxu0 0
    %2287 = vmatprep.subr.bf16.mxu0 0
    %2288 = vmatpush1.bf16.msra.mxu0 0
    %2289 = vmatprep.subr.bf16.mxu0 0
    %2290 = vmatpush1.bf16.msra.mxu0 0
    %2291 = vmatprep.subr.bf16.mxu0 0
    %2292 = vmatpush1.bf16.msra.mxu0 0
    %2293 = vmatprep.subr.bf16.mxu0 0
    %2294 = vmatpush1.bf16.msra.mxu0 0
    %2295 = vmatprep.subr.bf16.mxu0 0
    %2296 = vmatpush1.bf16.msra.mxu0 0
    %2297 = vmatprep.subr.bf16.mxu0 0
    %2298 = vmatpush1.bf16.msra.mxu0 0
    %2299 = vmatprep.subr.bf16.mxu0 0
    %2300 = vmatpush1.bf16.msra.mxu0 0
    %2301 = vmatprep.subr.bf16.mxu0 0
    %2302 = vmatpush1.bf16.msra.mxu0 0
    %2303 = vmatprep.subr.bf16.mxu0 0
    %2304 = vmatpush1.bf16.msra.mxu0 0
    %2305 = vmatprep.subr.bf16.mxu0 0
    %2306 = vmatpush1.bf16.msra.mxu0 0
    %2307 = vmatprep.mubr.bf16.mxu0 0
    %2308 = vmatmul.mubr.bf16.gmra.mrb[0].mxu0 %v52
    %v2309 = vpop.f32.mrb[0].mxu0
    %v2310 = vadd.f32 0.0, %v2309
    %v2311 = vpop.f32.mrb[0].mxu0
    %v2312 = vpop.f32.mrb[0].mxu0
    %v2313 = vadd.f32 0.0, %v2312
    %v2314 = vpop.f32.mrb[0].mxu0
    %2315 = vdwg.mxu0
    %s2316 = scalar_lea.vmem %s2, 80
    %v2317 = vld [vmem:[%s2316] sm:$0xf]
    %v2318 = vld [vmem:[%s2316 + $0x4] sm:$0xf]
    %v2319 = vld [vmem:[%s2316 + $0x8] sm:$0xf]
    %v2320 = vld [vmem:[%s2316 + $0xc] sm:$0xf]
    %v2325 = vunpack.c.l.b16 %v2317
    %v2326 = vunpack.c.l.b16 %v2318
    %v2327 = vunpack.c.l.b16 %v2319
    %v2328 = vunpack.c.l.b16 %v2320
    %v2329 = vpack.c.b16 %v2326, %v2325
    %v2330 = vpack.c.b16 %v2328, %v2327
    %2333 = vmatprep.subr.bf16.mxu0 0
    %2334 = vmatpush1.bf16.msra.mxu0 %v2329
    %2335 = vmatprep.subr.bf16.mxu0 0
    %2336 = vmatpush1.bf16.msra.mxu0 %v2330
    %2337 = vmatprep.subr.bf16.mxu0 0
    %2338 = vmatpush1.bf16.msra.mxu0 0
    %2339 = vmatprep.subr.bf16.mxu0 0
    %2340 = vmatpush1.bf16.msra.mxu0 0
    %2341 = vmatprep.subr.bf16.mxu0 0
    %2342 = vmatpush1.bf16.msra.mxu0 0
    %2343 = vmatprep.subr.bf16.mxu0 0
    %2344 = vmatpush1.bf16.msra.mxu0 0
    %2345 = vmatprep.subr.bf16.mxu0 0
    %2346 = vmatpush1.bf16.msra.mxu0 0
    %2347 = vmatprep.subr.bf16.mxu0 0
    %2348 = vmatpush1.bf16.msra.mxu0 0
    %2349 = vmatprep.subr.bf16.mxu0 0
    %2350 = vmatpush1.bf16.msra.mxu0 0
    %2351 = vmatprep.subr.bf16.mxu0 0
    %2352 = vmatpush1.bf16.msra.mxu0 0
    %2353 = vmatprep.subr.bf16.mxu0 0
    %2354 = vmatpush1.bf16.msra.mxu0 0
    %2355 = vmatprep.subr.bf16.mxu0 0
    %2356 = vmatpush1.bf16.msra.mxu0 0
    %2357 = vmatprep.subr.bf16.mxu0 0
    %2358 = vmatpush1.bf16.msra.mxu0 0
    %2359 = vmatprep.subr.bf16.mxu0 0
    %2360 = vmatpush1.bf16.msra.mxu0 0
    %2361 = vmatprep.subr.bf16.mxu0 0
    %2362 = vmatpush1.bf16.msra.mxu0 0
    %2363 = vmatprep.subr.bf16.mxu0 0
    %2364 = vmatpush1.bf16.msra.mxu0 0
    %2365 = vmatprep.mubr.bf16.mxu0 0
    %2366 = vmatmul.mubr.bf16.gmra.mrb[0].mxu0 %v52
    %v2367 = vpop.f32.mrb[0].mxu0
    %v2368 = vadd.f32 0.0, %v2367
    %v2369 = vpop.f32.mrb[0].mxu0
    %v2370 = vpop.f32.mrb[0].mxu0
    %v2371 = vadd.f32 0.0, %v2370
    %v2372 = vpop.f32.mrb[0].mxu0
    %2373 = vdwg.mxu0
    %s2374 = scalar_lea.vmem %s3, 80
    %v2375 = vld [vmem:[%s2374] sm:$0xf]
    %v2376 = vld [vmem:[%s2374 + $0x4] sm:$0xf]
    %v2377 = vld [vmem:[%s2374 + $0x8] sm:$0xf]
    %v2378 = vld [vmem:[%s2374 + $0xc] sm:$0xf]
    %v2383 = vunpack.c.l.b16 %v2375
    %v2384 = vunpack.c.l.b16 %v2376
    %v2385 = vunpack.c.l.b16 %v2377
    %v2386 = vunpack.c.l.b16 %v2378
    %v2387 = vpack.c.b16 %v2384, %v2383
    %v2388 = vpack.c.b16 %v2386, %v2385
    %2391 = vmatprep.subr.bf16.mxu0 0
    %2392 = vmatpush1.bf16.msra.mxu0 %v2387
    %2393 = vmatprep.subr.bf16.mxu0 0
    %2394 = vmatpush1.bf16.msra.mxu0 %v2388
    %2395 = vmatprep.subr.bf16.mxu0 0
    %2396 = vmatpush1.bf16.msra.mxu0 0
    %2397 = vmatprep.subr.bf16.mxu0 0
    %2398 = vmatpush1.bf16.msra.mxu0 0
    %2399 = vmatprep.subr.bf16.mxu0 0
    %2400 = vmatpush1.bf16.msra.mxu0 0
    %2401 = vmatprep.subr.bf16.mxu0 0
    %2402 = vmatpush1.bf16.msra.mxu0 0
    %2403 = vmatprep.subr.bf16.mxu0 0
    %2404 = vmatpush1.bf16.msra.mxu0 0
    %2405 = vmatprep.subr.bf16.mxu0 0
    %2406 = vmatpush1.bf16.msra.mxu0 0
    %2407 = vmatprep.subr.bf16.mxu0 0
    %2408 = vmatpush1.bf16.msra.mxu0 0
    %2409 = vmatprep.subr.bf16.mxu0 0
    %2410 = vmatpush1.bf16.msra.mxu0 0
    %2411 = vmatprep.subr.bf16.mxu0 0
    %2412 = vmatpush1.bf16.msra.mxu0 0
    %2413 = vmatprep.subr.bf16.mxu0 0
    %2414 = vmatpush1.bf16.msra.mxu0 0
    %2415 = vmatprep.subr.bf16.mxu0 0
    %2416 = vmatpush1.bf16.msra.mxu0 0
    %2417 = vmatprep.subr.bf16.mxu0 0
    %2418 = vmatpush1.bf16.msra.mxu0 0
    %2419 = vmatprep.subr.bf16.mxu0 0
    %2420 = vmatpush1.bf16.msra.mxu0 0
    %2421 = vmatprep.subr.bf16.mxu0 0
    %2422 = vmatpush1.bf16.msra.mxu0 0
    %2423 = vmatprep.mubr.bf16.mxu0 0
    %2424 = vmatmul.mubr.bf16.gmra.mrb[0].mxu0 %v52
    %v2425 = vpop.f32.mrb[0].mxu0
    %v2426 = vadd.f32 0.0, %v2425
    %v2427 = vpop.f32.mrb[0].mxu0
    %v2428 = vpop.f32.mrb[0].mxu0
    %v2429 = vadd.f32 0.0, %v2428
    %v2430 = vpop.f32.mrb[0].mxu0
    %2431 = vdwg.mxu0
    %v2432 = vpack.c.bf16 %v2310, %v2310
    %v2433 = vpack.c.bf16 %v2313, %v2313
    %v2434 = vpack.c.bf16 %v2368, %v2368
    %v2435 = vpack.c.bf16 %v2371, %v2371
    %v2436 = vpack.c.bf16 %v2426, %v2426
    %v2437 = vpack.c.bf16 %v2429, %v2429
    %v2439 = vsel %vm215, %v2432, 0
    %v2442 = vsel %vm215, %v2434, 0
    %2444 = vmatprep.subr.bf16.mxu0 0
    %2445 = vmatpush1.bf16.xpose.msra.mxu0 %v2442
    %2446 = vmatprep.subr.bf16.mxu0 0
    %2447 = vmatpush1.bf16.xpose.msra.mxu0 0
    %2448 = vmatprep.subr.bf16.mxu0 0
    %2449 = vmatpush1.bf16.xpose.msra.mxu0 0
    %2450 = vmatprep.subr.bf16.mxu0 0
    %2451 = vmatpush1.bf16.xpose.msra.mxu0 0
    %2452 = vmatprep.subr.bf16.mxu0 0
    %2453 = vmatpush1.bf16.xpose.msra.mxu0 0
    %2454 = vmatprep.subr.bf16.mxu0 0
    %2455 = vmatpush1.bf16.xpose.msra.mxu0 0
    %2456 = vmatprep.subr.bf16.mxu0 0
    %2457 = vmatpush1.bf16.xpose.msra.mxu0 0
    %2458 = vmatprep.subr.bf16.mxu0 0
    %2459 = vmatpush1.bf16.xpose.msra.mxu0 0
    %2460 = vmatprep.subr.bf16.mxu0 0
    %2461 = vmatpush1.bf16.xpose.msra.mxu0 0
    %2462 = vmatprep.subr.bf16.mxu0 0
    %2463 = vmatpush1.bf16.xpose.msra.mxu0 0
    %2464 = vmatprep.subr.bf16.mxu0 0
    %2465 = vmatpush1.bf16.xpose.msra.mxu0 0
    %2466 = vmatprep.subr.bf16.mxu0 0
    %2467 = vmatpush1.bf16.xpose.msra.mxu0 0
    %2468 = vmatprep.subr.bf16.mxu0 0
    %2469 = vmatpush1.bf16.xpose.msra.mxu0 0
    %2470 = vmatprep.subr.bf16.mxu0 0
    %2471 = vmatpush1.bf16.xpose.msra.mxu0 0
    %2472 = vmatprep.subr.bf16.mxu0 0
    %2473 = vmatpush1.bf16.xpose.msra.mxu0 0
    %2474 = vmatprep.subr.bf16.mxu0 0
    %2475 = vmatpush1.bf16.xpose.msra.mxu0 0
    %2476 = vmatprep.mubr.bf16.mxu0 0
    %2477 = vmatmul.mubr.bf16.gmra.mrb[0].mxu0 %v2439
    %v2478 = vpop.f32.mrb[0].mxu0
    %v2479 = vadd.f32 0.0, %v2478
    %v2480 = vpop.f32.mrb[0].mxu0
    %v2481 = vpop.f32.mrb[0].mxu0
    %v2482 = vpop.f32.mrb[0].mxu0
    %2483 = vdwg.mxu0
    %v2485 = vsel %vm215, %v2433, 0
    %v2488 = vsel %vm215, %v2435, 0
    %2490 = vmatprep.subr.bf16.mxu0 0
    %2491 = vmatpush1.bf16.xpose.msra.mxu0 %v2488
    %2492 = vmatprep.subr.bf16.mxu0 0
    %2493 = vmatpush1.bf16.xpose.msra.mxu0 0
    %2494 = vmatprep.subr.bf16.mxu0 0
    %2495 = vmatpush1.bf16.xpose.msra.mxu0 0
    %2496 = vmatprep.subr.bf16.mxu0 0
    %2497 = vmatpush1.bf16.xpose.msra.mxu0 0
    %2498 = vmatprep.subr.bf16.mxu0 0
    %2499 = vmatpush1.bf16.xpose.msra.mxu0 0
    %2500 = vmatprep.subr.bf16.mxu0 0
    %2501 = vmatpush1.bf16.xpose.msra.mxu0 0
    %2502 = vmatprep.subr.bf16.mxu0 0
    %2503 = vmatpush1.bf16.xpose.msra.mxu0 0
    %2504 = vmatprep.subr.bf16.mxu0 0
    %2505 = vmatpush1.bf16.xpose.msra.mxu0 0
    %2506 = vmatprep.subr.bf16.mxu0 0
    %2507 = vmatpush1.bf16.xpose.msra.mxu0 0
    %2508 = vmatprep.subr.bf16.mxu0 0
    %2509 = vmatpush1.bf16.xpose.msra.mxu0 0
    %2510 = vmatprep.subr.bf16.mxu0 0
    %2511 = vmatpush1.bf16.xpose.msra.mxu0 0
    %2512 = vmatprep.subr.bf16.mxu0 0
    %2513 = vmatpush1.bf16.xpose.msra.mxu0 0
    %2514 = vmatprep.subr.bf16.mxu0 0
    %2515 = vmatpush1.bf16.xpose.msra.mxu0 0
    %2516 = vmatprep.subr.bf16.mxu0 0
    %2517 = vmatpush1.bf16.xpose.msra.mxu0 0
    %2518 = vmatprep.subr.bf16.mxu0 0
    %2519 = vmatpush1.bf16.xpose.msra.mxu0 0
    %2520 = vmatprep.subr.bf16.mxu0 0
    %2521 = vmatpush1.bf16.xpose.msra.mxu0 0
    %2522 = vmatprep.mubr.bf16.mxu0 0
    %2523 = vmatmul.mubr.bf16.gmra.mrb[0].mxu0 %v2485
    %v2524 = vpop.f32.mrb[0].mxu0
    %v2525 = vadd.f32 0.0, %v2524
    %v2526 = vpop.f32.mrb[0].mxu0
    %v2527 = vpop.f32.mrb[0].mxu0
    %v2528 = vpop.f32.mrb[0].mxu0
    %2529 = vdwg.mxu0
    %v2530 = vsel %vm308, %v2479, -inf
    %2531 = vmax.xlane.f32.xlu0 %v2530
    %v2532 = vpop.xlane.xlu0 %2531
    %v2533 = vsel %vm308, %v2525, -inf
    %2534 = vmax.xlane.f32.xlu0 %v2533
    %v2535 = vpop.xlane.xlu0 %2534
    %v2536 = vsub.f32 %v2479, %v2532
    %v2537 = vsub.f32 %v2525, %v2535
    %v2538 = vmul.f32 %v2536, 1.442695
    %v2539 = vpow.pop %v2538
    %v2540 = vmul.f32 %v2537, 1.442695
    %v2541 = vpow.pop %v2540
    %v2542 = vsel %vm308, %v2539, 0.0
    %2543 = vadd.xlane.f32.xlu0 %v2542
    %v2544 = vpop.xlane.xlu0 %2543
    %v2545 = vsel %vm308, %v2541, 0.0
    %2546 = vadd.xlane.f32.xlu0 %v2545
    %v2547 = vpop.xlane.xlu0 %2546
    %v2548 = vpack.c.bf16 %v2539, %v2539
    %v2549 = vpack.c.bf16 %v2541, %v2541
    %v2551 = vsel %vm308, %v2548, 0
    %v2554 = vsel %vm332, %v2436, 0
    %2556 = vmatprep.subr.bf16.mxu0 0
    %2557 = vmatpush1.bf16.msra.mxu0 %v2554
    %2558 = vmatprep.subr.bf16.mxu0 0
    %2559 = vmatpush1.bf16.msra.mxu0 0
    %2560 = vmatprep.subr.bf16.mxu0 0
    %2561 = vmatpush1.bf16.msra.mxu0 0
    %2562 = vmatprep.subr.bf16.mxu0 0
    %2563 = vmatpush1.bf16.msra.mxu0 0
    %2564 = vmatprep.subr.bf16.mxu0 0
    %2565 = vmatpush1.bf16.msra.mxu0 0
    %2566 = vmatprep.subr.bf16.mxu0 0
    %2567 = vmatpush1.bf16.msra.mxu0 0
    %2568 = vmatprep.subr.bf16.mxu0 0
    %2569 = vmatpush1.bf16.msra.mxu0 0
    %2570 = vmatprep.subr.bf16.mxu0 0
    %2571 = vmatpush1.bf16.msra.mxu0 0
    %2572 = vmatprep.subr.bf16.mxu0 0
    %2573 = vmatpush1.bf16.msra.mxu0 0
    %2574 = vmatprep.subr.bf16.mxu0 0
    %2575 = vmatpush1.bf16.msra.mxu0 0
    %2576 = vmatprep.subr.bf16.mxu0 0
    %2577 = vmatpush1.bf16.msra.mxu0 0
    %2578 = vmatprep.subr.bf16.mxu0 0
    %2579 = vmatpush1.bf16.msra.mxu0 0
    %2580 = vmatprep.subr.bf16.mxu0 0
    %2581 = vmatpush1.bf16.msra.mxu0 0
    %2582 = vmatprep.subr.bf16.mxu0 0
    %2583 = vmatpush1.bf16.msra.mxu0 0
    %2584 = vmatprep.subr.bf16.mxu0 0
    %2585 = vmatpush1.bf16.msra.mxu0 0
    %2586 = vmatprep.subr.bf16.mxu0 0
    %2587 = vmatpush1.bf16.msra.mxu0 0
    %2588 = vmatprep.mubr.bf16.mxu0 0
    %2589 = vmatmul.mubr.bf16.gmra.mrb[0].mxu0 %v2551
    %v2590 = vpop.f32.mrb[0].mxu0
    %v2591 = vadd.f32 0.0, %v2590
    %v2592 = vpop.f32.mrb[0].mxu0
    %v2593 = vpop.f32.mrb[0].mxu0
    %v2594 = vpop.f32.mrb[0].mxu0
    %2595 = vdwg.mxu0
    %v2597 = vsel %vm308, %v2549, 0
    %v2600 = vsel %vm332, %v2437, 0
    %2602 = vmatprep.subr.bf16.mxu0 0
    %2603 = vmatpush1.bf16.msra.mxu0 %v2600
    %2604 = vmatprep.subr.bf16.mxu0 0
    %2605 = vmatpush1.bf16.msra.mxu0 0
    %2606 = vmatprep.subr.bf16.mxu0 0
    %2607 = vmatpush1.bf16.msra.mxu0 0
    %2608 = vmatprep.subr.bf16.mxu0 0
    %2609 = vmatpush1.bf16.msra.mxu0 0
    %2610 = vmatprep.subr.bf16.mxu0 0
    %2611 = vmatpush1.bf16.msra.mxu0 0
    %2612 = vmatprep.subr.bf16.mxu0 0
    %2613 = vmatpush1.bf16.msra.mxu0 0
    %2614 = vmatprep.subr.bf16.mxu0 0
    %2615 = vmatpush1.bf16.msra.mxu0 0
    %2616 = vmatprep.subr.bf16.mxu0 0
    %2617 = vmatpush1.bf16.msra.mxu0 0
    %2618 = vmatprep.subr.bf16.mxu0 0
    %2619 = vmatpush1.bf16.msra.mxu0 0
    %2620 = vmatprep.subr.bf16.mxu0 0
    %2621 = vmatpush1.bf16.msra.mxu0 0
    %2622 = vmatprep.subr.bf16.mxu0 0
    %2623 = vmatpush1.bf16.msra.mxu0 0
    %2624 = vmatprep.subr.bf16.mxu0 0
    %2625 = vmatpush1.bf16.msra.mxu0 0
    %2626 = vmatprep.subr.bf16.mxu0 0
    %2627 = vmatpush1.bf16.msra.mxu0 0
    %2628 = vmatprep.subr.bf16.mxu0 0
    %2629 = vmatpush1.bf16.msra.mxu0 0
    %2630 = vmatprep.subr.bf16.mxu0 0
    %2631 = vmatpush1.bf16.msra.mxu0 0
    %2632 = vmatprep.subr.bf16.mxu0 0
    %2633 = vmatpush1.bf16.msra.mxu0 0
    %2634 = vmatprep.mubr.bf16.mxu0 0
    %2635 = vmatmul.mubr.bf16.gmra.mrb[0].mxu0 %v2597
    %v2636 = vpop.f32.mrb[0].mxu0
    %v2637 = vadd.f32 0.0, %v2636
    %v2638 = vpop.f32.mrb[0].mxu0
    %v2639 = vpop.f32.mrb[0].mxu0
    %v2640 = vpop.f32.mrb[0].mxu0
    %2641 = vdwg.mxu0
    %v2642 = vrcp.pop %v2544
    %v2643 = vrcp.pop %v2547
    %v2644 = vmul.f32 %v2591, %v2642
    %v2645 = vmul.f32 %v2637, %v2643
    %v2646 = vld [vmem:[#allocation2] sm:$0xff]
    %v2647 = vld [vmem:[#allocation2 + $0x8] sm:$0xff]
    %v2648 = vpack.c.bf16 %v2645, %v2644
    %s2649 = scalar_lea.vmem %s4, 10
    %v2650 = vld [vmem:[%s2649] sm:$0x3]
    %v2652 = vsel %vm215, %v2648, 0
    %v2655 = vsel %vm433, %v2650, 0
    %2657 = vmatprep.subr.bf16.mxu0 0
    %2658 = vmatpush1.bf16.msra.mxu0 %v2655
    %2659 = vmatprep.subr.bf16.mxu0 0
    %2660 = vmatpush1.bf16.msra.mxu0 0
    %2661 = vmatprep.subr.bf16.mxu0 0
    %2662 = vmatpush1.bf16.msra.mxu0 0
    %2663 = vmatprep.subr.bf16.mxu0 0
    %2664 = vmatpush1.bf16.msra.mxu0 0
    %2665 = vmatprep.subr.bf16.mxu0 0
    %2666 = vmatpush1.bf16.msra.mxu0 0
    %2667 = vmatprep.subr.bf16.mxu0 0
    %2668 = vmatpush1.bf16.msra.mxu0 0
    %2669 = vmatprep.subr.bf16.mxu0 0
    %2670 = vmatpush1.bf16.msra.mxu0 0
    %2671 = vmatprep.subr.bf16.mxu0 0
    %2672 = vmatpush1.bf16.msra.mxu0 0
    %2673 = vmatprep.subr.bf16.mxu0 0
    %2674 = vmatpush1.bf16.msra.mxu0 0
    %2675 = vmatprep.subr.bf16.mxu0 0
    %2676 = vmatpush1.bf16.msra.mxu0 0
    %2677 = vmatprep.subr.bf16.mxu0 0
    %2678 = vmatpush1.bf16.msra.mxu0 0
    %2679 = vmatprep.subr.bf16.mxu0 0
    %2680 = vmatpush1.bf16.msra.mxu0 0
    %2681 = vmatprep.subr.bf16.mxu0 0
    %2682 = vmatpush1.bf16.msra.mxu0 0
    %2683 = vmatprep.subr.bf16.mxu0 0
    %2684 = vmatpush1.bf16.msra.mxu0 0
    %2685 = vmatprep.subr.bf16.mxu0 0
    %2686 = vmatpush1.bf16.msra.mxu0 0
    %2687 = vmatprep.subr.bf16.mxu0 0
    %2688 = vmatpush1.bf16.msra.mxu0 0
    %2689 = vmatprep.mubr.bf16.mxu0 0
    %2690 = vmatmul.mubr.bf16.gmra.mrb[0].mxu0 %v2652
    %v2691 = vpop.f32.mrb[0].mxu0
    %v2692 = vadd.f32 0.0, %v2691
    %v2693 = vpop.f32.mrb[0].mxu0
    %v2694 = vpop.f32.mrb[0].mxu0
    %v2695 = vadd.f32 0.0, %v2694
    %v2696 = vpop.f32.mrb[0].mxu0
    %2697 = vdwg.mxu0
    %v2698 = vadd.f32 %v2646, %v2692
    %v2699 = vadd.f32 %v2647, %v2695
    %2700 = vst.msk [vmem:[#allocation2] sm:$0xff] %vm27, %v2698
    %2701 = vst.msk [vmem:[#allocation2 + $0x8] sm:$0xff] %vm27, %v2699
    %s2702 = scalar_lea.vmem %s1, 96
    %v2703 = vld [vmem:[%s2702] sm:$0xf]
    %v2704 = vld [vmem:[%s2702 + $0x4] sm:$0xf]
    %v2705 = vld [vmem:[%s2702 + $0x8] sm:$0xf]
    %v2706 = vld [vmem:[%s2702 + $0xc] sm:$0xf]
    %v2711 = vunpack.c.l.b16 %v2703
    %v2712 = vunpack.c.l.b16 %v2704
    %v2713 = vunpack.c.l.b16 %v2705
    %v2714 = vunpack.c.l.b16 %v2706
    %v2715 = vpack.c.b16 %v2712, %v2711
    %v2716 = vpack.c.b16 %v2714, %v2713
    %2719 = vmatprep.subr.bf16.mxu0 0
    %2720 = vmatpush1.bf16.msra.mxu0 %v2715
    %2721 = vmatprep.subr.bf16.mxu0 0
    %2722 = vmatpush1.bf16.msra.mxu0 %v2716
    %2723 = vmatprep.subr.bf16.mxu0 0
    %2724 = vmatpush1.bf16.msra.mxu0 0
    %2725 = vmatprep.subr.bf16.mxu0 0
    %2726 = vmatpush1.bf16.msra.mxu0 0
    %2727 = vmatprep.subr.bf16.mxu0 0
    %2728 = vmatpush1.bf16.msra.mxu0 0
    %2729 = vmatprep.subr.bf16.mxu0 0
    %2730 = vmatpush1.bf16.msra.mxu0 0
    %2731 = vmatprep.subr.bf16.mxu0 0
    %2732 = vmatpush1.bf16.msra.mxu0 0
    %2733 = vmatprep.subr.bf16.mxu0 0
    %2734 = vmatpush1.bf16.msra.mxu0 0
    %2735 = vmatprep.subr.bf16.mxu0 0
    %2736 = vmatpush1.bf16.msra.mxu0 0
    %2737 = vmatprep.subr.bf16.mxu0 0
    %2738 = vmatpush1.bf16.msra.mxu0 0
    %2739 = vmatprep.subr.bf16.mxu0 0
    %2740 = vmatpush1.bf16.msra.mxu0 0
    %2741 = vmatprep.subr.bf16.mxu0 0
    %2742 = vmatpush1.bf16.msra.mxu0 0
    %2743 = vmatprep.subr.bf16.mxu0 0
    %2744 = vmatpush1.bf16.msra.mxu0 0
    %2745 = vmatprep.subr.bf16.mxu0 0
    %2746 = vmatpush1.bf16.msra.mxu0 0
    %2747 = vmatprep.subr.bf16.mxu0 0
    %2748 = vmatpush1.bf16.msra.mxu0 0
    %2749 = vmatprep.subr.bf16.mxu0 0
    %2750 = vmatpush1.bf16.msra.mxu0 0
    %2751 = vmatprep.mubr.bf16.mxu0 0
    %2752 = vmatmul.mubr.bf16.gmra.mrb[0].mxu0 %v52
    %v2753 = vpop.f32.mrb[0].mxu0
    %v2754 = vadd.f32 0.0, %v2753
    %v2755 = vpop.f32.mrb[0].mxu0
    %v2756 = vpop.f32.mrb[0].mxu0
    %v2757 = vadd.f32 0.0, %v2756
    %v2758 = vpop.f32.mrb[0].mxu0
    %2759 = vdwg.mxu0
    %s2760 = scalar_lea.vmem %s2, 96
    %v2761 = vld [vmem:[%s2760] sm:$0xf]
    %v2762 = vld [vmem:[%s2760 + $0x4] sm:$0xf]
    %v2763 = vld [vmem:[%s2760 + $0x8] sm:$0xf]
    %v2764 = vld [vmem:[%s2760 + $0xc] sm:$0xf]
    %v2769 = vunpack.c.l.b16 %v2761
    %v2770 = vunpack.c.l.b16 %v2762
    %v2771 = vunpack.c.l.b16 %v2763
    %v2772 = vunpack.c.l.b16 %v2764
    %v2773 = vpack.c.b16 %v2770, %v2769
    %v2774 = vpack.c.b16 %v2772, %v2771
    %2777 = vmatprep.subr.bf16.mxu0 0
    %2778 = vmatpush1.bf16.msra.mxu0 %v2773
    %2779 = vmatprep.subr.bf16.mxu0 0
    %2780 = vmatpush1.bf16.msra.mxu0 %v2774
    %2781 = vmatprep.subr.bf16.mxu0 0
    %2782 = vmatpush1.bf16.msra.mxu0 0
    %2783 = vmatprep.subr.bf16.mxu0 0
    %2784 = vmatpush1.bf16.msra.mxu0 0
    %2785 = vmatprep.subr.bf16.mxu0 0
    %2786 = vmatpush1.bf16.msra.mxu0 0
    %2787 = vmatprep.subr.bf16.mxu0 0
    %2788 = vmatpush1.bf16.msra.mxu0 0
    %2789 = vmatprep.subr.bf16.mxu0 0
    %2790 = vmatpush1.bf16.msra.mxu0 0
    %2791 = vmatprep.subr.bf16.mxu0 0
    %2792 = vmatpush1.bf16.msra.mxu0 0
    %2793 = vmatprep.subr.bf16.mxu0 0
    %2794 = vmatpush1.bf16.msra.mxu0 0
    %2795 = vmatprep.subr.bf16.mxu0 0
    %2796 = vmatpush1.bf16.msra.mxu0 0
    %2797 = vmatprep.subr.bf16.mxu0 0
    %2798 = vmatpush1.bf16.msra.mxu0 0
    %2799 = vmatprep.subr.bf16.mxu0 0
    %2800 = vmatpush1.bf16.msra.mxu0 0
    %2801 = vmatprep.subr.bf16.mxu0 0
    %2802 = vmatpush1.bf16.msra.mxu0 0
    %2803 = vmatprep.subr.bf16.mxu0 0
    %2804 = vmatpush1.bf16.msra.mxu0 0
    %2805 = vmatprep.subr.bf16.mxu0 0
    %2806 = vmatpush1.bf16.msra.mxu0 0
    %2807 = vmatprep.subr.bf16.mxu0 0
    %2808 = vmatpush1.bf16.msra.mxu0 0
    %2809 = vmatprep.mubr.bf16.mxu0 0
    %2810 = vmatmul.mubr.bf16.gmra.mrb[0].mxu0 %v52
    %v2811 = vpop.f32.mrb[0].mxu0
    %v2812 = vadd.f32 0.0, %v2811
    %v2813 = vpop.f32.mrb[0].mxu0
    %v2814 = vpop.f32.mrb[0].mxu0
    %v2815 = vadd.f32 0.0, %v2814
    %v2816 = vpop.f32.mrb[0].mxu0
    %2817 = vdwg.mxu0
    %s2818 = scalar_lea.vmem %s3, 96
    %v2819 = vld [vmem:[%s2818] sm:$0xf]
    %v2820 = vld [vmem:[%s2818 + $0x4] sm:$0xf]
    %v2821 = vld [vmem:[%s2818 + $0x8] sm:$0xf]
    %v2822 = vld [vmem:[%s2818 + $0xc] sm:$0xf]
    %v2827 = vunpack.c.l.b16 %v2819
    %v2828 = vunpack.c.l.b16 %v2820
    %v2829 = vunpack.c.l.b16 %v2821
    %v2830 = vunpack.c.l.b16 %v2822
    %v2831 = vpack.c.b16 %v2828, %v2827
    %v2832 = vpack.c.b16 %v2830, %v2829
    %2835 = vmatprep.subr.bf16.mxu0 0
    %2836 = vmatpush1.bf16.msra.mxu0 %v2831
    %2837 = vmatprep.subr.bf16.mxu0 0
    %2838 = vmatpush1.bf16.msra.mxu0 %v2832
    %2839 = vmatprep.subr.bf16.mxu0 0
    %2840 = vmatpush1.bf16.msra.mxu0 0
    %2841 = vmatprep.subr.bf16.mxu0 0
    %2842 = vmatpush1.bf16.msra.mxu0 0
    %2843 = vmatprep.subr.bf16.mxu0 0
    %2844 = vmatpush1.bf16.msra.mxu0 0
    %2845 = vmatprep.subr.bf16.mxu0 0
    %2846 = vmatpush1.bf16.msra.mxu0 0
    %2847 = vmatprep.subr.bf16.mxu0 0
    %2848 = vmatpush1.bf16.msra.mxu0 0
    %2849 = vmatprep.subr.bf16.mxu0 0
    %2850 = vmatpush1.bf16.msra.mxu0 0
    %2851 = vmatprep.subr.bf16.mxu0 0
    %2852 = vmatpush1.bf16.msra.mxu0 0
    %2853 = vmatprep.subr.bf16.mxu0 0
    %2854 = vmatpush1.bf16.msra.mxu0 0
    %2855 = vmatprep.subr.bf16.mxu0 0
    %2856 = vmatpush1.bf16.msra.mxu0 0
    %2857 = vmatprep.subr.bf16.mxu0 0
    %2858 = vmatpush1.bf16.msra.mxu0 0
    %2859 = vmatprep.subr.bf16.mxu0 0
    %2860 = vmatpush1.bf16.msra.mxu0 0
    %2861 = vmatprep.subr.bf16.mxu0 0
    %2862 = vmatpush1.bf16.msra.mxu0 0
    %2863 = vmatprep.subr.bf16.mxu0 0
    %2864 = vmatpush1.bf16.msra.mxu0 0
    %2865 = vmatprep.subr.bf16.mxu0 0
    %2866 = vmatpush1.bf16.msra.mxu0 0
    %2867 = vmatprep.mubr.bf16.mxu0 0
    %2868 = vmatmul.mubr.bf16.gmra.mrb[0].mxu0 %v52
    %v2869 = vpop.f32.mrb[0].mxu0
    %v2870 = vadd.f32 0.0, %v2869
    %v2871 = vpop.f32.mrb[0].mxu0
    %v2872 = vpop.f32.mrb[0].mxu0
    %v2873 = vadd.f32 0.0, %v2872
    %v2874 = vpop.f32.mrb[0].mxu0
    %2875 = vdwg.mxu0
    %v2876 = vpack.c.bf16 %v2754, %v2754
    %v2877 = vpack.c.bf16 %v2757, %v2757
    %v2878 = vpack.c.bf16 %v2812, %v2812
    %v2879 = vpack.c.bf16 %v2815, %v2815
    %v2880 = vpack.c.bf16 %v2870, %v2870
    %v2881 = vpack.c.bf16 %v2873, %v2873
    %v2883 = vsel %vm215, %v2876, 0
    %v2886 = vsel %vm215, %v2878, 0
    %2888 = vmatprep.subr.bf16.mxu0 0
    %2889 = vmatpush1.bf16.xpose.msra.mxu0 %v2886
    %2890 = vmatprep.subr.bf16.mxu0 0
    %2891 = vmatpush1.bf16.xpose.msra.mxu0 0
    %2892 = vmatprep.subr.bf16.mxu0 0
    %2893 = vmatpush1.bf16.xpose.msra.mxu0 0
    %2894 = vmatprep.subr.bf16.mxu0 0
    %2895 = vmatpush1.bf16.xpose.msra.mxu0 0
    %2896 = vmatprep.subr.bf16.mxu0 0
    %2897 = vmatpush1.bf16.xpose.msra.mxu0 0
    %2898 = vmatprep.subr.bf16.mxu0 0
    %2899 = vmatpush1.bf16.xpose.msra.mxu0 0
    %2900 = vmatprep.subr.bf16.mxu0 0
    %2901 = vmatpush1.bf16.xpose.msra.mxu0 0
    %2902 = vmatprep.subr.bf16.mxu0 0
    %2903 = vmatpush1.bf16.xpose.msra.mxu0 0
    %2904 = vmatprep.subr.bf16.mxu0 0
    %2905 = vmatpush1.bf16.xpose.msra.mxu0 0
    %2906 = vmatprep.subr.bf16.mxu0 0
    %2907 = vmatpush1.bf16.xpose.msra.mxu0 0
    %2908 = vmatprep.subr.bf16.mxu0 0
    %2909 = vmatpush1.bf16.xpose.msra.mxu0 0
    %2910 = vmatprep.subr.bf16.mxu0 0
    %2911 = vmatpush1.bf16.xpose.msra.mxu0 0
    %2912 = vmatprep.subr.bf16.mxu0 0
    %2913 = vmatpush1.bf16.xpose.msra.mxu0 0
    %2914 = vmatprep.subr.bf16.mxu0 0
    %2915 = vmatpush1.bf16.xpose.msra.mxu0 0
    %2916 = vmatprep.subr.bf16.mxu0 0
    %2917 = vmatpush1.bf16.xpose.msra.mxu0 0
    %2918 = vmatprep.subr.bf16.mxu0 0
    %2919 = vmatpush1.bf16.xpose.msra.mxu0 0
    %2920 = vmatprep.mubr.bf16.mxu0 0
    %2921 = vmatmul.mubr.bf16.gmra.mrb[0].mxu0 %v2883
    %v2922 = vpop.f32.mrb[0].mxu0
    %v2923 = vadd.f32 0.0, %v2922
    %v2924 = vpop.f32.mrb[0].mxu0
    %v2925 = vpop.f32.mrb[0].mxu0
    %v2926 = vpop.f32.mrb[0].mxu0
    %2927 = vdwg.mxu0
    %v2929 = vsel %vm215, %v2877, 0
    %v2932 = vsel %vm215, %v2879, 0
    %2934 = vmatprep.subr.bf16.mxu0 0
    %2935 = vmatpush1.bf16.xpose.msra.mxu0 %v2932
    %2936 = vmatprep.subr.bf16.mxu0 0
    %2937 = vmatpush1.bf16.xpose.msra.mxu0 0
    %2938 = vmatprep.subr.bf16.mxu0 0
    %2939 = vmatpush1.bf16.xpose.msra.mxu0 0
    %2940 = vmatprep.subr.bf16.mxu0 0
    %2941 = vmatpush1.bf16.xpose.msra.mxu0 0
    %2942 = vmatprep.subr.bf16.mxu0 0
    %2943 = vmatpush1.bf16.xpose.msra.mxu0 0
    %2944 = vmatprep.subr.bf16.mxu0 0
    %2945 = vmatpush1.bf16.xpose.msra.mxu0 0
    %2946 = vmatprep.subr.bf16.mxu0 0
    %2947 = vmatpush1.bf16.xpose.msra.mxu0 0
    %2948 = vmatprep.subr.bf16.mxu0 0
    %2949 = vmatpush1.bf16.xpose.msra.mxu0 0
    %2950 = vmatprep.subr.bf16.mxu0 0
    %2951 = vmatpush1.bf16.xpose.msra.mxu0 0
    %2952 = vmatprep.subr.bf16.mxu0 0
    %2953 = vmatpush1.bf16.xpose.msra.mxu0 0
    %2954 = vmatprep.subr.bf16.mxu0 0
    %2955 = vmatpush1.bf16.xpose.msra.mxu0 0
    %2956 = vmatprep.subr.bf16.mxu0 0
    %2957 = vmatpush1.bf16.xpose.msra.mxu0 0
    %2958 = vmatprep.subr.bf16.mxu0 0
    %2959 = vmatpush1.bf16.xpose.msra.mxu0 0
    %2960 = vmatprep.subr.bf16.mxu0 0
    %2961 = vmatpush1.bf16.xpose.msra.mxu0 0
    %2962 = vmatprep.subr.bf16.mxu0 0
    %2963 = vmatpush1.bf16.xpose.msra.mxu0 0
    %2964 = vmatprep.subr.bf16.mxu0 0
    %2965 = vmatpush1.bf16.xpose.msra.mxu0 0
    %2966 = vmatprep.mubr.bf16.mxu0 0
    %2967 = vmatmul.mubr.bf16.gmra.mrb[0].mxu0 %v2929
    %v2968 = vpop.f32.mrb[0].mxu0
    %v2969 = vadd.f32 0.0, %v2968
    %v2970 = vpop.f32.mrb[0].mxu0
    %v2971 = vpop.f32.mrb[0].mxu0
    %v2972 = vpop.f32.mrb[0].mxu0
    %2973 = vdwg.mxu0
    %v2974 = vsel %vm308, %v2923, -inf
    %2975 = vmax.xlane.f32.xlu0 %v2974
    %v2976 = vpop.xlane.xlu0 %2975
    %v2977 = vsel %vm308, %v2969, -inf
    %2978 = vmax.xlane.f32.xlu0 %v2977
    %v2979 = vpop.xlane.xlu0 %2978
    %v2980 = vsub.f32 %v2923, %v2976
    %v2981 = vsub.f32 %v2969, %v2979
    %v2982 = vmul.f32 %v2980, 1.442695
    %v2983 = vpow.pop %v2982
    %v2984 = vmul.f32 %v2981, 1.442695
    %v2985 = vpow.pop %v2984
    %v2986 = vsel %vm308, %v2983, 0.0
    %2987 = vadd.xlane.f32.xlu0 %v2986
    %v2988 = vpop.xlane.xlu0 %2987
    %v2989 = vsel %vm308, %v2985, 0.0
    %2990 = vadd.xlane.f32.xlu0 %v2989
    %v2991 = vpop.xlane.xlu0 %2990
    %v2992 = vpack.c.bf16 %v2983, %v2983
    %v2993 = vpack.c.bf16 %v2985, %v2985
    %v2995 = vsel %vm308, %v2992, 0
    %v2998 = vsel %vm332, %v2880, 0
    %3000 = vmatprep.subr.bf16.mxu0 0
    %3001 = vmatpush1.bf16.msra.mxu0 %v2998
    %3002 = vmatprep.subr.bf16.mxu0 0
    %3003 = vmatpush1.bf16.msra.mxu0 0
    %3004 = vmatprep.subr.bf16.mxu0 0
    %3005 = vmatpush1.bf16.msra.mxu0 0
    %3006 = vmatprep.subr.bf16.mxu0 0
    %3007 = vmatpush1.bf16.msra.mxu0 0
    %3008 = vmatprep.subr.bf16.mxu0 0
    %3009 = vmatpush1.bf16.msra.mxu0 0
    %3010 = vmatprep.subr.bf16.mxu0 0
    %3011 = vmatpush1.bf16.msra.mxu0 0
    %3012 = vmatprep.subr.bf16.mxu0 0
    %3013 = vmatpush1.bf16.msra.mxu0 0
    %3014 = vmatprep.subr.bf16.mxu0 0
    %3015 = vmatpush1.bf16.msra.mxu0 0
    %3016 = vmatprep.subr.bf16.mxu0 0
    %3017 = vmatpush1.bf16.msra.mxu0 0
    %3018 = vmatprep.subr.bf16.mxu0 0
    %3019 = vmatpush1.bf16.msra.mxu0 0
    %3020 = vmatprep.subr.bf16.mxu0 0
    %3021 = vmatpush1.bf16.msra.mxu0 0
    %3022 = vmatprep.subr.bf16.mxu0 0
    %3023 = vmatpush1.bf16.msra.mxu0 0
    %3024 = vmatprep.subr.bf16.mxu0 0
    %3025 = vmatpush1.bf16.msra.mxu0 0
    %3026 = vmatprep.subr.bf16.mxu0 0
    %3027 = vmatpush1.bf16.msra.mxu0 0
    %3028 = vmatprep.subr.bf16.mxu0 0
    %3029 = vmatpush1.bf16.msra.mxu0 0
    %3030 = vmatprep.subr.bf16.mxu0 0
    %3031 = vmatpush1.bf16.msra.mxu0 0
    %3032 = vmatprep.mubr.bf16.mxu0 0
    %3033 = vmatmul.mubr.bf16.gmra.mrb[0].mxu0 %v2995
    %v3034 = vpop.f32.mrb[0].mxu0
    %v3035 = vadd.f32 0.0, %v3034
    %v3036 = vpop.f32.mrb[0].mxu0
    %v3037 = vpop.f32.mrb[0].mxu0
    %v3038 = vpop.f32.mrb[0].mxu0
    %3039 = vdwg.mxu0
    %v3041 = vsel %vm308, %v2993, 0
    %v3044 = vsel %vm332, %v2881, 0
    %3046 = vmatprep.subr.bf16.mxu0 0
    %3047 = vmatpush1.bf16.msra.mxu0 %v3044
    %3048 = vmatprep.subr.bf16.mxu0 0
    %3049 = vmatpush1.bf16.msra.mxu0 0
    %3050 = vmatprep.subr.bf16.mxu0 0
    %3051 = vmatpush1.bf16.msra.mxu0 0
    %3052 = vmatprep.subr.bf16.mxu0 0
    %3053 = vmatpush1.bf16.msra.mxu0 0
    %3054 = vmatprep.subr.bf16.mxu0 0
    %3055 = vmatpush1.bf16.msra.mxu0 0
    %3056 = vmatprep.subr.bf16.mxu0 0
    %3057 = vmatpush1.bf16.msra.mxu0 0
    %3058 = vmatprep.subr.bf16.mxu0 0
    %3059 = vmatpush1.bf16.msra.mxu0 0
    %3060 = vmatprep.subr.bf16.mxu0 0
    %3061 = vmatpush1.bf16.msra.mxu0 0
    %3062 = vmatprep.subr.bf16.mxu0 0
    %3063 = vmatpush1.bf16.msra.mxu0 0
    %3064 = vmatprep.subr.bf16.mxu0 0
    %3065 = vmatpush1.bf16.msra.mxu0 0
    %3066 = vmatprep.subr.bf16.mxu0 0
    %3067 = vmatpush1.bf16.msra.mxu0 0
    %3068 = vmatprep.subr.bf16.mxu0 0
    %3069 = vmatpush1.bf16.msra.mxu0 0
    %3070 = vmatprep.subr.bf16.mxu0 0
    %3071 = vmatpush1.bf16.msra.mxu0 0
    %3072 = vmatprep.subr.bf16.mxu0 0
    %3073 = vmatpush1.bf16.msra.mxu0 0
    %3074 = vmatprep.subr.bf16.mxu0 0
    %3075 = vmatpush1.bf16.msra.mxu0 0
    %3076 = vmatprep.subr.bf16.mxu0 0
    %3077 = vmatpush1.bf16.msra.mxu0 0
    %3078 = vmatprep.mubr.bf16.mxu0 0
    %3079 = vmatmul.mubr.bf16.gmra.mrb[0].mxu0 %v3041
    %v3080 = vpop.f32.mrb[0].mxu0
    %v3081 = vadd.f32 0.0, %v3080
    %v3082 = vpop.f32.mrb[0].mxu0
    %v3083 = vpop.f32.mrb[0].mxu0
    %v3084 = vpop.f32.mrb[0].mxu0
    %3085 = vdwg.mxu0
    %v3086 = vrcp.pop %v2988
    %v3087 = vrcp.pop %v2991
    %v3088 = vmul.f32 %v3035, %v3086
    %v3089 = vmul.f32 %v3081, %v3087
    %v3090 = vld [vmem:[#allocation2] sm:$0xff]
    %v3091 = vld [vmem:[#allocation2 + $0x8] sm:$0xff]
    %v3092 = vpack.c.bf16 %v3089, %v3088
    %s3093 = scalar_lea.vmem %s4, 12
    %v3094 = vld [vmem:[%s3093] sm:$0x3]
    %v3096 = vsel %vm215, %v3092, 0
    %v3099 = vsel %vm433, %v3094, 0
    %3101 = vmatprep.subr.bf16.mxu0 0
    %3102 = vmatpush1.bf16.msra.mxu0 %v3099
    %3103 = vmatprep.subr.bf16.mxu0 0
    %3104 = vmatpush1.bf16.msra.mxu0 0
    %3105 = vmatprep.subr.bf16.mxu0 0
    %3106 = vmatpush1.bf16.msra.mxu0 0
    %3107 = vmatprep.subr.bf16.mxu0 0
    %3108 = vmatpush1.bf16.msra.mxu0 0
    %3109 = vmatprep.subr.bf16.mxu0 0
    %3110 = vmatpush1.bf16.msra.mxu0 0
    %3111 = vmatprep.subr.bf16.mxu0 0
    %3112 = vmatpush1.bf16.msra.mxu0 0
    %3113 = vmatprep.subr.bf16.mxu0 0
    %3114 = vmatpush1.bf16.msra.mxu0 0
    %3115 = vmatprep.subr.bf16.mxu0 0
    %3116 = vmatpush1.bf16.msra.mxu0 0
    %3117 = vmatprep.subr.bf16.mxu0 0
    %3118 = vmatpush1.bf16.msra.mxu0 0
    %3119 = vmatprep.subr.bf16.mxu0 0
    %3120 = vmatpush1.bf16.msra.mxu0 0
    %3121 = vmatprep.subr.bf16.mxu0 0
    %3122 = vmatpush1.bf16.msra.mxu0 0
    %3123 = vmatprep.subr.bf16.mxu0 0
    %3124 = vmatpush1.bf16.msra.mxu0 0
    %3125 = vmatprep.subr.bf16.mxu0 0
    %3126 = vmatpush1.bf16.msra.mxu0 0
    %3127 = vmatprep.subr.bf16.mxu0 0
    %3128 = vmatpush1.bf16.msra.mxu0 0
    %3129 = vmatprep.subr.bf16.mxu0 0
    %3130 = vmatpush1.bf16.msra.mxu0 0
    %3131 = vmatprep.subr.bf16.mxu0 0
    %3132 = vmatpush1.bf16.msra.mxu0 0
    %3133 = vmatprep.mubr.bf16.mxu0 0
    %3134 = vmatmul.mubr.bf16.gmra.mrb[0].mxu0 %v3096
    %v3135 = vpop.f32.mrb[0].mxu0
    %v3136 = vadd.f32 0.0, %v3135
    %v3137 = vpop.f32.mrb[0].mxu0
    %v3138 = vpop.f32.mrb[0].mxu0
    %v3139 = vadd.f32 0.0, %v3138
    %v3140 = vpop.f32.mrb[0].mxu0
    %3141 = vdwg.mxu0
    %v3142 = vadd.f32 %v3090, %v3136
    %v3143 = vadd.f32 %v3091, %v3139
    %3144 = vst.msk [vmem:[#allocation2] sm:$0xff] %vm27, %v3142
    %3145 = vst.msk [vmem:[#allocation2 + $0x8] sm:$0xff] %vm27, %v3143
    %s3146 = scalar_lea.vmem %s1, 112
    %v3147 = vld [vmem:[%s3146] sm:$0xf]
    %v3148 = vld [vmem:[%s3146 + $0x4] sm:$0xf]
    %v3149 = vld [vmem:[%s3146 + $0x8] sm:$0xf]
    %v3150 = vld [vmem:[%s3146 + $0xc] sm:$0xf]
    %v3155 = vunpack.c.l.b16 %v3147
    %v3156 = vunpack.c.l.b16 %v3148
    %v3157 = vunpack.c.l.b16 %v3149
    %v3158 = vunpack.c.l.b16 %v3150
    %v3159 = vpack.c.b16 %v3156, %v3155
    %v3160 = vpack.c.b16 %v3158, %v3157
    %3163 = vmatprep.subr.bf16.mxu0 0
    %3164 = vmatpush1.bf16.msra.mxu0 %v3159
    %3165 = vmatprep.subr.bf16.mxu0 0
    %3166 = vmatpush1.bf16.msra.mxu0 %v3160
    %3167 = vmatprep.subr.bf16.mxu0 0
    %3168 = vmatpush1.bf16.msra.mxu0 0
    %3169 = vmatprep.subr.bf16.mxu0 0
    %3170 = vmatpush1.bf16.msra.mxu0 0
    %3171 = vmatprep.subr.bf16.mxu0 0
    %3172 = vmatpush1.bf16.msra.mxu0 0
    %3173 = vmatprep.subr.bf16.mxu0 0
    %3174 = vmatpush1.bf16.msra.mxu0 0
    %3175 = vmatprep.subr.bf16.mxu0 0
    %3176 = vmatpush1.bf16.msra.mxu0 0
    %3177 = vmatprep.subr.bf16.mxu0 0
    %3178 = vmatpush1.bf16.msra.mxu0 0
    %3179 = vmatprep.subr.bf16.mxu0 0
    %3180 = vmatpush1.bf16.msra.mxu0 0
    %3181 = vmatprep.subr.bf16.mxu0 0
    %3182 = vmatpush1.bf16.msra.mxu0 0
    %3183 = vmatprep.subr.bf16.mxu0 0
    %3184 = vmatpush1.bf16.msra.mxu0 0
    %3185 = vmatprep.subr.bf16.mxu0 0
    %3186 = vmatpush1.bf16.msra.mxu0 0
    %3187 = vmatprep.subr.bf16.mxu0 0
    %3188 = vmatpush1.bf16.msra.mxu0 0
    %3189 = vmatprep.subr.bf16.mxu0 0
    %3190 = vmatpush1.bf16.msra.mxu0 0
    %3191 = vmatprep.subr.bf16.mxu0 0
    %3192 = vmatpush1.bf16.msra.mxu0 0
    %3193 = vmatprep.subr.bf16.mxu0 0
    %3194 = vmatpush1.bf16.msra.mxu0 0
    %3195 = vmatprep.mubr.bf16.mxu0 0
    %3196 = vmatmul.mubr.bf16.gmra.mrb[0].mxu0 %v52
    %v3197 = vpop.f32.mrb[0].mxu0
    %v3198 = vadd.f32 0.0, %v3197
    %v3199 = vpop.f32.mrb[0].mxu0
    %v3200 = vpop.f32.mrb[0].mxu0
    %v3201 = vadd.f32 0.0, %v3200
    %v3202 = vpop.f32.mrb[0].mxu0
    %3203 = vdwg.mxu0
    %s3204 = scalar_lea.vmem %s2, 112
    %v3205 = vld [vmem:[%s3204] sm:$0xf]
    %v3206 = vld [vmem:[%s3204 + $0x4] sm:$0xf]
    %v3207 = vld [vmem:[%s3204 + $0x8] sm:$0xf]
    %v3208 = vld [vmem:[%s3204 + $0xc] sm:$0xf]
    %v3213 = vunpack.c.l.b16 %v3205
    %v3214 = vunpack.c.l.b16 %v3206
    %v3215 = vunpack.c.l.b16 %v3207
    %v3216 = vunpack.c.l.b16 %v3208
    %v3217 = vpack.c.b16 %v3214, %v3213
    %v3218 = vpack.c.b16 %v3216, %v3215
    %3221 = vmatprep.subr.bf16.mxu0 0
    %3222 = vmatpush1.bf16.msra.mxu0 %v3217
    %3223 = vmatprep.subr.bf16.mxu0 0
    %3224 = vmatpush1.bf16.msra.mxu0 %v3218
    %3225 = vmatprep.subr.bf16.mxu0 0
    %3226 = vmatpush1.bf16.msra.mxu0 0
    %3227 = vmatprep.subr.bf16.mxu0 0
    %3228 = vmatpush1.bf16.msra.mxu0 0
    %3229 = vmatprep.subr.bf16.mxu0 0
    %3230 = vmatpush1.bf16.msra.mxu0 0
    %3231 = vmatprep.subr.bf16.mxu0 0
    %3232 = vmatpush1.bf16.msra.mxu0 0
    %3233 = vmatprep.subr.bf16.mxu0 0
    %3234 = vmatpush1.bf16.msra.mxu0 0
    %3235 = vmatprep.subr.bf16.mxu0 0
    %3236 = vmatpush1.bf16.msra.mxu0 0
    %3237 = vmatprep.subr.bf16.mxu0 0
    %3238 = vmatpush1.bf16.msra.mxu0 0
    %3239 = vmatprep.subr.bf16.mxu0 0
    %3240 = vmatpush1.bf16.msra.mxu0 0
    %3241 = vmatprep.subr.bf16.mxu0 0
    %3242 = vmatpush1.bf16.msra.mxu0 0
    %3243 = vmatprep.subr.bf16.mxu0 0
    %3244 = vmatpush1.bf16.msra.mxu0 0
    %3245 = vmatprep.subr.bf16.mxu0 0
    %3246 = vmatpush1.bf16.msra.mxu0 0
    %3247 = vmatprep.subr.bf16.mxu0 0
    %3248 = vmatpush1.bf16.msra.mxu0 0
    %3249 = vmatprep.subr.bf16.mxu0 0
    %3250 = vmatpush1.bf16.msra.mxu0 0
    %3251 = vmatprep.subr.bf16.mxu0 0
    %3252 = vmatpush1.bf16.msra.mxu0 0
    %3253 = vmatprep.mubr.bf16.mxu0 0
    %3254 = vmatmul.mubr.bf16.gmra.mrb[0].mxu0 %v52
    %v3255 = vpop.f32.mrb[0].mxu0
    %v3256 = vadd.f32 0.0, %v3255
    %v3257 = vpop.f32.mrb[0].mxu0
    %v3258 = vpop.f32.mrb[0].mxu0
    %v3259 = vadd.f32 0.0, %v3258
    %v3260 = vpop.f32.mrb[0].mxu0
    %3261 = vdwg.mxu0
    %s3262 = scalar_lea.vmem %s3, 112
    %v3263 = vld [vmem:[%s3262] sm:$0xf]
    %v3264 = vld [vmem:[%s3262 + $0x4] sm:$0xf]
    %v3265 = vld [vmem:[%s3262 + $0x8] sm:$0xf]
    %v3266 = vld [vmem:[%s3262 + $0xc] sm:$0xf]
    %v3271 = vunpack.c.l.b16 %v3263
    %v3272 = vunpack.c.l.b16 %v3264
    %v3273 = vunpack.c.l.b16 %v3265
    %v3274 = vunpack.c.l.b16 %v3266
    %v3275 = vpack.c.b16 %v3272, %v3271
    %v3276 = vpack.c.b16 %v3274, %v3273
    %3279 = vmatprep.subr.bf16.mxu0 0
    %3280 = vmatpush1.bf16.msra.mxu0 %v3275
    %3281 = vmatprep.subr.bf16.mxu0 0
    %3282 = vmatpush1.bf16.msra.mxu0 %v3276
    %3283 = vmatprep.subr.bf16.mxu0 0
    %3284 = vmatpush1.bf16.msra.mxu0 0
    %3285 = vmatprep.subr.bf16.mxu0 0
    %3286 = vmatpush1.bf16.msra.mxu0 0
    %3287 = vmatprep.subr.bf16.mxu0 0
    %3288 = vmatpush1.bf16.msra.mxu0 0
    %3289 = vmatprep.subr.bf16.mxu0 0
    %3290 = vmatpush1.bf16.msra.mxu0 0
    %3291 = vmatprep.subr.bf16.mxu0 0
    %3292 = vmatpush1.bf16.msra.mxu0 0
    %3293 = vmatprep.subr.bf16.mxu0 0
    %3294 = vmatpush1.bf16.msra.mxu0 0
    %3295 = vmatprep.subr.bf16.mxu0 0
    %3296 = vmatpush1.bf16.msra.mxu0 0
    %3297 = vmatprep.subr.bf16.mxu0 0
    %3298 = vmatpush1.bf16.msra.mxu0 0
    %3299 = vmatprep.subr.bf16.mxu0 0
    %3300 = vmatpush1.bf16.msra.mxu0 0
    %3301 = vmatprep.subr.bf16.mxu0 0
    %3302 = vmatpush1.bf16.msra.mxu0 0
    %3303 = vmatprep.subr.bf16.mxu0 0
    %3304 = vmatpush1.bf16.msra.mxu0 0
    %3305 = vmatprep.subr.bf16.mxu0 0
    %3306 = vmatpush1.bf16.msra.mxu0 0
    %3307 = vmatprep.subr.bf16.mxu0 0
    %3308 = vmatpush1.bf16.msra.mxu0 0
    %3309 = vmatprep.subr.bf16.mxu0 0
    %3310 = vmatpush1.bf16.msra.mxu0 0
    %3311 = vmatprep.mubr.bf16.mxu0 0
    %3312 = vmatmul.mubr.bf16.gmra.mrb[0].mxu0 %v52
    %v3313 = vpop.f32.mrb[0].mxu0
    %v3314 = vadd.f32 0.0, %v3313
    %v3315 = vpop.f32.mrb[0].mxu0
    %v3316 = vpop.f32.mrb[0].mxu0
    %v3317 = vadd.f32 0.0, %v3316
    %v3318 = vpop.f32.mrb[0].mxu0
    %3319 = vdwg.mxu0
    %v3320 = vpack.c.bf16 %v3198, %v3198
    %v3321 = vpack.c.bf16 %v3201, %v3201
    %v3322 = vpack.c.bf16 %v3256, %v3256
    %v3323 = vpack.c.bf16 %v3259, %v3259
    %v3324 = vpack.c.bf16 %v3314, %v3314
    %v3325 = vpack.c.bf16 %v3317, %v3317
    %v3327 = vsel %vm215, %v3320, 0
    %v3330 = vsel %vm215, %v3322, 0
    %3332 = vmatprep.subr.bf16.mxu0 0
    %3333 = vmatpush1.bf16.xpose.msra.mxu0 %v3330
    %3334 = vmatprep.subr.bf16.mxu0 0
    %3335 = vmatpush1.bf16.xpose.msra.mxu0 0
    %3336 = vmatprep.subr.bf16.mxu0 0
    %3337 = vmatpush1.bf16.xpose.msra.mxu0 0
    %3338 = vmatprep.subr.bf16.mxu0 0
    %3339 = vmatpush1.bf16.xpose.msra.mxu0 0
    %3340 = vmatprep.subr.bf16.mxu0 0
    %3341 = vmatpush1.bf16.xpose.msra.mxu0 0
    %3342 = vmatprep.subr.bf16.mxu0 0
    %3343 = vmatpush1.bf16.xpose.msra.mxu0 0
    %3344 = vmatprep.subr.bf16.mxu0 0
    %3345 = vmatpush1.bf16.xpose.msra.mxu0 0
    %3346 = vmatprep.subr.bf16.mxu0 0
    %3347 = vmatpush1.bf16.xpose.msra.mxu0 0
    %3348 = vmatprep.subr.bf16.mxu0 0
    %3349 = vmatpush1.bf16.xpose.msra.mxu0 0
    %3350 = vmatprep.subr.bf16.mxu0 0
    %3351 = vmatpush1.bf16.xpose.msra.mxu0 0
    %3352 = vmatprep.subr.bf16.mxu0 0
    %3353 = vmatpush1.bf16.xpose.msra.mxu0 0
    %3354 = vmatprep.subr.bf16.mxu0 0
    %3355 = vmatpush1.bf16.xpose.msra.mxu0 0
    %3356 = vmatprep.subr.bf16.mxu0 0
    %3357 = vmatpush1.bf16.xpose.msra.mxu0 0
    %3358 = vmatprep.subr.bf16.mxu0 0
    %3359 = vmatpush1.bf16.xpose.msra.mxu0 0
    %3360 = vmatprep.subr.bf16.mxu0 0
    %3361 = vmatpush1.bf16.xpose.msra.mxu0 0
    %3362 = vmatprep.subr.bf16.mxu0 0
    %3363 = vmatpush1.bf16.xpose.msra.mxu0 0
    %3364 = vmatprep.mubr.bf16.mxu0 0
    %3365 = vmatmul.mubr.bf16.gmra.mrb[0].mxu0 %v3327
    %v3366 = vpop.f32.mrb[0].mxu0
    %v3367 = vadd.f32 0.0, %v3366
    %v3368 = vpop.f32.mrb[0].mxu0
    %v3369 = vpop.f32.mrb[0].mxu0
    %v3370 = vpop.f32.mrb[0].mxu0
    %3371 = vdwg.mxu0
    %v3373 = vsel %vm215, %v3321, 0
    %v3376 = vsel %vm215, %v3323, 0
    %3378 = vmatprep.subr.bf16.mxu0 0
    %3379 = vmatpush1.bf16.xpose.msra.mxu0 %v3376
    %3380 = vmatprep.subr.bf16.mxu0 0
    %3381 = vmatpush1.bf16.xpose.msra.mxu0 0
    %3382 = vmatprep.subr.bf16.mxu0 0
    %3383 = vmatpush1.bf16.xpose.msra.mxu0 0
    %3384 = vmatprep.subr.bf16.mxu0 0
    %3385 = vmatpush1.bf16.xpose.msra.mxu0 0
    %3386 = vmatprep.subr.bf16.mxu0 0
    %3387 = vmatpush1.bf16.xpose.msra.mxu0 0
    %3388 = vmatprep.subr.bf16.mxu0 0
    %3389 = vmatpush1.bf16.xpose.msra.mxu0 0
    %3390 = vmatprep.subr.bf16.mxu0 0
    %3391 = vmatpush1.bf16.xpose.msra.mxu0 0
    %3392 = vmatprep.subr.bf16.mxu0 0
    %3393 = vmatpush1.bf16.xpose.msra.mxu0 0
    %3394 = vmatprep.subr.bf16.mxu0 0
    %3395 = vmatpush1.bf16.xpose.msra.mxu0 0
    %3396 = vmatprep.subr.bf16.mxu0 0
    %3397 = vmatpush1.bf16.xpose.msra.mxu0 0
    %3398 = vmatprep.subr.bf16.mxu0 0
    %3399 = vmatpush1.bf16.xpose.msra.mxu0 0
    %3400 = vmatprep.subr.bf16.mxu0 0
    %3401 = vmatpush1.bf16.xpose.msra.mxu0 0
    %3402 = vmatprep.subr.bf16.mxu0 0
    %3403 = vmatpush1.bf16.xpose.msra.mxu0 0
    %3404 = vmatprep.subr.bf16.mxu0 0
    %3405 = vmatpush1.bf16.xpose.msra.mxu0 0
    %3406 = vmatprep.subr.bf16.mxu0 0
    %3407 = vmatpush1.bf16.xpose.msra.mxu0 0
    %3408 = vmatprep.subr.bf16.mxu0 0
    %3409 = vmatpush1.bf16.xpose.msra.mxu0 0
    %3410 = vmatprep.mubr.bf16.mxu0 0
    %3411 = vmatmul.mubr.bf16.gmra.mrb[0].mxu0 %v3373
    %v3412 = vpop.f32.mrb[0].mxu0
    %v3413 = vadd.f32 0.0, %v3412
    %v3414 = vpop.f32.mrb[0].mxu0
    %v3415 = vpop.f32.mrb[0].mxu0
    %v3416 = vpop.f32.mrb[0].mxu0
    %3417 = vdwg.mxu0
    %v3418 = vsel %vm308, %v3367, -inf
    %3419 = vmax.xlane.f32.xlu0 %v3418
    %v3420 = vpop.xlane.xlu0 %3419
    %v3421 = vsel %vm308, %v3413, -inf
    %3422 = vmax.xlane.f32.xlu0 %v3421
    %v3423 = vpop.xlane.xlu0 %3422
    %v3424 = vsub.f32 %v3367, %v3420
    %v3425 = vsub.f32 %v3413, %v3423
    %v3426 = vmul.f32 %v3424, 1.442695
    %v3427 = vpow.pop %v3426
    %v3428 = vmul.f32 %v3425, 1.442695
    %v3429 = vpow.pop %v3428
    %v3430 = vsel %vm308, %v3427, 0.0
    %3431 = vadd.xlane.f32.xlu0 %v3430
    %v3432 = vpop.xlane.xlu0 %3431
    %v3433 = vsel %vm308, %v3429, 0.0
    %3434 = vadd.xlane.f32.xlu0 %v3433
    %v3435 = vpop.xlane.xlu0 %3434
    %v3436 = vpack.c.bf16 %v3427, %v3427
    %v3437 = vpack.c.bf16 %v3429, %v3429
    %v3439 = vsel %vm308, %v3436, 0
    %v3442 = vsel %vm332, %v3324, 0
    %3444 = vmatprep.subr.bf16.mxu0 0
    %3445 = vmatpush1.bf16.msra.mxu0 %v3442
    %3446 = vmatprep.subr.bf16.mxu0 0
    %3447 = vmatpush1.bf16.msra.mxu0 0
    %3448 = vmatprep.subr.bf16.mxu0 0
    %3449 = vmatpush1.bf16.msra.mxu0 0
    %3450 = vmatprep.subr.bf16.mxu0 0
    %3451 = vmatpush1.bf16.msra.mxu0 0
    %3452 = vmatprep.subr.bf16.mxu0 0
    %3453 = vmatpush1.bf16.msra.mxu0 0
    %3454 = vmatprep.subr.bf16.mxu0 0
    %3455 = vmatpush1.bf16.msra.mxu0 0
    %3456 = vmatprep.subr.bf16.mxu0 0
    %3457 = vmatpush1.bf16.msra.mxu0 0
    %3458 = vmatprep.subr.bf16.mxu0 0
    %3459 = vmatpush1.bf16.msra.mxu0 0
    %3460 = vmatprep.subr.bf16.mxu0 0
    %3461 = vmatpush1.bf16.msra.mxu0 0
    %3462 = vmatprep.subr.bf16.mxu0 0
    %3463 = vmatpush1.bf16.msra.mxu0 0
    %3464 = vmatprep.subr.bf16.mxu0 0
    %3465 = vmatpush1.bf16.msra.mxu0 0
    %3466 = vmatprep.subr.bf16.mxu0 0
    %3467 = vmatpush1.bf16.msra.mxu0 0
    %3468 = vmatprep.subr.bf16.mxu0 0
    %3469 = vmatpush1.bf16.msra.mxu0 0
    %3470 = vmatprep.subr.bf16.mxu0 0
    %3471 = vmatpush1.bf16.msra.mxu0 0
    %3472 = vmatprep.subr.bf16.mxu0 0
    %3473 = vmatpush1.bf16.msra.mxu0 0
    %3474 = vmatprep.subr.bf16.mxu0 0
    %3475 = vmatpush1.bf16.msra.mxu0 0
    %3476 = vmatprep.mubr.bf16.mxu0 0
    %3477 = vmatmul.mubr.bf16.gmra.mrb[0].mxu0 %v3439
    %v3478 = vpop.f32.mrb[0].mxu0
    %v3479 = vadd.f32 0.0, %v3478
    %v3480 = vpop.f32.mrb[0].mxu0
    %v3481 = vpop.f32.mrb[0].mxu0
    %v3482 = vpop.f32.mrb[0].mxu0
    %3483 = vdwg.mxu0
    %v3485 = vsel %vm308, %v3437, 0
    %v3488 = vsel %vm332, %v3325, 0
    %3490 = vmatprep.subr.bf16.mxu0 0
    %3491 = vmatpush1.bf16.msra.mxu0 %v3488
    %3492 = vmatprep.subr.bf16.mxu0 0
    %3493 = vmatpush1.bf16.msra.mxu0 0
    %3494 = vmatprep.subr.bf16.mxu0 0
    %3495 = vmatpush1.bf16.msra.mxu0 0
    %3496 = vmatprep.subr.bf16.mxu0 0
    %3497 = vmatpush1.bf16.msra.mxu0 0
    %3498 = vmatprep.subr.bf16.mxu0 0
    %3499 = vmatpush1.bf16.msra.mxu0 0
    %3500 = vmatprep.subr.bf16.mxu0 0
    %3501 = vmatpush1.bf16.msra.mxu0 0
    %3502 = vmatprep.subr.bf16.mxu0 0
    %3503 = vmatpush1.bf16.msra.mxu0 0
    %3504 = vmatprep.subr.bf16.mxu0 0
    %3505 = vmatpush1.bf16.msra.mxu0 0
    %3506 = vmatprep.subr.bf16.mxu0 0
    %3507 = vmatpush1.bf16.msra.mxu0 0
    %3508 = vmatprep.subr.bf16.mxu0 0
    %3509 = vmatpush1.bf16.msra.mxu0 0
    %3510 = vmatprep.subr.bf16.mxu0 0
    %3511 = vmatpush1.bf16.msra.mxu0 0
    %3512 = vmatprep.subr.bf16.mxu0 0
    %3513 = vmatpush1.bf16.msra.mxu0 0
    %3514 = vmatprep.subr.bf16.mxu0 0
    %3515 = vmatpush1.bf16.msra.mxu0 0
    %3516 = vmatprep.subr.bf16.mxu0 0
    %3517 = vmatpush1.bf16.msra.mxu0 0
    %3518 = vmatprep.subr.bf16.mxu0 0
    %3519 = vmatpush1.bf16.msra.mxu0 0
    %3520 = vmatprep.subr.bf16.mxu0 0
    %3521 = vmatpush1.bf16.msra.mxu0 0
    %3522 = vmatprep.mubr.bf16.mxu0 0
    %3523 = vmatmul.mubr.bf16.gmra.mrb[0].mxu0 %v3485
    %v3524 = vpop.f32.mrb[0].mxu0
    %v3525 = vadd.f32 0.0, %v3524
    %v3526 = vpop.f32.mrb[0].mxu0
    %v3527 = vpop.f32.mrb[0].mxu0
    %v3528 = vpop.f32.mrb[0].mxu0
    %3529 = vdwg.mxu0
    %v3530 = vrcp.pop %v3432
    %v3531 = vrcp.pop %v3435
    %v3532 = vmul.f32 %v3479, %v3530
    %v3533 = vmul.f32 %v3525, %v3531
    %v3534 = vld [vmem:[#allocation2] sm:$0xff]
    %v3535 = vld [vmem:[#allocation2 + $0x8] sm:$0xff]
    %v3536 = vpack.c.bf16 %v3533, %v3532
    %s3537 = scalar_lea.vmem %s4, 14
    %v3538 = vld [vmem:[%s3537] sm:$0x3]
    %v3540 = vsel %vm215, %v3536, 0
    %v3543 = vsel %vm433, %v3538, 0
    %3545 = vmatprep.subr.bf16.mxu0 0
    %3546 = vmatpush1.bf16.msra.mxu0 %v3543
    %3547 = vmatprep.subr.bf16.mxu0 0
    %3548 = vmatpush1.bf16.msra.mxu0 0
    %3549 = vmatprep.subr.bf16.mxu0 0
    %3550 = vmatpush1.bf16.msra.mxu0 0
    %3551 = vmatprep.subr.bf16.mxu0 0
    %3552 = vmatpush1.bf16.msra.mxu0 0
    %3553 = vmatprep.subr.bf16.mxu0 0
    %3554 = vmatpush1.bf16.msra.mxu0 0
    %3555 = vmatprep.subr.bf16.mxu0 0
    %3556 = vmatpush1.bf16.msra.mxu0 0
    %3557 = vmatprep.subr.bf16.mxu0 0
    %3558 = vmatpush1.bf16.msra.mxu0 0
    %3559 = vmatprep.subr.bf16.mxu0 0
    %3560 = vmatpush1.bf16.msra.mxu0 0
    %3561 = vmatprep.subr.bf16.mxu0 0
    %3562 = vmatpush1.bf16.msra.mxu0 0
    %3563 = vmatprep.subr.bf16.mxu0 0
    %3564 = vmatpush1.bf16.msra.mxu0 0
    %3565 = vmatprep.subr.bf16.mxu0 0
    %3566 = vmatpush1.bf16.msra.mxu0 0
    %3567 = vmatprep.subr.bf16.mxu0 0
    %3568 = vmatpush1.bf16.msra.mxu0 0
    %3569 = vmatprep.subr.bf16.mxu0 0
    %3570 = vmatpush1.bf16.msra.mxu0 0
    %3571 = vmatprep.subr.bf16.mxu0 0
    %3572 = vmatpush1.bf16.msra.mxu0 0
    %3573 = vmatprep.subr.bf16.mxu0 0
    %3574 = vmatpush1.bf16.msra.mxu0 0
    %3575 = vmatprep.subr.bf16.mxu0 0
    %3576 = vmatpush1.bf16.msra.mxu0 0
    %3577 = vmatprep.mubr.bf16.mxu0 0
    %3578 = vmatmul.mubr.bf16.gmra.mrb[0].mxu0 %v3540
    %v3579 = vpop.f32.mrb[0].mxu0
    %v3580 = vadd.f32 0.0, %v3579
    %v3581 = vpop.f32.mrb[0].mxu0
    %v3582 = vpop.f32.mrb[0].mxu0
    %v3583 = vadd.f32 0.0, %v3582
    %v3584 = vpop.f32.mrb[0].mxu0
    %3585 = vdwg.mxu0
    %v3586 = vadd.f32 %v3534, %v3580
    %v3587 = vadd.f32 %v3535, %v3583
    %3588 = vst.msk [vmem:[#allocation2] sm:$0xff] %vm27, %v3586
    %3589 = vst.msk [vmem:[#allocation2 + $0x8] sm:$0xff] %vm27, %v3587
    %v3590 = vld [vmem:[#allocation2] sm:$0xff]
    %v3591 = vld [vmem:[#allocation2 + $0x8] sm:$0xff]
    %v3592 = vld [vmem:[%s5] sm:$0x1]
    %v3594 = vlaneseq
    %v3595 = vshrl.u32 %v3594, 7
    %v3596 = vsub.s32 0, %v3595
    %v3597 = vrot.slane %v3592, %v3596
    %v3599 = vadd.f32 %v3590, %v3597
    %v3600 = vadd.f32 %v3591, %v3597
    %3601 = vst.msk [vmem:[#allocation3] sm:$0xff] %vm27, %v3599
    %3602 = vst.msk [vmem:[#allocation3 + $0x8] sm:$0xff] %vm27, %v3600
    // Predicated region
    $region26: #{tpu_custom_call.1} parent=1 // pred_check
      _
    $region27: #{tpu_custom_call.1} parent=1 // pred_check_branch
      %3604 = sbr.rel (0) target = $region29
    $region28: #{tpu_custom_call.1} parent=1 // pred_region
      %s3606 = ssub.s32 256, 256
      %3607 = vsyncadd [#allocation4], %s3606
      %s3608 = sshll.u32 [#allocation3], 4
      %s3609 = int_to_ptr.vmem [resolvable:$true] %s3608
      %3614 = dma.vmem_to_hbm [thread:$0]  %s3609, 256, %s6, [#allocation4], 128, 128, 8
    $region29: #{tpu_custom_call.1} parent=1 // pred_fallthru
      _
    // Predicated region
    $region30: #{tpu_custom_call.1} parent=1 // pred_check
      _
    $region31: #{tpu_custom_call.1} parent=1 // pred_check_branch
      %3616 = sbr.rel (0) target = $region33
    $region32: #{tpu_custom_call.1} parent=1 // pred_region
      %3617 = dma.done [#allocation4], 256
    $region33: #{tpu_custom_call.1} parent=1 // pred_fallthru
      _
    %3618 = vsyncpa [#allocation4], 1

</llo_original>
